<compile_context>
chip_gen: v6e
topology: v6e:2x2x1
jax: 0.10.0
libtpu: 0.0.40
codegen_flags: <defaults>
</compile_context>

<pallas_src>
import functools

import jax
import jax.numpy as jnp
from jax.experimental import pallas as pl
from jax.experimental.pallas import tpu as pltpu

BN_EPS = 1e-5   # PyTorch BatchNorm2d default eps
LANE = 128      # channel (lane) padding multiple


def _round_up(n, m):
    return ((n + m - 1) // m) * m


def _dw_dtype_for_device():
    """bf16 depthwise path on v6e/v7x (packed bf16 VALU); f32 on v5e and older."""
    try:
        kind = jax.devices()[0].device_kind.lower()
    except Exception:
        return jnp.float32
    if any(t in kind for t in ("v2", "v3", "v4", "v5")):
        return jnp.float32
    return jnp.bfloat16


# ----------------------------------------------------------------------------
# Fused Block kernel (one image per grid step)
# ----------------------------------------------------------------------------
def _block_kernel(*refs, n_sep, has_skip, dilation, stride, dw_dtype):
    x_ref = refs[0]
    pos = 1
    sep_refs = []
    for _ in range(n_sep):
        sep_refs.append(refs[pos:pos + 4])
        pos += 4
    if has_skip:
        skipw_ref, skipb_ref = refs[pos], refs[pos + 1]
        pos += 2
    out_ref, hook_ref, xpad_ref = refs[pos], refs[pos + 1], refs[pos + 2]

    d = dilation
    _, hin, win, _ = x_ref.shape
    _, ho, wo, _ = out_ref.shape
    cpad = xpad_ref.shape[-1]

    # Zero only the thin halo strips (top/bottom d rows, left/right d cols).  The
    # interior is fully overwritten by every sepconv's pad-fill below, so no full
    # padded-scratch zero fill is needed.  Re-zeroed every grid step (cheap) so it
    # stays correct even when the N axis is split across TensorCores (the second
    # core's first step is not program_id 0).
    xpad_ref[:, 0:d, :, :] = jnp.zeros((1, d, win + 2 * d, cpad), dw_dtype)
    xpad_ref[:, d + hin:, :, :] = jnp.zeros((1, d, win + 2 * d, cpad), dw_dtype)
    xpad_ref[:, d:d + hin, 0:d, :] = jnp.zeros((1, hin, d, cpad), dw_dtype)
    xpad_ref[:, d:d + hin, d + win:, :] = jnp.zeros((1, hin, d, cpad), dw_dtype)

    def sepconv(h_in, dww_ref, bn1b_ref, pww_ref, bn2b_ref, *, s, oh, ow):
        """ReLU -> DW3x3 (dilated, strided) -> +BN1 bias -> ReLU -> 1x1 -> +BN2 bias.
        BN scales are pre-folded into dww / pww by fold_block_params."""
        cin = dww_ref.shape[1]
        cout = pww_ref.shape[1]

        # ReLU commutes with zero padding: write ReLU(h) into the scratch interior.
        xpad_ref[:, d:d + hin, d:d + win, 0:cin] = (
            jnp.maximum(h_in, 0.0).astype(dw_dtype))
        dww = dww_ref[...]                       # (9, cin), BN1 scale pre-folded

        def tap(kh, kw):
            # Ref-sliced loads (no full padded-tensor materialization); when striding,
            # the stride is applied inside the load so only kept positions are MAC'd.
            if s == 1:
                return xpad_ref[:, kh * d:kh * d + oh, kw * d:kw * d + ow, 0:cin]
            return xpad_ref[:, pl.ds(kh * d, oh, s), pl.ds(kw * d, ow, s), 0:cin]

        # Depthwise 3x3: 9 shifted elementwise MACs on the VPU; products in dw_dtype
        # (bf16 on v6e/v7x), accumulation in f32.
        acc = (tap(0, 0) * dww[0]).astype(jnp.float32)
        for kh in range(3):
            for kw in range(3):
                if kh == 0 and kw == 0:
                    continue
                acc = acc + (tap(kh, kw) * dww[kh * 3 + kw]).astype(jnp.float32)

        hmid = jnp.maximum(acc + bn1b_ref[...], 0.0)     # BN1 bias + ReLU (f32)
        # 1x1 conv == matmul on the MXU; bf16 operands, f32 accumulate.
        y = jnp.dot(hmid.reshape(oh * ow, cin).astype(jnp.bfloat16),
                    pww_ref[...],                         # bf16, BN2 scale pre-folded
                    preferred_element_type=jnp.float32)
        return y.reshape(1, oh, ow, cout) + bn2b_ref[...]

    # sepconvs[:-1]: stride 1, chained entirely inside VMEM (no HBM round trips).
    h = x_ref[...]
    for i in range(n_sep - 1):
        h = sepconv(h, *sep_refs[i], s=1, oh=hin, ow=win)
    hook_ref[...] = h.astype(hook_ref.dtype)              # mirrors self.hook_layer

    # Last sepconv carries the stride; residual branch fused.
    y = sepconv(h, *sep_refs[-1], s=stride, oh=ho, ow=wo)
    if has_skip:
        cx = x_ref.shape[-1]
        cout = out_ref.shape[-1]
        if stride == 1:
            xr = x_ref[...]
        else:
            xr = x_ref[:, pl.ds(0, ho, stride), pl.ds(0, wo, stride), :]
        sk = jnp.dot(xr.reshape(ho * wo, cx).astype(jnp.bfloat16),
                     skipw_ref[...],                      # bf16, skip-BN scale folded
                     preferred_element_type=jnp.float32)
        y = y + sk.reshape(1, ho, wo, cout) + skipb_ref[...]
    else:
        y = y + x_ref[...].astype(jnp.float32)
    out_ref[...] = y.astype(out_ref.dtype)


# ----------------------------------------------------------------------------
# pallas_call wrapper (NHWC, lane-padded channels)
# ----------------------------------------------------------------------------
def block_apply(x, folded, *, dilation, stride, has_skip, dw_dtype,
                out_dtype, hook_dtype):
    n, h, w, in_cp = x.shape
    seps = folded["sepconvs"]
    n_sep = len(seps)
    d = dilation
    ho = (h - 1) // stride + 1
    wo = (w - 1) // stride + 1
    mid_cp = seps[-1][0].shape[1]        # padded channels of the hook layer
    out_cp = seps[-1][2].shape[1]        # padded output channels
    max_cp = max(s[0].shape[1] for s in seps)

    in_specs = [pl.BlockSpec((1, h, w, in_cp), lambda i: (i, 0, 0, 0))]
    args = [x]
    for (dww, bn1b, pww, bn2b) in seps:
        in_specs += [pl.BlockSpec(dww.shape, lambda i: (0, 0)),
                     pl.BlockSpec(bn1b.shape, lambda i: (0, 0)),
                     pl.BlockSpec(pww.shape, lambda i: (0, 0)),
                     pl.BlockSpec(bn2b.shape, lambda i: (0, 0))]
        args += [dww, bn1b, pww, bn2b]
    if has_skip:
        in_specs += [pl.BlockSpec(folded["skip_w"].shape, lambda i: (0, 0)),
                     pl.BlockSpec(folded["skip_b"].shape, lambda i: (0, 0))]
        args += [folded["skip_w"], folded["skip_b"]]

    out_shape = (jax.ShapeDtypeStruct((n, ho, wo, out_cp), out_dtype),
                 jax.ShapeDtypeStruct((n, h, w, mid_cp), hook_dtype))
    out_specs = (pl.BlockSpec((1, ho, wo, out_cp), lambda i: (i, 0, 0, 0)),
                 pl.BlockSpec((1, h, w, mid_cp), lambda i: (i, 0, 0, 0)))

    kernel = functools.partial(_block_kernel, n_sep=n_sep, has_skip=has_skip,
                               dilation=dilation, stride=stride, dw_dtype=dw_dtype)
    return pl.pallas_call(
        kernel,
        out_shape=out_shape,
        grid=(n,),
        in_specs=in_specs,
        out_specs=out_specs,
        scratch_shapes=[pltpu.VMEM((1, h + 2 * d, w + 2 * d, max_cp), dw_dtype)],
        compiler_params=pltpu.CompilerParams(dimension_semantics=("parallel",)),
    )(*args)


# ----------------------------------------------------------------------------
# Block forward (NCHW <-> padded NHWC glue)
# ----------------------------------------------------------------------------
def block_forward(x_nchw, folded, *, stride, dilation, has_skip, dw_dtype,
                  out_dtype=None, hook_dtype=jnp.bfloat16):
    x = jnp.transpose(x_nchw, (0, 2, 3, 1))              # NCHW -> NHWC once
    in_c = x.shape[-1]
    in_cp = folded["sepconvs"][0][0].shape[1]
    if in_cp != in_c:                                     # lane-pad channels once
        x = jnp.pad(x, ((0, 0), (0, 0), (0, 0), (0, in_cp - in_c)))
    if out_dtype is None:
        out_dtype = x_nchw.dtype
    out_p, hook_p = block_apply(x, folded, dilation=dilation, stride=stride,
                                has_skip=has_skip, dw_dtype=dw_dtype,
                                out_dtype=out_dtype, hook_dtype=hook_dtype)
    out = out_p[..., :folded["out_c"]]
    hook = hook_p[..., :folded["mid_c"]]
    return (jnp.transpose(out, (0, 3, 1, 2)),
            jnp.transpose(hook, (0, 3, 1, 2)).astype(x_nchw.dtype))


# ----------------------------------------------------------------------------
# Deterministic parameter construction + BN folding / lane padding
# ----------------------------------------------------------------------------
def _make_bn(key, c):
    k1, k2, k3, k4 = jax.random.split(key, 4)
    gamma = 1.0 + 0.1 * jax.random.normal(k1, (c,), jnp.float32)
    beta = 0.1 * jax.random.normal(k2, (c,), jnp.float32)
    mean = 0.1 * jax.random.normal(k3, (c,), jnp.float32)
    var = 1.0 + 0.1 * jax.random.uniform(k4, (c,), jnp.float32)
    scale = gamma / jnp.sqrt(var + BN_EPS)   # inference-mode folded scale/bias
    bias = beta - mean * scale
    return scale, bias


def _make_sepconv_params(key, cin, cout):
    k1, k2, k3, k4 = jax.random.split(key, 4)
    p = {"dw_w": 0.2 * jax.random.normal(k1, (9, cin), jnp.float32)}   # [kh*3+kw, c]
    p["bn1_s"], p["bn1_b"] = _make_bn(k2, cin)
    p["pw_w"] = 0.2 * jax.random.normal(k3, (cin, cout), jnp.float32)  # 1x1 as (Cin, Cout)
    p["bn2_s"], p["bn2_b"] = _make_bn(k4, cout)
    return p


def make_block_params(key, in_c, out_c, reps, *, stride, grow_first=True):
    # Mirrors the PyTorch constructor: first + (reps-2) middle + last SeparableConvs
    # (note: PyTorch builds 2 sepconvs even for reps=1; this list does the same).
    mid_c = out_c if grow_first else in_c
    chans = [(in_c, mid_c)] + [(mid_c, mid_c)] * (reps - 2) + [(mid_c, out_c)]
    keys = jax.random.split(key, len(chans) + 2)
    params = {"sepconvs": [_make_sepconv_params(keys[i], ci, co)
                           for i, (ci, co) in enumerate(chans)]}
    has_skip = (in_c != out_c) or (stride != 1)
    if has_skip:
        params["skip_w"] = 0.2 * jax.random.normal(keys[-2], (in_c, out_c), jnp.float32)
        params["skip_bn_s"], params["skip_bn_b"] = _make_bn(keys[-1], out_c)
    return params, has_skip


def fold_block_params(params, has_skip, *, lane=LANE, dw_dtype=jnp.float32):
    """Fold BN scales into conv weights, zero-pad channels to lane multiples, and
    pre-cast the MXU (bf16) / depthwise (dw_dtype) operands."""
    def pad_to(a, axis, tgt):
        if a.shape[axis] == tgt:
            return a
        widths = [(0, 0)] * a.ndim
        widths[axis] = (0, tgt - a.shape[axis])
        return jnp.pad(a, widths)

    folded = {"sepconvs": []}
    for p in params["sepconvs"]:
        cin, cout = p["pw_w"].shape
        cin_p, cout_p = _round_up(cin, lane), _round_up(cout, lane)
        dww = pad_to(p["dw_w"] * p["bn1_s"][None, :], 1, cin_p).astype(dw_dtype)
        bn1b = pad_to(p["bn1_b"], 0, cin_p).reshape(1, cin_p).astype(jnp.float32)
        pww = pad_to(pad_to(p["pw_w"] * p["bn2_s"][None, :], 0, cin_p),
                     1, cout_p).astype(jnp.bfloat16)
        bn2b = pad_to(p["bn2_b"], 0, cout_p).reshape(1, cout_p).astype(jnp.float32)
        folded["sepconvs"].append((dww, bn1b, pww, bn2b))
    folded["mid_c"] = params["sepconvs"][-1]["pw_w"].shape[0]
    folded["out_c"] = params["sepconvs"][-1]["pw_w"].shape[1]
    if has_skip:
        cin, cout = params["skip_w"].shape
        cin_p, cout_p = _round_up(cin, lane), _round_up(cout, lane)
        folded["skip_w"] = pad_to(pad_to(params["skip_w"] * params["skip_bn_s"][None, :],
                                         0, cin_p), 1, cout_p).astype(jnp.bfloat16)
        folded["skip_b"] = pad_to(params["skip_bn_b"], 0, cout_p).reshape(
            1, cout_p).astype(jnp.float32)
    return folded


# ----------------------------------------------------------------------------
# Pure-JAX f32 reference (numerical sanity check)
# ----------------------------------------------------------------------------
def _sepconv_ref(x, p, *, dilation, stride):
    cin = x.shape[-1]
    h = jnp.maximum(x, 0.0)
    h = jax.lax.conv_general_dilated(
        h, p["dw_w"].reshape(3, 3, 1, cin),
        window_strides=(stride, stride),
        padding=[(dilation, dilation), (dilation, dilation)],
        rhs_dilation=(dilation, dilation),
        dimension_numbers=("NHWC", "HWIO", "NHWC"),
        feature_group_count=cin)
    h = h * p["bn1_s"] + p["bn1_b"]
    h = jnp.maximum(h, 0.0)
    y = jnp.einsum("nhwc,cd->nhwd", h, p["pw_w"])
    return y * p["bn2_s"] + p["bn2_b"]


def _block_ref(x_nchw, params, has_skip, *, stride, dilation):
    x = jnp.transpose(x_nchw, (0, 2, 3, 1))
    h = x
    for p in params["sepconvs"][:-1]:
        h = _sepconv_ref(h, p, dilation=dilation, stride=1)
    hook = h
    h = _sepconv_ref(h, params["sepconvs"][-1], dilation=dilation, stride=stride)
    if has_skip:
        xs = x[:, ::stride, ::stride, :]
        s = jnp.einsum("nhwc,cd->nhwd", xs, params["skip_w"])
        s = s * params["skip_bn_s"] + params["skip_bn_b"]
        out = h + s
    else:
        out = h + x
    return jnp.transpose(out, (0, 3, 1, 2)), jnp.transpose(hook, (0, 3, 1, 2))


# ----------------------------------------------------------------------------
if __name__ == "__main__":
    N, H, W = 2, 16, 16
    configs = [
        # (name, in_c, out_c, reps, stride, dilation)
        ("conv_skip", 4, 8, 3, 1, 1),       # skip = BN(Conv1x1(x)) fused into the kernel
        ("identity_skip", 8, 8, 2, 1, 1),   # identity residual fused into the kernel
    ]
    root = jax.random.PRNGKey(0)
    dw_dtype = _dw_dtype_for_device()       # bf16 depthwise on v6e/v7x, f32 on v5e/older

    for idx, (name, in_c, out_c, reps, stride, dilation) in enumerate(configs):
        kx, kp = jax.random.split(jax.random.fold_in(root, idx))
        x = jax.random.normal(kx, (N, in_c, H, W), jnp.float32)  # NCHW, as in PyTorch
        params, has_skip = make_block_params(kp, in_c, out_c, reps, stride=stride)
        folded = fold_block_params(params, has_skip, dw_dtype=dw_dtype)

        out, hook = block_forward(x, folded, stride=stride, dilation=dilation,
                                  has_skip=has_skip, dw_dtype=dw_dtype)
        out = jax.block_until_ready(out)
        hook = jax.block_until_ready(hook)

        ref_out, ref_hook = _block_ref(x, params, has_skip, stride=stride,
                                       dilation=dilation)
        ref_out = jax.block_until_ready(ref_out)

        ho = (H - 1) // stride + 1
        assert out.shape == (N, out_c, ho, ho), (name, out.shape)
        # bf16 MXU operands (+ bf16 depthwise on v6e/v7x) vs. a pure-f32 reference.
        if not jnp.allclose(out, ref_out, rtol=3e-2, atol=3e-2):
            err = float(jnp.max(jnp.abs(out - ref_out)))
            raise AssertionError(f"{name}: output mismatch vs JAX reference, max|diff|={err}")
        if not jnp.allclose(hook, ref_hook, rtol=3e-2, atol=3e-2):
            err = float(jnp.max(jnp.abs(hook - ref_hook)))
            raise AssertionError(f"{name}: hook mismatch vs JAX reference, max|diff|={err}")

    print("KERNEL_OK")
</pallas_src>

<mosaic_0001>
module attributes {stable_mosaic.version = 11 : i64} {
  func.func @_block_kernel(%arg0: i32, %arg1: memref<1x16x16x128xf32, #tpu.memory_space<vmem>>, %arg2: memref<9x128xbf16, #tpu.memory_space<vmem>>, %arg3: memref<1x128xf32, #tpu.memory_space<vmem>>, %arg4: memref<128x128xbf16, #tpu.memory_space<vmem>>, %arg5: memref<1x128xf32, #tpu.memory_space<vmem>>, %arg6: memref<9x128xbf16, #tpu.memory_space<vmem>>, %arg7: memref<1x128xf32, #tpu.memory_space<vmem>>, %arg8: memref<128x128xbf16, #tpu.memory_space<vmem>>, %arg9: memref<1x128xf32, #tpu.memory_space<vmem>>, %arg10: memref<9x128xbf16, #tpu.memory_space<vmem>>, %arg11: memref<1x128xf32, #tpu.memory_space<vmem>>, %arg12: memref<128x128xbf16, #tpu.memory_space<vmem>>, %arg13: memref<1x128xf32, #tpu.memory_space<vmem>>, %arg14: memref<128x128xbf16, #tpu.memory_space<vmem>>, %arg15: memref<1x128xf32, #tpu.memory_space<vmem>>, %arg16: memref<1x16x16x128xf32, #tpu.memory_space<vmem>>, %arg17: memref<1x16x16x128xbf16, #tpu.memory_space<vmem>>, %arg18: memref<1x18x18x128xbf16, #tpu.memory_space<vmem>>) attributes {dimension_semantics = [#tpu.dimension_semantics<parallel>], iteration_bounds = array<i64: 2>, scalar_prefetch = 0 : i64, scratch_operands = 1 : i64, tpu.core_type = #tpu.core_type<tc>, window_params = [{transform_indices = @transform_0, window_bounds = array<i64: 1, 16, 16, 128>}, {pipeline_mode = #tpu.pipeline_mode<synchronous>, transform_indices = @transform_1, window_bounds = array<i64: 9, 128>}, {pipeline_mode = #tpu.pipeline_mode<synchronous>, transform_indices = @transform_2, window_bounds = array<i64: 1, 128>}, {pipeline_mode = #tpu.pipeline_mode<synchronous>, transform_indices = @transform_3, window_bounds = array<i64: 128, 128>}, {pipeline_mode = #tpu.pipeline_mode<synchronous>, transform_indices = @transform_4, window_bounds = array<i64: 1, 128>}, {pipeline_mode = #tpu.pipeline_mode<synchronous>, transform_indices = @transform_5, window_bounds = array<i64: 9, 128>}, {pipeline_mode = #tpu.pipeline_mode<synchronous>, transform_indices = @transform_6, window_bounds = array<i64: 1, 128>}, {pipeline_mode = #tpu.pipeline_mode<synchronous>, transform_indices = @transform_7, window_bounds = array<i64: 128, 128>}, {pipeline_mode = #tpu.pipeline_mode<synchronous>, transform_indices = @transform_8, window_bounds = array<i64: 1, 128>}, {pipeline_mode = #tpu.pipeline_mode<synchronous>, transform_indices = @transform_9, window_bounds = array<i64: 9, 128>}, {pipeline_mode = #tpu.pipeline_mode<synchronous>, transform_indices = @transform_10, window_bounds = array<i64: 1, 128>}, {pipeline_mode = #tpu.pipeline_mode<synchronous>, transform_indices = @transform_11, window_bounds = array<i64: 128, 128>}, {pipeline_mode = #tpu.pipeline_mode<synchronous>, transform_indices = @transform_12, window_bounds = array<i64: 1, 128>}, {pipeline_mode = #tpu.pipeline_mode<synchronous>, transform_indices = @transform_13, window_bounds = array<i64: 128, 128>}, {pipeline_mode = #tpu.pipeline_mode<synchronous>, transform_indices = @transform_14, window_bounds = array<i64: 1, 128>}, {transform_indices = @transform_15, window_bounds = array<i64: 1, 16, 16, 128>}, {transform_indices = @transform_16, window_bounds = array<i64: 1, 16, 16, 128>}]} {
    %cst = arith.constant 0.000000e+00 : bf16
    %0 = vector.broadcast %cst : bf16 to vector<1x1x18x128xbf16>
    %c0 = arith.constant 0 : index
    %c0_0 = arith.constant 0 : index
    %c0_1 = arith.constant 0 : index
    %c0_2 = arith.constant 0 : index
    %1 = vector.load %arg18[%c0, %c0_0, %c0_1, %c0_2] : memref<1x18x18x128xbf16, #tpu.memory_space<vmem>>, vector<1x1x18x128xbf16>
    tpu.vector_store %arg18[%c0, %c0_0, %c0_1, %c0_2], %0 {strides = array<i32>} : memref<1x18x18x128xbf16, #tpu.memory_space<vmem>>, vector<1x1x18x128xbf16>,
    %cst_3 = arith.constant 0.000000e+00 : bf16
    %2 = vector.broadcast %cst_3 : bf16 to vector<1x1x18x128xbf16>
    %c0_4 = arith.constant 0 : index
    %c17 = arith.constant 17 : index
    %c0_5 = arith.constant 0 : index
    %c0_6 = arith.constant 0 : index
    %3 = vector.load %arg18[%c0_4, %c17, %c0_5, %c0_6] : memref<1x18x18x128xbf16, #tpu.memory_space<vmem>>, vector<1x1x18x128xbf16>
    tpu.vector_store %arg18[%c0_4, %c17, %c0_5, %c0_6], %2 {strides = array<i32>} : memref<1x18x18x128xbf16, #tpu.memory_space<vmem>>, vector<1x1x18x128xbf16>,
    %cst_7 = arith.constant 0.000000e+00 : bf16
    %4 = vector.broadcast %cst_7 : bf16 to vector<1x16x1x128xbf16>
    %c0_8 = arith.constant 0 : index
    %c1 = arith.constant 1 : index
    %c0_9 = arith.constant 0 : index
    %c0_10 = arith.constant 0 : index
    %5 = vector.load %arg18[%c0_8, %c1, %c0_9, %c0_10] : memref<1x18x18x128xbf16, #tpu.memory_space<vmem>>, vector<1x16x1x128xbf16>
    tpu.vector_store %arg18[%c0_8, %c1, %c0_9, %c0_10], %4 {strides = array<i32>} : memref<1x18x18x128xbf16, #tpu.memory_space<vmem>>, vector<1x16x1x128xbf16>,
    %cst_11 = arith.constant 0.000000e+00 : bf16
    %6 = vector.broadcast %cst_11 : bf16 to vector<1x16x1x128xbf16>
    %c0_12 = arith.constant 0 : index
    %c1_13 = arith.constant 1 : index
    %c17_14 = arith.constant 17 : index
    %c0_15 = arith.constant 0 : index
    %7 = vector.load %arg18[%c0_12, %c1_13, %c17_14, %c0_15] : memref<1x18x18x128xbf16, #tpu.memory_space<vmem>>, vector<1x16x1x128xbf16>
    tpu.vector_store %arg18[%c0_12, %c1_13, %c17_14, %c0_15], %6 {strides = array<i32>} : memref<1x18x18x128xbf16, #tpu.memory_space<vmem>>, vector<1x16x1x128xbf16>,
    %c0_16 = arith.constant 0 : index
    %c0_17 = arith.constant 0 : index
    %c0_18 = arith.constant 0 : index
    %c0_19 = arith.constant 0 : index
    %8 = vector.load %arg1[%c0_16, %c0_17, %c0_18, %c0_19] : memref<1x16x16x128xf32, #tpu.memory_space<vmem>>, vector<1x16x16x128xf32>
    %cst_20 = arith.constant 0.000000e+00 : f32
    %9 = vector.broadcast %cst_20 : f32 to vector<1x16x16x128xf32>
    %10 = arith.maximumf %8, %9 : vector<1x16x16x128xf32>
    %11 = arith.truncf %10 : vector<1x16x16x128xf32> to vector<1x16x16x128xbf16>
    %c0_21 = arith.constant 0 : index
    %c1_22 = arith.constant 1 : index
    %c1_23 = arith.constant 1 : index
    %c0_24 = arith.constant 0 : index
    %12 = vector.load %arg18[%c0_21, %c1_22, %c1_23, %c0_24] : memref<1x18x18x128xbf16, #tpu.memory_space<vmem>>, vector<1x16x16x128xbf16>
    tpu.vector_store %arg18[%c0_21, %c1_22, %c1_23, %c0_24], %11 {strides = array<i32>} : memref<1x18x18x128xbf16, #tpu.memory_space<vmem>>, vector<1x16x16x128xbf16>,
    %c0_25 = arith.constant 0 : index
    %c0_26 = arith.constant 0 : index
    %13 = vector.load %arg2[%c0_25, %c0_26] : memref<9x128xbf16, #tpu.memory_space<vmem>>, vector<9x128xbf16>
    %c0_27 = arith.constant 0 : index
    %c0_28 = arith.constant 0 : index
    %c0_29 = arith.constant 0 : index
    %c0_30 = arith.constant 0 : index
    %14 = vector.load %arg18[%c0_27, %c0_28, %c0_29, %c0_30] : memref<1x18x18x128xbf16, #tpu.memory_space<vmem>>, vector<1x16x16x128xbf16>
    %15 = vector.extract_strided_slice %13 {offsets = [0, 0], sizes = [1, 128], strides = [1, 1]} : vector<9x128xbf16> to vector<1x128xbf16>
    %16 = vector.shape_cast %15 : vector<1x128xbf16> to vector<128xbf16>
    %17 = vector.shape_cast %16 : vector<128xbf16> to vector<1x1x1x128xbf16>
    %18 = vector.broadcast %17 : vector<1x1x1x128xbf16> to vector<1x16x16x128xbf16>
    %19 = arith.mulf %14, %18 : vector<1x16x16x128xbf16>
    %20 = arith.extf %19 : vector<1x16x16x128xbf16> to vector<1x16x16x128xf32>
    %c0_31 = arith.constant 0 : index
    %c0_32 = arith.constant 0 : index
    %c1_33 = arith.constant 1 : index
    %c0_34 = arith.constant 0 : index
    %21 = vector.load %arg18[%c0_31, %c0_32, %c1_33, %c0_34] : memref<1x18x18x128xbf16, #tpu.memory_space<vmem>>, vector<1x16x16x128xbf16>
    %22 = vector.extract_strided_slice %13 {offsets = [1, 0], sizes = [1, 128], strides = [1, 1]} : vector<9x128xbf16> to vector<1x128xbf16>
    %23 = vector.shape_cast %22 : vector<1x128xbf16> to vector<128xbf16>
    %24 = vector.shape_cast %23 : vector<128xbf16> to vector<1x1x1x128xbf16>
    %25 = vector.broadcast %24 : vector<1x1x1x128xbf16> to vector<1x16x16x128xbf16>
    %26 = arith.mulf %21, %25 : vector<1x16x16x128xbf16>
    %27 = arith.extf %26 : vector<1x16x16x128xbf16> to vector<1x16x16x128xf32>
    %28 = arith.addf %20, %27 : vector<1x16x16x128xf32>
    %c0_35 = arith.constant 0 : index
    %c0_36 = arith.constant 0 : index
    %c2 = arith.constant 2 : index
    %c0_37 = arith.constant 0 : index
    %29 = vector.load %arg18[%c0_35, %c0_36, %c2, %c0_37] : memref<1x18x18x128xbf16, #tpu.memory_space<vmem>>, vector<1x16x16x128xbf16>
    %30 = vector.extract_strided_slice %13 {offsets = [2, 0], sizes = [1, 128], strides = [1, 1]} : vector<9x128xbf16> to vector<1x128xbf16>
    %31 = vector.shape_cast %30 : vector<1x128xbf16> to vector<128xbf16>
    %32 = vector.shape_cast %31 : vector<128xbf16> to vector<1x1x1x128xbf16>
    %33 = vector.broadcast %32 : vector<1x1x1x128xbf16> to vector<1x16x16x128xbf16>
    %34 = arith.mulf %29, %33 : vector<1x16x16x128xbf16>
    %35 = arith.extf %34 : vector<1x16x16x128xbf16> to vector<1x16x16x128xf32>
    %36 = arith.addf %28, %35 : vector<1x16x16x128xf32>
    %c0_38 = arith.constant 0 : index
    %c1_39 = arith.constant 1 : index
    %c0_40 = arith.constant 0 : index
    %c0_41 = arith.constant 0 : index
    %37 = vector.load %arg18[%c0_38, %c1_39, %c0_40, %c0_41] : memref<1x18x18x128xbf16, #tpu.memory_space<vmem>>, vector<1x16x16x128xbf16>
    %38 = vector.extract_strided_slice %13 {offsets = [3, 0], sizes = [1, 128], strides = [1, 1]} : vector<9x128xbf16> to vector<1x128xbf16>
    %39 = vector.shape_cast %38 : vector<1x128xbf16> to vector<128xbf16>
    %40 = vector.shape_cast %39 : vector<128xbf16> to vector<1x1x1x128xbf16>
    %41 = vector.broadcast %40 : vector<1x1x1x128xbf16> to vector<1x16x16x128xbf16>
    %42 = arith.mulf %37, %41 : vector<1x16x16x128xbf16>
    %43 = arith.extf %42 : vector<1x16x16x128xbf16> to vector<1x16x16x128xf32>
    %44 = arith.addf %36, %43 : vector<1x16x16x128xf32>
    %c0_42 = arith.constant 0 : index
    %c1_43 = arith.constant 1 : index
    %c1_44 = arith.constant 1 : index
    %c0_45 = arith.constant 0 : index
    %45 = vector.load %arg18[%c0_42, %c1_43, %c1_44, %c0_45] : memref<1x18x18x128xbf16, #tpu.memory_space<vmem>>, vector<1x16x16x128xbf16>
    %46 = vector.extract_strided_slice %13 {offsets = [4, 0], sizes = [1, 128], strides = [1, 1]} : vector<9x128xbf16> to vector<1x128xbf16>
    %47 = vector.shape_cast %46 : vector<1x128xbf16> to vector<128xbf16>
    %48 = vector.shape_cast %47 : vector<128xbf16> to vector<1x1x1x128xbf16>
    %49 = vector.broadcast %48 : vector<1x1x1x128xbf16> to vector<1x16x16x128xbf16>
    %50 = arith.mulf %45, %49 : vector<1x16x16x128xbf16>
    %51 = arith.extf %50 : vector<1x16x16x128xbf16> to vector<1x16x16x128xf32>
    %52 = arith.addf %44, %51 : vector<1x16x16x128xf32>
    %c0_46 = arith.constant 0 : index
    %c1_47 = arith.constant 1 : index
    %c2_48 = arith.constant 2 : index
    %c0_49 = arith.constant 0 : index
    %53 = vector.load %arg18[%c0_46, %c1_47, %c2_48, %c0_49] : memref<1x18x18x128xbf16, #tpu.memory_space<vmem>>, vector<1x16x16x128xbf16>
    %54 = vector.extract_strided_slice %13 {offsets = [5, 0], sizes = [1, 128], strides = [1, 1]} : vector<9x128xbf16> to vector<1x128xbf16>
    %55 = vector.shape_cast %54 : vector<1x128xbf16> to vector<128xbf16>
    %56 = vector.shape_cast %55 : vector<128xbf16> to vector<1x1x1x128xbf16>
    %57 = vector.broadcast %56 : vector<1x1x1x128xbf16> to vector<1x16x16x128xbf16>
    %58 = arith.mulf %53, %57 : vector<1x16x16x128xbf16>
    %59 = arith.extf %58 : vector<1x16x16x128xbf16> to vector<1x16x16x128xf32>
    %60 = arith.addf %52, %59 : vector<1x16x16x128xf32>
    %c0_50 = arith.constant 0 : index
    %c2_51 = arith.constant 2 : index
    %c0_52 = arith.constant 0 : index
    %c0_53 = arith.constant 0 : index
    %61 = vector.load %arg18[%c0_50, %c2_51, %c0_52, %c0_53] : memref<1x18x18x128xbf16, #tpu.memory_space<vmem>>, vector<1x16x16x128xbf16>
    %62 = vector.extract_strided_slice %13 {offsets = [6, 0], sizes = [1, 128], strides = [1, 1]} : vector<9x128xbf16> to vector<1x128xbf16>
    %63 = vector.shape_cast %62 : vector<1x128xbf16> to vector<128xbf16>
    %64 = vector.shape_cast %63 : vector<128xbf16> to vector<1x1x1x128xbf16>
    %65 = vector.broadcast %64 : vector<1x1x1x128xbf16> to vector<1x16x16x128xbf16>
    %66 = arith.mulf %61, %65 : vector<1x16x16x128xbf16>
    %67 = arith.extf %66 : vector<1x16x16x128xbf16> to vector<1x16x16x128xf32>
    %68 = arith.addf %60, %67 : vector<1x16x16x128xf32>
    %c0_54 = arith.constant 0 : index
    %c2_55 = arith.constant 2 : index
    %c1_56 = arith.constant 1 : index
    %c0_57 = arith.constant 0 : index
    %69 = vector.load %arg18[%c0_54, %c2_55, %c1_56, %c0_57] : memref<1x18x18x128xbf16, #tpu.memory_space<vmem>>, vector<1x16x16x128xbf16>
    %70 = vector.extract_strided_slice %13 {offsets = [7, 0], sizes = [1, 128], strides = [1, 1]} : vector<9x128xbf16> to vector<1x128xbf16>
    %71 = vector.shape_cast %70 : vector<1x128xbf16> to vector<128xbf16>
    %72 = vector.shape_cast %71 : vector<128xbf16> to vector<1x1x1x128xbf16>
    %73 = vector.broadcast %72 : vector<1x1x1x128xbf16> to vector<1x16x16x128xbf16>
    %74 = arith.mulf %69, %73 : vector<1x16x16x128xbf16>
    %75 = arith.extf %74 : vector<1x16x16x128xbf16> to vector<1x16x16x128xf32>
    %76 = arith.addf %68, %75 : vector<1x16x16x128xf32>
    %c0_58 = arith.constant 0 : index
    %c2_59 = arith.constant 2 : index
    %c2_60 = arith.constant 2 : index
    %c0_61 = arith.constant 0 : index
    %77 = vector.load %arg18[%c0_58, %c2_59, %c2_60, %c0_61] : memref<1x18x18x128xbf16, #tpu.memory_space<vmem>>, vector<1x16x16x128xbf16>
    %78 = vector.extract_strided_slice %13 {offsets = [8, 0], sizes = [1, 128], strides = [1, 1]} : vector<9x128xbf16> to vector<1x128xbf16>
    %79 = vector.shape_cast %78 : vector<1x128xbf16> to vector<128xbf16>
    %80 = vector.shape_cast %79 : vector<128xbf16> to vector<1x1x1x128xbf16>
    %81 = vector.broadcast %80 : vector<1x1x1x128xbf16> to vector<1x16x16x128xbf16>
    %82 = arith.mulf %77, %81 : vector<1x16x16x128xbf16>
    %83 = arith.extf %82 : vector<1x16x16x128xbf16> to vector<1x16x16x128xf32>
    %84 = arith.addf %76, %83 : vector<1x16x16x128xf32>
    %c0_62 = arith.constant 0 : index
    %c0_63 = arith.constant 0 : index
    %85 = vector.load %arg3[%c0_62, %c0_63] : memref<1x128xf32, #tpu.memory_space<vmem>>, vector<1x128xf32>
    %86 = vector.shape_cast %85 : vector<1x128xf32> to vector<1x1x1x128xf32>
    %87 = vector.broadcast %86 : vector<1x1x1x128xf32> to vector<1x16x16x128xf32>
    %88 = arith.addf %84, %87 : vector<1x16x16x128xf32>
    %cst_64 = arith.constant 0.000000e+00 : f32
    %89 = vector.broadcast %cst_64 : f32 to vector<1x16x16x128xf32>
    %90 = arith.maximumf %88, %89 : vector<1x16x16x128xf32>
    %91 = vector.shape_cast %90 : vector<1x16x16x128xf32> to vector<256x128xf32>
    %92 = arith.truncf %91 : vector<256x128xf32> to vector<256x128xbf16>
    %c0_65 = arith.constant 0 : index
    %c0_66 = arith.constant 0 : index
    %93 = vector.load %arg4[%c0_65, %c0_66] : memref<128x128xbf16, #tpu.memory_space<vmem>>, vector<128x128xbf16>
    %cst_67 = arith.constant dense<0.000000e+00> : vector<256x128xf32>
    %94 = tpu.matmul %92, %93, %cst_67 {dimension_numbers = #tpu.dot_dimension_numbers<[1], [0], [0], [1], [0, 0, 1, 1], [], []>} : vector<256x128xbf16>, vector<128x128xbf16>, vector<256x128xf32> -> vector<256x128xf32>
    %95 = vector.shape_cast %94 : vector<256x128xf32> to vector<1x16x16x128xf32>
    %c0_68 = arith.constant 0 : index
    %c0_69 = arith.constant 0 : index
    %96 = vector.load %arg5[%c0_68, %c0_69] : memref<1x128xf32, #tpu.memory_space<vmem>>, vector<1x128xf32>
    %97 = vector.shape_cast %96 : vector<1x128xf32> to vector<1x1x1x128xf32>
    %98 = vector.broadcast %97 : vector<1x1x1x128xf32> to vector<1x16x16x128xf32>
    %99 = arith.addf %95, %98 : vector<1x16x16x128xf32>
    %cst_70 = arith.constant 0.000000e+00 : f32
    %100 = vector.broadcast %cst_70 : f32 to vector<1x16x16x128xf32>
    %101 = arith.maximumf %99, %100 : vector<1x16x16x128xf32>
    %102 = arith.truncf %101 : vector<1x16x16x128xf32> to vector<1x16x16x128xbf16>
    %c0_71 = arith.constant 0 : index
    %c1_72 = arith.constant 1 : index
    %c1_73 = arith.constant 1 : index
    %c0_74 = arith.constant 0 : index
    %103 = vector.load %arg18[%c0_71, %c1_72, %c1_73, %c0_74] : memref<1x18x18x128xbf16, #tpu.memory_space<vmem>>, vector<1x16x16x128xbf16>
    tpu.vector_store %arg18[%c0_71, %c1_72, %c1_73, %c0_74], %102 {strides = array<i32>} : memref<1x18x18x128xbf16, #tpu.memory_space<vmem>>, vector<1x16x16x128xbf16>,
    %c0_75 = arith.constant 0 : index
    %c0_76 = arith.constant 0 : index
    %104 = vector.load %arg6[%c0_75, %c0_76] : memref<9x128xbf16, #tpu.memory_space<vmem>>, vector<9x128xbf16>
    %c0_77 = arith.constant 0 : index
    %c0_78 = arith.constant 0 : index
    %c0_79 = arith.constant 0 : index
    %c0_80 = arith.constant 0 : index
    %105 = vector.load %arg18[%c0_77, %c0_78, %c0_79, %c0_80] : memref<1x18x18x128xbf16, #tpu.memory_space<vmem>>, vector<1x16x16x128xbf16>
    %106 = vector.extract_strided_slice %104 {offsets = [0, 0], sizes = [1, 128], strides = [1, 1]} : vector<9x128xbf16> to vector<1x128xbf16>
    %107 = vector.shape_cast %106 : vector<1x128xbf16> to vector<128xbf16>
    %108 = vector.shape_cast %107 : vector<128xbf16> to vector<1x1x1x128xbf16>
    %109 = vector.broadcast %108 : vector<1x1x1x128xbf16> to vector<1x16x16x128xbf16>
    %110 = arith.mulf %105, %109 : vector<1x16x16x128xbf16>
    %111 = arith.extf %110 : vector<1x16x16x128xbf16> to vector<1x16x16x128xf32>
    %c0_81 = arith.constant 0 : index
    %c0_82 = arith.constant 0 : index
    %c1_83 = arith.constant 1 : index
    %c0_84 = arith.constant 0 : index
    %112 = vector.load %arg18[%c0_81, %c0_82, %c1_83, %c0_84] : memref<1x18x18x128xbf16, #tpu.memory_space<vmem>>, vector<1x16x16x128xbf16>
    %113 = vector.extract_strided_slice %104 {offsets = [1, 0], sizes = [1, 128], strides = [1, 1]} : vector<9x128xbf16> to vector<1x128xbf16>
    %114 = vector.shape_cast %113 : vector<1x128xbf16> to vector<128xbf16>
    %115 = vector.shape_cast %114 : vector<128xbf16> to vector<1x1x1x128xbf16>
    %116 = vector.broadcast %115 : vector<1x1x1x128xbf16> to vector<1x16x16x128xbf16>
    %117 = arith.mulf %112, %116 : vector<1x16x16x128xbf16>
    %118 = arith.extf %117 : vector<1x16x16x128xbf16> to vector<1x16x16x128xf32>
    %119 = arith.addf %111, %118 : vector<1x16x16x128xf32>
    %c0_85 = arith.constant 0 : index
    %c0_86 = arith.constant 0 : index
    %c2_87 = arith.constant 2 : index
    %c0_88 = arith.constant 0 : index
    %120 = vector.load %arg18[%c0_85, %c0_86, %c2_87, %c0_88] : memref<1x18x18x128xbf16, #tpu.memory_space<vmem>>, vector<1x16x16x128xbf16>
    %121 = vector.extract_strided_slice %104 {offsets = [2, 0], sizes = [1, 128], strides = [1, 1]} : vector<9x128xbf16> to vector<1x128xbf16>
    %122 = vector.shape_cast %121 : vector<1x128xbf16> to vector<128xbf16>
    %123 = vector.shape_cast %122 : vector<128xbf16> to vector<1x1x1x128xbf16>
    %124 = vector.broadcast %123 : vector<1x1x1x128xbf16> to vector<1x16x16x128xbf16>
    %125 = arith.mulf %120, %124 : vector<1x16x16x128xbf16>
    %126 = arith.extf %125 : vector<1x16x16x128xbf16> to vector<1x16x16x128xf32>
    %127 = arith.addf %119, %126 : vector<1x16x16x128xf32>
    %c0_89 = arith.constant 0 : index
    %c1_90 = arith.constant 1 : index
    %c0_91 = arith.constant 0 : index
    %c0_92 = arith.constant 0 : index
    %128 = vector.load %arg18[%c0_89, %c1_90, %c0_91, %c0_92] : memref<1x18x18x128xbf16, #tpu.memory_space<vmem>>, vector<1x16x16x128xbf16>
    %129 = vector.extract_strided_slice %104 {offsets = [3, 0], sizes = [1, 128], strides = [1, 1]} : vector<9x128xbf16> to vector<1x128xbf16>
    %130 = vector.shape_cast %129 : vector<1x128xbf16> to vector<128xbf16>
    %131 = vector.shape_cast %130 : vector<128xbf16> to vector<1x1x1x128xbf16>
    %132 = vector.broadcast %131 : vector<1x1x1x128xbf16> to vector<1x16x16x128xbf16>
    %133 = arith.mulf %128, %132 : vector<1x16x16x128xbf16>
    %134 = arith.extf %133 : vector<1x16x16x128xbf16> to vector<1x16x16x128xf32>
    %135 = arith.addf %127, %134 : vector<1x16x16x128xf32>
    %c0_93 = arith.constant 0 : index
    %c1_94 = arith.constant 1 : index
    %c1_95 = arith.constant 1 : index
    %c0_96 = arith.constant 0 : index
    %136 = vector.load %arg18[%c0_93, %c1_94, %c1_95, %c0_96] : memref<1x18x18x128xbf16, #tpu.memory_space<vmem>>, vector<1x16x16x128xbf16>
    %137 = vector.extract_strided_slice %104 {offsets = [4, 0], sizes = [1, 128], strides = [1, 1]} : vector<9x128xbf16> to vector<1x128xbf16>
    %138 = vector.shape_cast %137 : vector<1x128xbf16> to vector<128xbf16>
    %139 = vector.shape_cast %138 : vector<128xbf16> to vector<1x1x1x128xbf16>
    %140 = vector.broadcast %139 : vector<1x1x1x128xbf16> to vector<1x16x16x128xbf16>
    %141 = arith.mulf %136, %140 : vector<1x16x16x128xbf16>
    %142 = arith.extf %141 : vector<1x16x16x128xbf16> to vector<1x16x16x128xf32>
    %143 = arith.addf %135, %142 : vector<1x16x16x128xf32>
    %c0_97 = arith.constant 0 : index
    %c1_98 = arith.constant 1 : index
    %c2_99 = arith.constant 2 : index
    %c0_100 = arith.constant 0 : index
    %144 = vector.load %arg18[%c0_97, %c1_98, %c2_99, %c0_100] : memref<1x18x18x128xbf16, #tpu.memory_space<vmem>>, vector<1x16x16x128xbf16>
    %145 = vector.extract_strided_slice %104 {offsets = [5, 0], sizes = [1, 128], strides = [1, 1]} : vector<9x128xbf16> to vector<1x128xbf16>
    %146 = vector.shape_cast %145 : vector<1x128xbf16> to vector<128xbf16>
    %147 = vector.shape_cast %146 : vector<128xbf16> to vector<1x1x1x128xbf16>
    %148 = vector.broadcast %147 : vector<1x1x1x128xbf16> to vector<1x16x16x128xbf16>
    %149 = arith.mulf %144, %148 : vector<1x16x16x128xbf16>
    %150 = arith.extf %149 : vector<1x16x16x128xbf16> to vector<1x16x16x128xf32>
    %151 = arith.addf %143, %150 : vector<1x16x16x128xf32>
    %c0_101 = arith.constant 0 : index
    %c2_102 = arith.constant 2 : index
    %c0_103 = arith.constant 0 : index
    %c0_104 = arith.constant 0 : index
    %152 = vector.load %arg18[%c0_101, %c2_102, %c0_103, %c0_104] : memref<1x18x18x128xbf16, #tpu.memory_space<vmem>>, vector<1x16x16x128xbf16>
    %153 = vector.extract_strided_slice %104 {offsets = [6, 0], sizes = [1, 128], strides = [1, 1]} : vector<9x128xbf16> to vector<1x128xbf16>
    %154 = vector.shape_cast %153 : vector<1x128xbf16> to vector<128xbf16>
    %155 = vector.shape_cast %154 : vector<128xbf16> to vector<1x1x1x128xbf16>
    %156 = vector.broadcast %155 : vector<1x1x1x128xbf16> to vector<1x16x16x128xbf16>
    %157 = arith.mulf %152, %156 : vector<1x16x16x128xbf16>
    %158 = arith.extf %157 : vector<1x16x16x128xbf16> to vector<1x16x16x128xf32>
    %159 = arith.addf %151, %158 : vector<1x16x16x128xf32>
    %c0_105 = arith.constant 0 : index
    %c2_106 = arith.constant 2 : index
    %c1_107 = arith.constant 1 : index
    %c0_108 = arith.constant 0 : index
    %160 = vector.load %arg18[%c0_105, %c2_106, %c1_107, %c0_108] : memref<1x18x18x128xbf16, #tpu.memory_space<vmem>>, vector<1x16x16x128xbf16>
    %161 = vector.extract_strided_slice %104 {offsets = [7, 0], sizes = [1, 128], strides = [1, 1]} : vector<9x128xbf16> to vector<1x128xbf16>
    %162 = vector.shape_cast %161 : vector<1x128xbf16> to vector<128xbf16>
    %163 = vector.shape_cast %162 : vector<128xbf16> to vector<1x1x1x128xbf16>
    %164 = vector.broadcast %163 : vector<1x1x1x128xbf16> to vector<1x16x16x128xbf16>
    %165 = arith.mulf %160, %164 : vector<1x16x16x128xbf16>
    %166 = arith.extf %165 : vector<1x16x16x128xbf16> to vector<1x16x16x128xf32>
    %167 = arith.addf %159, %166 : vector<1x16x16x128xf32>
    %c0_109 = arith.constant 0 : index
    %c2_110 = arith.constant 2 : index
    %c2_111 = arith.constant 2 : index
    %c0_112 = arith.constant 0 : index
    %168 = vector.load %arg18[%c0_109, %c2_110, %c2_111, %c0_112] : memref<1x18x18x128xbf16, #tpu.memory_space<vmem>>, vector<1x16x16x128xbf16>
    %169 = vector.extract_strided_slice %104 {offsets = [8, 0], sizes = [1, 128], strides = [1, 1]} : vector<9x128xbf16> to vector<1x128xbf16>
    %170 = vector.shape_cast %169 : vector<1x128xbf16> to vector<128xbf16>
    %171 = vector.shape_cast %170 : vector<128xbf16> to vector<1x1x1x128xbf16>
    %172 = vector.broadcast %171 : vector<1x1x1x128xbf16> to vector<1x16x16x128xbf16>
    %173 = arith.mulf %168, %172 : vector<1x16x16x128xbf16>
    %174 = arith.extf %173 : vector<1x16x16x128xbf16> to vector<1x16x16x128xf32>
    %175 = arith.addf %167, %174 : vector<1x16x16x128xf32>
    %c0_113 = arith.constant 0 : index
    %c0_114 = arith.constant 0 : index
    %176 = vector.load %arg7[%c0_113, %c0_114] : memref<1x128xf32, #tpu.memory_space<vmem>>, vector<1x128xf32>
    %177 = vector.shape_cast %176 : vector<1x128xf32> to vector<1x1x1x128xf32>
    %178 = vector.broadcast %177 : vector<1x1x1x128xf32> to vector<1x16x16x128xf32>
    %179 = arith.addf %175, %178 : vector<1x16x16x128xf32>
    %cst_115 = arith.constant 0.000000e+00 : f32
    %180 = vector.broadcast %cst_115 : f32 to vector<1x16x16x128xf32>
    %181 = arith.maximumf %179, %180 : vector<1x16x16x128xf32>
    %182 = vector.shape_cast %181 : vector<1x16x16x128xf32> to vector<256x128xf32>
    %183 = arith.truncf %182 : vector<256x128xf32> to vector<256x128xbf16>
    %c0_116 = arith.constant 0 : index
    %c0_117 = arith.constant 0 : index
    %184 = vector.load %arg8[%c0_116, %c0_117] : memref<128x128xbf16, #tpu.memory_space<vmem>>, vector<128x128xbf16>
    %cst_118 = arith.constant dense<0.000000e+00> : vector<256x128xf32>
    %185 = tpu.matmul %183, %184, %cst_118 {dimension_numbers = #tpu.dot_dimension_numbers<[1], [0], [0], [1], [0, 0, 1, 1], [], []>} : vector<256x128xbf16>, vector<128x128xbf16>, vector<256x128xf32> -> vector<256x128xf32>
    %186 = vector.shape_cast %185 : vector<256x128xf32> to vector<1x16x16x128xf32>
    %c0_119 = arith.constant 0 : index
    %c0_120 = arith.constant 0 : index
    %187 = vector.load %arg9[%c0_119, %c0_120] : memref<1x128xf32, #tpu.memory_space<vmem>>, vector<1x128xf32>
    %188 = vector.shape_cast %187 : vector<1x128xf32> to vector<1x1x1x128xf32>
    %189 = vector.broadcast %188 : vector<1x1x1x128xf32> to vector<1x16x16x128xf32>
    %190 = arith.addf %186, %189 : vector<1x16x16x128xf32>
    %191 = arith.truncf %190 : vector<1x16x16x128xf32> to vector<1x16x16x128xbf16>
    %c0_121 = arith.constant 0 : index
    %c0_122 = arith.constant 0 : index
    %c0_123 = arith.constant 0 : index
    %c0_124 = arith.constant 0 : index
    %192 = vector.load %arg17[%c0_121, %c0_122, %c0_123, %c0_124] : memref<1x16x16x128xbf16, #tpu.memory_space<vmem>>, vector<1x16x16x128xbf16>
    tpu.vector_store %arg17[%c0_121, %c0_122, %c0_123, %c0_124], %191 {strides = array<i32>} : memref<1x16x16x128xbf16, #tpu.memory_space<vmem>>, vector<1x16x16x128xbf16>,
    %cst_125 = arith.constant 0.000000e+00 : f32
    %193 = vector.broadcast %cst_125 : f32 to vector<1x16x16x128xf32>
    %194 = arith.maximumf %190, %193 : vector<1x16x16x128xf32>
    %195 = arith.truncf %194 : vector<1x16x16x128xf32> to vector<1x16x16x128xbf16>
    %c0_126 = arith.constant 0 : index
    %c1_127 = arith.constant 1 : index
    %c1_128 = arith.constant 1 : index
    %c0_129 = arith.constant 0 : index
    %196 = vector.load %arg18[%c0_126, %c1_127, %c1_128, %c0_129] : memref<1x18x18x128xbf16, #tpu.memory_space<vmem>>, vector<1x16x16x128xbf16>
    tpu.vector_store %arg18[%c0_126, %c1_127, %c1_128, %c0_129], %195 {strides = array<i32>} : memref<1x18x18x128xbf16, #tpu.memory_space<vmem>>, vector<1x16x16x128xbf16>,
    %c0_130 = arith.constant 0 : index
    %c0_131 = arith.constant 0 : index
    %197 = vector.load %arg10[%c0_130, %c0_131] : memref<9x128xbf16, #tpu.memory_space<vmem>>, vector<9x128xbf16>
    %c0_132 = arith.constant 0 : index
    %c0_133 = arith.constant 0 : index
    %c0_134 = arith.constant 0 : index
    %c0_135 = arith.constant 0 : index
    %198 = vector.load %arg18[%c0_132, %c0_133, %c0_134, %c0_135] : memref<1x18x18x128xbf16, #tpu.memory_space<vmem>>, vector<1x16x16x128xbf16>
    %199 = vector.extract_strided_slice %197 {offsets = [0, 0], sizes = [1, 128], strides = [1, 1]} : vector<9x128xbf16> to vector<1x128xbf16>
    %200 = vector.shape_cast %199 : vector<1x128xbf16> to vector<128xbf16>
    %201 = vector.shape_cast %200 : vector<128xbf16> to vector<1x1x1x128xbf16>
    %202 = vector.broadcast %201 : vector<1x1x1x128xbf16> to vector<1x16x16x128xbf16>
    %203 = arith.mulf %198, %202 : vector<1x16x16x128xbf16>
    %204 = arith.extf %203 : vector<1x16x16x128xbf16> to vector<1x16x16x128xf32>
    %c0_136 = arith.constant 0 : index
    %c0_137 = arith.constant 0 : index
    %c1_138 = arith.constant 1 : index
    %c0_139 = arith.constant 0 : index
    %205 = vector.load %arg18[%c0_136, %c0_137, %c1_138, %c0_139] : memref<1x18x18x128xbf16, #tpu.memory_space<vmem>>, vector<1x16x16x128xbf16>
    %206 = vector.extract_strided_slice %197 {offsets = [1, 0], sizes = [1, 128], strides = [1, 1]} : vector<9x128xbf16> to vector<1x128xbf16>
    %207 = vector.shape_cast %206 : vector<1x128xbf16> to vector<128xbf16>
    %208 = vector.shape_cast %207 : vector<128xbf16> to vector<1x1x1x128xbf16>
    %209 = vector.broadcast %208 : vector<1x1x1x128xbf16> to vector<1x16x16x128xbf16>
    %210 = arith.mulf %205, %209 : vector<1x16x16x128xbf16>
    %211 = arith.extf %210 : vector<1x16x16x128xbf16> to vector<1x16x16x128xf32>
    %212 = arith.addf %204, %211 : vector<1x16x16x128xf32>
    %c0_140 = arith.constant 0 : index
    %c0_141 = arith.constant 0 : index
    %c2_142 = arith.constant 2 : index
    %c0_143 = arith.constant 0 : index
    %213 = vector.load %arg18[%c0_140, %c0_141, %c2_142, %c0_143] : memref<1x18x18x128xbf16, #tpu.memory_space<vmem>>, vector<1x16x16x128xbf16>
    %214 = vector.extract_strided_slice %197 {offsets = [2, 0], sizes = [1, 128], strides = [1, 1]} : vector<9x128xbf16> to vector<1x128xbf16>
    %215 = vector.shape_cast %214 : vector<1x128xbf16> to vector<128xbf16>
    %216 = vector.shape_cast %215 : vector<128xbf16> to vector<1x1x1x128xbf16>
    %217 = vector.broadcast %216 : vector<1x1x1x128xbf16> to vector<1x16x16x128xbf16>
    %218 = arith.mulf %213, %217 : vector<1x16x16x128xbf16>
    %219 = arith.extf %218 : vector<1x16x16x128xbf16> to vector<1x16x16x128xf32>
    %220 = arith.addf %212, %219 : vector<1x16x16x128xf32>
    %c0_144 = arith.constant 0 : index
    %c1_145 = arith.constant 1 : index
    %c0_146 = arith.constant 0 : index
    %c0_147 = arith.constant 0 : index
    %221 = vector.load %arg18[%c0_144, %c1_145, %c0_146, %c0_147] : memref<1x18x18x128xbf16, #tpu.memory_space<vmem>>, vector<1x16x16x128xbf16>
    %222 = vector.extract_strided_slice %197 {offsets = [3, 0], sizes = [1, 128], strides = [1, 1]} : vector<9x128xbf16> to vector<1x128xbf16>
    %223 = vector.shape_cast %222 : vector<1x128xbf16> to vector<128xbf16>
    %224 = vector.shape_cast %223 : vector<128xbf16> to vector<1x1x1x128xbf16>
    %225 = vector.broadcast %224 : vector<1x1x1x128xbf16> to vector<1x16x16x128xbf16>
    %226 = arith.mulf %221, %225 : vector<1x16x16x128xbf16>
    %227 = arith.extf %226 : vector<1x16x16x128xbf16> to vector<1x16x16x128xf32>
    %228 = arith.addf %220, %227 : vector<1x16x16x128xf32>
    %c0_148 = arith.constant 0 : index
    %c1_149 = arith.constant 1 : index
    %c1_150 = arith.constant 1 : index
    %c0_151 = arith.constant 0 : index
    %229 = vector.load %arg18[%c0_148, %c1_149, %c1_150, %c0_151] : memref<1x18x18x128xbf16, #tpu.memory_space<vmem>>, vector<1x16x16x128xbf16>
    %230 = vector.extract_strided_slice %197 {offsets = [4, 0], sizes = [1, 128], strides = [1, 1]} : vector<9x128xbf16> to vector<1x128xbf16>
    %231 = vector.shape_cast %230 : vector<1x128xbf16> to vector<128xbf16>
    %232 = vector.shape_cast %231 : vector<128xbf16> to vector<1x1x1x128xbf16>
    %233 = vector.broadcast %232 : vector<1x1x1x128xbf16> to vector<1x16x16x128xbf16>
    %234 = arith.mulf %229, %233 : vector<1x16x16x128xbf16>
    %235 = arith.extf %234 : vector<1x16x16x128xbf16> to vector<1x16x16x128xf32>
    %236 = arith.addf %228, %235 : vector<1x16x16x128xf32>
    %c0_152 = arith.constant 0 : index
    %c1_153 = arith.constant 1 : index
    %c2_154 = arith.constant 2 : index
    %c0_155 = arith.constant 0 : index
    %237 = vector.load %arg18[%c0_152, %c1_153, %c2_154, %c0_155] : memref<1x18x18x128xbf16, #tpu.memory_space<vmem>>, vector<1x16x16x128xbf16>
    %238 = vector.extract_strided_slice %197 {offsets = [5, 0], sizes = [1, 128], strides = [1, 1]} : vector<9x128xbf16> to vector<1x128xbf16>
    %239 = vector.shape_cast %238 : vector<1x128xbf16> to vector<128xbf16>
    %240 = vector.shape_cast %239 : vector<128xbf16> to vector<1x1x1x128xbf16>
    %241 = vector.broadcast %240 : vector<1x1x1x128xbf16> to vector<1x16x16x128xbf16>
    %242 = arith.mulf %237, %241 : vector<1x16x16x128xbf16>
    %243 = arith.extf %242 : vector<1x16x16x128xbf16> to vector<1x16x16x128xf32>
    %244 = arith.addf %236, %243 : vector<1x16x16x128xf32>
    %c0_156 = arith.constant 0 : index
    %c2_157 = arith.constant 2 : index
    %c0_158 = arith.constant 0 : index
    %c0_159 = arith.constant 0 : index
    %245 = vector.load %arg18[%c0_156, %c2_157, %c0_158, %c0_159] : memref<1x18x18x128xbf16, #tpu.memory_space<vmem>>, vector<1x16x16x128xbf16>
    %246 = vector.extract_strided_slice %197 {offsets = [6, 0], sizes = [1, 128], strides = [1, 1]} : vector<9x128xbf16> to vector<1x128xbf16>
    %247 = vector.shape_cast %246 : vector<1x128xbf16> to vector<128xbf16>
    %248 = vector.shape_cast %247 : vector<128xbf16> to vector<1x1x1x128xbf16>
    %249 = vector.broadcast %248 : vector<1x1x1x128xbf16> to vector<1x16x16x128xbf16>
    %250 = arith.mulf %245, %249 : vector<1x16x16x128xbf16>
    %251 = arith.extf %250 : vector<1x16x16x128xbf16> to vector<1x16x16x128xf32>
    %252 = arith.addf %244, %251 : vector<1x16x16x128xf32>
    %c0_160 = arith.constant 0 : index
    %c2_161 = arith.constant 2 : index
    %c1_162 = arith.constant 1 : index
    %c0_163 = arith.constant 0 : index
    %253 = vector.load %arg18[%c0_160, %c2_161, %c1_162, %c0_163] : memref<1x18x18x128xbf16, #tpu.memory_space<vmem>>, vector<1x16x16x128xbf16>
    %254 = vector.extract_strided_slice %197 {offsets = [7, 0], sizes = [1, 128], strides = [1, 1]} : vector<9x128xbf16> to vector<1x128xbf16>
    %255 = vector.shape_cast %254 : vector<1x128xbf16> to vector<128xbf16>
    %256 = vector.shape_cast %255 : vector<128xbf16> to vector<1x1x1x128xbf16>
    %257 = vector.broadcast %256 : vector<1x1x1x128xbf16> to vector<1x16x16x128xbf16>
    %258 = arith.mulf %253, %257 : vector<1x16x16x128xbf16>
    %259 = arith.extf %258 : vector<1x16x16x128xbf16> to vector<1x16x16x128xf32>
    %260 = arith.addf %252, %259 : vector<1x16x16x128xf32>
    %c0_164 = arith.constant 0 : index
    %c2_165 = arith.constant 2 : index
    %c2_166 = arith.constant 2 : index
    %c0_167 = arith.constant 0 : index
    %261 = vector.load %arg18[%c0_164, %c2_165, %c2_166, %c0_167] : memref<1x18x18x128xbf16, #tpu.memory_space<vmem>>, vector<1x16x16x128xbf16>
    %262 = vector.extract_strided_slice %197 {offsets = [8, 0], sizes = [1, 128], strides = [1, 1]} : vector<9x128xbf16> to vector<1x128xbf16>
    %263 = vector.shape_cast %262 : vector<1x128xbf16> to vector<128xbf16>
    %264 = vector.shape_cast %263 : vector<128xbf16> to vector<1x1x1x128xbf16>
    %265 = vector.broadcast %264 : vector<1x1x1x128xbf16> to vector<1x16x16x128xbf16>
    %266 = arith.mulf %261, %265 : vector<1x16x16x128xbf16>
    %267 = arith.extf %266 : vector<1x16x16x128xbf16> to vector<1x16x16x128xf32>
    %268 = arith.addf %260, %267 : vector<1x16x16x128xf32>
    %c0_168 = arith.constant 0 : index
    %c0_169 = arith.constant 0 : index
    %269 = vector.load %arg11[%c0_168, %c0_169] : memref<1x128xf32, #tpu.memory_space<vmem>>, vector<1x128xf32>
    %270 = vector.shape_cast %269 : vector<1x128xf32> to vector<1x1x1x128xf32>
    %271 = vector.broadcast %270 : vector<1x1x1x128xf32> to vector<1x16x16x128xf32>
    %272 = arith.addf %268, %271 : vector<1x16x16x128xf32>
    %cst_170 = arith.constant 0.000000e+00 : f32
    %273 = vector.broadcast %cst_170 : f32 to vector<1x16x16x128xf32>
    %274 = arith.maximumf %272, %273 : vector<1x16x16x128xf32>
    %275 = vector.shape_cast %274 : vector<1x16x16x128xf32> to vector<256x128xf32>
    %276 = arith.truncf %275 : vector<256x128xf32> to vector<256x128xbf16>
    %c0_171 = arith.constant 0 : index
    %c0_172 = arith.constant 0 : index
    %277 = vector.load %arg12[%c0_171, %c0_172] : memref<128x128xbf16, #tpu.memory_space<vmem>>, vector<128x128xbf16>
    %cst_173 = arith.constant dense<0.000000e+00> : vector<256x128xf32>
    %278 = tpu.matmul %276, %277, %cst_173 {dimension_numbers = #tpu.dot_dimension_numbers<[1], [0], [0], [1], [0, 0, 1, 1], [], []>} : vector<256x128xbf16>, vector<128x128xbf16>, vector<256x128xf32> -> vector<256x128xf32>
    %279 = vector.shape_cast %278 : vector<256x128xf32> to vector<1x16x16x128xf32>
    %c0_174 = arith.constant 0 : index
    %c0_175 = arith.constant 0 : index
    %280 = vector.load %arg13[%c0_174, %c0_175] : memref<1x128xf32, #tpu.memory_space<vmem>>, vector<1x128xf32>
    %281 = vector.shape_cast %280 : vector<1x128xf32> to vector<1x1x1x128xf32>
    %282 = vector.broadcast %281 : vector<1x1x1x128xf32> to vector<1x16x16x128xf32>
    %283 = arith.addf %279, %282 : vector<1x16x16x128xf32>
    %c0_176 = arith.constant 0 : index
    %c0_177 = arith.constant 0 : index
    %c0_178 = arith.constant 0 : index
    %c0_179 = arith.constant 0 : index
    %284 = vector.load %arg1[%c0_176, %c0_177, %c0_178, %c0_179] : memref<1x16x16x128xf32, #tpu.memory_space<vmem>>, vector<1x16x16x128xf32>
    %285 = vector.shape_cast %284 : vector<1x16x16x128xf32> to vector<256x128xf32>
    %286 = arith.truncf %285 : vector<256x128xf32> to vector<256x128xbf16>
    %c0_180 = arith.constant 0 : index
    %c0_181 = arith.constant 0 : index
    %287 = vector.load %arg14[%c0_180, %c0_181] : memref<128x128xbf16, #tpu.memory_space<vmem>>, vector<128x128xbf16>
    %cst_182 = arith.constant dense<0.000000e+00> : vector<256x128xf32>
    %288 = tpu.matmul %286, %287, %cst_182 {dimension_numbers = #tpu.dot_dimension_numbers<[1], [0], [0], [1], [0, 0, 1, 1], [], []>} : vector<256x128xbf16>, vector<128x128xbf16>, vector<256x128xf32> -> vector<256x128xf32>
    %289 = vector.shape_cast %288 : vector<256x128xf32> to vector<1x16x16x128xf32>
    %290 = arith.addf %283, %289 : vector<1x16x16x128xf32>
    %c0_183 = arith.constant 0 : index
    %c0_184 = arith.constant 0 : index
    %291 = vector.load %arg15[%c0_183, %c0_184] : memref<1x128xf32, #tpu.memory_space<vmem>>, vector<1x128xf32>
    %292 = vector.shape_cast %291 : vector<1x128xf32> to vector<1x1x1x128xf32>
    %293 = vector.broadcast %292 : vector<1x1x1x128xf32> to vector<1x16x16x128xf32>
    %294 = arith.addf %290, %293 : vector<1x16x16x128xf32>
    %c0_185 = arith.constant 0 : index
    %c0_186 = arith.constant 0 : index
    %c0_187 = arith.constant 0 : index
    %c0_188 = arith.constant 0 : index
    %295 = vector.load %arg16[%c0_185, %c0_186, %c0_187, %c0_188] : memref<1x16x16x128xf32, #tpu.memory_space<vmem>>, vector<1x16x16x128xf32>
    tpu.vector_store %arg16[%c0_185, %c0_186, %c0_187, %c0_188], %294 {strides = array<i32>} : memref<1x16x16x128xf32, #tpu.memory_space<vmem>>, vector<1x16x16x128xf32>,
    return
  }
  func.func @transform_0(%arg0: i32) -> (i32, i32, i32, i32) {
    %c0_i32 = arith.constant 0 : i32
    %c0_i32_0 = arith.constant 0 : i32
    %c0_i32_1 = arith.constant 0 : i32
    %c0_i32_2 = arith.constant 0 : i32
    return %arg0, %c0_i32, %c0_i32_0, %c0_i32_1 : i32, i32, i32, i32
  }
  func.func @transform_1(%arg0: i32) -> (i32, i32) {
    %c0_i32 = arith.constant 0 : i32
    %c0_i32_0 = arith.constant 0 : i32
    %c0_i32_1 = arith.constant 0 : i32
    return %c0_i32, %c0_i32_0 : i32, i32
  }
  func.func @transform_2(%arg0: i32) -> (i32, i32) {
    %c0_i32 = arith.constant 0 : i32
    %c0_i32_0 = arith.constant 0 : i32
    %c0_i32_1 = arith.constant 0 : i32
    return %c0_i32, %c0_i32_0 : i32, i32
  }
  func.func @transform_3(%arg0: i32) -> (i32, i32) {
    %c0_i32 = arith.constant 0 : i32
    %c0_i32_0 = arith.constant 0 : i32
    %c0_i32_1 = arith.constant 0 : i32
    return %c0_i32, %c0_i32_0 : i32, i32
  }
  func.func @transform_4(%arg0: i32) -> (i32, i32) {
    %c0_i32 = arith.constant 0 : i32
    %c0_i32_0 = arith.constant 0 : i32
    %c0_i32_1 = arith.constant 0 : i32
    return %c0_i32, %c0_i32_0 : i32, i32
  }
  func.func @transform_5(%arg0: i32) -> (i32, i32) {
    %c0_i32 = arith.constant 0 : i32
    %c0_i32_0 = arith.constant 0 : i32
    %c0_i32_1 = arith.constant 0 : i32
    return %c0_i32, %c0_i32_0 : i32, i32
  }
  func.func @transform_6(%arg0: i32) -> (i32, i32) {
    %c0_i32 = arith.constant 0 : i32
    %c0_i32_0 = arith.constant 0 : i32
    %c0_i32_1 = arith.constant 0 : i32
    return %c0_i32, %c0_i32_0 : i32, i32
  }
  func.func @transform_7(%arg0: i32) -> (i32, i32) {
    %c0_i32 = arith.constant 0 : i32
    %c0_i32_0 = arith.constant 0 : i32
    %c0_i32_1 = arith.constant 0 : i32
    return %c0_i32, %c0_i32_0 : i32, i32
  }
  func.func @transform_8(%arg0: i32) -> (i32, i32) {
    %c0_i32 = arith.constant 0 : i32
    %c0_i32_0 = arith.constant 0 : i32
    %c0_i32_1 = arith.constant 0 : i32
    return %c0_i32, %c0_i32_0 : i32, i32
  }
  func.func @transform_9(%arg0: i32) -> (i32, i32) {
    %c0_i32 = arith.constant 0 : i32
    %c0_i32_0 = arith.constant 0 : i32
    %c0_i32_1 = arith.constant 0 : i32
    return %c0_i32, %c0_i32_0 : i32, i32
  }
  func.func @transform_10(%arg0: i32) -> (i32, i32) {
    %c0_i32 = arith.constant 0 : i32
    %c0_i32_0 = arith.constant 0 : i32
    %c0_i32_1 = arith.constant 0 : i32
    return %c0_i32, %c0_i32_0 : i32, i32
  }
  func.func @transform_11(%arg0: i32) -> (i32, i32) {
    %c0_i32 = arith.constant 0 : i32
    %c0_i32_0 = arith.constant 0 : i32
    %c0_i32_1 = arith.constant 0 : i32
    return %c0_i32, %c0_i32_0 : i32, i32
  }
  func.func @transform_12(%arg0: i32) -> (i32, i32) {
    %c0_i32 = arith.constant 0 : i32
    %c0_i32_0 = arith.constant 0 : i32
    %c0_i32_1 = arith.constant 0 : i32
    return %c0_i32, %c0_i32_0 : i32, i32
  }
  func.func @transform_13(%arg0: i32) -> (i32, i32) {
    %c0_i32 = arith.constant 0 : i32
    %c0_i32_0 = arith.constant 0 : i32
    %c0_i32_1 = arith.constant 0 : i32
    return %c0_i32, %c0_i32_0 : i32, i32
  }
  func.func @transform_14(%arg0: i32) -> (i32, i32) {
    %c0_i32 = arith.constant 0 : i32
    %c0_i32_0 = arith.constant 0 : i32
    %c0_i32_1 = arith.constant 0 : i32
    return %c0_i32, %c0_i32_0 : i32, i32
  }
  func.func @transform_15(%arg0: i32) -> (i32, i32, i32, i32) {
    %c0_i32 = arith.constant 0 : i32
    %c0_i32_0 = arith.constant 0 : i32
    %c0_i32_1 = arith.constant 0 : i32
    %c0_i32_2 = arith.constant 0 : i32
    return %arg0, %c0_i32, %c0_i32_0, %c0_i32_1 : i32, i32, i32, i32
  }
  func.func @transform_16(%arg0: i32) -> (i32, i32, i32, i32) {
    %c0_i32 = arith.constant 0 : i32
    %c0_i32_0 = arith.constant 0 : i32
    %c0_i32_1 = arith.constant 0 : i32
    %c0_i32_2 = arith.constant 0 : i32
    return %arg0, %c0_i32, %c0_i32_0, %c0_i32_1 : i32, i32, i32, i32
  }
}

</mosaic_0001>

<llo_original>
// kernel: tpu_custom_call.1
$region0: #{tpu_custom_call.1}
  #allocation0 [shape = 'u32[]', space=smem, size = 0x4, offset = 0x4, fixed_abs, tag = 'smem constant byte address 0x4 - core index']
  #allocation1 [shape = 'u32[144,128]{1,0:T(1,128)}', space=vmem, size = 0x12000, scoped, tag = 'internal scratch']
  #allocation2 [shape = 'bf16[1,18,18,128]{3,2,1,0:T(8,128)(2,1)}', space=vmem, size = 0x1b000, scoped, tag = 'scratch operand']
  %s0 = inlined_call_operand.hbm [shape: f32[2,16,16,128], index: 0, kind: input, shape index: {}]
  %s1 = inlined_call_operand.hbm [shape: bf16[9,128], index: 1, kind: input, shape index: {}]
  %s2 = inlined_call_operand.hbm [shape: f32[1,128], index: 2, kind: input, shape index: {}]
  %s3 = inlined_call_operand.hbm [shape: bf16[128,128], index: 3, kind: input, shape index: {}]
  %s4 = inlined_call_operand.hbm [shape: f32[1,128], index: 4, kind: input, shape index: {}]
  %s5 = inlined_call_operand.vmem [shape: bf16[9,128], index: 5, kind: input, shape index: {}]
  %s6 = inlined_call_operand.hbm [shape: f32[1,128], index: 6, kind: input, shape index: {}]
  %s7 = inlined_call_operand.hbm [shape: bf16[128,128], index: 7, kind: input, shape index: {}]
  %s8 = inlined_call_operand.hbm [shape: f32[1,128], index: 8, kind: input, shape index: {}]
  %s9 = inlined_call_operand.vmem [shape: bf16[9,128], index: 9, kind: input, shape index: {}]
  %s10 = inlined_call_operand.vmem [shape: f32[1,128], index: 10, kind: input, shape index: {}]
  %s11 = inlined_call_operand.hbm [shape: bf16[128,128], index: 11, kind: input, shape index: {}]
  %s12 = inlined_call_operand.vmem [shape: f32[1,128], index: 12, kind: input, shape index: {}]
  %s13 = inlined_call_operand.hbm [shape: bf16[128,128], index: 13, kind: input, shape index: {}]
  %s14 = inlined_call_operand.vmem [shape: f32[1,128], index: 14, kind: input, shape index: {}]
  %s15 = inlined_call_operand.hbm [shape: f32[2,16,16,128], index: 15, kind: output, shape index: {0}]
  %s16 = inlined_call_operand.hbm [shape: bf16[2,16,16,128], index: 16, kind: output, shape index: {1}]
  %17 = xla_tuple %s15, %s16
  %s18 = sld [smem:[#allocation0]]
  $region141: #{tpu_custom_call.1} parent=0
    _
  %s20 = ssub.s32 1, %s18
  %s21 = scalar_select 0, %s20, %s18
  $region1: #{tpu_custom_call.1} parent=0
    #allocation3 [shape = 'u8[262144]{0}', space=vmem, size = 0x40000, scoped, tag = 'input window, operand 0']
    #allocation4 [shape = 's32[2]{0}', space=sflag, size = 0x8, scoped, tag = 'scoped memory for tpu_custom_call.1']
    #allocation5 [shape = 's32[2]{0}', space=sflag, size = 0x8, scoped, tag = 'scoped memory for tpu_custom_call.1']
    #allocation6 [shape = 'u8[4096]{0}', space=vmem, size = 0x1000, scoped, tag = 'input window, operand 1, single buffered']
    #allocation7 [shape = 's32[1]{0}', space=sflag, size = 0x4, scoped, tag = 'scoped memory for tpu_custom_call.1']
    #allocation8 [shape = 'u8[512]{0}', space=vmem, size = 0x400, scoped, tag = 'input window, operand 2, single buffered']
    #allocation9 [shape = 'u8[32768]{0}', space=vmem, size = 0x8000, scoped, tag = 'input window, operand 3, single buffered']
    #allocation10 [shape = 's32[1]{0}', space=sflag, size = 0x4, scoped, tag = 'scoped memory for tpu_custom_call.1']
    #allocation11 [shape = 'u8[512]{0}', space=vmem, size = 0x400, scoped, tag = 'input window, operand 4, single buffered']
    #allocation12 [shape = 'u8[512]{0}', space=vmem, size = 0x400, scoped, tag = 'input window, operand 6, single buffered']
    #allocation13 [shape = 's32[1]{0}', space=sflag, size = 0x4, scoped, tag = 'scoped memory for tpu_custom_call.1']
    #allocation14 [shape = 'u8[32768]{0}', space=vmem, size = 0x8000, scoped, tag = 'input window, operand 7, single buffered']
    #allocation15 [shape = 'u8[512]{0}', space=vmem, size = 0x400, scoped, tag = 'input window, operand 8, single buffered']
    #allocation16 [shape = 's32[1]{0}', space=sflag, size = 0x4, scoped, tag = 'scoped memory for tpu_custom_call.1']
    #allocation17 [shape = 'u8[32768]{0}', space=vmem, size = 0x8000, scoped, tag = 'input window, operand 11, single buffered']
    #allocation18 [shape = 'u8[32768]{0}', space=vmem, size = 0x8000, scoped, tag = 'input window, operand 13, single buffered']
    #allocation19 [shape = 's32[1]{0}', space=sflag, size = 0x4, scoped, tag = 'scoped memory for tpu_custom_call.1']
    #allocation20 [shape = 'u8[262144]{0}', space=vmem, size = 0x40000, scoped, tag = 'output window, operand 0']
    #allocation21 [shape = 'u8[131072]{0}', space=vmem, size = 0x20000, scoped, tag = 'output window, operand 1']
    #allocation22 [shape = 's32[2]{0}', space=sflag, size = 0x8, scoped, tag = 'scoped memory for tpu_custom_call.1']
    %22 = vsyncpa [#allocation4], 0
    %s23 = scalar_lea.sflag [#allocation4], 1
    %24 = vsyncpa %s23, 0
    %25 = vsyncpa [#allocation7], 0
    %26 = vsyncpa [#allocation10], 0
    %27 = vsyncpa [#allocation13], 0
    %28 = vsyncpa [#allocation16], 0
    %29 = vsyncpa [#allocation19], 0
    %30 = vsyncpa [#allocation5], 0
    %s31 = scalar_lea.sflag [#allocation5], 1
    %32 = vsyncpa %s31, 0
    %33 = vsyncpa [#allocation22], 0
    %s34 = scalar_lea.sflag [#allocation22], 1
    %35 = vsyncpa %s34, 0
    loop: start=0, step=1, limit=4
    $region2: #{tpu_custom_call.1} parent=1 // loop_pre_header
      _
    $region3: #{tpu_custom_call.1} parent=1 // loop_header
      %s37 = sphi 0, %s41
      %p38 = scmp.ge.s32.totalorder %s37, 4
      %s47 = sphi 0, %s49
      %s50 = sphi 0, %s47
      %s51 = sphi 0, %s50
      %s67 = sphi 0, %s51
      %s71 = sphi 0, %s71
      %s73 = sphi 0, %s71
      %s74 = sphi 0, %s73
      %s88 = sphi 0, %s74
      %s92 = sphi 0, %s92
      %s94 = sphi 0, %s92
      %s95 = sphi 0, %s94
      %s109 = sphi 0, %s95
      %s113 = sphi 0, %s113
      %s115 = sphi 0, %s113
      %s116 = sphi 0, %s115
      %s130 = sphi 0, %s116
      %s134 = sphi 0, %s134
      %s136 = sphi 0, %s134
      %s137 = sphi 0, %s136
      %s151 = sphi 0, %s137
      %s155 = sphi 0, %s155
      %s157 = sphi 0, %s155
      %s158 = sphi 0, %s157
      %s172 = sphi 0, %s158
      %s176 = sphi 0, %s176
      %s178 = sphi 0, %s176
      %s179 = sphi 0, %s178
      %s193 = sphi 0, %s179
      %s197 = sphi 0, %s197
      %s199 = sphi 0, %s197
      %s200 = sphi 0, %s199
      %s214 = sphi 0, %s200
      %s218 = sphi 0, %s218
      %s220 = sphi 0, %s218
      %s221 = sphi 0, %s220
      %s235 = sphi 0, %s221
      %s239 = sphi 0, %s239
      %s241 = sphi 0, %s239
      %s242 = sphi 0, %s241
      %s256 = sphi 0, %s242
      %s260 = sphi 0, %s260
      %s262 = sphi 0, %s260
      %s263 = sphi 0, %s262
      %s277 = sphi 0, %s263
      %s281 = sphi 0, %s281
      %s283 = sphi 0, %s281
      %s284 = sphi 0, %s283
      %s298 = sphi 0, %s284
      %s302 = sphi 0, %s302
      %s304 = sphi 0, %s302
      %s305 = sphi 0, %s304
      %s319 = sphi 0, %s305
      %s323 = sphi 0, %s323
      %s325 = sphi 0, %s323
      %s326 = sphi 0, %s325
      %s340 = sphi 0, %s326
      %s344 = sphi 0, %s344
      %s346 = sphi 0, %s344
      %s347 = sphi 0, %s346
      %s361 = sphi 0, %s347
      %s367 = sphi 0, %s369
      %s370 = sphi 0, %s367
      %s371 = sphi 0, %s370
      %s387 = sphi 0, %s371
      %s393 = sphi 0, %s395
      %s396 = sphi 0, %s393
      %s397 = sphi 0, %s396
      %s413 = sphi 0, %s397
    $region4: #{tpu_custom_call.1} parent=1 // loop_header_branch
      %40 = sbr.rel (%p38) target = $region8
    $region5: #{tpu_custom_call.1} parent=1 // loop_body
      %s42 = ssub.s32 %s37, 1
      %s43 = ssub.s32 %s37, 2
      %s44 = sadd.s32 %s37, 1
      %s45 = ssub.s32 %s37, %s44
      %p46 = scmp.eq.s32.totalorder %s45, 0
      %s48 = sadd.s32 %s47, 1
      %s49 = scalar_select %p46, %s47, %s48
      %p52 = pneg %p46
      %p53 = scmp.eq.s32.totalorder %s37, 1
      %p54 = por %p52, %p53
      %p55 = scmp.ne.s32.totalorder %s47, %s50
      %p56 = scmp.eq.s32.totalorder %s37, 0
      %p57 = por %p55, %p56
      %p58 = scmp.ne.s32.totalorder %s47, %s50
      %p59 = scmp.eq.s32.totalorder %s42, 1
      %p60 = por %p58, %p59
      %p61 = scmp.ne.s32.totalorder %s50, %s51
      %p62 = scmp.eq.s32.totalorder %s42, 0
      %p63 = por %p61, %p62
      %p64 = scmp.ne.s32.totalorder %s50, %s51
      %p65 = scmp.eq.s32.totalorder %s43, 1
      %p66 = por %p64, %p65
      %p68 = scmp.ne.s32.totalorder %s51, %s67
      %p69 = scmp.eq.s32.totalorder %s43, 0
      %p70 = por %p68, %p69
      %s72 = sadd.s32 %s71, 1
      %p75 = scmp.eq.s32.totalorder %s37, 1
      %p76 = scmp.ne.s32.totalorder %s71, %s73
      %p77 = scmp.eq.s32.totalorder %s37, 0
      %p78 = por %p76, %p77
      %p79 = scmp.ne.s32.totalorder %s71, %s73
      %p80 = scmp.eq.s32.totalorder %s42, 1
      %p81 = por %p79, %p80
      %p82 = scmp.ne.s32.totalorder %s73, %s74
      %p83 = scmp.eq.s32.totalorder %s42, 0
      %p84 = por %p82, %p83
      %p85 = scmp.ne.s32.totalorder %s73, %s74
      %p86 = scmp.eq.s32.totalorder %s43, 1
      %p87 = por %p85, %p86
      %p89 = scmp.ne.s32.totalorder %s74, %s88
      %p90 = scmp.eq.s32.totalorder %s43, 0
      %p91 = por %p89, %p90
      %s93 = sadd.s32 %s92, 1
      %p96 = scmp.eq.s32.totalorder %s37, 1
      %p97 = scmp.ne.s32.totalorder %s92, %s94
      %p98 = scmp.eq.s32.totalorder %s37, 0
      %p99 = por %p97, %p98
      %p100 = scmp.ne.s32.totalorder %s92, %s94
      %p101 = scmp.eq.s32.totalorder %s42, 1
      %p102 = por %p100, %p101
      %p103 = scmp.ne.s32.totalorder %s94, %s95
      %p104 = scmp.eq.s32.totalorder %s42, 0
      %p105 = por %p103, %p104
      %p106 = scmp.ne.s32.totalorder %s94, %s95
      %p107 = scmp.eq.s32.totalorder %s43, 1
      %p108 = por %p106, %p107
      %p110 = scmp.ne.s32.totalorder %s95, %s109
      %p111 = scmp.eq.s32.totalorder %s43, 0
      %p112 = por %p110, %p111
      %s114 = sadd.s32 %s113, 1
      %p117 = scmp.eq.s32.totalorder %s37, 1
      %p118 = scmp.ne.s32.totalorder %s113, %s115
      %p119 = scmp.eq.s32.totalorder %s37, 0
      %p120 = por %p118, %p119
      %p121 = scmp.ne.s32.totalorder %s113, %s115
      %p122 = scmp.eq.s32.totalorder %s42, 1
      %p123 = por %p121, %p122
      %p124 = scmp.ne.s32.totalorder %s115, %s116
      %p125 = scmp.eq.s32.totalorder %s42, 0
      %p126 = por %p124, %p125
      %p127 = scmp.ne.s32.totalorder %s115, %s116
      %p128 = scmp.eq.s32.totalorder %s43, 1
      %p129 = por %p127, %p128
      %p131 = scmp.ne.s32.totalorder %s116, %s130
      %p132 = scmp.eq.s32.totalorder %s43, 0
      %p133 = por %p131, %p132
      %s135 = sadd.s32 %s134, 1
      %p138 = scmp.eq.s32.totalorder %s37, 1
      %p139 = scmp.ne.s32.totalorder %s134, %s136
      %p140 = scmp.eq.s32.totalorder %s37, 0
      %p141 = por %p139, %p140
      %p142 = scmp.ne.s32.totalorder %s134, %s136
      %p143 = scmp.eq.s32.totalorder %s42, 1
      %p144 = por %p142, %p143
      %p145 = scmp.ne.s32.totalorder %s136, %s137
      %p146 = scmp.eq.s32.totalorder %s42, 0
      %p147 = por %p145, %p146
      %p148 = scmp.ne.s32.totalorder %s136, %s137
      %p149 = scmp.eq.s32.totalorder %s43, 1
      %p150 = por %p148, %p149
      %p152 = scmp.ne.s32.totalorder %s137, %s151
      %p153 = scmp.eq.s32.totalorder %s43, 0
      %p154 = por %p152, %p153
      %s156 = sadd.s32 %s155, 1
      %p159 = scmp.eq.s32.totalorder %s37, 1
      %p160 = scmp.ne.s32.totalorder %s155, %s157
      %p161 = scmp.eq.s32.totalorder %s37, 0
      %p162 = por %p160, %p161
      %p163 = scmp.ne.s32.totalorder %s155, %s157
      %p164 = scmp.eq.s32.totalorder %s42, 1
      %p165 = por %p163, %p164
      %p166 = scmp.ne.s32.totalorder %s157, %s158
      %p167 = scmp.eq.s32.totalorder %s42, 0
      %p168 = por %p166, %p167
      %p169 = scmp.ne.s32.totalorder %s157, %s158
      %p170 = scmp.eq.s32.totalorder %s43, 1
      %p171 = por %p169, %p170
      %p173 = scmp.ne.s32.totalorder %s158, %s172
      %p174 = scmp.eq.s32.totalorder %s43, 0
      %p175 = por %p173, %p174
      %s177 = sadd.s32 %s176, 1
      %p180 = scmp.eq.s32.totalorder %s37, 1
      %p181 = scmp.ne.s32.totalorder %s176, %s178
      %p182 = scmp.eq.s32.totalorder %s37, 0
      %p183 = por %p181, %p182
      %p184 = scmp.ne.s32.totalorder %s176, %s178
      %p185 = scmp.eq.s32.totalorder %s42, 1
      %p186 = por %p184, %p185
      %p187 = scmp.ne.s32.totalorder %s178, %s179
      %p188 = scmp.eq.s32.totalorder %s42, 0
      %p189 = por %p187, %p188
      %p190 = scmp.ne.s32.totalorder %s178, %s179
      %p191 = scmp.eq.s32.totalorder %s43, 1
      %p192 = por %p190, %p191
      %p194 = scmp.ne.s32.totalorder %s179, %s193
      %p195 = scmp.eq.s32.totalorder %s43, 0
      %p196 = por %p194, %p195
      %s198 = sadd.s32 %s197, 1
      %p201 = scmp.eq.s32.totalorder %s37, 1
      %p202 = scmp.ne.s32.totalorder %s197, %s199
      %p203 = scmp.eq.s32.totalorder %s37, 0
      %p204 = por %p202, %p203
      %p205 = scmp.ne.s32.totalorder %s197, %s199
      %p206 = scmp.eq.s32.totalorder %s42, 1
      %p207 = por %p205, %p206
      %p208 = scmp.ne.s32.totalorder %s199, %s200
      %p209 = scmp.eq.s32.totalorder %s42, 0
      %p210 = por %p208, %p209
      %p211 = scmp.ne.s32.totalorder %s199, %s200
      %p212 = scmp.eq.s32.totalorder %s43, 1
      %p213 = por %p211, %p212
      %p215 = scmp.ne.s32.totalorder %s200, %s214
      %p216 = scmp.eq.s32.totalorder %s43, 0
      %p217 = por %p215, %p216
      %s219 = sadd.s32 %s218, 1
      %p222 = scmp.eq.s32.totalorder %s37, 1
      %p223 = scmp.ne.s32.totalorder %s218, %s220
      %p224 = scmp.eq.s32.totalorder %s37, 0
      %p225 = por %p223, %p224
      %p226 = scmp.ne.s32.totalorder %s218, %s220
      %p227 = scmp.eq.s32.totalorder %s42, 1
      %p228 = por %p226, %p227
      %p229 = scmp.ne.s32.totalorder %s220, %s221
      %p230 = scmp.eq.s32.totalorder %s42, 0
      %p231 = por %p229, %p230
      %p232 = scmp.ne.s32.totalorder %s220, %s221
      %p233 = scmp.eq.s32.totalorder %s43, 1
      %p234 = por %p232, %p233
      %p236 = scmp.ne.s32.totalorder %s221, %s235
      %p237 = scmp.eq.s32.totalorder %s43, 0
      %p238 = por %p236, %p237
      %s240 = sadd.s32 %s239, 1
      %p243 = scmp.eq.s32.totalorder %s37, 1
      %p244 = scmp.ne.s32.totalorder %s239, %s241
      %p245 = scmp.eq.s32.totalorder %s37, 0
      %p246 = por %p244, %p245
      %p247 = scmp.ne.s32.totalorder %s239, %s241
      %p248 = scmp.eq.s32.totalorder %s42, 1
      %p249 = por %p247, %p248
      %p250 = scmp.ne.s32.totalorder %s241, %s242
      %p251 = scmp.eq.s32.totalorder %s42, 0
      %p252 = por %p250, %p251
      %p253 = scmp.ne.s32.totalorder %s241, %s242
      %p254 = scmp.eq.s32.totalorder %s43, 1
      %p255 = por %p253, %p254
      %p257 = scmp.ne.s32.totalorder %s242, %s256
      %p258 = scmp.eq.s32.totalorder %s43, 0
      %p259 = por %p257, %p258
      %s261 = sadd.s32 %s260, 1
      %p264 = scmp.eq.s32.totalorder %s37, 1
      %p265 = scmp.ne.s32.totalorder %s260, %s262
      %p266 = scmp.eq.s32.totalorder %s37, 0
      %p267 = por %p265, %p266
      %p268 = scmp.ne.s32.totalorder %s260, %s262
      %p269 = scmp.eq.s32.totalorder %s42, 1
      %p270 = por %p268, %p269
      %p271 = scmp.ne.s32.totalorder %s262, %s263
      %p272 = scmp.eq.s32.totalorder %s42, 0
      %p273 = por %p271, %p272
      %p274 = scmp.ne.s32.totalorder %s262, %s263
      %p275 = scmp.eq.s32.totalorder %s43, 1
      %p276 = por %p274, %p275
      %p278 = scmp.ne.s32.totalorder %s263, %s277
      %p279 = scmp.eq.s32.totalorder %s43, 0
      %p280 = por %p278, %p279
      %s282 = sadd.s32 %s281, 1
      %p285 = scmp.eq.s32.totalorder %s37, 1
      %p286 = scmp.ne.s32.totalorder %s281, %s283
      %p287 = scmp.eq.s32.totalorder %s37, 0
      %p288 = por %p286, %p287
      %p289 = scmp.ne.s32.totalorder %s281, %s283
      %p290 = scmp.eq.s32.totalorder %s42, 1
      %p291 = por %p289, %p290
      %p292 = scmp.ne.s32.totalorder %s283, %s284
      %p293 = scmp.eq.s32.totalorder %s42, 0
      %p294 = por %p292, %p293
      %p295 = scmp.ne.s32.totalorder %s283, %s284
      %p296 = scmp.eq.s32.totalorder %s43, 1
      %p297 = por %p295, %p296
      %p299 = scmp.ne.s32.totalorder %s284, %s298
      %p300 = scmp.eq.s32.totalorder %s43, 0
      %p301 = por %p299, %p300
      %s303 = sadd.s32 %s302, 1
      %p306 = scmp.eq.s32.totalorder %s37, 1
      %p307 = scmp.ne.s32.totalorder %s302, %s304
      %p308 = scmp.eq.s32.totalorder %s37, 0
      %p309 = por %p307, %p308
      %p310 = scmp.ne.s32.totalorder %s302, %s304
      %p311 = scmp.eq.s32.totalorder %s42, 1
      %p312 = por %p310, %p311
      %p313 = scmp.ne.s32.totalorder %s304, %s305
      %p314 = scmp.eq.s32.totalorder %s42, 0
      %p315 = por %p313, %p314
      %p316 = scmp.ne.s32.totalorder %s304, %s305
      %p317 = scmp.eq.s32.totalorder %s43, 1
      %p318 = por %p316, %p317
      %p320 = scmp.ne.s32.totalorder %s305, %s319
      %p321 = scmp.eq.s32.totalorder %s43, 0
      %p322 = por %p320, %p321
      %s324 = sadd.s32 %s323, 1
      %p327 = scmp.eq.s32.totalorder %s37, 1
      %p328 = scmp.ne.s32.totalorder %s323, %s325
      %p329 = scmp.eq.s32.totalorder %s37, 0
      %p330 = por %p328, %p329
      %p331 = scmp.ne.s32.totalorder %s323, %s325
      %p332 = scmp.eq.s32.totalorder %s42, 1
      %p333 = por %p331, %p332
      %p334 = scmp.ne.s32.totalorder %s325, %s326
      %p335 = scmp.eq.s32.totalorder %s42, 0
      %p336 = por %p334, %p335
      %p337 = scmp.ne.s32.totalorder %s325, %s326
      %p338 = scmp.eq.s32.totalorder %s43, 1
      %p339 = por %p337, %p338
      %p341 = scmp.ne.s32.totalorder %s326, %s340
      %p342 = scmp.eq.s32.totalorder %s43, 0
      %p343 = por %p341, %p342
      %s345 = sadd.s32 %s344, 1
      %p348 = scmp.eq.s32.totalorder %s37, 1
      %p349 = scmp.ne.s32.totalorder %s344, %s346
      %p350 = scmp.eq.s32.totalorder %s37, 0
      %p351 = por %p349, %p350
      %p352 = scmp.ne.s32.totalorder %s344, %s346
      %p353 = scmp.eq.s32.totalorder %s42, 1
      %p354 = por %p352, %p353
      %p355 = scmp.ne.s32.totalorder %s346, %s347
      %p356 = scmp.eq.s32.totalorder %s42, 0
      %p357 = por %p355, %p356
      %p358 = scmp.ne.s32.totalorder %s346, %s347
      %p359 = scmp.eq.s32.totalorder %s43, 1
      %p360 = por %p358, %p359
      %p362 = scmp.ne.s32.totalorder %s347, %s361
      %p363 = scmp.eq.s32.totalorder %s43, 0
      %p364 = por %p362, %p363
      %s365 = ssub.s32 %s37, %s44
      %p366 = scmp.eq.s32.totalorder %s365, 0
      %s368 = sadd.s32 %s367, 1
      %s369 = scalar_select %p366, %s367, %s368
      %p372 = pneg %p366
      %p373 = scmp.eq.s32.totalorder %s37, 1
      %p374 = por %p372, %p373
      %p375 = scmp.ne.s32.totalorder %s367, %s370
      %p376 = scmp.eq.s32.totalorder %s37, 0
      %p377 = por %p375, %p376
      %p378 = scmp.ne.s32.totalorder %s367, %s370
      %p379 = scmp.eq.s32.totalorder %s42, 1
      %p380 = por %p378, %p379
      %p381 = scmp.ne.s32.totalorder %s370, %s371
      %p382 = scmp.eq.s32.totalorder %s42, 0
      %p383 = por %p381, %p382
      %p384 = scmp.ne.s32.totalorder %s370, %s371
      %p385 = scmp.eq.s32.totalorder %s43, 1
      %p386 = por %p384, %p385
      %p388 = scmp.ne.s32.totalorder %s371, %s387
      %p389 = scmp.eq.s32.totalorder %s43, 0
      %p390 = por %p388, %p389
      %s391 = ssub.s32 %s37, %s44
      %p392 = scmp.eq.s32.totalorder %s391, 0
      %s394 = sadd.s32 %s393, 1
      %s395 = scalar_select %p392, %s393, %s394
      %p398 = pneg %p392
      %p399 = scmp.eq.s32.totalorder %s37, 1
      %p400 = por %p398, %p399
      %p401 = scmp.ne.s32.totalorder %s393, %s396
      %p402 = scmp.eq.s32.totalorder %s37, 0
      %p403 = por %p401, %p402
      %p404 = scmp.ne.s32.totalorder %s393, %s396
      %p405 = scmp.eq.s32.totalorder %s42, 1
      %p406 = por %p404, %p405
      %p407 = scmp.ne.s32.totalorder %s396, %s397
      %p408 = scmp.eq.s32.totalorder %s42, 0
      %p409 = por %p407, %p408
      %p410 = scmp.ne.s32.totalorder %s396, %s397
      %p411 = scmp.eq.s32.totalorder %s43, 1
      %p412 = por %p410, %p411
      %p414 = scmp.ne.s32.totalorder %s397, %s413
      %p415 = scmp.eq.s32.totalorder %s43, 0
      %p416 = por %p414, %p415
      %p417 = scmp.le.s32.totalorder 1, %s37
      %p418 = scmp.lt.s32.totalorder %s37, 3
      %p419 = pnand %p417, %p418
      %p420 = pneg %p419
      // Predicated region
      $region9: #{tpu_custom_call.1} parent=5 // pred_check
        _
      $region10: #{tpu_custom_call.1} parent=5 // pred_check_branch
        %422 = sbr.rel (%p419) target = $region12
      $region11: #{tpu_custom_call.1} parent=5 // pred_region
        %s423 = ssub.s32 %s37, 1
        // Predicated region
        $region13: #{tpu_custom_call.1} parent=11 // pred_check
          %p424 = pneg %p84
        $region14: #{tpu_custom_call.1} parent=11 // pred_check_branch
          %426 = sbr.rel (%p424) target = $region16
        $region15: #{tpu_custom_call.1} parent=11 // pred_region
          %s428 = ssub.s32 128, 128
          %429 = vsyncadd [#allocation7], %s428
          %s430 = sshll.u32 [#allocation6], 4
          %s431 = int_to_ptr.vmem [resolvable:$true] %s430
          %436 = dma.hbm_to_vmem [thread:$0]  %s1, 128, %s431, [#allocation7], 64, 64, 4
        $region16: #{tpu_custom_call.1} parent=11 // pred_fallthru
          _
        // Predicated region
        $region17: #{tpu_custom_call.1} parent=11 // pred_check
          %p437 = pneg %p105
        $region18: #{tpu_custom_call.1} parent=11 // pred_check_branch
          %439 = sbr.rel (%p437) target = $region20
        $region19: #{tpu_custom_call.1} parent=11 // pred_region
          %s441 = ssub.s32 16, 16
          %442 = vsyncadd [#allocation7], %s441
          %s444 = sshll.u32 [#allocation8], 4
          %s445 = int_to_ptr.vmem [resolvable:$true] %s444
          %447 = dma.hbm_to_vmem [thread:$0]  %s2, 16, %s445, [#allocation7]
        $region20: #{tpu_custom_call.1} parent=11 // pred_fallthru
          _
        // Predicated region
        $region21: #{tpu_custom_call.1} parent=11 // pred_check
          %p448 = pneg %p126
        $region22: #{tpu_custom_call.1} parent=11 // pred_check_branch
          %450 = sbr.rel (%p448) target = $region24
        $region23: #{tpu_custom_call.1} parent=11 // pred_region
          %s452 = ssub.s32 1024, 1024
          %453 = vsyncadd [#allocation10], %s452
          %s454 = sshll.u32 [#allocation9], 4
          %s455 = int_to_ptr.vmem [resolvable:$true] %s454
          %460 = dma.hbm_to_vmem [thread:$0]  %s3, 1024, %s455, [#allocation10], 64, 64, 4
        $region24: #{tpu_custom_call.1} parent=11 // pred_fallthru
          _
        // Predicated region
        $region25: #{tpu_custom_call.1} parent=11 // pred_check
          %p461 = pneg %p147
        $region26: #{tpu_custom_call.1} parent=11 // pred_check_branch
          %463 = sbr.rel (%p461) target = $region28
        $region27: #{tpu_custom_call.1} parent=11 // pred_region
          %s465 = ssub.s32 16, 16
          %466 = vsyncadd [#allocation10], %s465
          %s468 = sshll.u32 [#allocation11], 4
          %s469 = int_to_ptr.vmem [resolvable:$true] %s468
          %471 = dma.hbm_to_vmem [thread:$0]  %s4, 16, %s469, [#allocation10]
        $region28: #{tpu_custom_call.1} parent=11 // pred_fallthru
          _
        // Predicated region
        $region29: #{tpu_custom_call.1} parent=11 // pred_check
          %p472 = pneg %p168
        $region30: #{tpu_custom_call.1} parent=11 // pred_check_branch
          %474 = sbr.rel (%p472) target = $region32
        $region31: #{tpu_custom_call.1} parent=11 // pred_region
          _
        $region32: #{tpu_custom_call.1} parent=11 // pred_fallthru
          _
        // Predicated region
        $region33: #{tpu_custom_call.1} parent=11 // pred_check
          %p475 = pneg %p189
        $region34: #{tpu_custom_call.1} parent=11 // pred_check_branch
          %477 = sbr.rel (%p475) target = $region36
        $region35: #{tpu_custom_call.1} parent=11 // pred_region
          %s479 = ssub.s32 16, 16
          %480 = vsyncadd [#allocation13], %s479
          %s482 = sshll.u32 [#allocation12], 4
          %s483 = int_to_ptr.vmem [resolvable:$true] %s482
          %485 = dma.hbm_to_vmem [thread:$0]  %s6, 16, %s483, [#allocation13]
        $region36: #{tpu_custom_call.1} parent=11 // pred_fallthru
          _
        // Predicated region
        $region37: #{tpu_custom_call.1} parent=11 // pred_check
          %p486 = pneg %p210
        $region38: #{tpu_custom_call.1} parent=11 // pred_check_branch
          %488 = sbr.rel (%p486) target = $region40
        $region39: #{tpu_custom_call.1} parent=11 // pred_region
          %s490 = ssub.s32 1024, 1024
          %491 = vsyncadd [#allocation13], %s490
          %s492 = sshll.u32 [#allocation14], 4
          %s493 = int_to_ptr.vmem [resolvable:$true] %s492
          %498 = dma.hbm_to_vmem [thread:$0]  %s7, 1024, %s493, [#allocation13], 64, 64, 4
        $region40: #{tpu_custom_call.1} parent=11 // pred_fallthru
          _
        // Predicated region
        $region41: #{tpu_custom_call.1} parent=11 // pred_check
          %p499 = pneg %p231
        $region42: #{tpu_custom_call.1} parent=11 // pred_check_branch
          %501 = sbr.rel (%p499) target = $region44
        $region43: #{tpu_custom_call.1} parent=11 // pred_region
          %s503 = ssub.s32 16, 16
          %504 = vsyncadd [#allocation16], %s503
          %s506 = sshll.u32 [#allocation15], 4
          %s507 = int_to_ptr.vmem [resolvable:$true] %s506
          %509 = dma.hbm_to_vmem [thread:$0]  %s8, 16, %s507, [#allocation16]
        $region44: #{tpu_custom_call.1} parent=11 // pred_fallthru
          _
        // Predicated region
        $region45: #{tpu_custom_call.1} parent=11 // pred_check
          %p510 = pneg %p252
        $region46: #{tpu_custom_call.1} parent=11 // pred_check_branch
          %512 = sbr.rel (%p510) target = $region48
        $region47: #{tpu_custom_call.1} parent=11 // pred_region
          _
        $region48: #{tpu_custom_call.1} parent=11 // pred_fallthru
          _
        // Predicated region
        $region49: #{tpu_custom_call.1} parent=11 // pred_check
          %p513 = pneg %p273
        $region50: #{tpu_custom_call.1} parent=11 // pred_check_branch
          %515 = sbr.rel (%p513) target = $region52
        $region51: #{tpu_custom_call.1} parent=11 // pred_region
          _
        $region52: #{tpu_custom_call.1} parent=11 // pred_fallthru
          _
        // Predicated region
        $region53: #{tpu_custom_call.1} parent=11 // pred_check
          %p516 = pneg %p294
        $region54: #{tpu_custom_call.1} parent=11 // pred_check_branch
          %518 = sbr.rel (%p516) target = $region56
        $region55: #{tpu_custom_call.1} parent=11 // pred_region
          %s520 = ssub.s32 1024, 1024
          %521 = vsyncadd [#allocation16], %s520
          %s522 = sshll.u32 [#allocation17], 4
          %s523 = int_to_ptr.vmem [resolvable:$true] %s522
          %528 = dma.hbm_to_vmem [thread:$0]  %s11, 1024, %s523, [#allocation16], 64, 64, 4
        $region56: #{tpu_custom_call.1} parent=11 // pred_fallthru
          _
        // Predicated region
        $region57: #{tpu_custom_call.1} parent=11 // pred_check
          %p529 = pneg %p315
        $region58: #{tpu_custom_call.1} parent=11 // pred_check_branch
          %531 = sbr.rel (%p529) target = $region60
        $region59: #{tpu_custom_call.1} parent=11 // pred_region
          _
        $region60: #{tpu_custom_call.1} parent=11 // pred_fallthru
          _
        // Predicated region
        $region61: #{tpu_custom_call.1} parent=11 // pred_check
          %p532 = pneg %p336
        $region62: #{tpu_custom_call.1} parent=11 // pred_check_branch
          %534 = sbr.rel (%p532) target = $region64
        $region63: #{tpu_custom_call.1} parent=11 // pred_region
          %s536 = ssub.s32 1024, 1024
          %537 = vsyncadd [#allocation19], %s536
          %s538 = sshll.u32 [#allocation18], 4
          %s539 = int_to_ptr.vmem [resolvable:$true] %s538
          %544 = dma.hbm_to_vmem [thread:$0]  %s13, 1024, %s539, [#allocation19], 64, 64, 4
        $region64: #{tpu_custom_call.1} parent=11 // pred_fallthru
          _
        // Predicated region
        $region65: #{tpu_custom_call.1} parent=11 // pred_check
          %p545 = pneg %p357
        $region66: #{tpu_custom_call.1} parent=11 // pred_check_branch
          %547 = sbr.rel (%p545) target = $region68
        $region67: #{tpu_custom_call.1} parent=11 // pred_region
          _
        $region68: #{tpu_custom_call.1} parent=11 // pred_fallthru
          _
      $region12: #{tpu_custom_call.1} parent=5 // pred_fallthru
        _
      %p548 = scmp.lt.s32.totalorder %s37, 2
      // Predicated region
      $region69: #{tpu_custom_call.1} parent=5 // pred_check
        %p549 = pneg %p548
      $region70: #{tpu_custom_call.1} parent=5 // pred_check_branch
        %551 = sbr.rel (%p549) target = $region72
      $region71: #{tpu_custom_call.1} parent=5 // pred_region
        // Predicated region
        $region73: #{tpu_custom_call.1} parent=71 // pred_check
          %p552 = pneg %p57
        $region74: #{tpu_custom_call.1} parent=71 // pred_check_branch
          %554 = sbr.rel (%p552) target = $region76
        $region75: #{tpu_custom_call.1} parent=71 // pred_region
          %s555 = sand.u32 %s47, 1
          %s556 = scalar_lea.sflag [#allocation4], %s555
          %s557 = sand.u32 %s47, 1
          %s558 = smul.addr %s557, 256
          %s559 = scalar_lea.vmem [#allocation3], %s558
          %s561 = ssub.s32 4096, 4096
          %562 = vsyncadd %s556, %s561
          %s563 = smul.addr %s37, 32
          %s564 = smul.addr %s563, 128
          %s565 = scalar_lea.hbm %s0, %s564
          %s566 = sshll.u32 %s559, 4
          %s567 = int_to_ptr.vmem [resolvable:$true] %s566
          %572 = dma.hbm_to_vmem [thread:$0]  %s565, 4096, %s567, %s556, 128, 128, 8
        $region76: #{tpu_custom_call.1} parent=71 // pred_fallthru
          _
      $region72: #{tpu_custom_call.1} parent=5 // pred_fallthru
        _
      %p573 = scmp.le.s32.totalorder 1, %s37
      %p574 = scmp.lt.s32.totalorder %s37, 3
      %p575 = pnand %p573, %p574
      %p576 = pneg %p575
      // Predicated region
      $region77: #{tpu_custom_call.1} parent=5 // pred_check
        _
      $region78: #{tpu_custom_call.1} parent=5 // pred_check_branch
        %578 = sbr.rel (%p575) target = $region80
      $region79: #{tpu_custom_call.1} parent=5 // pred_region
        %s579 = ssub.s32 %s37, 1
        %s580 = sand.u32 %s50, 1
        %s581 = scalar_lea.sflag [#allocation4], %s580
        %s582 = sand.u32 %s50, 1
        %s583 = smul.addr %s582, 256
        %s584 = scalar_lea.vmem [#allocation3], %s583
        // Predicated region
        $region81: #{tpu_custom_call.1} parent=79 // pred_check
          %p585 = pneg %p63
        $region82: #{tpu_custom_call.1} parent=79 // pred_check_branch
          %587 = sbr.rel (%p585) target = $region84
        $region83: #{tpu_custom_call.1} parent=79 // pred_region
          %588 = dma.done %s581, 4096
        $region84: #{tpu_custom_call.1} parent=79 // pred_fallthru
          _
        // Predicated region
        $region85: #{tpu_custom_call.1} parent=79 // pred_check
          %p589 = pneg %p84
        $region86: #{tpu_custom_call.1} parent=79 // pred_check_branch
          %591 = sbr.rel (%p589) target = $region88
        $region87: #{tpu_custom_call.1} parent=79 // pred_region
          %592 = dma.done [#allocation7], 128
        $region88: #{tpu_custom_call.1} parent=79 // pred_fallthru
          _
        // Predicated region
        $region89: #{tpu_custom_call.1} parent=79 // pred_check
          %p593 = pneg %p105
        $region90: #{tpu_custom_call.1} parent=79 // pred_check_branch
          %595 = sbr.rel (%p593) target = $region92
        $region91: #{tpu_custom_call.1} parent=79 // pred_region
          %596 = dma.done [#allocation7], 16
        $region92: #{tpu_custom_call.1} parent=79 // pred_fallthru
          _
        // Predicated region
        $region93: #{tpu_custom_call.1} parent=79 // pred_check
          %p597 = pneg %p126
        $region94: #{tpu_custom_call.1} parent=79 // pred_check_branch
          %599 = sbr.rel (%p597) target = $region96
        $region95: #{tpu_custom_call.1} parent=79 // pred_region
          %600 = dma.done [#allocation10], 1024
        $region96: #{tpu_custom_call.1} parent=79 // pred_fallthru
          _
        // Predicated region
        $region97: #{tpu_custom_call.1} parent=79 // pred_check
          %p601 = pneg %p147
        $region98: #{tpu_custom_call.1} parent=79 // pred_check_branch
          %603 = sbr.rel (%p601) target = $region100
        $region99: #{tpu_custom_call.1} parent=79 // pred_region
          %604 = dma.done [#allocation10], 16
        $region100: #{tpu_custom_call.1} parent=79 // pred_fallthru
          _
        // Predicated region
        $region101: #{tpu_custom_call.1} parent=79 // pred_check
          %p605 = pneg %p189
        $region102: #{tpu_custom_call.1} parent=79 // pred_check_branch
          %607 = sbr.rel (%p605) target = $region104
        $region103: #{tpu_custom_call.1} parent=79 // pred_region
          %608 = dma.done [#allocation13], 16
        $region104: #{tpu_custom_call.1} parent=79 // pred_fallthru
          _
        // Predicated region
        $region105: #{tpu_custom_call.1} parent=79 // pred_check
          %p609 = pneg %p210
        $region106: #{tpu_custom_call.1} parent=79 // pred_check_branch
          %611 = sbr.rel (%p609) target = $region108
        $region107: #{tpu_custom_call.1} parent=79 // pred_region
          %612 = dma.done [#allocation13], 1024
        $region108: #{tpu_custom_call.1} parent=79 // pred_fallthru
          _
        // Predicated region
        $region109: #{tpu_custom_call.1} parent=79 // pred_check
          %p613 = pneg %p231
        $region110: #{tpu_custom_call.1} parent=79 // pred_check_branch
          %615 = sbr.rel (%p613) target = $region112
        $region111: #{tpu_custom_call.1} parent=79 // pred_region
          %616 = dma.done [#allocation16], 16
        $region112: #{tpu_custom_call.1} parent=79 // pred_fallthru
          _
        // Predicated region
        $region113: #{tpu_custom_call.1} parent=79 // pred_check
          %p617 = pneg %p294
        $region114: #{tpu_custom_call.1} parent=79 // pred_check_branch
          %619 = sbr.rel (%p617) target = $region116
        $region115: #{tpu_custom_call.1} parent=79 // pred_region
          %620 = dma.done [#allocation16], 1024
        $region116: #{tpu_custom_call.1} parent=79 // pred_fallthru
          _
        // Predicated region
        $region117: #{tpu_custom_call.1} parent=79 // pred_check
          %p621 = pneg %p336
        $region118: #{tpu_custom_call.1} parent=79 // pred_check_branch
          %623 = sbr.rel (%p621) target = $region120
        $region119: #{tpu_custom_call.1} parent=79 // pred_region
          %624 = dma.done [#allocation19], 1024
        $region120: #{tpu_custom_call.1} parent=79 // pred_fallthru
          _
        %s625 = sand.u32 %s50, 1
        %s626 = scalar_lea.sflag [#allocation4], %s625
        %s627 = sand.u32 %s50, 1
        %s628 = smul.addr %s627, 256
        %s629 = scalar_lea.vmem [#allocation3], %s628
        %p630 = pneg %p63
        %p631 = pneg %p60
        %p632 = pneg %p84
        %p633 = pneg %p81
        %p634 = pneg %p105
        %p635 = pneg %p102
        %p636 = pneg %p126
        %p637 = pneg %p123
        %p638 = pneg %p147
        %p639 = pneg %p144
        %p640 = pneg %p168
        %p641 = pneg %p165
        %p642 = pneg %p189
        %p643 = pneg %p186
        %p644 = pneg %p210
        %p645 = pneg %p207
        %p646 = pneg %p231
        %p647 = pneg %p228
        %p648 = pneg %p252
        %p649 = pneg %p249
        %p650 = pneg %p273
        %p651 = pneg %p270
        %p652 = pneg %p294
        %p653 = pneg %p291
        %p654 = pneg %p315
        %p655 = pneg %p312
        %p656 = pneg %p336
        %p657 = pneg %p333
        %p658 = pneg %p357
        %p659 = pneg %p354
        %p660 = pneg %p383
        %p661 = pneg %p380
        %s662 = sand.u32 %s370, 1
        %s663 = scalar_lea.sflag [#allocation5], %s662
        %s664 = sand.u32 %s370, 1
        %s665 = smul.addr %s664, 256
        %s666 = scalar_lea.vmem [#allocation20], %s665
        %p667 = pneg %p409
        %p668 = pneg %p406
        %s669 = sand.u32 %s396, 1
        %s670 = scalar_lea.sflag [#allocation22], %s669
        %s671 = sand.u32 %s396, 1
        %s672 = smul.addr %s671, 128
        %s673 = scalar_lea.vmem [#allocation21], %s672
        %675 = vst [vmem:[#allocation2] sm:$0xf] 0
        %676 = vst [vmem:[#allocation2 + $0x4] sm:$0xf] 0
        %677 = vst [vmem:[#allocation2 + $0x8] sm:$0x1] 0
        %s678 = scalar_lea.vmem [#allocation2], 204
        %679 = vst [vmem:[%s678] sm:$0xf] 0
        %680 = vst [vmem:[%s678 + $0x4] sm:$0xf] 0
        %681 = vst [vmem:[%s678 + $0x8] sm:$0x1] 0
        %s682 = scalar_lea.vmem [#allocation2], 12
        %vm683 = vcmask 1040384
        %vm684 = vsmask.f32 256
        %vm685 = vmand %vm683, %vm684
        %v686 = vld [vmem:[%s682] sm:$0x1]
        %v687 = vsel %vm685, 0, %v686
        %688 = vst [vmem:[%s682] sm:$0x1] %v687
        %v689 = vld [vmem:[%s682 + $0xc] sm:$0x1]
        %v690 = vsel %vm685, 0, %v689
        %691 = vst [vmem:[%s682 + $0xc] sm:$0x1] %v690
        %v692 = vld [vmem:[%s682 + $0x18] sm:$0x1]
        %v693 = vsel %vm685, 0, %v692
        %694 = vst [vmem:[%s682 + $0x18] sm:$0x1] %v693
        %v695 = vld [vmem:[%s682 + $0x24] sm:$0x1]
        %v696 = vsel %vm685, 0, %v695
        %697 = vst [vmem:[%s682 + $0x24] sm:$0x1] %v696
        %v698 = vld [vmem:[%s682 + $0x30] sm:$0x1]
        %v699 = vsel %vm685, 0, %v698
        %700 = vst [vmem:[%s682 + $0x30] sm:$0x1] %v699
        %v701 = vld [vmem:[%s682 + $0x3c] sm:$0x1]
        %v702 = vsel %vm685, 0, %v701
        %703 = vst [vmem:[%s682 + $0x3c] sm:$0x1] %v702
        %v704 = vld [vmem:[%s682 + $0x48] sm:$0x1]
        %v705 = vsel %vm685, 0, %v704
        %706 = vst [vmem:[%s682 + $0x48] sm:$0x1] %v705
        %v707 = vld [vmem:[%s682 + $0x54] sm:$0x1]
        %v708 = vsel %vm685, 0, %v707
        %709 = vst [vmem:[%s682 + $0x54] sm:$0x1] %v708
        %v710 = vld [vmem:[%s682 + $0x60] sm:$0x1]
        %v711 = vsel %vm685, 0, %v710
        %712 = vst [vmem:[%s682 + $0x60] sm:$0x1] %v711
        %v713 = vld [vmem:[%s682 + $0x6c] sm:$0x1]
        %v714 = vsel %vm685, 0, %v713
        %715 = vst [vmem:[%s682 + $0x6c] sm:$0x1] %v714
        %v716 = vld [vmem:[%s682 + $0x78] sm:$0x1]
        %v717 = vsel %vm685, 0, %v716
        %718 = vst [vmem:[%s682 + $0x78] sm:$0x1] %v717
        %v719 = vld [vmem:[%s682 + $0x84] sm:$0x1]
        %v720 = vsel %vm685, 0, %v719
        %721 = vst [vmem:[%s682 + $0x84] sm:$0x1] %v720
        %v722 = vld [vmem:[%s682 + $0x90] sm:$0x1]
        %v723 = vsel %vm685, 0, %v722
        %724 = vst [vmem:[%s682 + $0x90] sm:$0x1] %v723
        %v725 = vld [vmem:[%s682 + $0x9c] sm:$0x1]
        %v726 = vsel %vm685, 0, %v725
        %727 = vst [vmem:[%s682 + $0x9c] sm:$0x1] %v726
        %v728 = vld [vmem:[%s682 + $0xa8] sm:$0x1]
        %v729 = vsel %vm685, 0, %v728
        %730 = vst [vmem:[%s682 + $0xa8] sm:$0x1] %v729
        %v731 = vld [vmem:[%s682 + $0xb4] sm:$0x1]
        %v732 = vsel %vm685, 0, %v731
        %733 = vst [vmem:[%s682 + $0xb4] sm:$0x1] %v732
        %vm734 = vsmask.f32 7938
        %vm735 = vmand %vm683, %vm734
        %v736 = vld [vmem:[%s682 + $0x8] sm:$0x1]
        %v737 = vsel %vm735, 0, %v736
        %738 = vst [vmem:[%s682 + $0x8] sm:$0x1] %v737
        %v739 = vld [vmem:[%s682 + $0x14] sm:$0x1]
        %v740 = vsel %vm735, 0, %v739
        %741 = vst [vmem:[%s682 + $0x14] sm:$0x1] %v740
        %v742 = vld [vmem:[%s682 + $0x20] sm:$0x1]
        %v743 = vsel %vm735, 0, %v742
        %744 = vst [vmem:[%s682 + $0x20] sm:$0x1] %v743
        %v745 = vld [vmem:[%s682 + $0x2c] sm:$0x1]
        %v746 = vsel %vm735, 0, %v745
        %747 = vst [vmem:[%s682 + $0x2c] sm:$0x1] %v746
        %v748 = vld [vmem:[%s682 + $0x38] sm:$0x1]
        %v749 = vsel %vm735, 0, %v748
        %750 = vst [vmem:[%s682 + $0x38] sm:$0x1] %v749
        %v751 = vld [vmem:[%s682 + $0x44] sm:$0x1]
        %v752 = vsel %vm735, 0, %v751
        %753 = vst [vmem:[%s682 + $0x44] sm:$0x1] %v752
        %v754 = vld [vmem:[%s682 + $0x50] sm:$0x1]
        %v755 = vsel %vm735, 0, %v754
        %756 = vst [vmem:[%s682 + $0x50] sm:$0x1] %v755
        %v757 = vld [vmem:[%s682 + $0x5c] sm:$0x1]
        %v758 = vsel %vm735, 0, %v757
        %759 = vst [vmem:[%s682 + $0x5c] sm:$0x1] %v758
        %v760 = vld [vmem:[%s682 + $0x68] sm:$0x1]
        %v761 = vsel %vm735, 0, %v760
        %762 = vst [vmem:[%s682 + $0x68] sm:$0x1] %v761
        %v763 = vld [vmem:[%s682 + $0x74] sm:$0x1]
        %v764 = vsel %vm735, 0, %v763
        %765 = vst [vmem:[%s682 + $0x74] sm:$0x1] %v764
        %v766 = vld [vmem:[%s682 + $0x80] sm:$0x1]
        %v767 = vsel %vm735, 0, %v766
        %768 = vst [vmem:[%s682 + $0x80] sm:$0x1] %v767
        %v769 = vld [vmem:[%s682 + $0x8c] sm:$0x1]
        %v770 = vsel %vm735, 0, %v769
        %771 = vst [vmem:[%s682 + $0x8c] sm:$0x1] %v770
        %v772 = vld [vmem:[%s682 + $0x98] sm:$0x1]
        %v773 = vsel %vm735, 0, %v772
        %774 = vst [vmem:[%s682 + $0x98] sm:$0x1] %v773
        %v775 = vld [vmem:[%s682 + $0xa4] sm:$0x1]
        %v776 = vsel %vm735, 0, %v775
        %777 = vst [vmem:[%s682 + $0xa4] sm:$0x1] %v776
        %v778 = vld [vmem:[%s682 + $0xb0] sm:$0x1]
        %v779 = vsel %vm735, 0, %v778
        %780 = vst [vmem:[%s682 + $0xb0] sm:$0x1] %v779
        %v781 = vld [vmem:[%s682 + $0xbc] sm:$0x1]
        %v782 = vsel %vm735, 0, %v781
        %783 = vst [vmem:[%s682 + $0xbc] sm:$0x1] %v782
        %v784 = vld [vmem:[%s584] sm:$0xff]
        %v785 = vld [vmem:[%s584 + $0x8] sm:$0xff]
        %v786 = vld [vmem:[%s584 + $0x10] sm:$0xff]
        %v787 = vld [vmem:[%s584 + $0x18] sm:$0xff]
        %v788 = vld [vmem:[%s584 + $0x20] sm:$0xff]
        %v789 = vld [vmem:[%s584 + $0x28] sm:$0xff]
        %v790 = vld [vmem:[%s584 + $0x30] sm:$0xff]
        %v791 = vld [vmem:[%s584 + $0x38] sm:$0xff]
        %v792 = vld [vmem:[%s584 + $0x40] sm:$0xff]
        %v793 = vld [vmem:[%s584 + $0x48] sm:$0xff]
        %v794 = vld [vmem:[%s584 + $0x50] sm:$0xff]
        %v795 = vld [vmem:[%s584 + $0x58] sm:$0xff]
        %v796 = vld [vmem:[%s584 + $0x60] sm:$0xff]
        %v797 = vld [vmem:[%s584 + $0x68] sm:$0xff]
        %v798 = vld [vmem:[%s584 + $0x70] sm:$0xff]
        %v799 = vld [vmem:[%s584 + $0x78] sm:$0xff]
        %v800 = vld [vmem:[%s584 + $0x80] sm:$0xff]
        %v801 = vld [vmem:[%s584 + $0x88] sm:$0xff]
        %v802 = vld [vmem:[%s584 + $0x90] sm:$0xff]
        %v803 = vld [vmem:[%s584 + $0x98] sm:$0xff]
        %v804 = vld [vmem:[%s584 + $0xa0] sm:$0xff]
        %v805 = vld [vmem:[%s584 + $0xa8] sm:$0xff]
        %v806 = vld [vmem:[%s584 + $0xb0] sm:$0xff]
        %v807 = vld [vmem:[%s584 + $0xb8] sm:$0xff]
        %v808 = vld [vmem:[%s584 + $0xc0] sm:$0xff]
        %v809 = vld [vmem:[%s584 + $0xc8] sm:$0xff]
        %v810 = vld [vmem:[%s584 + $0xd0] sm:$0xff]
        %v811 = vld [vmem:[%s584 + $0xd8] sm:$0xff]
        %v812 = vld [vmem:[%s584 + $0xe0] sm:$0xff]
        %v813 = vld [vmem:[%s584 + $0xe8] sm:$0xff]
        %v814 = vld [vmem:[%s584 + $0xf0] sm:$0xff]
        %v815 = vld [vmem:[%s584 + $0xf8] sm:$0xff]
        %v816 = vmax.f32 %v784, 0.0
        %v817 = vmax.f32 %v785, 0.0
        %v818 = vmax.f32 %v786, 0.0
        %v819 = vmax.f32 %v787, 0.0
        %v820 = vmax.f32 %v788, 0.0
        %v821 = vmax.f32 %v789, 0.0
        %v822 = vmax.f32 %v790, 0.0
        %v823 = vmax.f32 %v791, 0.0
        %v824 = vmax.f32 %v792, 0.0
        %v825 = vmax.f32 %v793, 0.0
        %v826 = vmax.f32 %v794, 0.0
        %v827 = vmax.f32 %v795, 0.0
        %v828 = vmax.f32 %v796, 0.0
        %v829 = vmax.f32 %v797, 0.0
        %v830 = vmax.f32 %v798, 0.0
        %v831 = vmax.f32 %v799, 0.0
        %v832 = vmax.f32 %v800, 0.0
        %v833 = vmax.f32 %v801, 0.0
        %v834 = vmax.f32 %v802, 0.0
        %v835 = vmax.f32 %v803, 0.0
        %v836 = vmax.f32 %v804, 0.0
        %v837 = vmax.f32 %v805, 0.0
        %v838 = vmax.f32 %v806, 0.0
        %v839 = vmax.f32 %v807, 0.0
        %v840 = vmax.f32 %v808, 0.0
        %v841 = vmax.f32 %v809, 0.0
        %v842 = vmax.f32 %v810, 0.0
        %v843 = vmax.f32 %v811, 0.0
        %v844 = vmax.f32 %v812, 0.0
        %v845 = vmax.f32 %v813, 0.0
        %v846 = vmax.f32 %v814, 0.0
        %v847 = vmax.f32 %v815, 0.0
        %v848 = vpack.c.bf16 %v817, %v816
        %v849 = vpack.c.bf16 %v819, %v818
        %v850 = vpack.c.bf16 %v821, %v820
        %v851 = vpack.c.bf16 %v823, %v822
        %v852 = vpack.c.bf16 %v825, %v824
        %v853 = vpack.c.bf16 %v827, %v826
        %v854 = vpack.c.bf16 %v829, %v828
        %v855 = vpack.c.bf16 %v831, %v830
        %v856 = vpack.c.bf16 %v833, %v832
        %v857 = vpack.c.bf16 %v835, %v834
        %v858 = vpack.c.bf16 %v837, %v836
        %v859 = vpack.c.bf16 %v839, %v838
        %v860 = vpack.c.bf16 %v841, %v840
        %v861 = vpack.c.bf16 %v843, %v842
        %v862 = vpack.c.bf16 %v845, %v844
        %v863 = vpack.c.bf16 %v847, %v846
        %v880 = vunpack.c.l.b16 %v848
        %v881 = vunpack.c.h.b16 %v848
        %v882 = vunpack.c.l.b16 %v849
        %v883 = vunpack.c.h.b16 %v849
        %v884 = vunpack.c.l.b16 %v850
        %v885 = vunpack.c.h.b16 %v850
        %v886 = vunpack.c.l.b16 %v851
        %v887 = vunpack.c.h.b16 %v851
        %v888 = vunpack.c.l.b16 %v852
        %v889 = vunpack.c.h.b16 %v852
        %v890 = vunpack.c.l.b16 %v853
        %v891 = vunpack.c.h.b16 %v853
        %v892 = vunpack.c.l.b16 %v854
        %v893 = vunpack.c.h.b16 %v854
        %v894 = vunpack.c.l.b16 %v855
        %v895 = vunpack.c.h.b16 %v855
        %v896 = vunpack.c.l.b16 %v856
        %v897 = vunpack.c.h.b16 %v856
        %v898 = vunpack.c.l.b16 %v857
        %v899 = vunpack.c.h.b16 %v857
        %v900 = vunpack.c.l.b16 %v858
        %v901 = vunpack.c.h.b16 %v858
        %v902 = vunpack.c.l.b16 %v859
        %v903 = vunpack.c.h.b16 %v859
        %v904 = vunpack.c.l.b16 %v860
        %v905 = vunpack.c.h.b16 %v860
        %v906 = vunpack.c.l.b16 %v861
        %v907 = vunpack.c.h.b16 %v861
        %v908 = vunpack.c.l.b16 %v862
        %v909 = vunpack.c.h.b16 %v862
        %v910 = vunpack.c.l.b16 %v863
        %v911 = vunpack.c.h.b16 %v863
        %v912 = vpack.c.b16 %v880, %v880
        %v913 = vpack.c.b16 %v881, %v881
        %v914 = vpack.c.b16 %v882, %v882
        %v915 = vpack.c.b16 %v883, %v883
        %v916 = vpack.c.b16 %v884, %v884
        %v917 = vpack.c.b16 %v885, %v885
        %v918 = vpack.c.b16 %v886, %v886
        %v919 = vpack.c.b16 %v887, %v887
        %v920 = vpack.c.b16 %v888, %v888
        %v921 = vpack.c.b16 %v889, %v889
        %v922 = vpack.c.b16 %v890, %v890
        %v923 = vpack.c.b16 %v891, %v891
        %v924 = vpack.c.b16 %v892, %v892
        %v925 = vpack.c.b16 %v893, %v893
        %v926 = vpack.c.b16 %v894, %v894
        %v927 = vpack.c.b16 %v895, %v895
        %v928 = vpack.c.b16 %v896, %v896
        %v929 = vpack.c.b16 %v897, %v897
        %v930 = vpack.c.b16 %v898, %v898
        %v931 = vpack.c.b16 %v899, %v899
        %v932 = vpack.c.b16 %v900, %v900
        %v933 = vpack.c.b16 %v901, %v901
        %v934 = vpack.c.b16 %v902, %v902
        %v935 = vpack.c.b16 %v903, %v903
        %v936 = vpack.c.b16 %v904, %v904
        %v937 = vpack.c.b16 %v905, %v905
        %v938 = vpack.c.b16 %v906, %v906
        %v939 = vpack.c.b16 %v907, %v907
        %v940 = vpack.c.b16 %v908, %v908
        %v941 = vpack.c.b16 %v909, %v909
        %v942 = vpack.c.b16 %v910, %v910
        %v943 = vpack.c.b16 %v911, %v911
        %vm944 = vsmask.f32 4368
        %vm945 = vmor %vm684, %vm944
        %v947 = vshrl.u32 %v912, 16
        %v949 = vrot.slane %v947, 7
        %v950 = vshll.u32 %v912, 16
        %v952 = vor.u32 %v949, %v950
        %v953 = vrot.slane %v949, 4
        %v955 = vshrl.u32 %v913, 16
        %v957 = vrot.slane %v955, 7
        %v958 = vshll.u32 %v913, 16
        %v960 = vor.u32 %v957, %v958
        %v961 = vsel %vm945, %v953, %v960
        %v962 = vrot.slane %v957, 4
        %v964 = vshrl.u32 %v914, 16
        %v966 = vrot.slane %v964, 7
        %v967 = vshll.u32 %v914, 16
        %v969 = vor.u32 %v966, %v967
        %v970 = vrot.slane %v966, 4
        %v972 = vshrl.u32 %v915, 16
        %v974 = vrot.slane %v972, 7
        %v975 = vshll.u32 %v915, 16
        %v977 = vor.u32 %v974, %v975
        %v978 = vsel %vm945, %v970, %v977
        %v979 = vrot.slane %v974, 4
        %v981 = vshrl.u32 %v916, 16
        %v983 = vrot.slane %v981, 7
        %v984 = vshll.u32 %v916, 16
        %v986 = vor.u32 %v983, %v984
        %v987 = vrot.slane %v983, 4
        %v989 = vshrl.u32 %v917, 16
        %v991 = vrot.slane %v989, 7
        %v992 = vshll.u32 %v917, 16
        %v994 = vor.u32 %v991, %v992
        %v995 = vsel %vm945, %v987, %v994
        %v996 = vrot.slane %v991, 4
        %v998 = vshrl.u32 %v918, 16
        %v1000 = vrot.slane %v998, 7
        %v1001 = vshll.u32 %v918, 16
        %v1003 = vor.u32 %v1000, %v1001
        %v1004 = vrot.slane %v1000, 4
        %v1006 = vshrl.u32 %v919, 16
        %v1008 = vrot.slane %v1006, 7
        %v1009 = vshll.u32 %v919, 16
        %v1011 = vor.u32 %v1008, %v1009
        %v1012 = vsel %vm945, %v1004, %v1011
        %v1013 = vrot.slane %v1008, 4
        %v1015 = vshrl.u32 %v920, 16
        %v1017 = vrot.slane %v1015, 7
        %v1018 = vshll.u32 %v920, 16
        %v1020 = vor.u32 %v1017, %v1018
        %v1021 = vrot.slane %v1017, 4
        %v1023 = vshrl.u32 %v921, 16
        %v1025 = vrot.slane %v1023, 7
        %v1026 = vshll.u32 %v921, 16
        %v1028 = vor.u32 %v1025, %v1026
        %v1029 = vsel %vm945, %v1021, %v1028
        %v1030 = vrot.slane %v1025, 4
        %v1032 = vshrl.u32 %v922, 16
        %v1034 = vrot.slane %v1032, 7
        %v1035 = vshll.u32 %v922, 16
        %v1037 = vor.u32 %v1034, %v1035
        %v1038 = vrot.slane %v1034, 4
        %v1040 = vshrl.u32 %v923, 16
        %v1042 = vrot.slane %v1040, 7
        %v1043 = vshll.u32 %v923, 16
        %v1045 = vor.u32 %v1042, %v1043
        %v1046 = vsel %vm945, %v1038, %v1045
        %v1047 = vrot.slane %v1042, 4
        %v1049 = vshrl.u32 %v924, 16
        %v1051 = vrot.slane %v1049, 7
        %v1052 = vshll.u32 %v924, 16
        %v1054 = vor.u32 %v1051, %v1052
        %v1055 = vrot.slane %v1051, 4
        %v1057 = vshrl.u32 %v925, 16
        %v1059 = vrot.slane %v1057, 7
        %v1060 = vshll.u32 %v925, 16
        %v1062 = vor.u32 %v1059, %v1060
        %v1063 = vsel %vm945, %v1055, %v1062
        %v1064 = vrot.slane %v1059, 4
        %v1066 = vshrl.u32 %v926, 16
        %v1068 = vrot.slane %v1066, 7
        %v1069 = vshll.u32 %v926, 16
        %v1071 = vor.u32 %v1068, %v1069
        %v1072 = vrot.slane %v1068, 4
        %v1074 = vshrl.u32 %v927, 16
        %v1076 = vrot.slane %v1074, 7
        %v1077 = vshll.u32 %v927, 16
        %v1079 = vor.u32 %v1076, %v1077
        %v1080 = vsel %vm945, %v1072, %v1079
        %v1081 = vrot.slane %v1076, 4
        %v1083 = vshrl.u32 %v928, 16
        %v1085 = vrot.slane %v1083, 7
        %v1086 = vshll.u32 %v928, 16
        %v1088 = vor.u32 %v1085, %v1086
        %v1089 = vrot.slane %v1085, 4
        %v1091 = vshrl.u32 %v929, 16
        %v1093 = vrot.slane %v1091, 7
        %v1094 = vshll.u32 %v929, 16
        %v1096 = vor.u32 %v1093, %v1094
        %v1097 = vsel %vm945, %v1089, %v1096
        %v1098 = vrot.slane %v1093, 4
        %v1100 = vshrl.u32 %v930, 16
        %v1102 = vrot.slane %v1100, 7
        %v1103 = vshll.u32 %v930, 16
        %v1105 = vor.u32 %v1102, %v1103
        %v1106 = vrot.slane %v1102, 4
        %v1108 = vshrl.u32 %v931, 16
        %v1110 = vrot.slane %v1108, 7
        %v1111 = vshll.u32 %v931, 16
        %v1113 = vor.u32 %v1110, %v1111
        %v1114 = vsel %vm945, %v1106, %v1113
        %v1115 = vrot.slane %v1110, 4
        %v1117 = vshrl.u32 %v932, 16
        %v1119 = vrot.slane %v1117, 7
        %v1120 = vshll.u32 %v932, 16
        %v1122 = vor.u32 %v1119, %v1120
        %v1123 = vrot.slane %v1119, 4
        %v1125 = vshrl.u32 %v933, 16
        %v1127 = vrot.slane %v1125, 7
        %v1128 = vshll.u32 %v933, 16
        %v1130 = vor.u32 %v1127, %v1128
        %v1131 = vsel %vm945, %v1123, %v1130
        %v1132 = vrot.slane %v1127, 4
        %v1134 = vshrl.u32 %v934, 16
        %v1136 = vrot.slane %v1134, 7
        %v1137 = vshll.u32 %v934, 16
        %v1139 = vor.u32 %v1136, %v1137
        %v1140 = vrot.slane %v1136, 4
        %v1142 = vshrl.u32 %v935, 16
        %v1144 = vrot.slane %v1142, 7
        %v1145 = vshll.u32 %v935, 16
        %v1147 = vor.u32 %v1144, %v1145
        %v1148 = vsel %vm945, %v1140, %v1147
        %v1149 = vrot.slane %v1144, 4
        %v1151 = vshrl.u32 %v936, 16
        %v1153 = vrot.slane %v1151, 7
        %v1154 = vshll.u32 %v936, 16
        %v1156 = vor.u32 %v1153, %v1154
        %v1157 = vrot.slane %v1153, 4
        %v1159 = vshrl.u32 %v937, 16
        %v1161 = vrot.slane %v1159, 7
        %v1162 = vshll.u32 %v937, 16
        %v1164 = vor.u32 %v1161, %v1162
        %v1165 = vsel %vm945, %v1157, %v1164
        %v1166 = vrot.slane %v1161, 4
        %v1168 = vshrl.u32 %v938, 16
        %v1170 = vrot.slane %v1168, 7
        %v1171 = vshll.u32 %v938, 16
        %v1173 = vor.u32 %v1170, %v1171
        %v1174 = vrot.slane %v1170, 4
        %v1176 = vshrl.u32 %v939, 16
        %v1178 = vrot.slane %v1176, 7
        %v1179 = vshll.u32 %v939, 16
        %v1181 = vor.u32 %v1178, %v1179
        %v1182 = vsel %vm945, %v1174, %v1181
        %v1183 = vrot.slane %v1178, 4
        %v1185 = vshrl.u32 %v940, 16
        %v1187 = vrot.slane %v1185, 7
        %v1188 = vshll.u32 %v940, 16
        %v1190 = vor.u32 %v1187, %v1188
        %v1191 = vrot.slane %v1187, 4
        %v1193 = vshrl.u32 %v941, 16
        %v1195 = vrot.slane %v1193, 7
        %v1196 = vshll.u32 %v941, 16
        %v1198 = vor.u32 %v1195, %v1196
        %v1199 = vsel %vm945, %v1191, %v1198
        %v1200 = vrot.slane %v1195, 4
        %v1202 = vshrl.u32 %v942, 16
        %v1204 = vrot.slane %v1202, 7
        %v1205 = vshll.u32 %v942, 16
        %v1207 = vor.u32 %v1204, %v1205
        %v1208 = vrot.slane %v1204, 4
        %v1210 = vshrl.u32 %v943, 16
        %v1212 = vrot.slane %v1210, 7
        %v1213 = vshll.u32 %v943, 16
        %v1215 = vor.u32 %v1212, %v1213
        %v1216 = vsel %vm945, %v1208, %v1215
        %v1217 = vrot.slane %v1212, 4
        %vm1266 = vcmask 1043456
        %vm1267 = vmand %vm1266, %vm734
        %v1268 = vld [vmem:[%s682] sm:$0xf]
        %v1269 = vsel %vm1267, %v952, %v1268
        %1270 = vst [vmem:[%s682] sm:$0xf] %v1269
        %1271 = vst [vmem:[%s682 + $0x4] sm:$0xf] %v961
        %v1272 = vld [vmem:[%s682 + $0x8] sm:$0x1]
        %v1273 = vsel %vm685, %v962, %v1272
        %1274 = vst [vmem:[%s682 + $0x8] sm:$0x1] %v1273
        %v1275 = vld [vmem:[%s682 + $0xc] sm:$0xf]
        %v1276 = vsel %vm1267, %v969, %v1275
        %1277 = vst [vmem:[%s682 + $0xc] sm:$0xf] %v1276
        %1278 = vst [vmem:[%s682 + $0x10] sm:$0xf] %v978
        %v1279 = vld [vmem:[%s682 + $0x14] sm:$0x1]
        %v1280 = vsel %vm685, %v979, %v1279
        %1281 = vst [vmem:[%s682 + $0x14] sm:$0x1] %v1280
        %v1282 = vld [vmem:[%s682 + $0x18] sm:$0xf]
        %v1283 = vsel %vm1267, %v986, %v1282
        %1284 = vst [vmem:[%s682 + $0x18] sm:$0xf] %v1283
        %1285 = vst [vmem:[%s682 + $0x1c] sm:$0xf] %v995
        %v1286 = vld [vmem:[%s682 + $0x20] sm:$0x1]
        %v1287 = vsel %vm685, %v996, %v1286
        %1288 = vst [vmem:[%s682 + $0x20] sm:$0x1] %v1287
        %v1289 = vld [vmem:[%s682 + $0x24] sm:$0xf]
        %v1290 = vsel %vm1267, %v1003, %v1289
        %1291 = vst [vmem:[%s682 + $0x24] sm:$0xf] %v1290
        %1292 = vst [vmem:[%s682 + $0x28] sm:$0xf] %v1012
        %v1293 = vld [vmem:[%s682 + $0x2c] sm:$0x1]
        %v1294 = vsel %vm685, %v1013, %v1293
        %1295 = vst [vmem:[%s682 + $0x2c] sm:$0x1] %v1294
        %v1296 = vld [vmem:[%s682 + $0x30] sm:$0xf]
        %v1297 = vsel %vm1267, %v1020, %v1296
        %1298 = vst [vmem:[%s682 + $0x30] sm:$0xf] %v1297
        %1299 = vst [vmem:[%s682 + $0x34] sm:$0xf] %v1029
        %v1300 = vld [vmem:[%s682 + $0x38] sm:$0x1]
        %v1301 = vsel %vm685, %v1030, %v1300
        %1302 = vst [vmem:[%s682 + $0x38] sm:$0x1] %v1301
        %v1303 = vld [vmem:[%s682 + $0x3c] sm:$0xf]
        %v1304 = vsel %vm1267, %v1037, %v1303
        %1305 = vst [vmem:[%s682 + $0x3c] sm:$0xf] %v1304
        %1306 = vst [vmem:[%s682 + $0x40] sm:$0xf] %v1046
        %v1307 = vld [vmem:[%s682 + $0x44] sm:$0x1]
        %v1308 = vsel %vm685, %v1047, %v1307
        %1309 = vst [vmem:[%s682 + $0x44] sm:$0x1] %v1308
        %v1310 = vld [vmem:[%s682 + $0x48] sm:$0xf]
        %v1311 = vsel %vm1267, %v1054, %v1310
        %1312 = vst [vmem:[%s682 + $0x48] sm:$0xf] %v1311
        %1313 = vst [vmem:[%s682 + $0x4c] sm:$0xf] %v1063
        %v1314 = vld [vmem:[%s682 + $0x50] sm:$0x1]
        %v1315 = vsel %vm685, %v1064, %v1314
        %1316 = vst [vmem:[%s682 + $0x50] sm:$0x1] %v1315
        %v1317 = vld [vmem:[%s682 + $0x54] sm:$0xf]
        %v1318 = vsel %vm1267, %v1071, %v1317
        %1319 = vst [vmem:[%s682 + $0x54] sm:$0xf] %v1318
        %1320 = vst [vmem:[%s682 + $0x58] sm:$0xf] %v1080
        %v1321 = vld [vmem:[%s682 + $0x5c] sm:$0x1]
        %v1322 = vsel %vm685, %v1081, %v1321
        %1323 = vst [vmem:[%s682 + $0x5c] sm:$0x1] %v1322
        %v1324 = vld [vmem:[%s682 + $0x60] sm:$0xf]
        %v1325 = vsel %vm1267, %v1088, %v1324
        %1326 = vst [vmem:[%s682 + $0x60] sm:$0xf] %v1325
        %1327 = vst [vmem:[%s682 + $0x64] sm:$0xf] %v1097
        %v1328 = vld [vmem:[%s682 + $0x68] sm:$0x1]
        %v1329 = vsel %vm685, %v1098, %v1328
        %1330 = vst [vmem:[%s682 + $0x68] sm:$0x1] %v1329
        %v1331 = vld [vmem:[%s682 + $0x6c] sm:$0xf]
        %v1332 = vsel %vm1267, %v1105, %v1331
        %1333 = vst [vmem:[%s682 + $0x6c] sm:$0xf] %v1332
        %1334 = vst [vmem:[%s682 + $0x70] sm:$0xf] %v1114
        %v1335 = vld [vmem:[%s682 + $0x74] sm:$0x1]
        %v1336 = vsel %vm685, %v1115, %v1335
        %1337 = vst [vmem:[%s682 + $0x74] sm:$0x1] %v1336
        %v1338 = vld [vmem:[%s682 + $0x78] sm:$0xf]
        %v1339 = vsel %vm1267, %v1122, %v1338
        %1340 = vst [vmem:[%s682 + $0x78] sm:$0xf] %v1339
        %1341 = vst [vmem:[%s682 + $0x7c] sm:$0xf] %v1131
        %v1342 = vld [vmem:[%s682 + $0x80] sm:$0x1]
        %v1343 = vsel %vm685, %v1132, %v1342
        %1344 = vst [vmem:[%s682 + $0x80] sm:$0x1] %v1343
        %v1345 = vld [vmem:[%s682 + $0x84] sm:$0xf]
        %v1346 = vsel %vm1267, %v1139, %v1345
        %1347 = vst [vmem:[%s682 + $0x84] sm:$0xf] %v1346
        %1348 = vst [vmem:[%s682 + $0x88] sm:$0xf] %v1148
        %v1349 = vld [vmem:[%s682 + $0x8c] sm:$0x1]
        %v1350 = vsel %vm685, %v1149, %v1349
        %1351 = vst [vmem:[%s682 + $0x8c] sm:$0x1] %v1350
        %v1352 = vld [vmem:[%s682 + $0x90] sm:$0xf]
        %v1353 = vsel %vm1267, %v1156, %v1352
        %1354 = vst [vmem:[%s682 + $0x90] sm:$0xf] %v1353
        %1355 = vst [vmem:[%s682 + $0x94] sm:$0xf] %v1165
        %v1356 = vld [vmem:[%s682 + $0x98] sm:$0x1]
        %v1357 = vsel %vm685, %v1166, %v1356
        %1358 = vst [vmem:[%s682 + $0x98] sm:$0x1] %v1357
        %v1359 = vld [vmem:[%s682 + $0x9c] sm:$0xf]
        %v1360 = vsel %vm1267, %v1173, %v1359
        %1361 = vst [vmem:[%s682 + $0x9c] sm:$0xf] %v1360
        %1362 = vst [vmem:[%s682 + $0xa0] sm:$0xf] %v1182
        %v1363 = vld [vmem:[%s682 + $0xa4] sm:$0x1]
        %v1364 = vsel %vm685, %v1183, %v1363
        %1365 = vst [vmem:[%s682 + $0xa4] sm:$0x1] %v1364
        %v1366 = vld [vmem:[%s682 + $0xa8] sm:$0xf]
        %v1367 = vsel %vm1267, %v1190, %v1366
        %1368 = vst [vmem:[%s682 + $0xa8] sm:$0xf] %v1367
        %1369 = vst [vmem:[%s682 + $0xac] sm:$0xf] %v1199
        %v1370 = vld [vmem:[%s682 + $0xb0] sm:$0x1]
        %v1371 = vsel %vm685, %v1200, %v1370
        %1372 = vst [vmem:[%s682 + $0xb0] sm:$0x1] %v1371
        %v1373 = vld [vmem:[%s682 + $0xb4] sm:$0xf]
        %v1374 = vsel %vm1267, %v1207, %v1373
        %1375 = vst [vmem:[%s682 + $0xb4] sm:$0xf] %v1374
        %1376 = vst [vmem:[%s682 + $0xb8] sm:$0xf] %v1216
        %v1377 = vld [vmem:[%s682 + $0xbc] sm:$0x1]
        %v1378 = vsel %vm685, %v1217, %v1377
        %1379 = vst [vmem:[%s682 + $0xbc] sm:$0x1] %v1378
        %v1380 = vld [vmem:[#allocation6] sm:$0xf]
        %v1381 = vld [vmem:[#allocation6 + $0x4] sm:$0x1]
        %v1382 = vld [vmem:[#allocation2] sm:$0xf]
        %v1383 = vld [vmem:[#allocation2 + $0x4] sm:$0xf]
        %v1384 = vld [vmem:[#allocation2 + $0xc] sm:$0xf]
        %v1385 = vld [vmem:[#allocation2 + $0x10] sm:$0xf]
        %v1386 = vld [vmem:[#allocation2 + $0x18] sm:$0xf]
        %v1387 = vld [vmem:[#allocation2 + $0x1c] sm:$0xf]
        %v1388 = vld [vmem:[#allocation2 + $0x24] sm:$0xf]
        %v1389 = vld [vmem:[#allocation2 + $0x28] sm:$0xf]
        %v1390 = vld [vmem:[#allocation2 + $0x30] sm:$0xf]
        %v1391 = vld [vmem:[#allocation2 + $0x34] sm:$0xf]
        %v1392 = vld [vmem:[#allocation2 + $0x3c] sm:$0xf]
        %v1393 = vld [vmem:[#allocation2 + $0x40] sm:$0xf]
        %v1394 = vld [vmem:[#allocation2 + $0x48] sm:$0xf]
        %v1395 = vld [vmem:[#allocation2 + $0x4c] sm:$0xf]
        %v1396 = vld [vmem:[#allocation2 + $0x54] sm:$0xf]
        %v1397 = vld [vmem:[#allocation2 + $0x58] sm:$0xf]
        %v1398 = vld [vmem:[#allocation2 + $0x60] sm:$0xf]
        %v1399 = vld [vmem:[#allocation2 + $0x64] sm:$0xf]
        %v1400 = vld [vmem:[#allocation2 + $0x6c] sm:$0xf]
        %v1401 = vld [vmem:[#allocation2 + $0x70] sm:$0xf]
        %v1402 = vld [vmem:[#allocation2 + $0x78] sm:$0xf]
        %v1403 = vld [vmem:[#allocation2 + $0x7c] sm:$0xf]
        %v1404 = vld [vmem:[#allocation2 + $0x84] sm:$0xf]
        %v1405 = vld [vmem:[#allocation2 + $0x88] sm:$0xf]
        %v1406 = vld [vmem:[#allocation2 + $0x90] sm:$0xf]
        %v1407 = vld [vmem:[#allocation2 + $0x94] sm:$0xf]
        %v1408 = vld [vmem:[#allocation2 + $0x9c] sm:$0xf]
        %v1409 = vld [vmem:[#allocation2 + $0xa0] sm:$0xf]
        %v1410 = vld [vmem:[#allocation2 + $0xa8] sm:$0xf]
        %v1411 = vld [vmem:[#allocation2 + $0xac] sm:$0xf]
        %v1412 = vld [vmem:[#allocation2 + $0xb4] sm:$0xf]
        %v1413 = vld [vmem:[#allocation2 + $0xb8] sm:$0xf]
        %v1415 = vpack.i.b16 %v1380, %v1380
        %v1417 = vlaneseq
        %v1418 = vshrl.u32 %v1417, 7
        %v1419 = vsub.s32 0, %v1418
        %v1420 = vrot.slane %v1415, %v1419
        %v1422 = vunpack.c.l.b16 %v1420
        %v1423 = vpack.c.b16 %v1422, %v1422
        %v1425 = vmul.bf16 %v1382, %v1423
        %v1426 = vmul.bf16 %v1383, %v1423
        %v1427 = vmul.bf16 %v1384, %v1423
        %v1428 = vmul.bf16 %v1385, %v1423
        %v1429 = vmul.bf16 %v1386, %v1423
        %v1430 = vmul.bf16 %v1387, %v1423
        %v1431 = vmul.bf16 %v1388, %v1423
        %v1432 = vmul.bf16 %v1389, %v1423
        %v1433 = vmul.bf16 %v1390, %v1423
        %v1434 = vmul.bf16 %v1391, %v1423
        %v1435 = vmul.bf16 %v1392, %v1423
        %v1436 = vmul.bf16 %v1393, %v1423
        %v1437 = vmul.bf16 %v1394, %v1423
        %v1438 = vmul.bf16 %v1395, %v1423
        %v1439 = vmul.bf16 %v1396, %v1423
        %v1440 = vmul.bf16 %v1397, %v1423
        %v1441 = vmul.bf16 %v1398, %v1423
        %v1442 = vmul.bf16 %v1399, %v1423
        %v1443 = vmul.bf16 %v1400, %v1423
        %v1444 = vmul.bf16 %v1401, %v1423
        %v1445 = vmul.bf16 %v1402, %v1423
        %v1446 = vmul.bf16 %v1403, %v1423
        %v1447 = vmul.bf16 %v1404, %v1423
        %v1448 = vmul.bf16 %v1405, %v1423
        %v1449 = vmul.bf16 %v1406, %v1423
        %v1450 = vmul.bf16 %v1407, %v1423
        %v1451 = vmul.bf16 %v1408, %v1423
        %v1452 = vmul.bf16 %v1409, %v1423
        %v1453 = vmul.bf16 %v1410, %v1423
        %v1454 = vmul.bf16 %v1411, %v1423
        %v1455 = vmul.bf16 %v1412, %v1423
        %v1456 = vmul.bf16 %v1413, %v1423
        %v1457 = vunpack.c.l.bf16 %v1425
        %v1458 = vunpack.c.l.bf16 %v1426
        %v1459 = vunpack.c.l.bf16 %v1427
        %v1460 = vunpack.c.l.bf16 %v1428
        %v1461 = vunpack.c.l.bf16 %v1429
        %v1462 = vunpack.c.l.bf16 %v1430
        %v1463 = vunpack.c.l.bf16 %v1431
        %v1464 = vunpack.c.l.bf16 %v1432
        %v1465 = vunpack.c.l.bf16 %v1433
        %v1466 = vunpack.c.l.bf16 %v1434
        %v1467 = vunpack.c.l.bf16 %v1435
        %v1468 = vunpack.c.l.bf16 %v1436
        %v1469 = vunpack.c.l.bf16 %v1437
        %v1470 = vunpack.c.l.bf16 %v1438
        %v1471 = vunpack.c.l.bf16 %v1439
        %v1472 = vunpack.c.l.bf16 %v1440
        %v1473 = vunpack.c.l.bf16 %v1441
        %v1474 = vunpack.c.l.bf16 %v1442
        %v1475 = vunpack.c.l.bf16 %v1443
        %v1476 = vunpack.c.l.bf16 %v1444
        %v1477 = vunpack.c.l.bf16 %v1445
        %v1478 = vunpack.c.l.bf16 %v1446
        %v1479 = vunpack.c.l.bf16 %v1447
        %v1480 = vunpack.c.l.bf16 %v1448
        %v1481 = vunpack.c.l.bf16 %v1449
        %v1482 = vunpack.c.l.bf16 %v1450
        %v1483 = vunpack.c.l.bf16 %v1451
        %v1484 = vunpack.c.l.bf16 %v1452
        %v1485 = vunpack.c.l.bf16 %v1453
        %v1486 = vunpack.c.l.bf16 %v1454
        %v1487 = vunpack.c.l.bf16 %v1455
        %v1488 = vunpack.c.l.bf16 %v1456
        %v1489 = vld [vmem:[#allocation2 + $0x8] sm:$0x1]
        %v1490 = vld [vmem:[#allocation2 + $0x14] sm:$0x1]
        %v1491 = vld [vmem:[#allocation2 + $0x20] sm:$0x1]
        %v1492 = vld [vmem:[#allocation2 + $0x2c] sm:$0x1]
        %v1493 = vld [vmem:[#allocation2 + $0x38] sm:$0x1]
        %v1494 = vld [vmem:[#allocation2 + $0x44] sm:$0x1]
        %v1495 = vld [vmem:[#allocation2 + $0x50] sm:$0x1]
        %v1496 = vld [vmem:[#allocation2 + $0x5c] sm:$0x1]
        %v1497 = vld [vmem:[#allocation2 + $0x68] sm:$0x1]
        %v1498 = vld [vmem:[#allocation2 + $0x74] sm:$0x1]
        %v1499 = vld [vmem:[#allocation2 + $0x80] sm:$0x1]
        %v1500 = vld [vmem:[#allocation2 + $0x8c] sm:$0x1]
        %v1501 = vld [vmem:[#allocation2 + $0x98] sm:$0x1]
        %v1502 = vld [vmem:[#allocation2 + $0xa4] sm:$0x1]
        %v1503 = vld [vmem:[#allocation2 + $0xb0] sm:$0x1]
        %v1504 = vld [vmem:[#allocation2 + $0xbc] sm:$0x1]
        %v1505 = vshrl.u32 %v1380, 16
        %v1506 = vpack.i.b16 %v1505, %v1505
        %v1508 = vlaneseq
        %v1509 = vshrl.u32 %v1508, 7
        %v1510 = vsub.s32 0, %v1509
        %v1511 = vrot.slane %v1506, %v1510
        %v1513 = vunpack.c.l.b16 %v1511
        %v1514 = vpack.c.b16 %v1513, %v1513
        %v1516 = vmul.bf16 %v1382, %v1514
        %v1517 = vmul.bf16 %v1383, %v1514
        %v1518 = vmul.bf16 %v1489, %v1514
        %v1519 = vmul.bf16 %v1384, %v1514
        %v1520 = vmul.bf16 %v1385, %v1514
        %v1521 = vmul.bf16 %v1490, %v1514
        %v1522 = vmul.bf16 %v1386, %v1514
        %v1523 = vmul.bf16 %v1387, %v1514
        %v1524 = vmul.bf16 %v1491, %v1514
        %v1525 = vmul.bf16 %v1388, %v1514
        %v1526 = vmul.bf16 %v1389, %v1514
        %v1527 = vmul.bf16 %v1492, %v1514
        %v1528 = vmul.bf16 %v1390, %v1514
        %v1529 = vmul.bf16 %v1391, %v1514
        %v1530 = vmul.bf16 %v1493, %v1514
        %v1531 = vmul.bf16 %v1392, %v1514
        %v1532 = vmul.bf16 %v1393, %v1514
        %v1533 = vmul.bf16 %v1494, %v1514
        %v1534 = vmul.bf16 %v1394, %v1514
        %v1535 = vmul.bf16 %v1395, %v1514
        %v1536 = vmul.bf16 %v1495, %v1514
        %v1537 = vmul.bf16 %v1396, %v1514
        %v1538 = vmul.bf16 %v1397, %v1514
        %v1539 = vmul.bf16 %v1496, %v1514
        %v1540 = vmul.bf16 %v1398, %v1514
        %v1541 = vmul.bf16 %v1399, %v1514
        %v1542 = vmul.bf16 %v1497, %v1514
        %v1543 = vmul.bf16 %v1400, %v1514
        %v1544 = vmul.bf16 %v1401, %v1514
        %v1545 = vmul.bf16 %v1498, %v1514
        %v1546 = vmul.bf16 %v1402, %v1514
        %v1547 = vmul.bf16 %v1403, %v1514
        %v1548 = vmul.bf16 %v1499, %v1514
        %v1549 = vmul.bf16 %v1404, %v1514
        %v1550 = vmul.bf16 %v1405, %v1514
        %v1551 = vmul.bf16 %v1500, %v1514
        %v1552 = vmul.bf16 %v1406, %v1514
        %v1553 = vmul.bf16 %v1407, %v1514
        %v1554 = vmul.bf16 %v1501, %v1514
        %v1555 = vmul.bf16 %v1408, %v1514
        %v1556 = vmul.bf16 %v1409, %v1514
        %v1557 = vmul.bf16 %v1502, %v1514
        %v1558 = vmul.bf16 %v1410, %v1514
        %v1559 = vmul.bf16 %v1411, %v1514
        %v1560 = vmul.bf16 %v1503, %v1514
        %v1561 = vmul.bf16 %v1412, %v1514
        %v1562 = vmul.bf16 %v1413, %v1514
        %v1563 = vmul.bf16 %v1504, %v1514
        %v1564 = vunpack.c.l.bf16 %v1516
        %v1565 = vunpack.c.l.bf16 %v1517
        %v1566 = vunpack.c.l.bf16 %v1518
        %v1567 = vunpack.c.l.bf16 %v1519
        %v1568 = vunpack.c.l.bf16 %v1520
        %v1569 = vunpack.c.l.bf16 %v1521
        %v1570 = vunpack.c.l.bf16 %v1522
        %v1571 = vunpack.c.l.bf16 %v1523
        %v1572 = vunpack.c.l.bf16 %v1524
        %v1573 = vunpack.c.l.bf16 %v1525
        %v1574 = vunpack.c.l.bf16 %v1526
        %v1575 = vunpack.c.l.bf16 %v1527
        %v1576 = vunpack.c.l.bf16 %v1528
        %v1577 = vunpack.c.l.bf16 %v1529
        %v1578 = vunpack.c.l.bf16 %v1530
        %v1579 = vunpack.c.l.bf16 %v1531
        %v1580 = vunpack.c.l.bf16 %v1532
        %v1581 = vunpack.c.l.bf16 %v1533
        %v1582 = vunpack.c.l.bf16 %v1534
        %v1583 = vunpack.c.l.bf16 %v1535
        %v1584 = vunpack.c.l.bf16 %v1536
        %v1585 = vunpack.c.l.bf16 %v1537
        %v1586 = vunpack.c.l.bf16 %v1538
        %v1587 = vunpack.c.l.bf16 %v1539
        %v1588 = vunpack.c.l.bf16 %v1540
        %v1589 = vunpack.c.l.bf16 %v1541
        %v1590 = vunpack.c.l.bf16 %v1542
        %v1591 = vunpack.c.l.bf16 %v1543
        %v1592 = vunpack.c.l.bf16 %v1544
        %v1593 = vunpack.c.l.bf16 %v1545
        %v1594 = vunpack.c.l.bf16 %v1546
        %v1595 = vunpack.c.l.bf16 %v1547
        %v1596 = vunpack.c.l.bf16 %v1548
        %v1597 = vunpack.c.l.bf16 %v1549
        %v1598 = vunpack.c.l.bf16 %v1550
        %v1599 = vunpack.c.l.bf16 %v1551
        %v1600 = vunpack.c.l.bf16 %v1552
        %v1601 = vunpack.c.l.bf16 %v1553
        %v1602 = vunpack.c.l.bf16 %v1554
        %v1603 = vunpack.c.l.bf16 %v1555
        %v1604 = vunpack.c.l.bf16 %v1556
        %v1605 = vunpack.c.l.bf16 %v1557
        %v1606 = vunpack.c.l.bf16 %v1558
        %v1607 = vunpack.c.l.bf16 %v1559
        %v1608 = vunpack.c.l.bf16 %v1560
        %v1609 = vunpack.c.l.bf16 %v1561
        %v1610 = vunpack.c.l.bf16 %v1562
        %v1611 = vunpack.c.l.bf16 %v1563
        %vm1660 = vcmask 1046528
        %v1661 = vrot.slane %v1564, 1
        %v1662 = vrot.slane %v1565, 1
        %v1663 = vsel %vm1660, %v1661, %v1662
        %v1664 = vrot.slane %v1566, 1
        %v1665 = vsel %vm1660, %v1662, %v1664
        %v1666 = vrot.slane %v1567, 1
        %v1667 = vrot.slane %v1568, 1
        %v1668 = vsel %vm1660, %v1666, %v1667
        %v1669 = vrot.slane %v1569, 1
        %v1670 = vsel %vm1660, %v1667, %v1669
        %v1671 = vrot.slane %v1570, 1
        %v1672 = vrot.slane %v1571, 1
        %v1673 = vsel %vm1660, %v1671, %v1672
        %v1674 = vrot.slane %v1572, 1
        %v1675 = vsel %vm1660, %v1672, %v1674
        %v1676 = vrot.slane %v1573, 1
        %v1677 = vrot.slane %v1574, 1
        %v1678 = vsel %vm1660, %v1676, %v1677
        %v1679 = vrot.slane %v1575, 1
        %v1680 = vsel %vm1660, %v1677, %v1679
        %v1681 = vrot.slane %v1576, 1
        %v1682 = vrot.slane %v1577, 1
        %v1683 = vsel %vm1660, %v1681, %v1682
        %v1684 = vrot.slane %v1578, 1
        %v1685 = vsel %vm1660, %v1682, %v1684
        %v1686 = vrot.slane %v1579, 1
        %v1687 = vrot.slane %v1580, 1
        %v1688 = vsel %vm1660, %v1686, %v1687
        %v1689 = vrot.slane %v1581, 1
        %v1690 = vsel %vm1660, %v1687, %v1689
        %v1691 = vrot.slane %v1582, 1
        %v1692 = vrot.slane %v1583, 1
        %v1693 = vsel %vm1660, %v1691, %v1692
        %v1694 = vrot.slane %v1584, 1
        %v1695 = vsel %vm1660, %v1692, %v1694
        %v1696 = vrot.slane %v1585, 1
        %v1697 = vrot.slane %v1586, 1
        %v1698 = vsel %vm1660, %v1696, %v1697
        %v1699 = vrot.slane %v1587, 1
        %v1700 = vsel %vm1660, %v1697, %v1699
        %v1701 = vrot.slane %v1588, 1
        %v1702 = vrot.slane %v1589, 1
        %v1703 = vsel %vm1660, %v1701, %v1702
        %v1704 = vrot.slane %v1590, 1
        %v1705 = vsel %vm1660, %v1702, %v1704
        %v1706 = vrot.slane %v1591, 1
        %v1707 = vrot.slane %v1592, 1
        %v1708 = vsel %vm1660, %v1706, %v1707
        %v1709 = vrot.slane %v1593, 1
        %v1710 = vsel %vm1660, %v1707, %v1709
        %v1711 = vrot.slane %v1594, 1
        %v1712 = vrot.slane %v1595, 1
        %v1713 = vsel %vm1660, %v1711, %v1712
        %v1714 = vrot.slane %v1596, 1
        %v1715 = vsel %vm1660, %v1712, %v1714
        %v1716 = vrot.slane %v1597, 1
        %v1717 = vrot.slane %v1598, 1
        %v1718 = vsel %vm1660, %v1716, %v1717
        %v1719 = vrot.slane %v1599, 1
        %v1720 = vsel %vm1660, %v1717, %v1719
        %v1721 = vrot.slane %v1600, 1
        %v1722 = vrot.slane %v1601, 1
        %v1723 = vsel %vm1660, %v1721, %v1722
        %v1724 = vrot.slane %v1602, 1
        %v1725 = vsel %vm1660, %v1722, %v1724
        %v1726 = vrot.slane %v1603, 1
        %v1727 = vrot.slane %v1604, 1
        %v1728 = vsel %vm1660, %v1726, %v1727
        %v1729 = vrot.slane %v1605, 1
        %v1730 = vsel %vm1660, %v1727, %v1729
        %v1731 = vrot.slane %v1606, 1
        %v1732 = vrot.slane %v1607, 1
        %v1733 = vsel %vm1660, %v1731, %v1732
        %v1734 = vrot.slane %v1608, 1
        %v1735 = vsel %vm1660, %v1732, %v1734
        %v1736 = vrot.slane %v1609, 1
        %v1737 = vrot.slane %v1610, 1
        %v1738 = vsel %vm1660, %v1736, %v1737
        %v1739 = vrot.slane %v1611, 1
        %v1740 = vsel %vm1660, %v1737, %v1739
        %v1773 = vadd.f32 %v1457, %v1663
        %v1774 = vadd.f32 %v1458, %v1665
        %v1775 = vadd.f32 %v1459, %v1668
        %v1776 = vadd.f32 %v1460, %v1670
        %v1777 = vadd.f32 %v1461, %v1673
        %v1778 = vadd.f32 %v1462, %v1675
        %v1779 = vadd.f32 %v1463, %v1678
        %v1780 = vadd.f32 %v1464, %v1680
        %v1781 = vadd.f32 %v1465, %v1683
        %v1782 = vadd.f32 %v1466, %v1685
        %v1783 = vadd.f32 %v1467, %v1688
        %v1784 = vadd.f32 %v1468, %v1690
        %v1785 = vadd.f32 %v1469, %v1693
        %v1786 = vadd.f32 %v1470, %v1695
        %v1787 = vadd.f32 %v1471, %v1698
        %v1788 = vadd.f32 %v1472, %v1700
        %v1789 = vadd.f32 %v1473, %v1703
        %v1790 = vadd.f32 %v1474, %v1705
        %v1791 = vadd.f32 %v1475, %v1708
        %v1792 = vadd.f32 %v1476, %v1710
        %v1793 = vadd.f32 %v1477, %v1713
        %v1794 = vadd.f32 %v1478, %v1715
        %v1795 = vadd.f32 %v1479, %v1718
        %v1796 = vadd.f32 %v1480, %v1720
        %v1797 = vadd.f32 %v1481, %v1723
        %v1798 = vadd.f32 %v1482, %v1725
        %v1799 = vadd.f32 %v1483, %v1728
        %v1800 = vadd.f32 %v1484, %v1730
        %v1801 = vadd.f32 %v1485, %v1733
        %v1802 = vadd.f32 %v1486, %v1735
        %v1803 = vadd.f32 %v1487, %v1738
        %v1804 = vadd.f32 %v1488, %v1740
        %v1805 = vld [vmem:[#allocation2] sm:$0xe]
        %v1806 = vld [vmem:[#allocation2 + $0xc] sm:$0xe]
        %v1807 = vld [vmem:[#allocation2 + $0x18] sm:$0xe]
        %v1808 = vld [vmem:[#allocation2 + $0x24] sm:$0xe]
        %v1809 = vld [vmem:[#allocation2 + $0x30] sm:$0xe]
        %v1810 = vld [vmem:[#allocation2 + $0x3c] sm:$0xe]
        %v1811 = vld [vmem:[#allocation2 + $0x48] sm:$0xe]
        %v1812 = vld [vmem:[#allocation2 + $0x54] sm:$0xe]
        %v1813 = vld [vmem:[#allocation2 + $0x60] sm:$0xe]
        %v1814 = vld [vmem:[#allocation2 + $0x6c] sm:$0xe]
        %v1815 = vld [vmem:[#allocation2 + $0x78] sm:$0xe]
        %v1816 = vld [vmem:[#allocation2 + $0x84] sm:$0xe]
        %v1817 = vld [vmem:[#allocation2 + $0x90] sm:$0xe]
        %v1818 = vld [vmem:[#allocation2 + $0x9c] sm:$0xe]
        %v1819 = vld [vmem:[#allocation2 + $0xa8] sm:$0xe]
        %v1820 = vld [vmem:[#allocation2 + $0xb4] sm:$0xe]
        %v1821 = vlaneseq
        %v1822 = vshrl.u32 %v1821, 7
        %v1823 = vsub.s32 1, %v1822
        %v1824 = vrot.slane %v1415, %v1823
        %v1826 = vunpack.c.l.b16 %v1824
        %v1827 = vpack.c.b16 %v1826, %v1826
        %v1829 = vmul.bf16 %v1805, %v1827
        %v1830 = vmul.bf16 %v1383, %v1827
        %v1831 = vmul.bf16 %v1489, %v1827
        %v1832 = vmul.bf16 %v1806, %v1827
        %v1833 = vmul.bf16 %v1385, %v1827
        %v1834 = vmul.bf16 %v1490, %v1827
        %v1835 = vmul.bf16 %v1807, %v1827
        %v1836 = vmul.bf16 %v1387, %v1827
        %v1837 = vmul.bf16 %v1491, %v1827
        %v1838 = vmul.bf16 %v1808, %v1827
        %v1839 = vmul.bf16 %v1389, %v1827
        %v1840 = vmul.bf16 %v1492, %v1827
        %v1841 = vmul.bf16 %v1809, %v1827
        %v1842 = vmul.bf16 %v1391, %v1827
        %v1843 = vmul.bf16 %v1493, %v1827
        %v1844 = vmul.bf16 %v1810, %v1827
        %v1845 = vmul.bf16 %v1393, %v1827
        %v1846 = vmul.bf16 %v1494, %v1827
        %v1847 = vmul.bf16 %v1811, %v1827
        %v1848 = vmul.bf16 %v1395, %v1827
        %v1849 = vmul.bf16 %v1495, %v1827
        %v1850 = vmul.bf16 %v1812, %v1827
        %v1851 = vmul.bf16 %v1397, %v1827
        %v1852 = vmul.bf16 %v1496, %v1827
        %v1853 = vmul.bf16 %v1813, %v1827
        %v1854 = vmul.bf16 %v1399, %v1827
        %v1855 = vmul.bf16 %v1497, %v1827
        %v1856 = vmul.bf16 %v1814, %v1827
        %v1857 = vmul.bf16 %v1401, %v1827
        %v1858 = vmul.bf16 %v1498, %v1827
        %v1859 = vmul.bf16 %v1815, %v1827
        %v1860 = vmul.bf16 %v1403, %v1827
        %v1861 = vmul.bf16 %v1499, %v1827
        %v1862 = vmul.bf16 %v1816, %v1827
        %v1863 = vmul.bf16 %v1405, %v1827
        %v1864 = vmul.bf16 %v1500, %v1827
        %v1865 = vmul.bf16 %v1817, %v1827
        %v1866 = vmul.bf16 %v1407, %v1827
        %v1867 = vmul.bf16 %v1501, %v1827
        %v1868 = vmul.bf16 %v1818, %v1827
        %v1869 = vmul.bf16 %v1409, %v1827
        %v1870 = vmul.bf16 %v1502, %v1827
        %v1871 = vmul.bf16 %v1819, %v1827
        %v1872 = vmul.bf16 %v1411, %v1827
        %v1873 = vmul.bf16 %v1503, %v1827
        %v1874 = vmul.bf16 %v1820, %v1827
        %v1875 = vmul.bf16 %v1413, %v1827
        %v1876 = vmul.bf16 %v1504, %v1827
        %v1877 = vunpack.c.l.bf16 %v1829
        %v1878 = vunpack.c.l.bf16 %v1830
        %v1879 = vunpack.c.l.bf16 %v1831
        %v1880 = vunpack.c.l.bf16 %v1832
        %v1881 = vunpack.c.l.bf16 %v1833
        %v1882 = vunpack.c.l.bf16 %v1834
        %v1883 = vunpack.c.l.bf16 %v1835
        %v1884 = vunpack.c.l.bf16 %v1836
        %v1885 = vunpack.c.l.bf16 %v1837
        %v1886 = vunpack.c.l.bf16 %v1838
        %v1887 = vunpack.c.l.bf16 %v1839
        %v1888 = vunpack.c.l.bf16 %v1840
        %v1889 = vunpack.c.l.bf16 %v1841
        %v1890 = vunpack.c.l.bf16 %v1842
        %v1891 = vunpack.c.l.bf16 %v1843
        %v1892 = vunpack.c.l.bf16 %v1844
        %v1893 = vunpack.c.l.bf16 %v1845
        %v1894 = vunpack.c.l.bf16 %v1846
        %v1895 = vunpack.c.l.bf16 %v1847
        %v1896 = vunpack.c.l.bf16 %v1848
        %v1897 = vunpack.c.l.bf16 %v1849
        %v1898 = vunpack.c.l.bf16 %v1850
        %v1899 = vunpack.c.l.bf16 %v1851
        %v1900 = vunpack.c.l.bf16 %v1852
        %v1901 = vunpack.c.l.bf16 %v1853
        %v1902 = vunpack.c.l.bf16 %v1854
        %v1903 = vunpack.c.l.bf16 %v1855
        %v1904 = vunpack.c.l.bf16 %v1856
        %v1905 = vunpack.c.l.bf16 %v1857
        %v1906 = vunpack.c.l.bf16 %v1858
        %v1907 = vunpack.c.l.bf16 %v1859
        %v1908 = vunpack.c.l.bf16 %v1860
        %v1909 = vunpack.c.l.bf16 %v1861
        %v1910 = vunpack.c.l.bf16 %v1862
        %v1911 = vunpack.c.l.bf16 %v1863
        %v1912 = vunpack.c.l.bf16 %v1864
        %v1913 = vunpack.c.l.bf16 %v1865
        %v1914 = vunpack.c.l.bf16 %v1866
        %v1915 = vunpack.c.l.bf16 %v1867
        %v1916 = vunpack.c.l.bf16 %v1868
        %v1917 = vunpack.c.l.bf16 %v1869
        %v1918 = vunpack.c.l.bf16 %v1870
        %v1919 = vunpack.c.l.bf16 %v1871
        %v1920 = vunpack.c.l.bf16 %v1872
        %v1921 = vunpack.c.l.bf16 %v1873
        %v1922 = vunpack.c.l.bf16 %v1874
        %v1923 = vunpack.c.l.bf16 %v1875
        %v1924 = vunpack.c.l.bf16 %v1876
        %vm1973 = vcmask 1045504
        %v1974 = vrot.slane %v1877, 2
        %v1975 = vrot.slane %v1878, 2
        %v1976 = vsel %vm1973, %v1974, %v1975
        %v1977 = vrot.slane %v1879, 2
        %v1978 = vsel %vm1973, %v1975, %v1977
        %v1979 = vrot.slane %v1880, 2
        %v1980 = vrot.slane %v1881, 2
        %v1981 = vsel %vm1973, %v1979, %v1980
        %v1982 = vrot.slane %v1882, 2
        %v1983 = vsel %vm1973, %v1980, %v1982
        %v1984 = vrot.slane %v1883, 2
        %v1985 = vrot.slane %v1884, 2
        %v1986 = vsel %vm1973, %v1984, %v1985
        %v1987 = vrot.slane %v1885, 2
        %v1988 = vsel %vm1973, %v1985, %v1987
        %v1989 = vrot.slane %v1886, 2
        %v1990 = vrot.slane %v1887, 2
        %v1991 = vsel %vm1973, %v1989, %v1990
        %v1992 = vrot.slane %v1888, 2
        %v1993 = vsel %vm1973, %v1990, %v1992
        %v1994 = vrot.slane %v1889, 2
        %v1995 = vrot.slane %v1890, 2
        %v1996 = vsel %vm1973, %v1994, %v1995
        %v1997 = vrot.slane %v1891, 2
        %v1998 = vsel %vm1973, %v1995, %v1997
        %v1999 = vrot.slane %v1892, 2
        %v2000 = vrot.slane %v1893, 2
        %v2001 = vsel %vm1973, %v1999, %v2000
        %v2002 = vrot.slane %v1894, 2
        %v2003 = vsel %vm1973, %v2000, %v2002
        %v2004 = vrot.slane %v1895, 2
        %v2005 = vrot.slane %v1896, 2
        %v2006 = vsel %vm1973, %v2004, %v2005
        %v2007 = vrot.slane %v1897, 2
        %v2008 = vsel %vm1973, %v2005, %v2007
        %v2009 = vrot.slane %v1898, 2
        %v2010 = vrot.slane %v1899, 2
        %v2011 = vsel %vm1973, %v2009, %v2010
        %v2012 = vrot.slane %v1900, 2
        %v2013 = vsel %vm1973, %v2010, %v2012
        %v2014 = vrot.slane %v1901, 2
        %v2015 = vrot.slane %v1902, 2
        %v2016 = vsel %vm1973, %v2014, %v2015
        %v2017 = vrot.slane %v1903, 2
        %v2018 = vsel %vm1973, %v2015, %v2017
        %v2019 = vrot.slane %v1904, 2
        %v2020 = vrot.slane %v1905, 2
        %v2021 = vsel %vm1973, %v2019, %v2020
        %v2022 = vrot.slane %v1906, 2
        %v2023 = vsel %vm1973, %v2020, %v2022
        %v2024 = vrot.slane %v1907, 2
        %v2025 = vrot.slane %v1908, 2
        %v2026 = vsel %vm1973, %v2024, %v2025
        %v2027 = vrot.slane %v1909, 2
        %v2028 = vsel %vm1973, %v2025, %v2027
        %v2029 = vrot.slane %v1910, 2
        %v2030 = vrot.slane %v1911, 2
        %v2031 = vsel %vm1973, %v2029, %v2030
        %v2032 = vrot.slane %v1912, 2
        %v2033 = vsel %vm1973, %v2030, %v2032
        %v2034 = vrot.slane %v1913, 2
        %v2035 = vrot.slane %v1914, 2
        %v2036 = vsel %vm1973, %v2034, %v2035
        %v2037 = vrot.slane %v1915, 2
        %v2038 = vsel %vm1973, %v2035, %v2037
        %v2039 = vrot.slane %v1916, 2
        %v2040 = vrot.slane %v1917, 2
        %v2041 = vsel %vm1973, %v2039, %v2040
        %v2042 = vrot.slane %v1918, 2
        %v2043 = vsel %vm1973, %v2040, %v2042
        %v2044 = vrot.slane %v1919, 2
        %v2045 = vrot.slane %v1920, 2
        %v2046 = vsel %vm1973, %v2044, %v2045
        %v2047 = vrot.slane %v1921, 2
        %v2048 = vsel %vm1973, %v2045, %v2047
        %v2049 = vrot.slane %v1922, 2
        %v2050 = vrot.slane %v1923, 2
        %v2051 = vsel %vm1973, %v2049, %v2050
        %v2052 = vrot.slane %v1924, 2
        %v2053 = vsel %vm1973, %v2050, %v2052
        %v2086 = vadd.f32 %v1773, %v1976
        %v2087 = vadd.f32 %v1774, %v1978
        %v2088 = vadd.f32 %v1775, %v1981
        %v2089 = vadd.f32 %v1776, %v1983
        %v2090 = vadd.f32 %v1777, %v1986
        %v2091 = vadd.f32 %v1778, %v1988
        %v2092 = vadd.f32 %v1779, %v1991
        %v2093 = vadd.f32 %v1780, %v1993
        %v2094 = vadd.f32 %v1781, %v1996
        %v2095 = vadd.f32 %v1782, %v1998
        %v2096 = vadd.f32 %v1783, %v2001
        %v2097 = vadd.f32 %v1784, %v2003
        %v2098 = vadd.f32 %v1785, %v2006
        %v2099 = vadd.f32 %v1786, %v2008
        %v2100 = vadd.f32 %v1787, %v2011
        %v2101 = vadd.f32 %v1788, %v2013
        %v2102 = vadd.f32 %v1789, %v2016
        %v2103 = vadd.f32 %v1790, %v2018
        %v2104 = vadd.f32 %v1791, %v2021
        %v2105 = vadd.f32 %v1792, %v2023
        %v2106 = vadd.f32 %v1793, %v2026
        %v2107 = vadd.f32 %v1794, %v2028
        %v2108 = vadd.f32 %v1795, %v2031
        %v2109 = vadd.f32 %v1796, %v2033
        %v2110 = vadd.f32 %v1797, %v2036
        %v2111 = vadd.f32 %v1798, %v2038
        %v2112 = vadd.f32 %v1799, %v2041
        %v2113 = vadd.f32 %v1800, %v2043
        %v2114 = vadd.f32 %v1801, %v2046
        %v2115 = vadd.f32 %v1802, %v2048
        %v2116 = vadd.f32 %v1803, %v2051
        %v2117 = vadd.f32 %v1804, %v2053
        %v2118 = vld [vmem:[%s682] sm:$0xf]
        %v2119 = vld [vmem:[%s682 + $0x4] sm:$0xf]
        %v2120 = vld [vmem:[%s682 + $0xc] sm:$0xf]
        %v2121 = vld [vmem:[%s682 + $0x10] sm:$0xf]
        %v2122 = vld [vmem:[%s682 + $0x18] sm:$0xf]
        %v2123 = vld [vmem:[%s682 + $0x1c] sm:$0xf]
        %v2124 = vld [vmem:[%s682 + $0x24] sm:$0xf]
        %v2125 = vld [vmem:[%s682 + $0x28] sm:$0xf]
        %v2126 = vld [vmem:[%s682 + $0x30] sm:$0xf]
        %v2127 = vld [vmem:[%s682 + $0x34] sm:$0xf]
        %v2128 = vld [vmem:[%s682 + $0x3c] sm:$0xf]
        %v2129 = vld [vmem:[%s682 + $0x40] sm:$0xf]
        %v2130 = vld [vmem:[%s682 + $0x48] sm:$0xf]
        %v2131 = vld [vmem:[%s682 + $0x4c] sm:$0xf]
        %v2132 = vld [vmem:[%s682 + $0x54] sm:$0xf]
        %v2133 = vld [vmem:[%s682 + $0x58] sm:$0xf]
        %v2134 = vld [vmem:[%s682 + $0x60] sm:$0xf]
        %v2135 = vld [vmem:[%s682 + $0x64] sm:$0xf]
        %v2136 = vld [vmem:[%s682 + $0x6c] sm:$0xf]
        %v2137 = vld [vmem:[%s682 + $0x70] sm:$0xf]
        %v2138 = vld [vmem:[%s682 + $0x78] sm:$0xf]
        %v2139 = vld [vmem:[%s682 + $0x7c] sm:$0xf]
        %v2140 = vld [vmem:[%s682 + $0x84] sm:$0xf]
        %v2141 = vld [vmem:[%s682 + $0x88] sm:$0xf]
        %v2142 = vld [vmem:[%s682 + $0x90] sm:$0xf]
        %v2143 = vld [vmem:[%s682 + $0x94] sm:$0xf]
        %v2144 = vld [vmem:[%s682 + $0x9c] sm:$0xf]
        %v2145 = vld [vmem:[%s682 + $0xa0] sm:$0xf]
        %v2146 = vld [vmem:[%s682 + $0xa8] sm:$0xf]
        %v2147 = vld [vmem:[%s682 + $0xac] sm:$0xf]
        %v2148 = vld [vmem:[%s682 + $0xb4] sm:$0xf]
        %v2149 = vld [vmem:[%s682 + $0xb8] sm:$0xf]
        %v2150 = vlaneseq
        %v2151 = vshrl.u32 %v2150, 7
        %v2152 = vsub.s32 1, %v2151
        %v2153 = vrot.slane %v1506, %v2152
        %v2155 = vunpack.c.l.b16 %v2153
        %v2156 = vpack.c.b16 %v2155, %v2155
        %v2158 = vmul.bf16 %v2118, %v2156
        %v2159 = vmul.bf16 %v2119, %v2156
        %v2160 = vmul.bf16 %v2120, %v2156
        %v2161 = vmul.bf16 %v2121, %v2156
        %v2162 = vmul.bf16 %v2122, %v2156
        %v2163 = vmul.bf16 %v2123, %v2156
        %v2164 = vmul.bf16 %v2124, %v2156
        %v2165 = vmul.bf16 %v2125, %v2156
        %v2166 = vmul.bf16 %v2126, %v2156
        %v2167 = vmul.bf16 %v2127, %v2156
        %v2168 = vmul.bf16 %v2128, %v2156
        %v2169 = vmul.bf16 %v2129, %v2156
        %v2170 = vmul.bf16 %v2130, %v2156
        %v2171 = vmul.bf16 %v2131, %v2156
        %v2172 = vmul.bf16 %v2132, %v2156
        %v2173 = vmul.bf16 %v2133, %v2156
        %v2174 = vmul.bf16 %v2134, %v2156
        %v2175 = vmul.bf16 %v2135, %v2156
        %v2176 = vmul.bf16 %v2136, %v2156
        %v2177 = vmul.bf16 %v2137, %v2156
        %v2178 = vmul.bf16 %v2138, %v2156
        %v2179 = vmul.bf16 %v2139, %v2156
        %v2180 = vmul.bf16 %v2140, %v2156
        %v2181 = vmul.bf16 %v2141, %v2156
        %v2182 = vmul.bf16 %v2142, %v2156
        %v2183 = vmul.bf16 %v2143, %v2156
        %v2184 = vmul.bf16 %v2144, %v2156
        %v2185 = vmul.bf16 %v2145, %v2156
        %v2186 = vmul.bf16 %v2146, %v2156
        %v2187 = vmul.bf16 %v2147, %v2156
        %v2188 = vmul.bf16 %v2148, %v2156
        %v2189 = vmul.bf16 %v2149, %v2156
        %v2190 = vunpack.c.l.bf16 %v2158
        %v2191 = vunpack.c.l.bf16 %v2159
        %v2192 = vunpack.c.l.bf16 %v2160
        %v2193 = vunpack.c.l.bf16 %v2161
        %v2194 = vunpack.c.l.bf16 %v2162
        %v2195 = vunpack.c.l.bf16 %v2163
        %v2196 = vunpack.c.l.bf16 %v2164
        %v2197 = vunpack.c.l.bf16 %v2165
        %v2198 = vunpack.c.l.bf16 %v2166
        %v2199 = vunpack.c.l.bf16 %v2167
        %v2200 = vunpack.c.l.bf16 %v2168
        %v2201 = vunpack.c.l.bf16 %v2169
        %v2202 = vunpack.c.l.bf16 %v2170
        %v2203 = vunpack.c.l.bf16 %v2171
        %v2204 = vunpack.c.l.bf16 %v2172
        %v2205 = vunpack.c.l.bf16 %v2173
        %v2206 = vunpack.c.l.bf16 %v2174
        %v2207 = vunpack.c.l.bf16 %v2175
        %v2208 = vunpack.c.l.bf16 %v2176
        %v2209 = vunpack.c.l.bf16 %v2177
        %v2210 = vunpack.c.l.bf16 %v2178
        %v2211 = vunpack.c.l.bf16 %v2179
        %v2212 = vunpack.c.l.bf16 %v2180
        %v2213 = vunpack.c.l.bf16 %v2181
        %v2214 = vunpack.c.l.bf16 %v2182
        %v2215 = vunpack.c.l.bf16 %v2183
        %v2216 = vunpack.c.l.bf16 %v2184
        %v2217 = vunpack.c.l.bf16 %v2185
        %v2218 = vunpack.c.l.bf16 %v2186
        %v2219 = vunpack.c.l.bf16 %v2187
        %v2220 = vunpack.c.l.bf16 %v2188
        %v2221 = vunpack.c.l.bf16 %v2189
        %v2222 = vadd.f32 %v2086, %v2190
        %v2223 = vadd.f32 %v2087, %v2191
        %v2224 = vadd.f32 %v2088, %v2192
        %v2225 = vadd.f32 %v2089, %v2193
        %v2226 = vadd.f32 %v2090, %v2194
        %v2227 = vadd.f32 %v2091, %v2195
        %v2228 = vadd.f32 %v2092, %v2196
        %v2229 = vadd.f32 %v2093, %v2197
        %v2230 = vadd.f32 %v2094, %v2198
        %v2231 = vadd.f32 %v2095, %v2199
        %v2232 = vadd.f32 %v2096, %v2200
        %v2233 = vadd.f32 %v2097, %v2201
        %v2234 = vadd.f32 %v2098, %v2202
        %v2235 = vadd.f32 %v2099, %v2203
        %v2236 = vadd.f32 %v2100, %v2204
        %v2237 = vadd.f32 %v2101, %v2205
        %v2238 = vadd.f32 %v2102, %v2206
        %v2239 = vadd.f32 %v2103, %v2207
        %v2240 = vadd.f32 %v2104, %v2208
        %v2241 = vadd.f32 %v2105, %v2209
        %v2242 = vadd.f32 %v2106, %v2210
        %v2243 = vadd.f32 %v2107, %v2211
        %v2244 = vadd.f32 %v2108, %v2212
        %v2245 = vadd.f32 %v2109, %v2213
        %v2246 = vadd.f32 %v2110, %v2214
        %v2247 = vadd.f32 %v2111, %v2215
        %v2248 = vadd.f32 %v2112, %v2216
        %v2249 = vadd.f32 %v2113, %v2217
        %v2250 = vadd.f32 %v2114, %v2218
        %v2251 = vadd.f32 %v2115, %v2219
        %v2252 = vadd.f32 %v2116, %v2220
        %v2253 = vadd.f32 %v2117, %v2221
        %v2254 = vld [vmem:[%s682 + $0x8] sm:$0x1]
        %v2255 = vld [vmem:[%s682 + $0x14] sm:$0x1]
        %v2256 = vld [vmem:[%s682 + $0x20] sm:$0x1]
        %v2257 = vld [vmem:[%s682 + $0x2c] sm:$0x1]
        %v2258 = vld [vmem:[%s682 + $0x38] sm:$0x1]
        %v2259 = vld [vmem:[%s682 + $0x44] sm:$0x1]
        %v2260 = vld [vmem:[%s682 + $0x50] sm:$0x1]
        %v2261 = vld [vmem:[%s682 + $0x5c] sm:$0x1]
        %v2262 = vld [vmem:[%s682 + $0x68] sm:$0x1]
        %v2263 = vld [vmem:[%s682 + $0x74] sm:$0x1]
        %v2264 = vld [vmem:[%s682 + $0x80] sm:$0x1]
        %v2265 = vld [vmem:[%s682 + $0x8c] sm:$0x1]
        %v2266 = vld [vmem:[%s682 + $0x98] sm:$0x1]
        %v2267 = vld [vmem:[%s682 + $0xa4] sm:$0x1]
        %v2268 = vld [vmem:[%s682 + $0xb0] sm:$0x1]
        %v2269 = vld [vmem:[%s682 + $0xbc] sm:$0x1]
        %v2270 = vlaneseq
        %v2271 = vshrl.u32 %v2270, 7
        %v2272 = vsub.s32 2, %v2271
        %v2273 = vrot.slane %v1415, %v2272
        %v2275 = vunpack.c.l.b16 %v2273
        %v2276 = vpack.c.b16 %v2275, %v2275
        %v2278 = vmul.bf16 %v2118, %v2276
        %v2279 = vmul.bf16 %v2119, %v2276
        %v2280 = vmul.bf16 %v2254, %v2276
        %v2281 = vmul.bf16 %v2120, %v2276
        %v2282 = vmul.bf16 %v2121, %v2276
        %v2283 = vmul.bf16 %v2255, %v2276
        %v2284 = vmul.bf16 %v2122, %v2276
        %v2285 = vmul.bf16 %v2123, %v2276
        %v2286 = vmul.bf16 %v2256, %v2276
        %v2287 = vmul.bf16 %v2124, %v2276
        %v2288 = vmul.bf16 %v2125, %v2276
        %v2289 = vmul.bf16 %v2257, %v2276
        %v2290 = vmul.bf16 %v2126, %v2276
        %v2291 = vmul.bf16 %v2127, %v2276
        %v2292 = vmul.bf16 %v2258, %v2276
        %v2293 = vmul.bf16 %v2128, %v2276
        %v2294 = vmul.bf16 %v2129, %v2276
        %v2295 = vmul.bf16 %v2259, %v2276
        %v2296 = vmul.bf16 %v2130, %v2276
        %v2297 = vmul.bf16 %v2131, %v2276
        %v2298 = vmul.bf16 %v2260, %v2276
        %v2299 = vmul.bf16 %v2132, %v2276
        %v2300 = vmul.bf16 %v2133, %v2276
        %v2301 = vmul.bf16 %v2261, %v2276
        %v2302 = vmul.bf16 %v2134, %v2276
        %v2303 = vmul.bf16 %v2135, %v2276
        %v2304 = vmul.bf16 %v2262, %v2276
        %v2305 = vmul.bf16 %v2136, %v2276
        %v2306 = vmul.bf16 %v2137, %v2276
        %v2307 = vmul.bf16 %v2263, %v2276
        %v2308 = vmul.bf16 %v2138, %v2276
        %v2309 = vmul.bf16 %v2139, %v2276
        %v2310 = vmul.bf16 %v2264, %v2276
        %v2311 = vmul.bf16 %v2140, %v2276
        %v2312 = vmul.bf16 %v2141, %v2276
        %v2313 = vmul.bf16 %v2265, %v2276
        %v2314 = vmul.bf16 %v2142, %v2276
        %v2315 = vmul.bf16 %v2143, %v2276
        %v2316 = vmul.bf16 %v2266, %v2276
        %v2317 = vmul.bf16 %v2144, %v2276
        %v2318 = vmul.bf16 %v2145, %v2276
        %v2319 = vmul.bf16 %v2267, %v2276
        %v2320 = vmul.bf16 %v2146, %v2276
        %v2321 = vmul.bf16 %v2147, %v2276
        %v2322 = vmul.bf16 %v2268, %v2276
        %v2323 = vmul.bf16 %v2148, %v2276
        %v2324 = vmul.bf16 %v2149, %v2276
        %v2325 = vmul.bf16 %v2269, %v2276
        %v2326 = vunpack.c.l.bf16 %v2278
        %v2327 = vunpack.c.l.bf16 %v2279
        %v2328 = vunpack.c.l.bf16 %v2280
        %v2329 = vunpack.c.l.bf16 %v2281
        %v2330 = vunpack.c.l.bf16 %v2282
        %v2331 = vunpack.c.l.bf16 %v2283
        %v2332 = vunpack.c.l.bf16 %v2284
        %v2333 = vunpack.c.l.bf16 %v2285
        %v2334 = vunpack.c.l.bf16 %v2286
        %v2335 = vunpack.c.l.bf16 %v2287
        %v2336 = vunpack.c.l.bf16 %v2288
        %v2337 = vunpack.c.l.bf16 %v2289
        %v2338 = vunpack.c.l.bf16 %v2290
        %v2339 = vunpack.c.l.bf16 %v2291
        %v2340 = vunpack.c.l.bf16 %v2292
        %v2341 = vunpack.c.l.bf16 %v2293
        %v2342 = vunpack.c.l.bf16 %v2294
        %v2343 = vunpack.c.l.bf16 %v2295
        %v2344 = vunpack.c.l.bf16 %v2296
        %v2345 = vunpack.c.l.bf16 %v2297
        %v2346 = vunpack.c.l.bf16 %v2298
        %v2347 = vunpack.c.l.bf16 %v2299
        %v2348 = vunpack.c.l.bf16 %v2300
        %v2349 = vunpack.c.l.bf16 %v2301
        %v2350 = vunpack.c.l.bf16 %v2302
        %v2351 = vunpack.c.l.bf16 %v2303
        %v2352 = vunpack.c.l.bf16 %v2304
        %v2353 = vunpack.c.l.bf16 %v2305
        %v2354 = vunpack.c.l.bf16 %v2306
        %v2355 = vunpack.c.l.bf16 %v2307
        %v2356 = vunpack.c.l.bf16 %v2308
        %v2357 = vunpack.c.l.bf16 %v2309
        %v2358 = vunpack.c.l.bf16 %v2310
        %v2359 = vunpack.c.l.bf16 %v2311
        %v2360 = vunpack.c.l.bf16 %v2312
        %v2361 = vunpack.c.l.bf16 %v2313
        %v2362 = vunpack.c.l.bf16 %v2314
        %v2363 = vunpack.c.l.bf16 %v2315
        %v2364 = vunpack.c.l.bf16 %v2316
        %v2365 = vunpack.c.l.bf16 %v2317
        %v2366 = vunpack.c.l.bf16 %v2318
        %v2367 = vunpack.c.l.bf16 %v2319
        %v2368 = vunpack.c.l.bf16 %v2320
        %v2369 = vunpack.c.l.bf16 %v2321
        %v2370 = vunpack.c.l.bf16 %v2322
        %v2371 = vunpack.c.l.bf16 %v2323
        %v2372 = vunpack.c.l.bf16 %v2324
        %v2373 = vunpack.c.l.bf16 %v2325
        %v2422 = vrot.slane %v2326, 1
        %v2423 = vrot.slane %v2327, 1
        %v2424 = vsel %vm1660, %v2422, %v2423
        %v2425 = vrot.slane %v2328, 1
        %v2426 = vsel %vm1660, %v2423, %v2425
        %v2427 = vrot.slane %v2329, 1
        %v2428 = vrot.slane %v2330, 1
        %v2429 = vsel %vm1660, %v2427, %v2428
        %v2430 = vrot.slane %v2331, 1
        %v2431 = vsel %vm1660, %v2428, %v2430
        %v2432 = vrot.slane %v2332, 1
        %v2433 = vrot.slane %v2333, 1
        %v2434 = vsel %vm1660, %v2432, %v2433
        %v2435 = vrot.slane %v2334, 1
        %v2436 = vsel %vm1660, %v2433, %v2435
        %v2437 = vrot.slane %v2335, 1
        %v2438 = vrot.slane %v2336, 1
        %v2439 = vsel %vm1660, %v2437, %v2438
        %v2440 = vrot.slane %v2337, 1
        %v2441 = vsel %vm1660, %v2438, %v2440
        %v2442 = vrot.slane %v2338, 1
        %v2443 = vrot.slane %v2339, 1
        %v2444 = vsel %vm1660, %v2442, %v2443
        %v2445 = vrot.slane %v2340, 1
        %v2446 = vsel %vm1660, %v2443, %v2445
        %v2447 = vrot.slane %v2341, 1
        %v2448 = vrot.slane %v2342, 1
        %v2449 = vsel %vm1660, %v2447, %v2448
        %v2450 = vrot.slane %v2343, 1
        %v2451 = vsel %vm1660, %v2448, %v2450
        %v2452 = vrot.slane %v2344, 1
        %v2453 = vrot.slane %v2345, 1
        %v2454 = vsel %vm1660, %v2452, %v2453
        %v2455 = vrot.slane %v2346, 1
        %v2456 = vsel %vm1660, %v2453, %v2455
        %v2457 = vrot.slane %v2347, 1
        %v2458 = vrot.slane %v2348, 1
        %v2459 = vsel %vm1660, %v2457, %v2458
        %v2460 = vrot.slane %v2349, 1
        %v2461 = vsel %vm1660, %v2458, %v2460
        %v2462 = vrot.slane %v2350, 1
        %v2463 = vrot.slane %v2351, 1
        %v2464 = vsel %vm1660, %v2462, %v2463
        %v2465 = vrot.slane %v2352, 1
        %v2466 = vsel %vm1660, %v2463, %v2465
        %v2467 = vrot.slane %v2353, 1
        %v2468 = vrot.slane %v2354, 1
        %v2469 = vsel %vm1660, %v2467, %v2468
        %v2470 = vrot.slane %v2355, 1
        %v2471 = vsel %vm1660, %v2468, %v2470
        %v2472 = vrot.slane %v2356, 1
        %v2473 = vrot.slane %v2357, 1
        %v2474 = vsel %vm1660, %v2472, %v2473
        %v2475 = vrot.slane %v2358, 1
        %v2476 = vsel %vm1660, %v2473, %v2475
        %v2477 = vrot.slane %v2359, 1
        %v2478 = vrot.slane %v2360, 1
        %v2479 = vsel %vm1660, %v2477, %v2478
        %v2480 = vrot.slane %v2361, 1
        %v2481 = vsel %vm1660, %v2478, %v2480
        %v2482 = vrot.slane %v2362, 1
        %v2483 = vrot.slane %v2363, 1
        %v2484 = vsel %vm1660, %v2482, %v2483
        %v2485 = vrot.slane %v2364, 1
        %v2486 = vsel %vm1660, %v2483, %v2485
        %v2487 = vrot.slane %v2365, 1
        %v2488 = vrot.slane %v2366, 1
        %v2489 = vsel %vm1660, %v2487, %v2488
        %v2490 = vrot.slane %v2367, 1
        %v2491 = vsel %vm1660, %v2488, %v2490
        %v2492 = vrot.slane %v2368, 1
        %v2493 = vrot.slane %v2369, 1
        %v2494 = vsel %vm1660, %v2492, %v2493
        %v2495 = vrot.slane %v2370, 1
        %v2496 = vsel %vm1660, %v2493, %v2495
        %v2497 = vrot.slane %v2371, 1
        %v2498 = vrot.slane %v2372, 1
        %v2499 = vsel %vm1660, %v2497, %v2498
        %v2500 = vrot.slane %v2373, 1
        %v2501 = vsel %vm1660, %v2498, %v2500
        %v2534 = vadd.f32 %v2222, %v2424
        %v2535 = vadd.f32 %v2223, %v2426
        %v2536 = vadd.f32 %v2224, %v2429
        %v2537 = vadd.f32 %v2225, %v2431
        %v2538 = vadd.f32 %v2226, %v2434
        %v2539 = vadd.f32 %v2227, %v2436
        %v2540 = vadd.f32 %v2228, %v2439
        %v2541 = vadd.f32 %v2229, %v2441
        %v2542 = vadd.f32 %v2230, %v2444
        %v2543 = vadd.f32 %v2231, %v2446
        %v2544 = vadd.f32 %v2232, %v2449
        %v2545 = vadd.f32 %v2233, %v2451
        %v2546 = vadd.f32 %v2234, %v2454
        %v2547 = vadd.f32 %v2235, %v2456
        %v2548 = vadd.f32 %v2236, %v2459
        %v2549 = vadd.f32 %v2237, %v2461
        %v2550 = vadd.f32 %v2238, %v2464
        %v2551 = vadd.f32 %v2239, %v2466
        %v2552 = vadd.f32 %v2240, %v2469
        %v2553 = vadd.f32 %v2241, %v2471
        %v2554 = vadd.f32 %v2242, %v2474
        %v2555 = vadd.f32 %v2243, %v2476
        %v2556 = vadd.f32 %v2244, %v2479
        %v2557 = vadd.f32 %v2245, %v2481
        %v2558 = vadd.f32 %v2246, %v2484
        %v2559 = vadd.f32 %v2247, %v2486
        %v2560 = vadd.f32 %v2248, %v2489
        %v2561 = vadd.f32 %v2249, %v2491
        %v2562 = vadd.f32 %v2250, %v2494
        %v2563 = vadd.f32 %v2251, %v2496
        %v2564 = vadd.f32 %v2252, %v2499
        %v2565 = vadd.f32 %v2253, %v2501
        %v2566 = vld [vmem:[%s682] sm:$0xe]
        %v2567 = vld [vmem:[%s682 + $0xc] sm:$0xe]
        %v2568 = vld [vmem:[%s682 + $0x18] sm:$0xe]
        %v2569 = vld [vmem:[%s682 + $0x24] sm:$0xe]
        %v2570 = vld [vmem:[%s682 + $0x30] sm:$0xe]
        %v2571 = vld [vmem:[%s682 + $0x3c] sm:$0xe]
        %v2572 = vld [vmem:[%s682 + $0x48] sm:$0xe]
        %v2573 = vld [vmem:[%s682 + $0x54] sm:$0xe]
        %v2574 = vld [vmem:[%s682 + $0x60] sm:$0xe]
        %v2575 = vld [vmem:[%s682 + $0x6c] sm:$0xe]
        %v2576 = vld [vmem:[%s682 + $0x78] sm:$0xe]
        %v2577 = vld [vmem:[%s682 + $0x84] sm:$0xe]
        %v2578 = vld [vmem:[%s682 + $0x90] sm:$0xe]
        %v2579 = vld [vmem:[%s682 + $0x9c] sm:$0xe]
        %v2580 = vld [vmem:[%s682 + $0xa8] sm:$0xe]
        %v2581 = vld [vmem:[%s682 + $0xb4] sm:$0xe]
        %v2582 = vlaneseq
        %v2583 = vshrl.u32 %v2582, 7
        %v2584 = vsub.s32 2, %v2583
        %v2585 = vrot.slane %v1506, %v2584
        %v2587 = vunpack.c.l.b16 %v2585
        %v2588 = vpack.c.b16 %v2587, %v2587
        %v2590 = vmul.bf16 %v2566, %v2588
        %v2591 = vmul.bf16 %v2119, %v2588
        %v2592 = vmul.bf16 %v2254, %v2588
        %v2593 = vmul.bf16 %v2567, %v2588
        %v2594 = vmul.bf16 %v2121, %v2588
        %v2595 = vmul.bf16 %v2255, %v2588
        %v2596 = vmul.bf16 %v2568, %v2588
        %v2597 = vmul.bf16 %v2123, %v2588
        %v2598 = vmul.bf16 %v2256, %v2588
        %v2599 = vmul.bf16 %v2569, %v2588
        %v2600 = vmul.bf16 %v2125, %v2588
        %v2601 = vmul.bf16 %v2257, %v2588
        %v2602 = vmul.bf16 %v2570, %v2588
        %v2603 = vmul.bf16 %v2127, %v2588
        %v2604 = vmul.bf16 %v2258, %v2588
        %v2605 = vmul.bf16 %v2571, %v2588
        %v2606 = vmul.bf16 %v2129, %v2588
        %v2607 = vmul.bf16 %v2259, %v2588
        %v2608 = vmul.bf16 %v2572, %v2588
        %v2609 = vmul.bf16 %v2131, %v2588
        %v2610 = vmul.bf16 %v2260, %v2588
        %v2611 = vmul.bf16 %v2573, %v2588
        %v2612 = vmul.bf16 %v2133, %v2588
        %v2613 = vmul.bf16 %v2261, %v2588
        %v2614 = vmul.bf16 %v2574, %v2588
        %v2615 = vmul.bf16 %v2135, %v2588
        %v2616 = vmul.bf16 %v2262, %v2588
        %v2617 = vmul.bf16 %v2575, %v2588
        %v2618 = vmul.bf16 %v2137, %v2588
        %v2619 = vmul.bf16 %v2263, %v2588
        %v2620 = vmul.bf16 %v2576, %v2588
        %v2621 = vmul.bf16 %v2139, %v2588
        %v2622 = vmul.bf16 %v2264, %v2588
        %v2623 = vmul.bf16 %v2577, %v2588
        %v2624 = vmul.bf16 %v2141, %v2588
        %v2625 = vmul.bf16 %v2265, %v2588
        %v2626 = vmul.bf16 %v2578, %v2588
        %v2627 = vmul.bf16 %v2143, %v2588
        %v2628 = vmul.bf16 %v2266, %v2588
        %v2629 = vmul.bf16 %v2579, %v2588
        %v2630 = vmul.bf16 %v2145, %v2588
        %v2631 = vmul.bf16 %v2267, %v2588
        %v2632 = vmul.bf16 %v2580, %v2588
        %v2633 = vmul.bf16 %v2147, %v2588
        %v2634 = vmul.bf16 %v2268, %v2588
        %v2635 = vmul.bf16 %v2581, %v2588
        %v2636 = vmul.bf16 %v2149, %v2588
        %v2637 = vmul.bf16 %v2269, %v2588
        %v2638 = vunpack.c.l.bf16 %v2590
        %v2639 = vunpack.c.l.bf16 %v2591
        %v2640 = vunpack.c.l.bf16 %v2592
        %v2641 = vunpack.c.l.bf16 %v2593
        %v2642 = vunpack.c.l.bf16 %v2594
        %v2643 = vunpack.c.l.bf16 %v2595
        %v2644 = vunpack.c.l.bf16 %v2596
        %v2645 = vunpack.c.l.bf16 %v2597
        %v2646 = vunpack.c.l.bf16 %v2598
        %v2647 = vunpack.c.l.bf16 %v2599
        %v2648 = vunpack.c.l.bf16 %v2600
        %v2649 = vunpack.c.l.bf16 %v2601
        %v2650 = vunpack.c.l.bf16 %v2602
        %v2651 = vunpack.c.l.bf16 %v2603
        %v2652 = vunpack.c.l.bf16 %v2604
        %v2653 = vunpack.c.l.bf16 %v2605
        %v2654 = vunpack.c.l.bf16 %v2606
        %v2655 = vunpack.c.l.bf16 %v2607
        %v2656 = vunpack.c.l.bf16 %v2608
        %v2657 = vunpack.c.l.bf16 %v2609
        %v2658 = vunpack.c.l.bf16 %v2610
        %v2659 = vunpack.c.l.bf16 %v2611
        %v2660 = vunpack.c.l.bf16 %v2612
        %v2661 = vunpack.c.l.bf16 %v2613
        %v2662 = vunpack.c.l.bf16 %v2614
        %v2663 = vunpack.c.l.bf16 %v2615
        %v2664 = vunpack.c.l.bf16 %v2616
        %v2665 = vunpack.c.l.bf16 %v2617
        %v2666 = vunpack.c.l.bf16 %v2618
        %v2667 = vunpack.c.l.bf16 %v2619
        %v2668 = vunpack.c.l.bf16 %v2620
        %v2669 = vunpack.c.l.bf16 %v2621
        %v2670 = vunpack.c.l.bf16 %v2622
        %v2671 = vunpack.c.l.bf16 %v2623
        %v2672 = vunpack.c.l.bf16 %v2624
        %v2673 = vunpack.c.l.bf16 %v2625
        %v2674 = vunpack.c.l.bf16 %v2626
        %v2675 = vunpack.c.l.bf16 %v2627
        %v2676 = vunpack.c.l.bf16 %v2628
        %v2677 = vunpack.c.l.bf16 %v2629
        %v2678 = vunpack.c.l.bf16 %v2630
        %v2679 = vunpack.c.l.bf16 %v2631
        %v2680 = vunpack.c.l.bf16 %v2632
        %v2681 = vunpack.c.l.bf16 %v2633
        %v2682 = vunpack.c.l.bf16 %v2634
        %v2683 = vunpack.c.l.bf16 %v2635
        %v2684 = vunpack.c.l.bf16 %v2636
        %v2685 = vunpack.c.l.bf16 %v2637
        %v2734 = vrot.slane %v2638, 2
        %v2735 = vrot.slane %v2639, 2
        %v2736 = vsel %vm1973, %v2734, %v2735
        %v2737 = vrot.slane %v2640, 2
        %v2738 = vsel %vm1973, %v2735, %v2737
        %v2739 = vrot.slane %v2641, 2
        %v2740 = vrot.slane %v2642, 2
        %v2741 = vsel %vm1973, %v2739, %v2740
        %v2742 = vrot.slane %v2643, 2
        %v2743 = vsel %vm1973, %v2740, %v2742
        %v2744 = vrot.slane %v2644, 2
        %v2745 = vrot.slane %v2645, 2
        %v2746 = vsel %vm1973, %v2744, %v2745
        %v2747 = vrot.slane %v2646, 2
        %v2748 = vsel %vm1973, %v2745, %v2747
        %v2749 = vrot.slane %v2647, 2
        %v2750 = vrot.slane %v2648, 2
        %v2751 = vsel %vm1973, %v2749, %v2750
        %v2752 = vrot.slane %v2649, 2
        %v2753 = vsel %vm1973, %v2750, %v2752
        %v2754 = vrot.slane %v2650, 2
        %v2755 = vrot.slane %v2651, 2
        %v2756 = vsel %vm1973, %v2754, %v2755
        %v2757 = vrot.slane %v2652, 2
        %v2758 = vsel %vm1973, %v2755, %v2757
        %v2759 = vrot.slane %v2653, 2
        %v2760 = vrot.slane %v2654, 2
        %v2761 = vsel %vm1973, %v2759, %v2760
        %v2762 = vrot.slane %v2655, 2
        %v2763 = vsel %vm1973, %v2760, %v2762
        %v2764 = vrot.slane %v2656, 2
        %v2765 = vrot.slane %v2657, 2
        %v2766 = vsel %vm1973, %v2764, %v2765
        %v2767 = vrot.slane %v2658, 2
        %v2768 = vsel %vm1973, %v2765, %v2767
        %v2769 = vrot.slane %v2659, 2
        %v2770 = vrot.slane %v2660, 2
        %v2771 = vsel %vm1973, %v2769, %v2770
        %v2772 = vrot.slane %v2661, 2
        %v2773 = vsel %vm1973, %v2770, %v2772
        %v2774 = vrot.slane %v2662, 2
        %v2775 = vrot.slane %v2663, 2
        %v2776 = vsel %vm1973, %v2774, %v2775
        %v2777 = vrot.slane %v2664, 2
        %v2778 = vsel %vm1973, %v2775, %v2777
        %v2779 = vrot.slane %v2665, 2
        %v2780 = vrot.slane %v2666, 2
        %v2781 = vsel %vm1973, %v2779, %v2780
        %v2782 = vrot.slane %v2667, 2
        %v2783 = vsel %vm1973, %v2780, %v2782
        %v2784 = vrot.slane %v2668, 2
        %v2785 = vrot.slane %v2669, 2
        %v2786 = vsel %vm1973, %v2784, %v2785
        %v2787 = vrot.slane %v2670, 2
        %v2788 = vsel %vm1973, %v2785, %v2787
        %v2789 = vrot.slane %v2671, 2
        %v2790 = vrot.slane %v2672, 2
        %v2791 = vsel %vm1973, %v2789, %v2790
        %v2792 = vrot.slane %v2673, 2
        %v2793 = vsel %vm1973, %v2790, %v2792
        %v2794 = vrot.slane %v2674, 2
        %v2795 = vrot.slane %v2675, 2
        %v2796 = vsel %vm1973, %v2794, %v2795
        %v2797 = vrot.slane %v2676, 2
        %v2798 = vsel %vm1973, %v2795, %v2797
        %v2799 = vrot.slane %v2677, 2
        %v2800 = vrot.slane %v2678, 2
        %v2801 = vsel %vm1973, %v2799, %v2800
        %v2802 = vrot.slane %v2679, 2
        %v2803 = vsel %vm1973, %v2800, %v2802
        %v2804 = vrot.slane %v2680, 2
        %v2805 = vrot.slane %v2681, 2
        %v2806 = vsel %vm1973, %v2804, %v2805
        %v2807 = vrot.slane %v2682, 2
        %v2808 = vsel %vm1973, %v2805, %v2807
        %v2809 = vrot.slane %v2683, 2
        %v2810 = vrot.slane %v2684, 2
        %v2811 = vsel %vm1973, %v2809, %v2810
        %v2812 = vrot.slane %v2685, 2
        %v2813 = vsel %vm1973, %v2810, %v2812
        %v2846 = vadd.f32 %v2534, %v2736
        %v2847 = vadd.f32 %v2535, %v2738
        %v2848 = vadd.f32 %v2536, %v2741
        %v2849 = vadd.f32 %v2537, %v2743
        %v2850 = vadd.f32 %v2538, %v2746
        %v2851 = vadd.f32 %v2539, %v2748
        %v2852 = vadd.f32 %v2540, %v2751
        %v2853 = vadd.f32 %v2541, %v2753
        %v2854 = vadd.f32 %v2542, %v2756
        %v2855 = vadd.f32 %v2543, %v2758
        %v2856 = vadd.f32 %v2544, %v2761
        %v2857 = vadd.f32 %v2545, %v2763
        %v2858 = vadd.f32 %v2546, %v2766
        %v2859 = vadd.f32 %v2547, %v2768
        %v2860 = vadd.f32 %v2548, %v2771
        %v2861 = vadd.f32 %v2549, %v2773
        %v2862 = vadd.f32 %v2550, %v2776
        %v2863 = vadd.f32 %v2551, %v2778
        %v2864 = vadd.f32 %v2552, %v2781
        %v2865 = vadd.f32 %v2553, %v2783
        %v2866 = vadd.f32 %v2554, %v2786
        %v2867 = vadd.f32 %v2555, %v2788
        %v2868 = vadd.f32 %v2556, %v2791
        %v2869 = vadd.f32 %v2557, %v2793
        %v2870 = vadd.f32 %v2558, %v2796
        %v2871 = vadd.f32 %v2559, %v2798
        %v2872 = vadd.f32 %v2560, %v2801
        %v2873 = vadd.f32 %v2561, %v2803
        %v2874 = vadd.f32 %v2562, %v2806
        %v2875 = vadd.f32 %v2563, %v2808
        %v2876 = vadd.f32 %v2564, %v2811
        %v2877 = vadd.f32 %v2565, %v2813
        %s2878 = scalar_lea.vmem [#allocation2], 24
        %v2879 = vld [vmem:[%s2878] sm:$0xf]
        %v2880 = vld [vmem:[%s2878 + $0x4] sm:$0xf]
        %v2881 = vld [vmem:[%s2878 + $0xc] sm:$0xf]
        %v2882 = vld [vmem:[%s2878 + $0x10] sm:$0xf]
        %v2883 = vld [vmem:[%s2878 + $0x18] sm:$0xf]
        %v2884 = vld [vmem:[%s2878 + $0x1c] sm:$0xf]
        %v2885 = vld [vmem:[%s2878 + $0x24] sm:$0xf]
        %v2886 = vld [vmem:[%s2878 + $0x28] sm:$0xf]
        %v2887 = vld [vmem:[%s2878 + $0x30] sm:$0xf]
        %v2888 = vld [vmem:[%s2878 + $0x34] sm:$0xf]
        %v2889 = vld [vmem:[%s2878 + $0x3c] sm:$0xf]
        %v2890 = vld [vmem:[%s2878 + $0x40] sm:$0xf]
        %v2891 = vld [vmem:[%s2878 + $0x48] sm:$0xf]
        %v2892 = vld [vmem:[%s2878 + $0x4c] sm:$0xf]
        %v2893 = vld [vmem:[%s2878 + $0x54] sm:$0xf]
        %v2894 = vld [vmem:[%s2878 + $0x58] sm:$0xf]
        %v2895 = vld [vmem:[%s2878 + $0x60] sm:$0xf]
        %v2896 = vld [vmem:[%s2878 + $0x64] sm:$0xf]
        %v2897 = vld [vmem:[%s2878 + $0x6c] sm:$0xf]
        %v2898 = vld [vmem:[%s2878 + $0x70] sm:$0xf]
        %v2899 = vld [vmem:[%s2878 + $0x78] sm:$0xf]
        %v2900 = vld [vmem:[%s2878 + $0x7c] sm:$0xf]
        %v2901 = vld [vmem:[%s2878 + $0x84] sm:$0xf]
        %v2902 = vld [vmem:[%s2878 + $0x88] sm:$0xf]
        %v2903 = vld [vmem:[%s2878 + $0x90] sm:$0xf]
        %v2904 = vld [vmem:[%s2878 + $0x94] sm:$0xf]
        %v2905 = vld [vmem:[%s2878 + $0x9c] sm:$0xf]
        %v2906 = vld [vmem:[%s2878 + $0xa0] sm:$0xf]
        %v2907 = vld [vmem:[%s2878 + $0xa8] sm:$0xf]
        %v2908 = vld [vmem:[%s2878 + $0xac] sm:$0xf]
        %v2909 = vld [vmem:[%s2878 + $0xb4] sm:$0xf]
        %v2910 = vld [vmem:[%s2878 + $0xb8] sm:$0xf]
        %v2911 = vlaneseq
        %v2912 = vshrl.u32 %v2911, 7
        %v2913 = vsub.s32 3, %v2912
        %v2914 = vrot.slane %v1415, %v2913
        %v2916 = vunpack.c.l.b16 %v2914
        %v2917 = vpack.c.b16 %v2916, %v2916
        %v2919 = vmul.bf16 %v2879, %v2917
        %v2920 = vmul.bf16 %v2880, %v2917
        %v2921 = vmul.bf16 %v2881, %v2917
        %v2922 = vmul.bf16 %v2882, %v2917
        %v2923 = vmul.bf16 %v2883, %v2917
        %v2924 = vmul.bf16 %v2884, %v2917
        %v2925 = vmul.bf16 %v2885, %v2917
        %v2926 = vmul.bf16 %v2886, %v2917
        %v2927 = vmul.bf16 %v2887, %v2917
        %v2928 = vmul.bf16 %v2888, %v2917
        %v2929 = vmul.bf16 %v2889, %v2917
        %v2930 = vmul.bf16 %v2890, %v2917
        %v2931 = vmul.bf16 %v2891, %v2917
        %v2932 = vmul.bf16 %v2892, %v2917
        %v2933 = vmul.bf16 %v2893, %v2917
        %v2934 = vmul.bf16 %v2894, %v2917
        %v2935 = vmul.bf16 %v2895, %v2917
        %v2936 = vmul.bf16 %v2896, %v2917
        %v2937 = vmul.bf16 %v2897, %v2917
        %v2938 = vmul.bf16 %v2898, %v2917
        %v2939 = vmul.bf16 %v2899, %v2917
        %v2940 = vmul.bf16 %v2900, %v2917
        %v2941 = vmul.bf16 %v2901, %v2917
        %v2942 = vmul.bf16 %v2902, %v2917
        %v2943 = vmul.bf16 %v2903, %v2917
        %v2944 = vmul.bf16 %v2904, %v2917
        %v2945 = vmul.bf16 %v2905, %v2917
        %v2946 = vmul.bf16 %v2906, %v2917
        %v2947 = vmul.bf16 %v2907, %v2917
        %v2948 = vmul.bf16 %v2908, %v2917
        %v2949 = vmul.bf16 %v2909, %v2917
        %v2950 = vmul.bf16 %v2910, %v2917
        %v2951 = vunpack.c.l.bf16 %v2919
        %v2952 = vunpack.c.l.bf16 %v2920
        %v2953 = vunpack.c.l.bf16 %v2921
        %v2954 = vunpack.c.l.bf16 %v2922
        %v2955 = vunpack.c.l.bf16 %v2923
        %v2956 = vunpack.c.l.bf16 %v2924
        %v2957 = vunpack.c.l.bf16 %v2925
        %v2958 = vunpack.c.l.bf16 %v2926
        %v2959 = vunpack.c.l.bf16 %v2927
        %v2960 = vunpack.c.l.bf16 %v2928
        %v2961 = vunpack.c.l.bf16 %v2929
        %v2962 = vunpack.c.l.bf16 %v2930
        %v2963 = vunpack.c.l.bf16 %v2931
        %v2964 = vunpack.c.l.bf16 %v2932
        %v2965 = vunpack.c.l.bf16 %v2933
        %v2966 = vunpack.c.l.bf16 %v2934
        %v2967 = vunpack.c.l.bf16 %v2935
        %v2968 = vunpack.c.l.bf16 %v2936
        %v2969 = vunpack.c.l.bf16 %v2937
        %v2970 = vunpack.c.l.bf16 %v2938
        %v2971 = vunpack.c.l.bf16 %v2939
        %v2972 = vunpack.c.l.bf16 %v2940
        %v2973 = vunpack.c.l.bf16 %v2941
        %v2974 = vunpack.c.l.bf16 %v2942
        %v2975 = vunpack.c.l.bf16 %v2943
        %v2976 = vunpack.c.l.bf16 %v2944
        %v2977 = vunpack.c.l.bf16 %v2945
        %v2978 = vunpack.c.l.bf16 %v2946
        %v2979 = vunpack.c.l.bf16 %v2947
        %v2980 = vunpack.c.l.bf16 %v2948
        %v2981 = vunpack.c.l.bf16 %v2949
        %v2982 = vunpack.c.l.bf16 %v2950
        %v2983 = vadd.f32 %v2846, %v2951
        %v2984 = vadd.f32 %v2847, %v2952
        %v2985 = vadd.f32 %v2848, %v2953
        %v2986 = vadd.f32 %v2849, %v2954
        %v2987 = vadd.f32 %v2850, %v2955
        %v2988 = vadd.f32 %v2851, %v2956
        %v2989 = vadd.f32 %v2852, %v2957
        %v2990 = vadd.f32 %v2853, %v2958
        %v2991 = vadd.f32 %v2854, %v2959
        %v2992 = vadd.f32 %v2855, %v2960
        %v2993 = vadd.f32 %v2856, %v2961
        %v2994 = vadd.f32 %v2857, %v2962
        %v2995 = vadd.f32 %v2858, %v2963
        %v2996 = vadd.f32 %v2859, %v2964
        %v2997 = vadd.f32 %v2860, %v2965
        %v2998 = vadd.f32 %v2861, %v2966
        %v2999 = vadd.f32 %v2862, %v2967
        %v3000 = vadd.f32 %v2863, %v2968
        %v3001 = vadd.f32 %v2864, %v2969
        %v3002 = vadd.f32 %v2865, %v2970
        %v3003 = vadd.f32 %v2866, %v2971
        %v3004 = vadd.f32 %v2867, %v2972
        %v3005 = vadd.f32 %v2868, %v2973
        %v3006 = vadd.f32 %v2869, %v2974
        %v3007 = vadd.f32 %v2870, %v2975
        %v3008 = vadd.f32 %v2871, %v2976
        %v3009 = vadd.f32 %v2872, %v2977
        %v3010 = vadd.f32 %v2873, %v2978
        %v3011 = vadd.f32 %v2874, %v2979
        %v3012 = vadd.f32 %v2875, %v2980
        %v3013 = vadd.f32 %v2876, %v2981
        %v3014 = vadd.f32 %v2877, %v2982
        %v3015 = vld [vmem:[%s2878 + $0x8] sm:$0x1]
        %v3016 = vld [vmem:[%s2878 + $0x14] sm:$0x1]
        %v3017 = vld [vmem:[%s2878 + $0x20] sm:$0x1]
        %v3018 = vld [vmem:[%s2878 + $0x2c] sm:$0x1]
        %v3019 = vld [vmem:[%s2878 + $0x38] sm:$0x1]
        %v3020 = vld [vmem:[%s2878 + $0x44] sm:$0x1]
        %v3021 = vld [vmem:[%s2878 + $0x50] sm:$0x1]
        %v3022 = vld [vmem:[%s2878 + $0x5c] sm:$0x1]
        %v3023 = vld [vmem:[%s2878 + $0x68] sm:$0x1]
        %v3024 = vld [vmem:[%s2878 + $0x74] sm:$0x1]
        %v3025 = vld [vmem:[%s2878 + $0x80] sm:$0x1]
        %v3026 = vld [vmem:[%s2878 + $0x8c] sm:$0x1]
        %v3027 = vld [vmem:[%s2878 + $0x98] sm:$0x1]
        %v3028 = vld [vmem:[%s2878 + $0xa4] sm:$0x1]
        %v3029 = vld [vmem:[%s2878 + $0xb0] sm:$0x1]
        %v3030 = vld [vmem:[%s2878 + $0xbc] sm:$0x1]
        %v3031 = vlaneseq
        %v3032 = vshrl.u32 %v3031, 7
        %v3033 = vsub.s32 3, %v3032
        %v3034 = vrot.slane %v1506, %v3033
        %v3036 = vunpack.c.l.b16 %v3034
        %v3037 = vpack.c.b16 %v3036, %v3036
        %v3039 = vmul.bf16 %v2879, %v3037
        %v3040 = vmul.bf16 %v2880, %v3037
        %v3041 = vmul.bf16 %v3015, %v3037
        %v3042 = vmul.bf16 %v2881, %v3037
        %v3043 = vmul.bf16 %v2882, %v3037
        %v3044 = vmul.bf16 %v3016, %v3037
        %v3045 = vmul.bf16 %v2883, %v3037
        %v3046 = vmul.bf16 %v2884, %v3037
        %v3047 = vmul.bf16 %v3017, %v3037
        %v3048 = vmul.bf16 %v2885, %v3037
        %v3049 = vmul.bf16 %v2886, %v3037
        %v3050 = vmul.bf16 %v3018, %v3037
        %v3051 = vmul.bf16 %v2887, %v3037
        %v3052 = vmul.bf16 %v2888, %v3037
        %v3053 = vmul.bf16 %v3019, %v3037
        %v3054 = vmul.bf16 %v2889, %v3037
        %v3055 = vmul.bf16 %v2890, %v3037
        %v3056 = vmul.bf16 %v3020, %v3037
        %v3057 = vmul.bf16 %v2891, %v3037
        %v3058 = vmul.bf16 %v2892, %v3037
        %v3059 = vmul.bf16 %v3021, %v3037
        %v3060 = vmul.bf16 %v2893, %v3037
        %v3061 = vmul.bf16 %v2894, %v3037
        %v3062 = vmul.bf16 %v3022, %v3037
        %v3063 = vmul.bf16 %v2895, %v3037
        %v3064 = vmul.bf16 %v2896, %v3037
        %v3065 = vmul.bf16 %v3023, %v3037
        %v3066 = vmul.bf16 %v2897, %v3037
        %v3067 = vmul.bf16 %v2898, %v3037
        %v3068 = vmul.bf16 %v3024, %v3037
        %v3069 = vmul.bf16 %v2899, %v3037
        %v3070 = vmul.bf16 %v2900, %v3037
        %v3071 = vmul.bf16 %v3025, %v3037
        %v3072 = vmul.bf16 %v2901, %v3037
        %v3073 = vmul.bf16 %v2902, %v3037
        %v3074 = vmul.bf16 %v3026, %v3037
        %v3075 = vmul.bf16 %v2903, %v3037
        %v3076 = vmul.bf16 %v2904, %v3037
        %v3077 = vmul.bf16 %v3027, %v3037
        %v3078 = vmul.bf16 %v2905, %v3037
        %v3079 = vmul.bf16 %v2906, %v3037
        %v3080 = vmul.bf16 %v3028, %v3037
        %v3081 = vmul.bf16 %v2907, %v3037
        %v3082 = vmul.bf16 %v2908, %v3037
        %v3083 = vmul.bf16 %v3029, %v3037
        %v3084 = vmul.bf16 %v2909, %v3037
        %v3085 = vmul.bf16 %v2910, %v3037
        %v3086 = vmul.bf16 %v3030, %v3037
        %v3087 = vunpack.c.l.bf16 %v3039
        %v3088 = vunpack.c.l.bf16 %v3040
        %v3089 = vunpack.c.l.bf16 %v3041
        %v3090 = vunpack.c.l.bf16 %v3042
        %v3091 = vunpack.c.l.bf16 %v3043
        %v3092 = vunpack.c.l.bf16 %v3044
        %v3093 = vunpack.c.l.bf16 %v3045
        %v3094 = vunpack.c.l.bf16 %v3046
        %v3095 = vunpack.c.l.bf16 %v3047
        %v3096 = vunpack.c.l.bf16 %v3048
        %v3097 = vunpack.c.l.bf16 %v3049
        %v3098 = vunpack.c.l.bf16 %v3050
        %v3099 = vunpack.c.l.bf16 %v3051
        %v3100 = vunpack.c.l.bf16 %v3052
        %v3101 = vunpack.c.l.bf16 %v3053
        %v3102 = vunpack.c.l.bf16 %v3054
        %v3103 = vunpack.c.l.bf16 %v3055
        %v3104 = vunpack.c.l.bf16 %v3056
        %v3105 = vunpack.c.l.bf16 %v3057
        %v3106 = vunpack.c.l.bf16 %v3058
        %v3107 = vunpack.c.l.bf16 %v3059
        %v3108 = vunpack.c.l.bf16 %v3060
        %v3109 = vunpack.c.l.bf16 %v3061
        %v3110 = vunpack.c.l.bf16 %v3062
        %v3111 = vunpack.c.l.bf16 %v3063
        %v3112 = vunpack.c.l.bf16 %v3064
        %v3113 = vunpack.c.l.bf16 %v3065
        %v3114 = vunpack.c.l.bf16 %v3066
        %v3115 = vunpack.c.l.bf16 %v3067
        %v3116 = vunpack.c.l.bf16 %v3068
        %v3117 = vunpack.c.l.bf16 %v3069
        %v3118 = vunpack.c.l.bf16 %v3070
        %v3119 = vunpack.c.l.bf16 %v3071
        %v3120 = vunpack.c.l.bf16 %v3072
        %v3121 = vunpack.c.l.bf16 %v3073
        %v3122 = vunpack.c.l.bf16 %v3074
        %v3123 = vunpack.c.l.bf16 %v3075
        %v3124 = vunpack.c.l.bf16 %v3076
        %v3125 = vunpack.c.l.bf16 %v3077
        %v3126 = vunpack.c.l.bf16 %v3078
        %v3127 = vunpack.c.l.bf16 %v3079
        %v3128 = vunpack.c.l.bf16 %v3080
        %v3129 = vunpack.c.l.bf16 %v3081
        %v3130 = vunpack.c.l.bf16 %v3082
        %v3131 = vunpack.c.l.bf16 %v3083
        %v3132 = vunpack.c.l.bf16 %v3084
        %v3133 = vunpack.c.l.bf16 %v3085
        %v3134 = vunpack.c.l.bf16 %v3086
        %v3183 = vrot.slane %v3087, 1
        %v3184 = vrot.slane %v3088, 1
        %v3185 = vsel %vm1660, %v3183, %v3184
        %v3186 = vrot.slane %v3089, 1
        %v3187 = vsel %vm1660, %v3184, %v3186
        %v3188 = vrot.slane %v3090, 1
        %v3189 = vrot.slane %v3091, 1
        %v3190 = vsel %vm1660, %v3188, %v3189
        %v3191 = vrot.slane %v3092, 1
        %v3192 = vsel %vm1660, %v3189, %v3191
        %v3193 = vrot.slane %v3093, 1
        %v3194 = vrot.slane %v3094, 1
        %v3195 = vsel %vm1660, %v3193, %v3194
        %v3196 = vrot.slane %v3095, 1
        %v3197 = vsel %vm1660, %v3194, %v3196
        %v3198 = vrot.slane %v3096, 1
        %v3199 = vrot.slane %v3097, 1
        %v3200 = vsel %vm1660, %v3198, %v3199
        %v3201 = vrot.slane %v3098, 1
        %v3202 = vsel %vm1660, %v3199, %v3201
        %v3203 = vrot.slane %v3099, 1
        %v3204 = vrot.slane %v3100, 1
        %v3205 = vsel %vm1660, %v3203, %v3204
        %v3206 = vrot.slane %v3101, 1
        %v3207 = vsel %vm1660, %v3204, %v3206
        %v3208 = vrot.slane %v3102, 1
        %v3209 = vrot.slane %v3103, 1
        %v3210 = vsel %vm1660, %v3208, %v3209
        %v3211 = vrot.slane %v3104, 1
        %v3212 = vsel %vm1660, %v3209, %v3211
        %v3213 = vrot.slane %v3105, 1
        %v3214 = vrot.slane %v3106, 1
        %v3215 = vsel %vm1660, %v3213, %v3214
        %v3216 = vrot.slane %v3107, 1
        %v3217 = vsel %vm1660, %v3214, %v3216
        %v3218 = vrot.slane %v3108, 1
        %v3219 = vrot.slane %v3109, 1
        %v3220 = vsel %vm1660, %v3218, %v3219
        %v3221 = vrot.slane %v3110, 1
        %v3222 = vsel %vm1660, %v3219, %v3221
        %v3223 = vrot.slane %v3111, 1
        %v3224 = vrot.slane %v3112, 1
        %v3225 = vsel %vm1660, %v3223, %v3224
        %v3226 = vrot.slane %v3113, 1
        %v3227 = vsel %vm1660, %v3224, %v3226
        %v3228 = vrot.slane %v3114, 1
        %v3229 = vrot.slane %v3115, 1
        %v3230 = vsel %vm1660, %v3228, %v3229
        %v3231 = vrot.slane %v3116, 1
        %v3232 = vsel %vm1660, %v3229, %v3231
        %v3233 = vrot.slane %v3117, 1
        %v3234 = vrot.slane %v3118, 1
        %v3235 = vsel %vm1660, %v3233, %v3234
        %v3236 = vrot.slane %v3119, 1
        %v3237 = vsel %vm1660, %v3234, %v3236
        %v3238 = vrot.slane %v3120, 1
        %v3239 = vrot.slane %v3121, 1
        %v3240 = vsel %vm1660, %v3238, %v3239
        %v3241 = vrot.slane %v3122, 1
        %v3242 = vsel %vm1660, %v3239, %v3241
        %v3243 = vrot.slane %v3123, 1
        %v3244 = vrot.slane %v3124, 1
        %v3245 = vsel %vm1660, %v3243, %v3244
        %v3246 = vrot.slane %v3125, 1
        %v3247 = vsel %vm1660, %v3244, %v3246
        %v3248 = vrot.slane %v3126, 1
        %v3249 = vrot.slane %v3127, 1
        %v3250 = vsel %vm1660, %v3248, %v3249
        %v3251 = vrot.slane %v3128, 1
        %v3252 = vsel %vm1660, %v3249, %v3251
        %v3253 = vrot.slane %v3129, 1
        %v3254 = vrot.slane %v3130, 1
        %v3255 = vsel %vm1660, %v3253, %v3254
        %v3256 = vrot.slane %v3131, 1
        %v3257 = vsel %vm1660, %v3254, %v3256
        %v3258 = vrot.slane %v3132, 1
        %v3259 = vrot.slane %v3133, 1
        %v3260 = vsel %vm1660, %v3258, %v3259
        %v3261 = vrot.slane %v3134, 1
        %v3262 = vsel %vm1660, %v3259, %v3261
        %v3295 = vadd.f32 %v2983, %v3185
        %v3296 = vadd.f32 %v2984, %v3187
        %v3297 = vadd.f32 %v2985, %v3190
        %v3298 = vadd.f32 %v2986, %v3192
        %v3299 = vadd.f32 %v2987, %v3195
        %v3300 = vadd.f32 %v2988, %v3197
        %v3301 = vadd.f32 %v2989, %v3200
        %v3302 = vadd.f32 %v2990, %v3202
        %v3303 = vadd.f32 %v2991, %v3205
        %v3304 = vadd.f32 %v2992, %v3207
        %v3305 = vadd.f32 %v2993, %v3210
        %v3306 = vadd.f32 %v2994, %v3212
        %v3307 = vadd.f32 %v2995, %v3215
        %v3308 = vadd.f32 %v2996, %v3217
        %v3309 = vadd.f32 %v2997, %v3220
        %v3310 = vadd.f32 %v2998, %v3222
        %v3311 = vadd.f32 %v2999, %v3225
        %v3312 = vadd.f32 %v3000, %v3227
        %v3313 = vadd.f32 %v3001, %v3230
        %v3314 = vadd.f32 %v3002, %v3232
        %v3315 = vadd.f32 %v3003, %v3235
        %v3316 = vadd.f32 %v3004, %v3237
        %v3317 = vadd.f32 %v3005, %v3240
        %v3318 = vadd.f32 %v3006, %v3242
        %v3319 = vadd.f32 %v3007, %v3245
        %v3320 = vadd.f32 %v3008, %v3247
        %v3321 = vadd.f32 %v3009, %v3250
        %v3322 = vadd.f32 %v3010, %v3252
        %v3323 = vadd.f32 %v3011, %v3255
        %v3324 = vadd.f32 %v3012, %v3257
        %v3325 = vadd.f32 %v3013, %v3260
        %v3326 = vadd.f32 %v3014, %v3262
        %v3327 = vld [vmem:[%s2878] sm:$0xe]
        %v3328 = vld [vmem:[%s2878 + $0xc] sm:$0xe]
        %v3329 = vld [vmem:[%s2878 + $0x18] sm:$0xe]
        %v3330 = vld [vmem:[%s2878 + $0x24] sm:$0xe]
        %v3331 = vld [vmem:[%s2878 + $0x30] sm:$0xe]
        %v3332 = vld [vmem:[%s2878 + $0x3c] sm:$0xe]
        %v3333 = vld [vmem:[%s2878 + $0x48] sm:$0xe]
        %v3334 = vld [vmem:[%s2878 + $0x54] sm:$0xe]
        %v3335 = vld [vmem:[%s2878 + $0x60] sm:$0xe]
        %v3336 = vld [vmem:[%s2878 + $0x6c] sm:$0xe]
        %v3337 = vld [vmem:[%s2878 + $0x78] sm:$0xe]
        %v3338 = vld [vmem:[%s2878 + $0x84] sm:$0xe]
        %v3339 = vld [vmem:[%s2878 + $0x90] sm:$0xe]
        %v3340 = vld [vmem:[%s2878 + $0x9c] sm:$0xe]
        %v3341 = vld [vmem:[%s2878 + $0xa8] sm:$0xe]
        %v3342 = vld [vmem:[%s2878 + $0xb4] sm:$0xe]
        %v3344 = vpack.i.b16 %v1381, %v1381
        %v3346 = vlaneseq
        %v3347 = vshrl.u32 %v3346, 7
        %v3348 = vsub.s32 0, %v3347
        %v3349 = vrot.slane %v3344, %v3348
        %v3351 = vunpack.c.l.b16 %v3349
        %v3352 = vpack.c.b16 %v3351, %v3351
        %v3354 = vmul.bf16 %v3327, %v3352
        %v3355 = vmul.bf16 %v2880, %v3352
        %v3356 = vmul.bf16 %v3015, %v3352
        %v3357 = vmul.bf16 %v3328, %v3352
        %v3358 = vmul.bf16 %v2882, %v3352
        %v3359 = vmul.bf16 %v3016, %v3352
        %v3360 = vmul.bf16 %v3329, %v3352
        %v3361 = vmul.bf16 %v2884, %v3352
        %v3362 = vmul.bf16 %v3017, %v3352
        %v3363 = vmul.bf16 %v3330, %v3352
        %v3364 = vmul.bf16 %v2886, %v3352
        %v3365 = vmul.bf16 %v3018, %v3352
        %v3366 = vmul.bf16 %v3331, %v3352
        %v3367 = vmul.bf16 %v2888, %v3352
        %v3368 = vmul.bf16 %v3019, %v3352
        %v3369 = vmul.bf16 %v3332, %v3352
        %v3370 = vmul.bf16 %v2890, %v3352
        %v3371 = vmul.bf16 %v3020, %v3352
        %v3372 = vmul.bf16 %v3333, %v3352
        %v3373 = vmul.bf16 %v2892, %v3352
        %v3374 = vmul.bf16 %v3021, %v3352
        %v3375 = vmul.bf16 %v3334, %v3352
        %v3376 = vmul.bf16 %v2894, %v3352
        %v3377 = vmul.bf16 %v3022, %v3352
        %v3378 = vmul.bf16 %v3335, %v3352
        %v3379 = vmul.bf16 %v2896, %v3352
        %v3380 = vmul.bf16 %v3023, %v3352
        %v3381 = vmul.bf16 %v3336, %v3352
        %v3382 = vmul.bf16 %v2898, %v3352
        %v3383 = vmul.bf16 %v3024, %v3352
        %v3384 = vmul.bf16 %v3337, %v3352
        %v3385 = vmul.bf16 %v2900, %v3352
        %v3386 = vmul.bf16 %v3025, %v3352
        %v3387 = vmul.bf16 %v3338, %v3352
        %v3388 = vmul.bf16 %v2902, %v3352
        %v3389 = vmul.bf16 %v3026, %v3352
        %v3390 = vmul.bf16 %v3339, %v3352
        %v3391 = vmul.bf16 %v2904, %v3352
        %v3392 = vmul.bf16 %v3027, %v3352
        %v3393 = vmul.bf16 %v3340, %v3352
        %v3394 = vmul.bf16 %v2906, %v3352
        %v3395 = vmul.bf16 %v3028, %v3352
        %v3396 = vmul.bf16 %v3341, %v3352
        %v3397 = vmul.bf16 %v2908, %v3352
        %v3398 = vmul.bf16 %v3029, %v3352
        %v3399 = vmul.bf16 %v3342, %v3352
        %v3400 = vmul.bf16 %v2910, %v3352
        %v3401 = vmul.bf16 %v3030, %v3352
        %v3402 = vunpack.c.l.bf16 %v3354
        %v3403 = vunpack.c.l.bf16 %v3355
        %v3404 = vunpack.c.l.bf16 %v3356
        %v3405 = vunpack.c.l.bf16 %v3357
        %v3406 = vunpack.c.l.bf16 %v3358
        %v3407 = vunpack.c.l.bf16 %v3359
        %v3408 = vunpack.c.l.bf16 %v3360
        %v3409 = vunpack.c.l.bf16 %v3361
        %v3410 = vunpack.c.l.bf16 %v3362
        %v3411 = vunpack.c.l.bf16 %v3363
        %v3412 = vunpack.c.l.bf16 %v3364
        %v3413 = vunpack.c.l.bf16 %v3365
        %v3414 = vunpack.c.l.bf16 %v3366
        %v3415 = vunpack.c.l.bf16 %v3367
        %v3416 = vunpack.c.l.bf16 %v3368
        %v3417 = vunpack.c.l.bf16 %v3369
        %v3418 = vunpack.c.l.bf16 %v3370
        %v3419 = vunpack.c.l.bf16 %v3371
        %v3420 = vunpack.c.l.bf16 %v3372
        %v3421 = vunpack.c.l.bf16 %v3373
        %v3422 = vunpack.c.l.bf16 %v3374
        %v3423 = vunpack.c.l.bf16 %v3375
        %v3424 = vunpack.c.l.bf16 %v3376
        %v3425 = vunpack.c.l.bf16 %v3377
        %v3426 = vunpack.c.l.bf16 %v3378
        %v3427 = vunpack.c.l.bf16 %v3379
        %v3428 = vunpack.c.l.bf16 %v3380
        %v3429 = vunpack.c.l.bf16 %v3381
        %v3430 = vunpack.c.l.bf16 %v3382
        %v3431 = vunpack.c.l.bf16 %v3383
        %v3432 = vunpack.c.l.bf16 %v3384
        %v3433 = vunpack.c.l.bf16 %v3385
        %v3434 = vunpack.c.l.bf16 %v3386
        %v3435 = vunpack.c.l.bf16 %v3387
        %v3436 = vunpack.c.l.bf16 %v3388
        %v3437 = vunpack.c.l.bf16 %v3389
        %v3438 = vunpack.c.l.bf16 %v3390
        %v3439 = vunpack.c.l.bf16 %v3391
        %v3440 = vunpack.c.l.bf16 %v3392
        %v3441 = vunpack.c.l.bf16 %v3393
        %v3442 = vunpack.c.l.bf16 %v3394
        %v3443 = vunpack.c.l.bf16 %v3395
        %v3444 = vunpack.c.l.bf16 %v3396
        %v3445 = vunpack.c.l.bf16 %v3397
        %v3446 = vunpack.c.l.bf16 %v3398
        %v3447 = vunpack.c.l.bf16 %v3399
        %v3448 = vunpack.c.l.bf16 %v3400
        %v3449 = vunpack.c.l.bf16 %v3401
        %v3498 = vrot.slane %v3402, 2
        %v3499 = vrot.slane %v3403, 2
        %v3500 = vsel %vm1973, %v3498, %v3499
        %v3501 = vrot.slane %v3404, 2
        %v3502 = vsel %vm1973, %v3499, %v3501
        %v3503 = vrot.slane %v3405, 2
        %v3504 = vrot.slane %v3406, 2
        %v3505 = vsel %vm1973, %v3503, %v3504
        %v3506 = vrot.slane %v3407, 2
        %v3507 = vsel %vm1973, %v3504, %v3506
        %v3508 = vrot.slane %v3408, 2
        %v3509 = vrot.slane %v3409, 2
        %v3510 = vsel %vm1973, %v3508, %v3509
        %v3511 = vrot.slane %v3410, 2
        %v3512 = vsel %vm1973, %v3509, %v3511
        %v3513 = vrot.slane %v3411, 2
        %v3514 = vrot.slane %v3412, 2
        %v3515 = vsel %vm1973, %v3513, %v3514
        %v3516 = vrot.slane %v3413, 2
        %v3517 = vsel %vm1973, %v3514, %v3516
        %v3518 = vrot.slane %v3414, 2
        %v3519 = vrot.slane %v3415, 2
        %v3520 = vsel %vm1973, %v3518, %v3519
        %v3521 = vrot.slane %v3416, 2
        %v3522 = vsel %vm1973, %v3519, %v3521
        %v3523 = vrot.slane %v3417, 2
        %v3524 = vrot.slane %v3418, 2
        %v3525 = vsel %vm1973, %v3523, %v3524
        %v3526 = vrot.slane %v3419, 2
        %v3527 = vsel %vm1973, %v3524, %v3526
        %v3528 = vrot.slane %v3420, 2
        %v3529 = vrot.slane %v3421, 2
        %v3530 = vsel %vm1973, %v3528, %v3529
        %v3531 = vrot.slane %v3422, 2
        %v3532 = vsel %vm1973, %v3529, %v3531
        %v3533 = vrot.slane %v3423, 2
        %v3534 = vrot.slane %v3424, 2
        %v3535 = vsel %vm1973, %v3533, %v3534
        %v3536 = vrot.slane %v3425, 2
        %v3537 = vsel %vm1973, %v3534, %v3536
        %v3538 = vrot.slane %v3426, 2
        %v3539 = vrot.slane %v3427, 2
        %v3540 = vsel %vm1973, %v3538, %v3539
        %v3541 = vrot.slane %v3428, 2
        %v3542 = vsel %vm1973, %v3539, %v3541
        %v3543 = vrot.slane %v3429, 2
        %v3544 = vrot.slane %v3430, 2
        %v3545 = vsel %vm1973, %v3543, %v3544
        %v3546 = vrot.slane %v3431, 2
        %v3547 = vsel %vm1973, %v3544, %v3546
        %v3548 = vrot.slane %v3432, 2
        %v3549 = vrot.slane %v3433, 2
        %v3550 = vsel %vm1973, %v3548, %v3549
        %v3551 = vrot.slane %v3434, 2
        %v3552 = vsel %vm1973, %v3549, %v3551
        %v3553 = vrot.slane %v3435, 2
        %v3554 = vrot.slane %v3436, 2
        %v3555 = vsel %vm1973, %v3553, %v3554
        %v3556 = vrot.slane %v3437, 2
        %v3557 = vsel %vm1973, %v3554, %v3556
        %v3558 = vrot.slane %v3438, 2
        %v3559 = vrot.slane %v3439, 2
        %v3560 = vsel %vm1973, %v3558, %v3559
        %v3561 = vrot.slane %v3440, 2
        %v3562 = vsel %vm1973, %v3559, %v3561
        %v3563 = vrot.slane %v3441, 2
        %v3564 = vrot.slane %v3442, 2
        %v3565 = vsel %vm1973, %v3563, %v3564
        %v3566 = vrot.slane %v3443, 2
        %v3567 = vsel %vm1973, %v3564, %v3566
        %v3568 = vrot.slane %v3444, 2
        %v3569 = vrot.slane %v3445, 2
        %v3570 = vsel %vm1973, %v3568, %v3569
        %v3571 = vrot.slane %v3446, 2
        %v3572 = vsel %vm1973, %v3569, %v3571
        %v3573 = vrot.slane %v3447, 2
        %v3574 = vrot.slane %v3448, 2
        %v3575 = vsel %vm1973, %v3573, %v3574
        %v3576 = vrot.slane %v3449, 2
        %v3577 = vsel %vm1973, %v3574, %v3576
        %v3610 = vadd.f32 %v3295, %v3500
        %v3611 = vadd.f32 %v3296, %v3502
        %v3612 = vadd.f32 %v3297, %v3505
        %v3613 = vadd.f32 %v3298, %v3507
        %v3614 = vadd.f32 %v3299, %v3510
        %v3615 = vadd.f32 %v3300, %v3512
        %v3616 = vadd.f32 %v3301, %v3515
        %v3617 = vadd.f32 %v3302, %v3517
        %v3618 = vadd.f32 %v3303, %v3520
        %v3619 = vadd.f32 %v3304, %v3522
        %v3620 = vadd.f32 %v3305, %v3525
        %v3621 = vadd.f32 %v3306, %v3527
        %v3622 = vadd.f32 %v3307, %v3530
        %v3623 = vadd.f32 %v3308, %v3532
        %v3624 = vadd.f32 %v3309, %v3535
        %v3625 = vadd.f32 %v3310, %v3537
        %v3626 = vadd.f32 %v3311, %v3540
        %v3627 = vadd.f32 %v3312, %v3542
        %v3628 = vadd.f32 %v3313, %v3545
        %v3629 = vadd.f32 %v3314, %v3547
        %v3630 = vadd.f32 %v3315, %v3550
        %v3631 = vadd.f32 %v3316, %v3552
        %v3632 = vadd.f32 %v3317, %v3555
        %v3633 = vadd.f32 %v3318, %v3557
        %v3634 = vadd.f32 %v3319, %v3560
        %v3635 = vadd.f32 %v3320, %v3562
        %v3636 = vadd.f32 %v3321, %v3565
        %v3637 = vadd.f32 %v3322, %v3567
        %v3638 = vadd.f32 %v3323, %v3570
        %v3639 = vadd.f32 %v3324, %v3572
        %v3640 = vadd.f32 %v3325, %v3575
        %v3641 = vadd.f32 %v3326, %v3577
        %v3642 = vld [vmem:[#allocation8] sm:$0x1]
        %v3644 = vlaneseq
        %v3645 = vshrl.u32 %v3644, 7
        %v3646 = vsub.s32 0, %v3645
        %v3647 = vrot.slane %v3642, %v3646
        %v3649 = vadd.f32 %v3610, %v3647
        %v3650 = vadd.f32 %v3611, %v3647
        %v3651 = vadd.f32 %v3612, %v3647
        %v3652 = vadd.f32 %v3613, %v3647
        %v3653 = vadd.f32 %v3614, %v3647
        %v3654 = vadd.f32 %v3615, %v3647
        %v3655 = vadd.f32 %v3616, %v3647
        %v3656 = vadd.f32 %v3617, %v3647
        %v3657 = vadd.f32 %v3618, %v3647
        %v3658 = vadd.f32 %v3619, %v3647
        %v3659 = vadd.f32 %v3620, %v3647
        %v3660 = vadd.f32 %v3621, %v3647
        %v3661 = vadd.f32 %v3622, %v3647
        %v3662 = vadd.f32 %v3623, %v3647
        %v3663 = vadd.f32 %v3624, %v3647
        %v3664 = vadd.f32 %v3625, %v3647
        %v3665 = vadd.f32 %v3626, %v3647
        %v3666 = vadd.f32 %v3627, %v3647
        %v3667 = vadd.f32 %v3628, %v3647
        %v3668 = vadd.f32 %v3629, %v3647
        %v3669 = vadd.f32 %v3630, %v3647
        %v3670 = vadd.f32 %v3631, %v3647
        %v3671 = vadd.f32 %v3632, %v3647
        %v3672 = vadd.f32 %v3633, %v3647
        %v3673 = vadd.f32 %v3634, %v3647
        %v3674 = vadd.f32 %v3635, %v3647
        %v3675 = vadd.f32 %v3636, %v3647
        %v3676 = vadd.f32 %v3637, %v3647
        %v3677 = vadd.f32 %v3638, %v3647
        %v3678 = vadd.f32 %v3639, %v3647
        %v3679 = vadd.f32 %v3640, %v3647
        %v3680 = vadd.f32 %v3641, %v3647
        %v3681 = vmax.f32 %v3649, 0.0
        %v3682 = vmax.f32 %v3650, 0.0
        %v3683 = vmax.f32 %v3651, 0.0
        %v3684 = vmax.f32 %v3652, 0.0
        %v3685 = vmax.f32 %v3653, 0.0
        %v3686 = vmax.f32 %v3654, 0.0
        %v3687 = vmax.f32 %v3655, 0.0
        %v3688 = vmax.f32 %v3656, 0.0
        %v3689 = vmax.f32 %v3657, 0.0
        %v3690 = vmax.f32 %v3658, 0.0
        %v3691 = vmax.f32 %v3659, 0.0
        %v3692 = vmax.f32 %v3660, 0.0
        %v3693 = vmax.f32 %v3661, 0.0
        %v3694 = vmax.f32 %v3662, 0.0
        %v3695 = vmax.f32 %v3663, 0.0
        %v3696 = vmax.f32 %v3664, 0.0
        %v3697 = vmax.f32 %v3665, 0.0
        %v3698 = vmax.f32 %v3666, 0.0
        %v3699 = vmax.f32 %v3667, 0.0
        %v3700 = vmax.f32 %v3668, 0.0
        %v3701 = vmax.f32 %v3669, 0.0
        %v3702 = vmax.f32 %v3670, 0.0
        %v3703 = vmax.f32 %v3671, 0.0
        %v3704 = vmax.f32 %v3672, 0.0
        %v3705 = vmax.f32 %v3673, 0.0
        %v3706 = vmax.f32 %v3674, 0.0
        %v3707 = vmax.f32 %v3675, 0.0
        %v3708 = vmax.f32 %v3676, 0.0
        %v3709 = vmax.f32 %v3677, 0.0
        %v3710 = vmax.f32 %v3678, 0.0
        %v3711 = vmax.f32 %v3679, 0.0
        %v3712 = vmax.f32 %v3680, 0.0
        %v3713 = vpack.c.bf16 %v3682, %v3681
        %v3714 = vpack.c.bf16 %v3684, %v3683
        %v3715 = vpack.c.bf16 %v3686, %v3685
        %v3716 = vpack.c.bf16 %v3688, %v3687
        %v3717 = vpack.c.bf16 %v3690, %v3689
        %v3718 = vpack.c.bf16 %v3692, %v3691
        %v3719 = vpack.c.bf16 %v3694, %v3693
        %v3720 = vpack.c.bf16 %v3696, %v3695
        %v3721 = vpack.c.bf16 %v3698, %v3697
        %v3722 = vpack.c.bf16 %v3700, %v3699
        %v3723 = vpack.c.bf16 %v3702, %v3701
        %v3724 = vpack.c.bf16 %v3704, %v3703
        %v3725 = vpack.c.bf16 %v3706, %v3705
        %v3726 = vpack.c.bf16 %v3708, %v3707
        %v3727 = vpack.c.bf16 %v3710, %v3709
        %v3728 = vpack.c.bf16 %v3712, %v3711
        %v3729 = vld [vmem:[#allocation9] sm:$0xf]
        %v3730 = vld [vmem:[#allocation9 + $0x4] sm:$0xf]
        %v3731 = vld [vmem:[#allocation9 + $0x8] sm:$0xf]
        %v3732 = vld [vmem:[#allocation9 + $0xc] sm:$0xf]
        %v3733 = vld [vmem:[#allocation9 + $0x10] sm:$0xf]
        %v3734 = vld [vmem:[#allocation9 + $0x14] sm:$0xf]
        %v3735 = vld [vmem:[#allocation9 + $0x18] sm:$0xf]
        %v3736 = vld [vmem:[#allocation9 + $0x1c] sm:$0xf]
        %v3737 = vld [vmem:[#allocation9 + $0x20] sm:$0xf]
        %v3738 = vld [vmem:[#allocation9 + $0x24] sm:$0xf]
        %v3739 = vld [vmem:[#allocation9 + $0x28] sm:$0xf]
        %v3740 = vld [vmem:[#allocation9 + $0x2c] sm:$0xf]
        %v3741 = vld [vmem:[#allocation9 + $0x30] sm:$0xf]
        %v3742 = vld [vmem:[#allocation9 + $0x34] sm:$0xf]
        %v3743 = vld [vmem:[#allocation9 + $0x38] sm:$0xf]
        %v3744 = vld [vmem:[#allocation9 + $0x3c] sm:$0xf]
        %v3761 = vunpack.c.l.b16 %v3729
        %v3762 = vunpack.c.l.b16 %v3730
        %v3763 = vunpack.c.l.b16 %v3731
        %v3764 = vunpack.c.l.b16 %v3732
        %v3765 = vunpack.c.l.b16 %v3733
        %v3766 = vunpack.c.l.b16 %v3734
        %v3767 = vunpack.c.l.b16 %v3735
        %v3768 = vunpack.c.l.b16 %v3736
        %v3769 = vunpack.c.l.b16 %v3737
        %v3770 = vunpack.c.l.b16 %v3738
        %v3771 = vunpack.c.l.b16 %v3739
        %v3772 = vunpack.c.l.b16 %v3740
        %v3773 = vunpack.c.l.b16 %v3741
        %v3774 = vunpack.c.l.b16 %v3742
        %v3775 = vunpack.c.l.b16 %v3743
        %v3776 = vunpack.c.l.b16 %v3744
        %v3777 = vpack.c.b16 %v3762, %v3761
        %v3778 = vpack.c.b16 %v3764, %v3763
        %v3779 = vpack.c.b16 %v3766, %v3765
        %v3780 = vpack.c.b16 %v3768, %v3767
        %v3781 = vpack.c.b16 %v3770, %v3769
        %v3782 = vpack.c.b16 %v3772, %v3771
        %v3783 = vpack.c.b16 %v3774, %v3773
        %v3784 = vpack.c.b16 %v3776, %v3775
        %3793 = vmatprep.subr.bf16.mxu0 0
        %3794 = vmatpush1.bf16.msra.mxu0 %v3784
        %3795 = vmatprep.subr.bf16.mxu0 0
        %3796 = vmatpush1.bf16.msra.mxu0 %v3783
        %3797 = vmatprep.subr.bf16.mxu0 0
        %3798 = vmatpush1.bf16.msra.mxu0 %v3782
        %3799 = vmatprep.subr.bf16.mxu0 0
        %3800 = vmatpush1.bf16.msra.mxu0 %v3781
        %3801 = vmatprep.subr.bf16.mxu0 0
        %3802 = vmatpush1.bf16.msra.mxu0 %v3780
        %3803 = vmatprep.subr.bf16.mxu0 0
        %3804 = vmatpush1.bf16.msra.mxu0 %v3779
        %3805 = vmatprep.subr.bf16.mxu0 0
        %3806 = vmatpush1.bf16.msra.mxu0 %v3778
        %3807 = vmatprep.subr.bf16.mxu0 0
        %3808 = vmatpush1.bf16.msra.mxu0 %v3777
        %3809 = vmatprep.subr.bf16.mxu0 0
        %3810 = vmatpush2.bf16.msra.mxu0 0
        %3811 = vmatprep.subr.bf16.mxu0 0
        %3812 = vmatpush2.bf16.msra.mxu0 0
        %3813 = vmatprep.subr.bf16.mxu0 0
        %3814 = vmatpush2.bf16.msra.mxu0 0
        %3815 = vmatprep.subr.bf16.mxu0 0
        %3816 = vmatpush2.bf16.msra.mxu0 0
        %3817 = vmatprep.subr.bf16.mxu0 0
        %3818 = vmatpush2.bf16.msra.mxu0 0
        %3819 = vmatprep.subr.bf16.mxu0 0
        %3820 = vmatpush2.bf16.msra.mxu0 0
        %3821 = vmatprep.subr.bf16.mxu0 0
        %3822 = vmatpush2.bf16.msra.mxu0 0
        %3823 = vmatprep.subr.bf16.mxu0 0
        %3824 = vmatpush2.bf16.msra.mxu0 0
        %3825 = vmatprep.mubr.bf16.mxu0 0
        %3826 = vmatmul.mubr.bf16.gmra.mxu0 %v3713
        %v3827 = vpop.f32.mrf.mxu0
        %v3828 = vadd.f32 0.0, %v3827
        %v3829 = vpop.f32.mrf.mxu0
        %v3830 = vpop.f32.mrf.mxu0
        %v3831 = vadd.f32 0.0, %v3830
        %v3832 = vpop.f32.mrf.mxu0
        %3833 = vmatprep.mubr.bf16.mxu0 0
        %3834 = vmatmul.mubr.bf16.gmra.mxu0 %v3714
        %v3835 = vpop.f32.mrf.mxu0
        %v3836 = vadd.f32 0.0, %v3835
        %v3837 = vpop.f32.mrf.mxu0
        %v3838 = vpop.f32.mrf.mxu0
        %v3839 = vadd.f32 0.0, %v3838
        %v3840 = vpop.f32.mrf.mxu0
        %3841 = vmatprep.mubr.bf16.mxu0 0
        %3842 = vmatmul.mubr.bf16.gmra.mxu0 %v3715
        %v3843 = vpop.f32.mrf.mxu0
        %v3844 = vadd.f32 0.0, %v3843
        %v3845 = vpop.f32.mrf.mxu0
        %v3846 = vpop.f32.mrf.mxu0
        %v3847 = vadd.f32 0.0, %v3846
        %v3848 = vpop.f32.mrf.mxu0
        %3849 = vmatprep.mubr.bf16.mxu0 0
        %3850 = vmatmul.mubr.bf16.gmra.mxu0 %v3716
        %v3851 = vpop.f32.mrf.mxu0
        %v3852 = vadd.f32 0.0, %v3851
        %v3853 = vpop.f32.mrf.mxu0
        %v3854 = vpop.f32.mrf.mxu0
        %v3855 = vadd.f32 0.0, %v3854
        %v3856 = vpop.f32.mrf.mxu0
        %3857 = vmatprep.mubr.bf16.mxu0 0
        %3858 = vmatmul.mubr.bf16.gmra.mxu0 %v3717
        %v3859 = vpop.f32.mrf.mxu0
        %v3860 = vadd.f32 0.0, %v3859
        %v3861 = vpop.f32.mrf.mxu0
        %v3862 = vpop.f32.mrf.mxu0
        %v3863 = vadd.f32 0.0, %v3862
        %v3864 = vpop.f32.mrf.mxu0
        %3865 = vmatprep.mubr.bf16.mxu0 0
        %3866 = vmatmul.mubr.bf16.gmra.mxu0 %v3718
        %v3867 = vpop.f32.mrf.mxu0
        %v3868 = vadd.f32 0.0, %v3867
        %v3869 = vpop.f32.mrf.mxu0
        %v3870 = vpop.f32.mrf.mxu0
        %v3871 = vadd.f32 0.0, %v3870
        %v3872 = vpop.f32.mrf.mxu0
        %3873 = vmatprep.mubr.bf16.mxu0 0
        %3874 = vmatmul.mubr.bf16.gmra.mxu0 %v3719
        %v3875 = vpop.f32.mrf.mxu0
        %v3876 = vadd.f32 0.0, %v3875
        %v3877 = vpop.f32.mrf.mxu0
        %v3878 = vpop.f32.mrf.mxu0
        %v3879 = vadd.f32 0.0, %v3878
        %v3880 = vpop.f32.mrf.mxu0
        %3881 = vmatprep.mubr.bf16.mxu0 0
        %3882 = vmatmul.mubr.bf16.gmra.mxu0 %v3720
        %v3883 = vpop.f32.mrf.mxu0
        %v3884 = vadd.f32 0.0, %v3883
        %v3885 = vpop.f32.mrf.mxu0
        %v3886 = vpop.f32.mrf.mxu0
        %v3887 = vadd.f32 0.0, %v3886
        %v3888 = vpop.f32.mrf.mxu0
        %3889 = vmatprep.mubr.bf16.mxu0 0
        %3890 = vmatmul.mubr.bf16.gmra.mxu0 %v3721
        %v3891 = vpop.f32.mrf.mxu0
        %v3892 = vadd.f32 0.0, %v3891
        %v3893 = vpop.f32.mrf.mxu0
        %v3894 = vpop.f32.mrf.mxu0
        %v3895 = vadd.f32 0.0, %v3894
        %v3896 = vpop.f32.mrf.mxu0
        %3897 = vmatprep.mubr.bf16.mxu0 0
        %3898 = vmatmul.mubr.bf16.gmra.mxu0 %v3722
        %v3899 = vpop.f32.mrf.mxu0
        %v3900 = vadd.f32 0.0, %v3899
        %v3901 = vpop.f32.mrf.mxu0
        %v3902 = vpop.f32.mrf.mxu0
        %v3903 = vadd.f32 0.0, %v3902
        %v3904 = vpop.f32.mrf.mxu0
        %3905 = vmatprep.mubr.bf16.mxu0 0
        %3906 = vmatmul.mubr.bf16.gmra.mxu0 %v3723
        %v3907 = vpop.f32.mrf.mxu0
        %v3908 = vadd.f32 0.0, %v3907
        %v3909 = vpop.f32.mrf.mxu0
        %v3910 = vpop.f32.mrf.mxu0
        %v3911 = vadd.f32 0.0, %v3910
        %v3912 = vpop.f32.mrf.mxu0
        %3913 = vmatprep.mubr.bf16.mxu0 0
        %3914 = vmatmul.mubr.bf16.gmra.mxu0 %v3724
        %v3915 = vpop.f32.mrf.mxu0
        %v3916 = vadd.f32 0.0, %v3915
        %v3917 = vpop.f32.mrf.mxu0
        %v3918 = vpop.f32.mrf.mxu0
        %v3919 = vadd.f32 0.0, %v3918
        %v3920 = vpop.f32.mrf.mxu0
        %3921 = vmatprep.mubr.bf16.mxu0 0
        %3922 = vmatmul.mubr.bf16.gmra.mxu0 %v3725
        %v3923 = vpop.f32.mrf.mxu0
        %v3924 = vadd.f32 0.0, %v3923
        %v3925 = vpop.f32.mrf.mxu0
        %v3926 = vpop.f32.mrf.mxu0
        %v3927 = vadd.f32 0.0, %v3926
        %v3928 = vpop.f32.mrf.mxu0
        %3929 = vmatprep.mubr.bf16.mxu0 0
        %3930 = vmatmul.mubr.bf16.gmra.mxu0 %v3726
        %v3931 = vpop.f32.mrf.mxu0
        %v3932 = vadd.f32 0.0, %v3931
        %v3933 = vpop.f32.mrf.mxu0
        %v3934 = vpop.f32.mrf.mxu0
        %v3935 = vadd.f32 0.0, %v3934
        %v3936 = vpop.f32.mrf.mxu0
        %3937 = vmatprep.mubr.bf16.mxu0 0
        %3938 = vmatmul.mubr.bf16.gmra.mxu0 %v3727
        %v3939 = vpop.f32.mrf.mxu0
        %v3940 = vadd.f32 0.0, %v3939
        %v3941 = vpop.f32.mrf.mxu0
        %v3942 = vpop.f32.mrf.mxu0
        %v3943 = vadd.f32 0.0, %v3942
        %v3944 = vpop.f32.mrf.mxu0
        %3945 = vmatprep.mubr.bf16.mxu0 0
        %3946 = vmatmul.mubr.bf16.gmra.mxu0 %v3728
        %v3947 = vpop.f32.mrf.mxu0
        %v3948 = vadd.f32 0.0, %v3947
        %v3949 = vpop.f32.mrf.mxu0
        %v3950 = vpop.f32.mrf.mxu0
        %v3951 = vadd.f32 0.0, %v3950
        %v3952 = vpop.f32.mrf.mxu0
        %3953 = vdwg.mxu0
        %v3954 = vld [vmem:[#allocation11] sm:$0x1]
        %v3956 = vlaneseq
        %v3957 = vshrl.u32 %v3956, 7
        %v3958 = vsub.s32 0, %v3957
        %v3959 = vrot.slane %v3954, %v3958
        %v3961 = vadd.f32 %v3828, %v3959
        %v3962 = vadd.f32 %v3831, %v3959
        %v3963 = vadd.f32 %v3836, %v3959
        %v3964 = vadd.f32 %v3839, %v3959
        %v3965 = vadd.f32 %v3844, %v3959
        %v3966 = vadd.f32 %v3847, %v3959
        %v3967 = vadd.f32 %v3852, %v3959
        %v3968 = vadd.f32 %v3855, %v3959
        %v3969 = vadd.f32 %v3860, %v3959
        %v3970 = vadd.f32 %v3863, %v3959
        %v3971 = vadd.f32 %v3868, %v3959
        %v3972 = vadd.f32 %v3871, %v3959
        %v3973 = vadd.f32 %v3876, %v3959
        %v3974 = vadd.f32 %v3879, %v3959
        %v3975 = vadd.f32 %v3884, %v3959
        %v3976 = vadd.f32 %v3887, %v3959
        %v3977 = vadd.f32 %v3892, %v3959
        %v3978 = vadd.f32 %v3895, %v3959
        %v3979 = vadd.f32 %v3900, %v3959
        %v3980 = vadd.f32 %v3903, %v3959
        %v3981 = vadd.f32 %v3908, %v3959
        %v3982 = vadd.f32 %v3911, %v3959
        %v3983 = vadd.f32 %v3916, %v3959
        %v3984 = vadd.f32 %v3919, %v3959
        %v3985 = vadd.f32 %v3924, %v3959
        %v3986 = vadd.f32 %v3927, %v3959
        %v3987 = vadd.f32 %v3932, %v3959
        %v3988 = vadd.f32 %v3935, %v3959
        %v3989 = vadd.f32 %v3940, %v3959
        %v3990 = vadd.f32 %v3943, %v3959
        %v3991 = vadd.f32 %v3948, %v3959
        %v3992 = vadd.f32 %v3951, %v3959
        %v3993 = vmax.f32 %v3961, 0.0
        %v3994 = vmax.f32 %v3962, 0.0
        %v3995 = vmax.f32 %v3963, 0.0
        %v3996 = vmax.f32 %v3964, 0.0
        %v3997 = vmax.f32 %v3965, 0.0
        %v3998 = vmax.f32 %v3966, 0.0
        %v3999 = vmax.f32 %v3967, 0.0
        %v4000 = vmax.f32 %v3968, 0.0
        %v4001 = vmax.f32 %v3969, 0.0
        %v4002 = vmax.f32 %v3970, 0.0
        %v4003 = vmax.f32 %v3971, 0.0
        %v4004 = vmax.f32 %v3972, 0.0
        %v4005 = vmax.f32 %v3973, 0.0
        %v4006 = vmax.f32 %v3974, 0.0
        %v4007 = vmax.f32 %v3975, 0.0
        %v4008 = vmax.f32 %v3976, 0.0
        %v4009 = vmax.f32 %v3977, 0.0
        %v4010 = vmax.f32 %v3978, 0.0
        %v4011 = vmax.f32 %v3979, 0.0
        %v4012 = vmax.f32 %v3980, 0.0
        %v4013 = vmax.f32 %v3981, 0.0
        %v4014 = vmax.f32 %v3982, 0.0
        %v4015 = vmax.f32 %v3983, 0.0
        %v4016 = vmax.f32 %v3984, 0.0
        %v4017 = vmax.f32 %v3985, 0.0
        %v4018 = vmax.f32 %v3986, 0.0
        %v4019 = vmax.f32 %v3987, 0.0
        %v4020 = vmax.f32 %v3988, 0.0
        %v4021 = vmax.f32 %v3989, 0.0
        %v4022 = vmax.f32 %v3990, 0.0
        %v4023 = vmax.f32 %v3991, 0.0
        %v4024 = vmax.f32 %v3992, 0.0
        %v4025 = vpack.c.bf16 %v3994, %v3993
        %v4026 = vpack.c.bf16 %v3996, %v3995
        %v4027 = vpack.c.bf16 %v3998, %v3997
        %v4028 = vpack.c.bf16 %v4000, %v3999
        %v4029 = vpack.c.bf16 %v4002, %v4001
        %v4030 = vpack.c.bf16 %v4004, %v4003
        %v4031 = vpack.c.bf16 %v4006, %v4005
        %v4032 = vpack.c.bf16 %v4008, %v4007
        %v4033 = vpack.c.bf16 %v4010, %v4009
        %v4034 = vpack.c.bf16 %v4012, %v4011
        %v4035 = vpack.c.bf16 %v4014, %v4013
        %v4036 = vpack.c.bf16 %v4016, %v4015
        %v4037 = vpack.c.bf16 %v4018, %v4017
        %v4038 = vpack.c.bf16 %v4020, %v4019
        %v4039 = vpack.c.bf16 %v4022, %v4021
        %v4040 = vpack.c.bf16 %v4024, %v4023
        %v4057 = vunpack.c.l.b16 %v4025
        %v4058 = vunpack.c.h.b16 %v4025
        %v4059 = vunpack.c.l.b16 %v4026
        %v4060 = vunpack.c.h.b16 %v4026
        %v4061 = vunpack.c.l.b16 %v4027
        %v4062 = vunpack.c.h.b16 %v4027
        %v4063 = vunpack.c.l.b16 %v4028
        %v4064 = vunpack.c.h.b16 %v4028
        %v4065 = vunpack.c.l.b16 %v4029
        %v4066 = vunpack.c.h.b16 %v4029
        %v4067 = vunpack.c.l.b16 %v4030
        %v4068 = vunpack.c.h.b16 %v4030
        %v4069 = vunpack.c.l.b16 %v4031
        %v4070 = vunpack.c.h.b16 %v4031
        %v4071 = vunpack.c.l.b16 %v4032
        %v4072 = vunpack.c.h.b16 %v4032
        %v4073 = vunpack.c.l.b16 %v4033
        %v4074 = vunpack.c.h.b16 %v4033
        %v4075 = vunpack.c.l.b16 %v4034
        %v4076 = vunpack.c.h.b16 %v4034
        %v4077 = vunpack.c.l.b16 %v4035
        %v4078 = vunpack.c.h.b16 %v4035
        %v4079 = vunpack.c.l.b16 %v4036
        %v4080 = vunpack.c.h.b16 %v4036
        %v4081 = vunpack.c.l.b16 %v4037
        %v4082 = vunpack.c.h.b16 %v4037
        %v4083 = vunpack.c.l.b16 %v4038
        %v4084 = vunpack.c.h.b16 %v4038
        %v4085 = vunpack.c.l.b16 %v4039
        %v4086 = vunpack.c.h.b16 %v4039
        %v4087 = vunpack.c.l.b16 %v4040
        %v4088 = vunpack.c.h.b16 %v4040
        %v4089 = vpack.c.b16 %v4057, %v4057
        %v4090 = vpack.c.b16 %v4058, %v4058
        %v4091 = vpack.c.b16 %v4059, %v4059
        %v4092 = vpack.c.b16 %v4060, %v4060
        %v4093 = vpack.c.b16 %v4061, %v4061
        %v4094 = vpack.c.b16 %v4062, %v4062
        %v4095 = vpack.c.b16 %v4063, %v4063
        %v4096 = vpack.c.b16 %v4064, %v4064
        %v4097 = vpack.c.b16 %v4065, %v4065
        %v4098 = vpack.c.b16 %v4066, %v4066
        %v4099 = vpack.c.b16 %v4067, %v4067
        %v4100 = vpack.c.b16 %v4068, %v4068
        %v4101 = vpack.c.b16 %v4069, %v4069
        %v4102 = vpack.c.b16 %v4070, %v4070
        %v4103 = vpack.c.b16 %v4071, %v4071
        %v4104 = vpack.c.b16 %v4072, %v4072
        %v4105 = vpack.c.b16 %v4073, %v4073
        %v4106 = vpack.c.b16 %v4074, %v4074
        %v4107 = vpack.c.b16 %v4075, %v4075
        %v4108 = vpack.c.b16 %v4076, %v4076
        %v4109 = vpack.c.b16 %v4077, %v4077
        %v4110 = vpack.c.b16 %v4078, %v4078
        %v4111 = vpack.c.b16 %v4079, %v4079
        %v4112 = vpack.c.b16 %v4080, %v4080
        %v4113 = vpack.c.b16 %v4081, %v4081
        %v4114 = vpack.c.b16 %v4082, %v4082
        %v4115 = vpack.c.b16 %v4083, %v4083
        %v4116 = vpack.c.b16 %v4084, %v4084
        %v4117 = vpack.c.b16 %v4085, %v4085
        %v4118 = vpack.c.b16 %v4086, %v4086
        %v4119 = vpack.c.b16 %v4087, %v4087
        %v4120 = vpack.c.b16 %v4088, %v4088
        %v4122 = vshrl.u32 %v4089, 16
        %v4124 = vrot.slane %v4122, 7
        %v4125 = vshll.u32 %v4089, 16
        %v4127 = vor.u32 %v4124, %v4125
        %v4128 = vrot.slane %v4124, 4
        %v4130 = vshrl.u32 %v4090, 16
        %v4132 = vrot.slane %v4130, 7
        %v4133 = vshll.u32 %v4090, 16
        %v4135 = vor.u32 %v4132, %v4133
        %v4136 = vsel %vm945, %v4128, %v4135
        %v4137 = vrot.slane %v4132, 4
        %v4139 = vshrl.u32 %v4091, 16
        %v4141 = vrot.slane %v4139, 7
        %v4142 = vshll.u32 %v4091, 16
        %v4144 = vor.u32 %v4141, %v4142
        %v4145 = vrot.slane %v4141, 4
        %v4147 = vshrl.u32 %v4092, 16
        %v4149 = vrot.slane %v4147, 7
        %v4150 = vshll.u32 %v4092, 16
        %v4152 = vor.u32 %v4149, %v4150
        %v4153 = vsel %vm945, %v4145, %v4152
        %v4154 = vrot.slane %v4149, 4
        %v4156 = vshrl.u32 %v4093, 16
        %v4158 = vrot.slane %v4156, 7
        %v4159 = vshll.u32 %v4093, 16
        %v4161 = vor.u32 %v4158, %v4159
        %v4162 = vrot.slane %v4158, 4
        %v4164 = vshrl.u32 %v4094, 16
        %v4166 = vrot.slane %v4164, 7
        %v4167 = vshll.u32 %v4094, 16
        %v4169 = vor.u32 %v4166, %v4167
        %v4170 = vsel %vm945, %v4162, %v4169
        %v4171 = vrot.slane %v4166, 4
        %v4173 = vshrl.u32 %v4095, 16
        %v4175 = vrot.slane %v4173, 7
        %v4176 = vshll.u32 %v4095, 16
        %v4178 = vor.u32 %v4175, %v4176
        %v4179 = vrot.slane %v4175, 4
        %v4181 = vshrl.u32 %v4096, 16
        %v4183 = vrot.slane %v4181, 7
        %v4184 = vshll.u32 %v4096, 16
        %v4186 = vor.u32 %v4183, %v4184
        %v4187 = vsel %vm945, %v4179, %v4186
        %v4188 = vrot.slane %v4183, 4
        %v4190 = vshrl.u32 %v4097, 16
        %v4192 = vrot.slane %v4190, 7
        %v4193 = vshll.u32 %v4097, 16
        %v4195 = vor.u32 %v4192, %v4193
        %v4196 = vrot.slane %v4192, 4
        %v4198 = vshrl.u32 %v4098, 16
        %v4200 = vrot.slane %v4198, 7
        %v4201 = vshll.u32 %v4098, 16
        %v4203 = vor.u32 %v4200, %v4201
        %v4204 = vsel %vm945, %v4196, %v4203
        %v4205 = vrot.slane %v4200, 4
        %v4207 = vshrl.u32 %v4099, 16
        %v4209 = vrot.slane %v4207, 7
        %v4210 = vshll.u32 %v4099, 16
        %v4212 = vor.u32 %v4209, %v4210
        %v4213 = vrot.slane %v4209, 4
        %v4215 = vshrl.u32 %v4100, 16
        %v4217 = vrot.slane %v4215, 7
        %v4218 = vshll.u32 %v4100, 16
        %v4220 = vor.u32 %v4217, %v4218
        %v4221 = vsel %vm945, %v4213, %v4220
        %v4222 = vrot.slane %v4217, 4
        %v4224 = vshrl.u32 %v4101, 16
        %v4226 = vrot.slane %v4224, 7
        %v4227 = vshll.u32 %v4101, 16
        %v4229 = vor.u32 %v4226, %v4227
        %v4230 = vrot.slane %v4226, 4
        %v4232 = vshrl.u32 %v4102, 16
        %v4234 = vrot.slane %v4232, 7
        %v4235 = vshll.u32 %v4102, 16
        %v4237 = vor.u32 %v4234, %v4235
        %v4238 = vsel %vm945, %v4230, %v4237
        %v4239 = vrot.slane %v4234, 4
        %v4241 = vshrl.u32 %v4103, 16
        %v4243 = vrot.slane %v4241, 7
        %v4244 = vshll.u32 %v4103, 16
        %v4246 = vor.u32 %v4243, %v4244
        %v4247 = vrot.slane %v4243, 4
        %v4249 = vshrl.u32 %v4104, 16
        %v4251 = vrot.slane %v4249, 7
        %v4252 = vshll.u32 %v4104, 16
        %v4254 = vor.u32 %v4251, %v4252
        %v4255 = vsel %vm945, %v4247, %v4254
        %v4256 = vrot.slane %v4251, 4
        %v4258 = vshrl.u32 %v4105, 16
        %v4260 = vrot.slane %v4258, 7
        %v4261 = vshll.u32 %v4105, 16
        %v4263 = vor.u32 %v4260, %v4261
        %v4264 = vrot.slane %v4260, 4
        %v4266 = vshrl.u32 %v4106, 16
        %v4268 = vrot.slane %v4266, 7
        %v4269 = vshll.u32 %v4106, 16
        %v4271 = vor.u32 %v4268, %v4269
        %v4272 = vsel %vm945, %v4264, %v4271
        %v4273 = vrot.slane %v4268, 4
        %v4275 = vshrl.u32 %v4107, 16
        %v4277 = vrot.slane %v4275, 7
        %v4278 = vshll.u32 %v4107, 16
        %v4280 = vor.u32 %v4277, %v4278
        %v4281 = vrot.slane %v4277, 4
        %v4283 = vshrl.u32 %v4108, 16
        %v4285 = vrot.slane %v4283, 7
        %v4286 = vshll.u32 %v4108, 16
        %v4288 = vor.u32 %v4285, %v4286
        %v4289 = vsel %vm945, %v4281, %v4288
        %v4290 = vrot.slane %v4285, 4
        %v4292 = vshrl.u32 %v4109, 16
        %v4294 = vrot.slane %v4292, 7
        %v4295 = vshll.u32 %v4109, 16
        %v4297 = vor.u32 %v4294, %v4295
        %v4298 = vrot.slane %v4294, 4
        %v4300 = vshrl.u32 %v4110, 16
        %v4302 = vrot.slane %v4300, 7
        %v4303 = vshll.u32 %v4110, 16
        %v4305 = vor.u32 %v4302, %v4303
        %v4306 = vsel %vm945, %v4298, %v4305
        %v4307 = vrot.slane %v4302, 4
        %v4309 = vshrl.u32 %v4111, 16
        %v4311 = vrot.slane %v4309, 7
        %v4312 = vshll.u32 %v4111, 16
        %v4314 = vor.u32 %v4311, %v4312
        %v4315 = vrot.slane %v4311, 4
        %v4317 = vshrl.u32 %v4112, 16
        %v4319 = vrot.slane %v4317, 7
        %v4320 = vshll.u32 %v4112, 16
        %v4322 = vor.u32 %v4319, %v4320
        %v4323 = vsel %vm945, %v4315, %v4322
        %v4324 = vrot.slane %v4319, 4
        %v4326 = vshrl.u32 %v4113, 16
        %v4328 = vrot.slane %v4326, 7
        %v4329 = vshll.u32 %v4113, 16
        %v4331 = vor.u32 %v4328, %v4329
        %v4332 = vrot.slane %v4328, 4
        %v4334 = vshrl.u32 %v4114, 16
        %v4336 = vrot.slane %v4334, 7
        %v4337 = vshll.u32 %v4114, 16
        %v4339 = vor.u32 %v4336, %v4337
        %v4340 = vsel %vm945, %v4332, %v4339
        %v4341 = vrot.slane %v4336, 4
        %v4343 = vshrl.u32 %v4115, 16
        %v4345 = vrot.slane %v4343, 7
        %v4346 = vshll.u32 %v4115, 16
        %v4348 = vor.u32 %v4345, %v4346
        %v4349 = vrot.slane %v4345, 4
        %v4351 = vshrl.u32 %v4116, 16
        %v4353 = vrot.slane %v4351, 7
        %v4354 = vshll.u32 %v4116, 16
        %v4356 = vor.u32 %v4353, %v4354
        %v4357 = vsel %vm945, %v4349, %v4356
        %v4358 = vrot.slane %v4353, 4
        %v4360 = vshrl.u32 %v4117, 16
        %v4362 = vrot.slane %v4360, 7
        %v4363 = vshll.u32 %v4117, 16
        %v4365 = vor.u32 %v4362, %v4363
        %v4366 = vrot.slane %v4362, 4
        %v4368 = vshrl.u32 %v4118, 16
        %v4370 = vrot.slane %v4368, 7
        %v4371 = vshll.u32 %v4118, 16
        %v4373 = vor.u32 %v4370, %v4371
        %v4374 = vsel %vm945, %v4366, %v4373
        %v4375 = vrot.slane %v4370, 4
        %v4377 = vshrl.u32 %v4119, 16
        %v4379 = vrot.slane %v4377, 7
        %v4380 = vshll.u32 %v4119, 16
        %v4382 = vor.u32 %v4379, %v4380
        %v4383 = vrot.slane %v4379, 4
        %v4385 = vshrl.u32 %v4120, 16
        %v4387 = vrot.slane %v4385, 7
        %v4388 = vshll.u32 %v4120, 16
        %v4390 = vor.u32 %v4387, %v4388
        %v4391 = vsel %vm945, %v4383, %v4390
        %v4392 = vrot.slane %v4387, 4
        %v4441 = vsel %vm1267, %v4127, %v2118
        %4442 = vst [vmem:[%s682] sm:$0xf] %v4441
        %4443 = vst [vmem:[%s682 + $0x4] sm:$0xf] %v4136
        %v4444 = vld [vmem:[%s682 + $0x8] sm:$0x1]
        %v4445 = vsel %vm685, %v4137, %v4444
        %4446 = vst [vmem:[%s682 + $0x8] sm:$0x1] %v4445
        %v4447 = vld [vmem:[%s682 + $0xc] sm:$0xf]
        %v4448 = vsel %vm1267, %v4144, %v4447
        %4449 = vst [vmem:[%s682 + $0xc] sm:$0xf] %v4448
        %4450 = vst [vmem:[%s682 + $0x10] sm:$0xf] %v4153
        %v4451 = vld [vmem:[%s682 + $0x14] sm:$0x1]
        %v4452 = vsel %vm685, %v4154, %v4451
        %4453 = vst [vmem:[%s682 + $0x14] sm:$0x1] %v4452
        %v4454 = vld [vmem:[%s682 + $0x18] sm:$0xf]
        %v4455 = vsel %vm1267, %v4161, %v4454
        %4456 = vst [vmem:[%s682 + $0x18] sm:$0xf] %v4455
        %4457 = vst [vmem:[%s682 + $0x1c] sm:$0xf] %v4170
        %v4458 = vld [vmem:[%s682 + $0x20] sm:$0x1]
        %v4459 = vsel %vm685, %v4171, %v4458
        %4460 = vst [vmem:[%s682 + $0x20] sm:$0x1] %v4459
        %v4461 = vld [vmem:[%s682 + $0x24] sm:$0xf]
        %v4462 = vsel %vm1267, %v4178, %v4461
        %4463 = vst [vmem:[%s682 + $0x24] sm:$0xf] %v4462
        %4464 = vst [vmem:[%s682 + $0x28] sm:$0xf] %v4187
        %v4465 = vld [vmem:[%s682 + $0x2c] sm:$0x1]
        %v4466 = vsel %vm685, %v4188, %v4465
        %4467 = vst [vmem:[%s682 + $0x2c] sm:$0x1] %v4466
        %v4468 = vld [vmem:[%s682 + $0x30] sm:$0xf]
        %v4469 = vsel %vm1267, %v4195, %v4468
        %4470 = vst [vmem:[%s682 + $0x30] sm:$0xf] %v4469
        %4471 = vst [vmem:[%s682 + $0x34] sm:$0xf] %v4204
        %v4472 = vld [vmem:[%s682 + $0x38] sm:$0x1]
        %v4473 = vsel %vm685, %v4205, %v4472
        %4474 = vst [vmem:[%s682 + $0x38] sm:$0x1] %v4473
        %v4475 = vld [vmem:[%s682 + $0x3c] sm:$0xf]
        %v4476 = vsel %vm1267, %v4212, %v4475
        %4477 = vst [vmem:[%s682 + $0x3c] sm:$0xf] %v4476
        %4478 = vst [vmem:[%s682 + $0x40] sm:$0xf] %v4221
        %v4479 = vld [vmem:[%s682 + $0x44] sm:$0x1]
        %v4480 = vsel %vm685, %v4222, %v4479
        %4481 = vst [vmem:[%s682 + $0x44] sm:$0x1] %v4480
        %v4482 = vld [vmem:[%s682 + $0x48] sm:$0xf]
        %v4483 = vsel %vm1267, %v4229, %v4482
        %4484 = vst [vmem:[%s682 + $0x48] sm:$0xf] %v4483
        %4485 = vst [vmem:[%s682 + $0x4c] sm:$0xf] %v4238
        %v4486 = vld [vmem:[%s682 + $0x50] sm:$0x1]
        %v4487 = vsel %vm685, %v4239, %v4486
        %4488 = vst [vmem:[%s682 + $0x50] sm:$0x1] %v4487
        %v4489 = vld [vmem:[%s682 + $0x54] sm:$0xf]
        %v4490 = vsel %vm1267, %v4246, %v4489
        %4491 = vst [vmem:[%s682 + $0x54] sm:$0xf] %v4490
        %4492 = vst [vmem:[%s682 + $0x58] sm:$0xf] %v4255
        %v4493 = vld [vmem:[%s682 + $0x5c] sm:$0x1]
        %v4494 = vsel %vm685, %v4256, %v4493
        %4495 = vst [vmem:[%s682 + $0x5c] sm:$0x1] %v4494
        %v4496 = vld [vmem:[%s682 + $0x60] sm:$0xf]
        %v4497 = vsel %vm1267, %v4263, %v4496
        %4498 = vst [vmem:[%s682 + $0x60] sm:$0xf] %v4497
        %4499 = vst [vmem:[%s682 + $0x64] sm:$0xf] %v4272
        %v4500 = vld [vmem:[%s682 + $0x68] sm:$0x1]
        %v4501 = vsel %vm685, %v4273, %v4500
        %4502 = vst [vmem:[%s682 + $0x68] sm:$0x1] %v4501
        %v4503 = vld [vmem:[%s682 + $0x6c] sm:$0xf]
        %v4504 = vsel %vm1267, %v4280, %v4503
        %4505 = vst [vmem:[%s682 + $0x6c] sm:$0xf] %v4504
        %4506 = vst [vmem:[%s682 + $0x70] sm:$0xf] %v4289
        %v4507 = vld [vmem:[%s682 + $0x74] sm:$0x1]
        %v4508 = vsel %vm685, %v4290, %v4507
        %4509 = vst [vmem:[%s682 + $0x74] sm:$0x1] %v4508
        %v4510 = vld [vmem:[%s682 + $0x78] sm:$0xf]
        %v4511 = vsel %vm1267, %v4297, %v4510
        %4512 = vst [vmem:[%s682 + $0x78] sm:$0xf] %v4511
        %4513 = vst [vmem:[%s682 + $0x7c] sm:$0xf] %v4306
        %v4514 = vld [vmem:[%s682 + $0x80] sm:$0x1]
        %v4515 = vsel %vm685, %v4307, %v4514
        %4516 = vst [vmem:[%s682 + $0x80] sm:$0x1] %v4515
        %v4517 = vld [vmem:[%s682 + $0x84] sm:$0xf]
        %v4518 = vsel %vm1267, %v4314, %v4517
        %4519 = vst [vmem:[%s682 + $0x84] sm:$0xf] %v4518
        %4520 = vst [vmem:[%s682 + $0x88] sm:$0xf] %v4323
        %v4521 = vld [vmem:[%s682 + $0x8c] sm:$0x1]
        %v4522 = vsel %vm685, %v4324, %v4521
        %4523 = vst [vmem:[%s682 + $0x8c] sm:$0x1] %v4522
        %v4524 = vld [vmem:[%s682 + $0x90] sm:$0xf]
        %v4525 = vsel %vm1267, %v4331, %v4524
        %4526 = vst [vmem:[%s682 + $0x90] sm:$0xf] %v4525
        %4527 = vst [vmem:[%s682 + $0x94] sm:$0xf] %v4340
        %v4528 = vld [vmem:[%s682 + $0x98] sm:$0x1]
        %v4529 = vsel %vm685, %v4341, %v4528
        %4530 = vst [vmem:[%s682 + $0x98] sm:$0x1] %v4529
        %v4531 = vld [vmem:[%s682 + $0x9c] sm:$0xf]
        %v4532 = vsel %vm1267, %v4348, %v4531
        %4533 = vst [vmem:[%s682 + $0x9c] sm:$0xf] %v4532
        %4534 = vst [vmem:[%s682 + $0xa0] sm:$0xf] %v4357
        %v4535 = vld [vmem:[%s682 + $0xa4] sm:$0x1]
        %v4536 = vsel %vm685, %v4358, %v4535
        %4537 = vst [vmem:[%s682 + $0xa4] sm:$0x1] %v4536
        %v4538 = vld [vmem:[%s682 + $0xa8] sm:$0xf]
        %v4539 = vsel %vm1267, %v4365, %v4538
        %4540 = vst [vmem:[%s682 + $0xa8] sm:$0xf] %v4539
        %4541 = vst [vmem:[%s682 + $0xac] sm:$0xf] %v4374
        %v4542 = vld [vmem:[%s682 + $0xb0] sm:$0x1]
        %v4543 = vsel %vm685, %v4375, %v4542
        %4544 = vst [vmem:[%s682 + $0xb0] sm:$0x1] %v4543
        %v4545 = vld [vmem:[%s682 + $0xb4] sm:$0xf]
        %v4546 = vsel %vm1267, %v4382, %v4545
        %4547 = vst [vmem:[%s682 + $0xb4] sm:$0xf] %v4546
        %4548 = vst [vmem:[%s682 + $0xb8] sm:$0xf] %v4391
        %v4549 = vld [vmem:[%s682 + $0xbc] sm:$0x1]
        %v4550 = vsel %vm685, %v4392, %v4549
        %4551 = vst [vmem:[%s682 + $0xbc] sm:$0x1] %v4550
        %v4552 = vld [vmem:[%s5] sm:$0xf]
        %v4553 = vld [vmem:[%s5 + $0x4] sm:$0x1]
        %v4554 = vld [vmem:[#allocation2] sm:$0xf]
        %v4555 = vld [vmem:[#allocation2 + $0x4] sm:$0xf]
        %v4556 = vld [vmem:[#allocation2 + $0xc] sm:$0xf]
        %v4557 = vld [vmem:[#allocation2 + $0x10] sm:$0xf]
        %v4558 = vld [vmem:[#allocation2 + $0x18] sm:$0xf]
        %v4559 = vld [vmem:[#allocation2 + $0x1c] sm:$0xf]
        %v4560 = vld [vmem:[#allocation2 + $0x24] sm:$0xf]
        %v4561 = vld [vmem:[#allocation2 + $0x28] sm:$0xf]
        %v4562 = vld [vmem:[#allocation2 + $0x30] sm:$0xf]
        %v4563 = vld [vmem:[#allocation2 + $0x34] sm:$0xf]
        %v4564 = vld [vmem:[#allocation2 + $0x3c] sm:$0xf]
        %v4565 = vld [vmem:[#allocation2 + $0x40] sm:$0xf]
        %v4566 = vld [vmem:[#allocation2 + $0x48] sm:$0xf]
        %v4567 = vld [vmem:[#allocation2 + $0x4c] sm:$0xf]
        %v4568 = vld [vmem:[#allocation2 + $0x54] sm:$0xf]
        %v4569 = vld [vmem:[#allocation2 + $0x58] sm:$0xf]
        %v4570 = vld [vmem:[#allocation2 + $0x60] sm:$0xf]
        %v4571 = vld [vmem:[#allocation2 + $0x64] sm:$0xf]
        %v4572 = vld [vmem:[#allocation2 + $0x6c] sm:$0xf]
        %v4573 = vld [vmem:[#allocation2 + $0x70] sm:$0xf]
        %v4574 = vld [vmem:[#allocation2 + $0x78] sm:$0xf]
        %v4575 = vld [vmem:[#allocation2 + $0x7c] sm:$0xf]
        %v4576 = vld [vmem:[#allocation2 + $0x84] sm:$0xf]
        %v4577 = vld [vmem:[#allocation2 + $0x88] sm:$0xf]
        %v4578 = vld [vmem:[#allocation2 + $0x90] sm:$0xf]
        %v4579 = vld [vmem:[#allocation2 + $0x94] sm:$0xf]
        %v4580 = vld [vmem:[#allocation2 + $0x9c] sm:$0xf]
        %v4581 = vld [vmem:[#allocation2 + $0xa0] sm:$0xf]
        %v4582 = vld [vmem:[#allocation2 + $0xa8] sm:$0xf]
        %v4583 = vld [vmem:[#allocation2 + $0xac] sm:$0xf]
        %v4584 = vld [vmem:[#allocation2 + $0xb4] sm:$0xf]
        %v4585 = vld [vmem:[#allocation2 + $0xb8] sm:$0xf]
        %v4587 = vpack.i.b16 %v4552, %v4552
        %v4589 = vlaneseq
        %v4590 = vshrl.u32 %v4589, 7
        %v4591 = vsub.s32 0, %v4590
        %v4592 = vrot.slane %v4587, %v4591
        %v4594 = vunpack.c.l.b16 %v4592
        %v4595 = vpack.c.b16 %v4594, %v4594
        %v4597 = vmul.bf16 %v4554, %v4595
        %v4598 = vmul.bf16 %v4555, %v4595
        %v4599 = vmul.bf16 %v4556, %v4595
        %v4600 = vmul.bf16 %v4557, %v4595
        %v4601 = vmul.bf16 %v4558, %v4595
        %v4602 = vmul.bf16 %v4559, %v4595
        %v4603 = vmul.bf16 %v4560, %v4595
        %v4604 = vmul.bf16 %v4561, %v4595
        %v4605 = vmul.bf16 %v4562, %v4595
        %v4606 = vmul.bf16 %v4563, %v4595
        %v4607 = vmul.bf16 %v4564, %v4595
        %v4608 = vmul.bf16 %v4565, %v4595
        %v4609 = vmul.bf16 %v4566, %v4595
        %v4610 = vmul.bf16 %v4567, %v4595
        %v4611 = vmul.bf16 %v4568, %v4595
        %v4612 = vmul.bf16 %v4569, %v4595
        %v4613 = vmul.bf16 %v4570, %v4595
        %v4614 = vmul.bf16 %v4571, %v4595
        %v4615 = vmul.bf16 %v4572, %v4595
        %v4616 = vmul.bf16 %v4573, %v4595
        %v4617 = vmul.bf16 %v4574, %v4595
        %v4618 = vmul.bf16 %v4575, %v4595
        %v4619 = vmul.bf16 %v4576, %v4595
        %v4620 = vmul.bf16 %v4577, %v4595
        %v4621 = vmul.bf16 %v4578, %v4595
        %v4622 = vmul.bf16 %v4579, %v4595
        %v4623 = vmul.bf16 %v4580, %v4595
        %v4624 = vmul.bf16 %v4581, %v4595
        %v4625 = vmul.bf16 %v4582, %v4595
        %v4626 = vmul.bf16 %v4583, %v4595
        %v4627 = vmul.bf16 %v4584, %v4595
        %v4628 = vmul.bf16 %v4585, %v4595
        %v4629 = vunpack.c.l.bf16 %v4597
        %v4630 = vunpack.c.l.bf16 %v4598
        %v4631 = vunpack.c.l.bf16 %v4599
        %v4632 = vunpack.c.l.bf16 %v4600
        %v4633 = vunpack.c.l.bf16 %v4601
        %v4634 = vunpack.c.l.bf16 %v4602
        %v4635 = vunpack.c.l.bf16 %v4603
        %v4636 = vunpack.c.l.bf16 %v4604
        %v4637 = vunpack.c.l.bf16 %v4605
        %v4638 = vunpack.c.l.bf16 %v4606
        %v4639 = vunpack.c.l.bf16 %v4607
        %v4640 = vunpack.c.l.bf16 %v4608
        %v4641 = vunpack.c.l.bf16 %v4609
        %v4642 = vunpack.c.l.bf16 %v4610
        %v4643 = vunpack.c.l.bf16 %v4611
        %v4644 = vunpack.c.l.bf16 %v4612
        %v4645 = vunpack.c.l.bf16 %v4613
        %v4646 = vunpack.c.l.bf16 %v4614
        %v4647 = vunpack.c.l.bf16 %v4615
        %v4648 = vunpack.c.l.bf16 %v4616
        %v4649 = vunpack.c.l.bf16 %v4617
        %v4650 = vunpack.c.l.bf16 %v4618
        %v4651 = vunpack.c.l.bf16 %v4619
        %v4652 = vunpack.c.l.bf16 %v4620
        %v4653 = vunpack.c.l.bf16 %v4621
        %v4654 = vunpack.c.l.bf16 %v4622
        %v4655 = vunpack.c.l.bf16 %v4623
        %v4656 = vunpack.c.l.bf16 %v4624
        %v4657 = vunpack.c.l.bf16 %v4625
        %v4658 = vunpack.c.l.bf16 %v4626
        %v4659 = vunpack.c.l.bf16 %v4627
        %v4660 = vunpack.c.l.bf16 %v4628
        %v4661 = vld [vmem:[#allocation2 + $0x8] sm:$0x1]
        %v4662 = vld [vmem:[#allocation2 + $0x14] sm:$0x1]
        %v4663 = vld [vmem:[#allocation2 + $0x20] sm:$0x1]
        %v4664 = vld [vmem:[#allocation2 + $0x2c] sm:$0x1]
        %v4665 = vld [vmem:[#allocation2 + $0x38] sm:$0x1]
        %v4666 = vld [vmem:[#allocation2 + $0x44] sm:$0x1]
        %v4667 = vld [vmem:[#allocation2 + $0x50] sm:$0x1]
        %v4668 = vld [vmem:[#allocation2 + $0x5c] sm:$0x1]
        %v4669 = vld [vmem:[#allocation2 + $0x68] sm:$0x1]
        %v4670 = vld [vmem:[#allocation2 + $0x74] sm:$0x1]
        %v4671 = vld [vmem:[#allocation2 + $0x80] sm:$0x1]
        %v4672 = vld [vmem:[#allocation2 + $0x8c] sm:$0x1]
        %v4673 = vld [vmem:[#allocation2 + $0x98] sm:$0x1]
        %v4674 = vld [vmem:[#allocation2 + $0xa4] sm:$0x1]
        %v4675 = vld [vmem:[#allocation2 + $0xb0] sm:$0x1]
        %v4676 = vld [vmem:[#allocation2 + $0xbc] sm:$0x1]
        %v4677 = vshrl.u32 %v4552, 16
        %v4678 = vpack.i.b16 %v4677, %v4677
        %v4680 = vlaneseq
        %v4681 = vshrl.u32 %v4680, 7
        %v4682 = vsub.s32 0, %v4681
        %v4683 = vrot.slane %v4678, %v4682
        %v4685 = vunpack.c.l.b16 %v4683
        %v4686 = vpack.c.b16 %v4685, %v4685
        %v4688 = vmul.bf16 %v4554, %v4686
        %v4689 = vmul.bf16 %v4555, %v4686
        %v4690 = vmul.bf16 %v4661, %v4686
        %v4691 = vmul.bf16 %v4556, %v4686
        %v4692 = vmul.bf16 %v4557, %v4686
        %v4693 = vmul.bf16 %v4662, %v4686
        %v4694 = vmul.bf16 %v4558, %v4686
        %v4695 = vmul.bf16 %v4559, %v4686
        %v4696 = vmul.bf16 %v4663, %v4686
        %v4697 = vmul.bf16 %v4560, %v4686
        %v4698 = vmul.bf16 %v4561, %v4686
        %v4699 = vmul.bf16 %v4664, %v4686
        %v4700 = vmul.bf16 %v4562, %v4686
        %v4701 = vmul.bf16 %v4563, %v4686
        %v4702 = vmul.bf16 %v4665, %v4686
        %v4703 = vmul.bf16 %v4564, %v4686
        %v4704 = vmul.bf16 %v4565, %v4686
        %v4705 = vmul.bf16 %v4666, %v4686
        %v4706 = vmul.bf16 %v4566, %v4686
        %v4707 = vmul.bf16 %v4567, %v4686
        %v4708 = vmul.bf16 %v4667, %v4686
        %v4709 = vmul.bf16 %v4568, %v4686
        %v4710 = vmul.bf16 %v4569, %v4686
        %v4711 = vmul.bf16 %v4668, %v4686
        %v4712 = vmul.bf16 %v4570, %v4686
        %v4713 = vmul.bf16 %v4571, %v4686
        %v4714 = vmul.bf16 %v4669, %v4686
        %v4715 = vmul.bf16 %v4572, %v4686
        %v4716 = vmul.bf16 %v4573, %v4686
        %v4717 = vmul.bf16 %v4670, %v4686
        %v4718 = vmul.bf16 %v4574, %v4686
        %v4719 = vmul.bf16 %v4575, %v4686
        %v4720 = vmul.bf16 %v4671, %v4686
        %v4721 = vmul.bf16 %v4576, %v4686
        %v4722 = vmul.bf16 %v4577, %v4686
        %v4723 = vmul.bf16 %v4672, %v4686
        %v4724 = vmul.bf16 %v4578, %v4686
        %v4725 = vmul.bf16 %v4579, %v4686
        %v4726 = vmul.bf16 %v4673, %v4686
        %v4727 = vmul.bf16 %v4580, %v4686
        %v4728 = vmul.bf16 %v4581, %v4686
        %v4729 = vmul.bf16 %v4674, %v4686
        %v4730 = vmul.bf16 %v4582, %v4686
        %v4731 = vmul.bf16 %v4583, %v4686
        %v4732 = vmul.bf16 %v4675, %v4686
        %v4733 = vmul.bf16 %v4584, %v4686
        %v4734 = vmul.bf16 %v4585, %v4686
        %v4735 = vmul.bf16 %v4676, %v4686
        %v4736 = vunpack.c.l.bf16 %v4688
        %v4737 = vunpack.c.l.bf16 %v4689
        %v4738 = vunpack.c.l.bf16 %v4690
        %v4739 = vunpack.c.l.bf16 %v4691
        %v4740 = vunpack.c.l.bf16 %v4692
        %v4741 = vunpack.c.l.bf16 %v4693
        %v4742 = vunpack.c.l.bf16 %v4694
        %v4743 = vunpack.c.l.bf16 %v4695
        %v4744 = vunpack.c.l.bf16 %v4696
        %v4745 = vunpack.c.l.bf16 %v4697
        %v4746 = vunpack.c.l.bf16 %v4698
        %v4747 = vunpack.c.l.bf16 %v4699
        %v4748 = vunpack.c.l.bf16 %v4700
        %v4749 = vunpack.c.l.bf16 %v4701
        %v4750 = vunpack.c.l.bf16 %v4702
        %v4751 = vunpack.c.l.bf16 %v4703
        %v4752 = vunpack.c.l.bf16 %v4704
        %v4753 = vunpack.c.l.bf16 %v4705
        %v4754 = vunpack.c.l.bf16 %v4706
        %v4755 = vunpack.c.l.bf16 %v4707
        %v4756 = vunpack.c.l.bf16 %v4708
        %v4757 = vunpack.c.l.bf16 %v4709
        %v4758 = vunpack.c.l.bf16 %v4710
        %v4759 = vunpack.c.l.bf16 %v4711
        %v4760 = vunpack.c.l.bf16 %v4712
        %v4761 = vunpack.c.l.bf16 %v4713
        %v4762 = vunpack.c.l.bf16 %v4714
        %v4763 = vunpack.c.l.bf16 %v4715
        %v4764 = vunpack.c.l.bf16 %v4716
        %v4765 = vunpack.c.l.bf16 %v4717
        %v4766 = vunpack.c.l.bf16 %v4718
        %v4767 = vunpack.c.l.bf16 %v4719
        %v4768 = vunpack.c.l.bf16 %v4720
        %v4769 = vunpack.c.l.bf16 %v4721
        %v4770 = vunpack.c.l.bf16 %v4722
        %v4771 = vunpack.c.l.bf16 %v4723
        %v4772 = vunpack.c.l.bf16 %v4724
        %v4773 = vunpack.c.l.bf16 %v4725
        %v4774 = vunpack.c.l.bf16 %v4726
        %v4775 = vunpack.c.l.bf16 %v4727
        %v4776 = vunpack.c.l.bf16 %v4728
        %v4777 = vunpack.c.l.bf16 %v4729
        %v4778 = vunpack.c.l.bf16 %v4730
        %v4779 = vunpack.c.l.bf16 %v4731
        %v4780 = vunpack.c.l.bf16 %v4732
        %v4781 = vunpack.c.l.bf16 %v4733
        %v4782 = vunpack.c.l.bf16 %v4734
        %v4783 = vunpack.c.l.bf16 %v4735
        %v4832 = vrot.slane %v4736, 1
        %v4833 = vrot.slane %v4737, 1
        %v4834 = vsel %vm1660, %v4832, %v4833
        %v4835 = vrot.slane %v4738, 1
        %v4836 = vsel %vm1660, %v4833, %v4835
        %v4837 = vrot.slane %v4739, 1
        %v4838 = vrot.slane %v4740, 1
        %v4839 = vsel %vm1660, %v4837, %v4838
        %v4840 = vrot.slane %v4741, 1
        %v4841 = vsel %vm1660, %v4838, %v4840
        %v4842 = vrot.slane %v4742, 1
        %v4843 = vrot.slane %v4743, 1
        %v4844 = vsel %vm1660, %v4842, %v4843
        %v4845 = vrot.slane %v4744, 1
        %v4846 = vsel %vm1660, %v4843, %v4845
        %v4847 = vrot.slane %v4745, 1
        %v4848 = vrot.slane %v4746, 1
        %v4849 = vsel %vm1660, %v4847, %v4848
        %v4850 = vrot.slane %v4747, 1
        %v4851 = vsel %vm1660, %v4848, %v4850
        %v4852 = vrot.slane %v4748, 1
        %v4853 = vrot.slane %v4749, 1
        %v4854 = vsel %vm1660, %v4852, %v4853
        %v4855 = vrot.slane %v4750, 1
        %v4856 = vsel %vm1660, %v4853, %v4855
        %v4857 = vrot.slane %v4751, 1
        %v4858 = vrot.slane %v4752, 1
        %v4859 = vsel %vm1660, %v4857, %v4858
        %v4860 = vrot.slane %v4753, 1
        %v4861 = vsel %vm1660, %v4858, %v4860
        %v4862 = vrot.slane %v4754, 1
        %v4863 = vrot.slane %v4755, 1
        %v4864 = vsel %vm1660, %v4862, %v4863
        %v4865 = vrot.slane %v4756, 1
        %v4866 = vsel %vm1660, %v4863, %v4865
        %v4867 = vrot.slane %v4757, 1
        %v4868 = vrot.slane %v4758, 1
        %v4869 = vsel %vm1660, %v4867, %v4868
        %v4870 = vrot.slane %v4759, 1
        %v4871 = vsel %vm1660, %v4868, %v4870
        %v4872 = vrot.slane %v4760, 1
        %v4873 = vrot.slane %v4761, 1
        %v4874 = vsel %vm1660, %v4872, %v4873
        %v4875 = vrot.slane %v4762, 1
        %v4876 = vsel %vm1660, %v4873, %v4875
        %v4877 = vrot.slane %v4763, 1
        %v4878 = vrot.slane %v4764, 1
        %v4879 = vsel %vm1660, %v4877, %v4878
        %v4880 = vrot.slane %v4765, 1
        %v4881 = vsel %vm1660, %v4878, %v4880
        %v4882 = vrot.slane %v4766, 1
        %v4883 = vrot.slane %v4767, 1
        %v4884 = vsel %vm1660, %v4882, %v4883
        %v4885 = vrot.slane %v4768, 1
        %v4886 = vsel %vm1660, %v4883, %v4885
        %v4887 = vrot.slane %v4769, 1
        %v4888 = vrot.slane %v4770, 1
        %v4889 = vsel %vm1660, %v4887, %v4888
        %v4890 = vrot.slane %v4771, 1
        %v4891 = vsel %vm1660, %v4888, %v4890
        %v4892 = vrot.slane %v4772, 1
        %v4893 = vrot.slane %v4773, 1
        %v4894 = vsel %vm1660, %v4892, %v4893
        %v4895 = vrot.slane %v4774, 1
        %v4896 = vsel %vm1660, %v4893, %v4895
        %v4897 = vrot.slane %v4775, 1
        %v4898 = vrot.slane %v4776, 1
        %v4899 = vsel %vm1660, %v4897, %v4898
        %v4900 = vrot.slane %v4777, 1
        %v4901 = vsel %vm1660, %v4898, %v4900
        %v4902 = vrot.slane %v4778, 1
        %v4903 = vrot.slane %v4779, 1
        %v4904 = vsel %vm1660, %v4902, %v4903
        %v4905 = vrot.slane %v4780, 1
        %v4906 = vsel %vm1660, %v4903, %v4905
        %v4907 = vrot.slane %v4781, 1
        %v4908 = vrot.slane %v4782, 1
        %v4909 = vsel %vm1660, %v4907, %v4908
        %v4910 = vrot.slane %v4783, 1
        %v4911 = vsel %vm1660, %v4908, %v4910
        %v4944 = vadd.f32 %v4629, %v4834
        %v4945 = vadd.f32 %v4630, %v4836
        %v4946 = vadd.f32 %v4631, %v4839
        %v4947 = vadd.f32 %v4632, %v4841
        %v4948 = vadd.f32 %v4633, %v4844
        %v4949 = vadd.f32 %v4634, %v4846
        %v4950 = vadd.f32 %v4635, %v4849
        %v4951 = vadd.f32 %v4636, %v4851
        %v4952 = vadd.f32 %v4637, %v4854
        %v4953 = vadd.f32 %v4638, %v4856
        %v4954 = vadd.f32 %v4639, %v4859
        %v4955 = vadd.f32 %v4640, %v4861
        %v4956 = vadd.f32 %v4641, %v4864
        %v4957 = vadd.f32 %v4642, %v4866
        %v4958 = vadd.f32 %v4643, %v4869
        %v4959 = vadd.f32 %v4644, %v4871
        %v4960 = vadd.f32 %v4645, %v4874
        %v4961 = vadd.f32 %v4646, %v4876
        %v4962 = vadd.f32 %v4647, %v4879
        %v4963 = vadd.f32 %v4648, %v4881
        %v4964 = vadd.f32 %v4649, %v4884
        %v4965 = vadd.f32 %v4650, %v4886
        %v4966 = vadd.f32 %v4651, %v4889
        %v4967 = vadd.f32 %v4652, %v4891
        %v4968 = vadd.f32 %v4653, %v4894
        %v4969 = vadd.f32 %v4654, %v4896
        %v4970 = vadd.f32 %v4655, %v4899
        %v4971 = vadd.f32 %v4656, %v4901
        %v4972 = vadd.f32 %v4657, %v4904
        %v4973 = vadd.f32 %v4658, %v4906
        %v4974 = vadd.f32 %v4659, %v4909
        %v4975 = vadd.f32 %v4660, %v4911
        %v4976 = vld [vmem:[#allocation2] sm:$0xe]
        %v4977 = vld [vmem:[#allocation2 + $0xc] sm:$0xe]
        %v4978 = vld [vmem:[#allocation2 + $0x18] sm:$0xe]
        %v4979 = vld [vmem:[#allocation2 + $0x24] sm:$0xe]
        %v4980 = vld [vmem:[#allocation2 + $0x30] sm:$0xe]
        %v4981 = vld [vmem:[#allocation2 + $0x3c] sm:$0xe]
        %v4982 = vld [vmem:[#allocation2 + $0x48] sm:$0xe]
        %v4983 = vld [vmem:[#allocation2 + $0x54] sm:$0xe]
        %v4984 = vld [vmem:[#allocation2 + $0x60] sm:$0xe]
        %v4985 = vld [vmem:[#allocation2 + $0x6c] sm:$0xe]
        %v4986 = vld [vmem:[#allocation2 + $0x78] sm:$0xe]
        %v4987 = vld [vmem:[#allocation2 + $0x84] sm:$0xe]
        %v4988 = vld [vmem:[#allocation2 + $0x90] sm:$0xe]
        %v4989 = vld [vmem:[#allocation2 + $0x9c] sm:$0xe]
        %v4990 = vld [vmem:[#allocation2 + $0xa8] sm:$0xe]
        %v4991 = vld [vmem:[#allocation2 + $0xb4] sm:$0xe]
        %v4992 = vlaneseq
        %v4993 = vshrl.u32 %v4992, 7
        %v4994 = vsub.s32 1, %v4993
        %v4995 = vrot.slane %v4587, %v4994
        %v4997 = vunpack.c.l.b16 %v4995
        %v4998 = vpack.c.b16 %v4997, %v4997
        %v5000 = vmul.bf16 %v4976, %v4998
        %v5001 = vmul.bf16 %v4555, %v4998
        %v5002 = vmul.bf16 %v4661, %v4998
        %v5003 = vmul.bf16 %v4977, %v4998
        %v5004 = vmul.bf16 %v4557, %v4998
        %v5005 = vmul.bf16 %v4662, %v4998
        %v5006 = vmul.bf16 %v4978, %v4998
        %v5007 = vmul.bf16 %v4559, %v4998
        %v5008 = vmul.bf16 %v4663, %v4998
        %v5009 = vmul.bf16 %v4979, %v4998
        %v5010 = vmul.bf16 %v4561, %v4998
        %v5011 = vmul.bf16 %v4664, %v4998
        %v5012 = vmul.bf16 %v4980, %v4998
        %v5013 = vmul.bf16 %v4563, %v4998
        %v5014 = vmul.bf16 %v4665, %v4998
        %v5015 = vmul.bf16 %v4981, %v4998
        %v5016 = vmul.bf16 %v4565, %v4998
        %v5017 = vmul.bf16 %v4666, %v4998
        %v5018 = vmul.bf16 %v4982, %v4998
        %v5019 = vmul.bf16 %v4567, %v4998
        %v5020 = vmul.bf16 %v4667, %v4998
        %v5021 = vmul.bf16 %v4983, %v4998
        %v5022 = vmul.bf16 %v4569, %v4998
        %v5023 = vmul.bf16 %v4668, %v4998
        %v5024 = vmul.bf16 %v4984, %v4998
        %v5025 = vmul.bf16 %v4571, %v4998
        %v5026 = vmul.bf16 %v4669, %v4998
        %v5027 = vmul.bf16 %v4985, %v4998
        %v5028 = vmul.bf16 %v4573, %v4998
        %v5029 = vmul.bf16 %v4670, %v4998
        %v5030 = vmul.bf16 %v4986, %v4998
        %v5031 = vmul.bf16 %v4575, %v4998
        %v5032 = vmul.bf16 %v4671, %v4998
        %v5033 = vmul.bf16 %v4987, %v4998
        %v5034 = vmul.bf16 %v4577, %v4998
        %v5035 = vmul.bf16 %v4672, %v4998
        %v5036 = vmul.bf16 %v4988, %v4998
        %v5037 = vmul.bf16 %v4579, %v4998
        %v5038 = vmul.bf16 %v4673, %v4998
        %v5039 = vmul.bf16 %v4989, %v4998
        %v5040 = vmul.bf16 %v4581, %v4998
        %v5041 = vmul.bf16 %v4674, %v4998
        %v5042 = vmul.bf16 %v4990, %v4998
        %v5043 = vmul.bf16 %v4583, %v4998
        %v5044 = vmul.bf16 %v4675, %v4998
        %v5045 = vmul.bf16 %v4991, %v4998
        %v5046 = vmul.bf16 %v4585, %v4998
        %v5047 = vmul.bf16 %v4676, %v4998
        %v5048 = vunpack.c.l.bf16 %v5000
        %v5049 = vunpack.c.l.bf16 %v5001
        %v5050 = vunpack.c.l.bf16 %v5002
        %v5051 = vunpack.c.l.bf16 %v5003
        %v5052 = vunpack.c.l.bf16 %v5004
        %v5053 = vunpack.c.l.bf16 %v5005
        %v5054 = vunpack.c.l.bf16 %v5006
        %v5055 = vunpack.c.l.bf16 %v5007
        %v5056 = vunpack.c.l.bf16 %v5008
        %v5057 = vunpack.c.l.bf16 %v5009
        %v5058 = vunpack.c.l.bf16 %v5010
        %v5059 = vunpack.c.l.bf16 %v5011
        %v5060 = vunpack.c.l.bf16 %v5012
        %v5061 = vunpack.c.l.bf16 %v5013
        %v5062 = vunpack.c.l.bf16 %v5014
        %v5063 = vunpack.c.l.bf16 %v5015
        %v5064 = vunpack.c.l.bf16 %v5016
        %v5065 = vunpack.c.l.bf16 %v5017
        %v5066 = vunpack.c.l.bf16 %v5018
        %v5067 = vunpack.c.l.bf16 %v5019
        %v5068 = vunpack.c.l.bf16 %v5020
        %v5069 = vunpack.c.l.bf16 %v5021
        %v5070 = vunpack.c.l.bf16 %v5022
        %v5071 = vunpack.c.l.bf16 %v5023
        %v5072 = vunpack.c.l.bf16 %v5024
        %v5073 = vunpack.c.l.bf16 %v5025
        %v5074 = vunpack.c.l.bf16 %v5026
        %v5075 = vunpack.c.l.bf16 %v5027
        %v5076 = vunpack.c.l.bf16 %v5028
        %v5077 = vunpack.c.l.bf16 %v5029
        %v5078 = vunpack.c.l.bf16 %v5030
        %v5079 = vunpack.c.l.bf16 %v5031
        %v5080 = vunpack.c.l.bf16 %v5032
        %v5081 = vunpack.c.l.bf16 %v5033
        %v5082 = vunpack.c.l.bf16 %v5034
        %v5083 = vunpack.c.l.bf16 %v5035
        %v5084 = vunpack.c.l.bf16 %v5036
        %v5085 = vunpack.c.l.bf16 %v5037
        %v5086 = vunpack.c.l.bf16 %v5038
        %v5087 = vunpack.c.l.bf16 %v5039
        %v5088 = vunpack.c.l.bf16 %v5040
        %v5089 = vunpack.c.l.bf16 %v5041
        %v5090 = vunpack.c.l.bf16 %v5042
        %v5091 = vunpack.c.l.bf16 %v5043
        %v5092 = vunpack.c.l.bf16 %v5044
        %v5093 = vunpack.c.l.bf16 %v5045
        %v5094 = vunpack.c.l.bf16 %v5046
        %v5095 = vunpack.c.l.bf16 %v5047
        %v5144 = vrot.slane %v5048, 2
        %v5145 = vrot.slane %v5049, 2
        %v5146 = vsel %vm1973, %v5144, %v5145
        %v5147 = vrot.slane %v5050, 2
        %v5148 = vsel %vm1973, %v5145, %v5147
        %v5149 = vrot.slane %v5051, 2
        %v5150 = vrot.slane %v5052, 2
        %v5151 = vsel %vm1973, %v5149, %v5150
        %v5152 = vrot.slane %v5053, 2
        %v5153 = vsel %vm1973, %v5150, %v5152
        %v5154 = vrot.slane %v5054, 2
        %v5155 = vrot.slane %v5055, 2
        %v5156 = vsel %vm1973, %v5154, %v5155
        %v5157 = vrot.slane %v5056, 2
        %v5158 = vsel %vm1973, %v5155, %v5157
        %v5159 = vrot.slane %v5057, 2
        %v5160 = vrot.slane %v5058, 2
        %v5161 = vsel %vm1973, %v5159, %v5160
        %v5162 = vrot.slane %v5059, 2
        %v5163 = vsel %vm1973, %v5160, %v5162
        %v5164 = vrot.slane %v5060, 2
        %v5165 = vrot.slane %v5061, 2
        %v5166 = vsel %vm1973, %v5164, %v5165
        %v5167 = vrot.slane %v5062, 2
        %v5168 = vsel %vm1973, %v5165, %v5167
        %v5169 = vrot.slane %v5063, 2
        %v5170 = vrot.slane %v5064, 2
        %v5171 = vsel %vm1973, %v5169, %v5170
        %v5172 = vrot.slane %v5065, 2
        %v5173 = vsel %vm1973, %v5170, %v5172
        %v5174 = vrot.slane %v5066, 2
        %v5175 = vrot.slane %v5067, 2
        %v5176 = vsel %vm1973, %v5174, %v5175
        %v5177 = vrot.slane %v5068, 2
        %v5178 = vsel %vm1973, %v5175, %v5177
        %v5179 = vrot.slane %v5069, 2
        %v5180 = vrot.slane %v5070, 2
        %v5181 = vsel %vm1973, %v5179, %v5180
        %v5182 = vrot.slane %v5071, 2
        %v5183 = vsel %vm1973, %v5180, %v5182
        %v5184 = vrot.slane %v5072, 2
        %v5185 = vrot.slane %v5073, 2
        %v5186 = vsel %vm1973, %v5184, %v5185
        %v5187 = vrot.slane %v5074, 2
        %v5188 = vsel %vm1973, %v5185, %v5187
        %v5189 = vrot.slane %v5075, 2
        %v5190 = vrot.slane %v5076, 2
        %v5191 = vsel %vm1973, %v5189, %v5190
        %v5192 = vrot.slane %v5077, 2
        %v5193 = vsel %vm1973, %v5190, %v5192
        %v5194 = vrot.slane %v5078, 2
        %v5195 = vrot.slane %v5079, 2
        %v5196 = vsel %vm1973, %v5194, %v5195
        %v5197 = vrot.slane %v5080, 2
        %v5198 = vsel %vm1973, %v5195, %v5197
        %v5199 = vrot.slane %v5081, 2
        %v5200 = vrot.slane %v5082, 2
        %v5201 = vsel %vm1973, %v5199, %v5200
        %v5202 = vrot.slane %v5083, 2
        %v5203 = vsel %vm1973, %v5200, %v5202
        %v5204 = vrot.slane %v5084, 2
        %v5205 = vrot.slane %v5085, 2
        %v5206 = vsel %vm1973, %v5204, %v5205
        %v5207 = vrot.slane %v5086, 2
        %v5208 = vsel %vm1973, %v5205, %v5207
        %v5209 = vrot.slane %v5087, 2
        %v5210 = vrot.slane %v5088, 2
        %v5211 = vsel %vm1973, %v5209, %v5210
        %v5212 = vrot.slane %v5089, 2
        %v5213 = vsel %vm1973, %v5210, %v5212
        %v5214 = vrot.slane %v5090, 2
        %v5215 = vrot.slane %v5091, 2
        %v5216 = vsel %vm1973, %v5214, %v5215
        %v5217 = vrot.slane %v5092, 2
        %v5218 = vsel %vm1973, %v5215, %v5217
        %v5219 = vrot.slane %v5093, 2
        %v5220 = vrot.slane %v5094, 2
        %v5221 = vsel %vm1973, %v5219, %v5220
        %v5222 = vrot.slane %v5095, 2
        %v5223 = vsel %vm1973, %v5220, %v5222
        %v5256 = vadd.f32 %v4944, %v5146
        %v5257 = vadd.f32 %v4945, %v5148
        %v5258 = vadd.f32 %v4946, %v5151
        %v5259 = vadd.f32 %v4947, %v5153
        %v5260 = vadd.f32 %v4948, %v5156
        %v5261 = vadd.f32 %v4949, %v5158
        %v5262 = vadd.f32 %v4950, %v5161
        %v5263 = vadd.f32 %v4951, %v5163
        %v5264 = vadd.f32 %v4952, %v5166
        %v5265 = vadd.f32 %v4953, %v5168
        %v5266 = vadd.f32 %v4954, %v5171
        %v5267 = vadd.f32 %v4955, %v5173
        %v5268 = vadd.f32 %v4956, %v5176
        %v5269 = vadd.f32 %v4957, %v5178
        %v5270 = vadd.f32 %v4958, %v5181
        %v5271 = vadd.f32 %v4959, %v5183
        %v5272 = vadd.f32 %v4960, %v5186
        %v5273 = vadd.f32 %v4961, %v5188
        %v5274 = vadd.f32 %v4962, %v5191
        %v5275 = vadd.f32 %v4963, %v5193
        %v5276 = vadd.f32 %v4964, %v5196
        %v5277 = vadd.f32 %v4965, %v5198
        %v5278 = vadd.f32 %v4966, %v5201
        %v5279 = vadd.f32 %v4967, %v5203
        %v5280 = vadd.f32 %v4968, %v5206
        %v5281 = vadd.f32 %v4969, %v5208
        %v5282 = vadd.f32 %v4970, %v5211
        %v5283 = vadd.f32 %v4971, %v5213
        %v5284 = vadd.f32 %v4972, %v5216
        %v5285 = vadd.f32 %v4973, %v5218
        %v5286 = vadd.f32 %v4974, %v5221
        %v5287 = vadd.f32 %v4975, %v5223
        %v5288 = vld [vmem:[%s682] sm:$0xf]
        %v5289 = vld [vmem:[%s682 + $0x4] sm:$0xf]
        %v5290 = vld [vmem:[%s682 + $0xc] sm:$0xf]
        %v5291 = vld [vmem:[%s682 + $0x10] sm:$0xf]
        %v5292 = vld [vmem:[%s682 + $0x18] sm:$0xf]
        %v5293 = vld [vmem:[%s682 + $0x1c] sm:$0xf]
        %v5294 = vld [vmem:[%s682 + $0x24] sm:$0xf]
        %v5295 = vld [vmem:[%s682 + $0x28] sm:$0xf]
        %v5296 = vld [vmem:[%s682 + $0x30] sm:$0xf]
        %v5297 = vld [vmem:[%s682 + $0x34] sm:$0xf]
        %v5298 = vld [vmem:[%s682 + $0x3c] sm:$0xf]
        %v5299 = vld [vmem:[%s682 + $0x40] sm:$0xf]
        %v5300 = vld [vmem:[%s682 + $0x48] sm:$0xf]
        %v5301 = vld [vmem:[%s682 + $0x4c] sm:$0xf]
        %v5302 = vld [vmem:[%s682 + $0x54] sm:$0xf]
        %v5303 = vld [vmem:[%s682 + $0x58] sm:$0xf]
        %v5304 = vld [vmem:[%s682 + $0x60] sm:$0xf]
        %v5305 = vld [vmem:[%s682 + $0x64] sm:$0xf]
        %v5306 = vld [vmem:[%s682 + $0x6c] sm:$0xf]
        %v5307 = vld [vmem:[%s682 + $0x70] sm:$0xf]
        %v5308 = vld [vmem:[%s682 + $0x78] sm:$0xf]
        %v5309 = vld [vmem:[%s682 + $0x7c] sm:$0xf]
        %v5310 = vld [vmem:[%s682 + $0x84] sm:$0xf]
        %v5311 = vld [vmem:[%s682 + $0x88] sm:$0xf]
        %v5312 = vld [vmem:[%s682 + $0x90] sm:$0xf]
        %v5313 = vld [vmem:[%s682 + $0x94] sm:$0xf]
        %v5314 = vld [vmem:[%s682 + $0x9c] sm:$0xf]
        %v5315 = vld [vmem:[%s682 + $0xa0] sm:$0xf]
        %v5316 = vld [vmem:[%s682 + $0xa8] sm:$0xf]
        %v5317 = vld [vmem:[%s682 + $0xac] sm:$0xf]
        %v5318 = vld [vmem:[%s682 + $0xb4] sm:$0xf]
        %v5319 = vld [vmem:[%s682 + $0xb8] sm:$0xf]
        %v5320 = vlaneseq
        %v5321 = vshrl.u32 %v5320, 7
        %v5322 = vsub.s32 1, %v5321
        %v5323 = vrot.slane %v4678, %v5322
        %v5325 = vunpack.c.l.b16 %v5323
        %v5326 = vpack.c.b16 %v5325, %v5325
        %v5328 = vmul.bf16 %v5288, %v5326
        %v5329 = vmul.bf16 %v5289, %v5326
        %v5330 = vmul.bf16 %v5290, %v5326
        %v5331 = vmul.bf16 %v5291, %v5326
        %v5332 = vmul.bf16 %v5292, %v5326
        %v5333 = vmul.bf16 %v5293, %v5326
        %v5334 = vmul.bf16 %v5294, %v5326
        %v5335 = vmul.bf16 %v5295, %v5326
        %v5336 = vmul.bf16 %v5296, %v5326
        %v5337 = vmul.bf16 %v5297, %v5326
        %v5338 = vmul.bf16 %v5298, %v5326
        %v5339 = vmul.bf16 %v5299, %v5326
        %v5340 = vmul.bf16 %v5300, %v5326
        %v5341 = vmul.bf16 %v5301, %v5326
        %v5342 = vmul.bf16 %v5302, %v5326
        %v5343 = vmul.bf16 %v5303, %v5326
        %v5344 = vmul.bf16 %v5304, %v5326
        %v5345 = vmul.bf16 %v5305, %v5326
        %v5346 = vmul.bf16 %v5306, %v5326
        %v5347 = vmul.bf16 %v5307, %v5326
        %v5348 = vmul.bf16 %v5308, %v5326
        %v5349 = vmul.bf16 %v5309, %v5326
        %v5350 = vmul.bf16 %v5310, %v5326
        %v5351 = vmul.bf16 %v5311, %v5326
        %v5352 = vmul.bf16 %v5312, %v5326
        %v5353 = vmul.bf16 %v5313, %v5326
        %v5354 = vmul.bf16 %v5314, %v5326
        %v5355 = vmul.bf16 %v5315, %v5326
        %v5356 = vmul.bf16 %v5316, %v5326
        %v5357 = vmul.bf16 %v5317, %v5326
        %v5358 = vmul.bf16 %v5318, %v5326
        %v5359 = vmul.bf16 %v5319, %v5326
        %v5360 = vunpack.c.l.bf16 %v5328
        %v5361 = vunpack.c.l.bf16 %v5329
        %v5362 = vunpack.c.l.bf16 %v5330
        %v5363 = vunpack.c.l.bf16 %v5331
        %v5364 = vunpack.c.l.bf16 %v5332
        %v5365 = vunpack.c.l.bf16 %v5333
        %v5366 = vunpack.c.l.bf16 %v5334
        %v5367 = vunpack.c.l.bf16 %v5335
        %v5368 = vunpack.c.l.bf16 %v5336
        %v5369 = vunpack.c.l.bf16 %v5337
        %v5370 = vunpack.c.l.bf16 %v5338
        %v5371 = vunpack.c.l.bf16 %v5339
        %v5372 = vunpack.c.l.bf16 %v5340
        %v5373 = vunpack.c.l.bf16 %v5341
        %v5374 = vunpack.c.l.bf16 %v5342
        %v5375 = vunpack.c.l.bf16 %v5343
        %v5376 = vunpack.c.l.bf16 %v5344
        %v5377 = vunpack.c.l.bf16 %v5345
        %v5378 = vunpack.c.l.bf16 %v5346
        %v5379 = vunpack.c.l.bf16 %v5347
        %v5380 = vunpack.c.l.bf16 %v5348
        %v5381 = vunpack.c.l.bf16 %v5349
        %v5382 = vunpack.c.l.bf16 %v5350
        %v5383 = vunpack.c.l.bf16 %v5351
        %v5384 = vunpack.c.l.bf16 %v5352
        %v5385 = vunpack.c.l.bf16 %v5353
        %v5386 = vunpack.c.l.bf16 %v5354
        %v5387 = vunpack.c.l.bf16 %v5355
        %v5388 = vunpack.c.l.bf16 %v5356
        %v5389 = vunpack.c.l.bf16 %v5357
        %v5390 = vunpack.c.l.bf16 %v5358
        %v5391 = vunpack.c.l.bf16 %v5359
        %v5392 = vadd.f32 %v5256, %v5360
        %v5393 = vadd.f32 %v5257, %v5361
        %v5394 = vadd.f32 %v5258, %v5362
        %v5395 = vadd.f32 %v5259, %v5363
        %v5396 = vadd.f32 %v5260, %v5364
        %v5397 = vadd.f32 %v5261, %v5365
        %v5398 = vadd.f32 %v5262, %v5366
        %v5399 = vadd.f32 %v5263, %v5367
        %v5400 = vadd.f32 %v5264, %v5368
        %v5401 = vadd.f32 %v5265, %v5369
        %v5402 = vadd.f32 %v5266, %v5370
        %v5403 = vadd.f32 %v5267, %v5371
        %v5404 = vadd.f32 %v5268, %v5372
        %v5405 = vadd.f32 %v5269, %v5373
        %v5406 = vadd.f32 %v5270, %v5374
        %v5407 = vadd.f32 %v5271, %v5375
        %v5408 = vadd.f32 %v5272, %v5376
        %v5409 = vadd.f32 %v5273, %v5377
        %v5410 = vadd.f32 %v5274, %v5378
        %v5411 = vadd.f32 %v5275, %v5379
        %v5412 = vadd.f32 %v5276, %v5380
        %v5413 = vadd.f32 %v5277, %v5381
        %v5414 = vadd.f32 %v5278, %v5382
        %v5415 = vadd.f32 %v5279, %v5383
        %v5416 = vadd.f32 %v5280, %v5384
        %v5417 = vadd.f32 %v5281, %v5385
        %v5418 = vadd.f32 %v5282, %v5386
        %v5419 = vadd.f32 %v5283, %v5387
        %v5420 = vadd.f32 %v5284, %v5388
        %v5421 = vadd.f32 %v5285, %v5389
        %v5422 = vadd.f32 %v5286, %v5390
        %v5423 = vadd.f32 %v5287, %v5391
        %v5424 = vld [vmem:[%s682 + $0x8] sm:$0x1]
        %v5425 = vld [vmem:[%s682 + $0x14] sm:$0x1]
        %v5426 = vld [vmem:[%s682 + $0x20] sm:$0x1]
        %v5427 = vld [vmem:[%s682 + $0x2c] sm:$0x1]
        %v5428 = vld [vmem:[%s682 + $0x38] sm:$0x1]
        %v5429 = vld [vmem:[%s682 + $0x44] sm:$0x1]
        %v5430 = vld [vmem:[%s682 + $0x50] sm:$0x1]
        %v5431 = vld [vmem:[%s682 + $0x5c] sm:$0x1]
        %v5432 = vld [vmem:[%s682 + $0x68] sm:$0x1]
        %v5433 = vld [vmem:[%s682 + $0x74] sm:$0x1]
        %v5434 = vld [vmem:[%s682 + $0x80] sm:$0x1]
        %v5435 = vld [vmem:[%s682 + $0x8c] sm:$0x1]
        %v5436 = vld [vmem:[%s682 + $0x98] sm:$0x1]
        %v5437 = vld [vmem:[%s682 + $0xa4] sm:$0x1]
        %v5438 = vld [vmem:[%s682 + $0xb0] sm:$0x1]
        %v5439 = vld [vmem:[%s682 + $0xbc] sm:$0x1]
        %v5440 = vlaneseq
        %v5441 = vshrl.u32 %v5440, 7
        %v5442 = vsub.s32 2, %v5441
        %v5443 = vrot.slane %v4587, %v5442
        %v5445 = vunpack.c.l.b16 %v5443
        %v5446 = vpack.c.b16 %v5445, %v5445
        %v5448 = vmul.bf16 %v5288, %v5446
        %v5449 = vmul.bf16 %v5289, %v5446
        %v5450 = vmul.bf16 %v5424, %v5446
        %v5451 = vmul.bf16 %v5290, %v5446
        %v5452 = vmul.bf16 %v5291, %v5446
        %v5453 = vmul.bf16 %v5425, %v5446
        %v5454 = vmul.bf16 %v5292, %v5446
        %v5455 = vmul.bf16 %v5293, %v5446
        %v5456 = vmul.bf16 %v5426, %v5446
        %v5457 = vmul.bf16 %v5294, %v5446
        %v5458 = vmul.bf16 %v5295, %v5446
        %v5459 = vmul.bf16 %v5427, %v5446
        %v5460 = vmul.bf16 %v5296, %v5446
        %v5461 = vmul.bf16 %v5297, %v5446
        %v5462 = vmul.bf16 %v5428, %v5446
        %v5463 = vmul.bf16 %v5298, %v5446
        %v5464 = vmul.bf16 %v5299, %v5446
        %v5465 = vmul.bf16 %v5429, %v5446
        %v5466 = vmul.bf16 %v5300, %v5446
        %v5467 = vmul.bf16 %v5301, %v5446
        %v5468 = vmul.bf16 %v5430, %v5446
        %v5469 = vmul.bf16 %v5302, %v5446
        %v5470 = vmul.bf16 %v5303, %v5446
        %v5471 = vmul.bf16 %v5431, %v5446
        %v5472 = vmul.bf16 %v5304, %v5446
        %v5473 = vmul.bf16 %v5305, %v5446
        %v5474 = vmul.bf16 %v5432, %v5446
        %v5475 = vmul.bf16 %v5306, %v5446
        %v5476 = vmul.bf16 %v5307, %v5446
        %v5477 = vmul.bf16 %v5433, %v5446
        %v5478 = vmul.bf16 %v5308, %v5446
        %v5479 = vmul.bf16 %v5309, %v5446
        %v5480 = vmul.bf16 %v5434, %v5446
        %v5481 = vmul.bf16 %v5310, %v5446
        %v5482 = vmul.bf16 %v5311, %v5446
        %v5483 = vmul.bf16 %v5435, %v5446
        %v5484 = vmul.bf16 %v5312, %v5446
        %v5485 = vmul.bf16 %v5313, %v5446
        %v5486 = vmul.bf16 %v5436, %v5446
        %v5487 = vmul.bf16 %v5314, %v5446
        %v5488 = vmul.bf16 %v5315, %v5446
        %v5489 = vmul.bf16 %v5437, %v5446
        %v5490 = vmul.bf16 %v5316, %v5446
        %v5491 = vmul.bf16 %v5317, %v5446
        %v5492 = vmul.bf16 %v5438, %v5446
        %v5493 = vmul.bf16 %v5318, %v5446
        %v5494 = vmul.bf16 %v5319, %v5446
        %v5495 = vmul.bf16 %v5439, %v5446
        %v5496 = vunpack.c.l.bf16 %v5448
        %v5497 = vunpack.c.l.bf16 %v5449
        %v5498 = vunpack.c.l.bf16 %v5450
        %v5499 = vunpack.c.l.bf16 %v5451
        %v5500 = vunpack.c.l.bf16 %v5452
        %v5501 = vunpack.c.l.bf16 %v5453
        %v5502 = vunpack.c.l.bf16 %v5454
        %v5503 = vunpack.c.l.bf16 %v5455
        %v5504 = vunpack.c.l.bf16 %v5456
        %v5505 = vunpack.c.l.bf16 %v5457
        %v5506 = vunpack.c.l.bf16 %v5458
        %v5507 = vunpack.c.l.bf16 %v5459
        %v5508 = vunpack.c.l.bf16 %v5460
        %v5509 = vunpack.c.l.bf16 %v5461
        %v5510 = vunpack.c.l.bf16 %v5462
        %v5511 = vunpack.c.l.bf16 %v5463
        %v5512 = vunpack.c.l.bf16 %v5464
        %v5513 = vunpack.c.l.bf16 %v5465
        %v5514 = vunpack.c.l.bf16 %v5466
        %v5515 = vunpack.c.l.bf16 %v5467
        %v5516 = vunpack.c.l.bf16 %v5468
        %v5517 = vunpack.c.l.bf16 %v5469
        %v5518 = vunpack.c.l.bf16 %v5470
        %v5519 = vunpack.c.l.bf16 %v5471
        %v5520 = vunpack.c.l.bf16 %v5472
        %v5521 = vunpack.c.l.bf16 %v5473
        %v5522 = vunpack.c.l.bf16 %v5474
        %v5523 = vunpack.c.l.bf16 %v5475
        %v5524 = vunpack.c.l.bf16 %v5476
        %v5525 = vunpack.c.l.bf16 %v5477
        %v5526 = vunpack.c.l.bf16 %v5478
        %v5527 = vunpack.c.l.bf16 %v5479
        %v5528 = vunpack.c.l.bf16 %v5480
        %v5529 = vunpack.c.l.bf16 %v5481
        %v5530 = vunpack.c.l.bf16 %v5482
        %v5531 = vunpack.c.l.bf16 %v5483
        %v5532 = vunpack.c.l.bf16 %v5484
        %v5533 = vunpack.c.l.bf16 %v5485
        %v5534 = vunpack.c.l.bf16 %v5486
        %v5535 = vunpack.c.l.bf16 %v5487
        %v5536 = vunpack.c.l.bf16 %v5488
        %v5537 = vunpack.c.l.bf16 %v5489
        %v5538 = vunpack.c.l.bf16 %v5490
        %v5539 = vunpack.c.l.bf16 %v5491
        %v5540 = vunpack.c.l.bf16 %v5492
        %v5541 = vunpack.c.l.bf16 %v5493
        %v5542 = vunpack.c.l.bf16 %v5494
        %v5543 = vunpack.c.l.bf16 %v5495
        %v5592 = vrot.slane %v5496, 1
        %v5593 = vrot.slane %v5497, 1
        %v5594 = vsel %vm1660, %v5592, %v5593
        %v5595 = vrot.slane %v5498, 1
        %v5596 = vsel %vm1660, %v5593, %v5595
        %v5597 = vrot.slane %v5499, 1
        %v5598 = vrot.slane %v5500, 1
        %v5599 = vsel %vm1660, %v5597, %v5598
        %v5600 = vrot.slane %v5501, 1
        %v5601 = vsel %vm1660, %v5598, %v5600
        %v5602 = vrot.slane %v5502, 1
        %v5603 = vrot.slane %v5503, 1
        %v5604 = vsel %vm1660, %v5602, %v5603
        %v5605 = vrot.slane %v5504, 1
        %v5606 = vsel %vm1660, %v5603, %v5605
        %v5607 = vrot.slane %v5505, 1
        %v5608 = vrot.slane %v5506, 1
        %v5609 = vsel %vm1660, %v5607, %v5608
        %v5610 = vrot.slane %v5507, 1
        %v5611 = vsel %vm1660, %v5608, %v5610
        %v5612 = vrot.slane %v5508, 1
        %v5613 = vrot.slane %v5509, 1
        %v5614 = vsel %vm1660, %v5612, %v5613
        %v5615 = vrot.slane %v5510, 1
        %v5616 = vsel %vm1660, %v5613, %v5615
        %v5617 = vrot.slane %v5511, 1
        %v5618 = vrot.slane %v5512, 1
        %v5619 = vsel %vm1660, %v5617, %v5618
        %v5620 = vrot.slane %v5513, 1
        %v5621 = vsel %vm1660, %v5618, %v5620
        %v5622 = vrot.slane %v5514, 1
        %v5623 = vrot.slane %v5515, 1
        %v5624 = vsel %vm1660, %v5622, %v5623
        %v5625 = vrot.slane %v5516, 1
        %v5626 = vsel %vm1660, %v5623, %v5625
        %v5627 = vrot.slane %v5517, 1
        %v5628 = vrot.slane %v5518, 1
        %v5629 = vsel %vm1660, %v5627, %v5628
        %v5630 = vrot.slane %v5519, 1
        %v5631 = vsel %vm1660, %v5628, %v5630
        %v5632 = vrot.slane %v5520, 1
        %v5633 = vrot.slane %v5521, 1
        %v5634 = vsel %vm1660, %v5632, %v5633
        %v5635 = vrot.slane %v5522, 1
        %v5636 = vsel %vm1660, %v5633, %v5635
        %v5637 = vrot.slane %v5523, 1
        %v5638 = vrot.slane %v5524, 1
        %v5639 = vsel %vm1660, %v5637, %v5638
        %v5640 = vrot.slane %v5525, 1
        %v5641 = vsel %vm1660, %v5638, %v5640
        %v5642 = vrot.slane %v5526, 1
        %v5643 = vrot.slane %v5527, 1
        %v5644 = vsel %vm1660, %v5642, %v5643
        %v5645 = vrot.slane %v5528, 1
        %v5646 = vsel %vm1660, %v5643, %v5645
        %v5647 = vrot.slane %v5529, 1
        %v5648 = vrot.slane %v5530, 1
        %v5649 = vsel %vm1660, %v5647, %v5648
        %v5650 = vrot.slane %v5531, 1
        %v5651 = vsel %vm1660, %v5648, %v5650
        %v5652 = vrot.slane %v5532, 1
        %v5653 = vrot.slane %v5533, 1
        %v5654 = vsel %vm1660, %v5652, %v5653
        %v5655 = vrot.slane %v5534, 1
        %v5656 = vsel %vm1660, %v5653, %v5655
        %v5657 = vrot.slane %v5535, 1
        %v5658 = vrot.slane %v5536, 1
        %v5659 = vsel %vm1660, %v5657, %v5658
        %v5660 = vrot.slane %v5537, 1
        %v5661 = vsel %vm1660, %v5658, %v5660
        %v5662 = vrot.slane %v5538, 1
        %v5663 = vrot.slane %v5539, 1
        %v5664 = vsel %vm1660, %v5662, %v5663
        %v5665 = vrot.slane %v5540, 1
        %v5666 = vsel %vm1660, %v5663, %v5665
        %v5667 = vrot.slane %v5541, 1
        %v5668 = vrot.slane %v5542, 1
        %v5669 = vsel %vm1660, %v5667, %v5668
        %v5670 = vrot.slane %v5543, 1
        %v5671 = vsel %vm1660, %v5668, %v5670
        %v5704 = vadd.f32 %v5392, %v5594
        %v5705 = vadd.f32 %v5393, %v5596
        %v5706 = vadd.f32 %v5394, %v5599
        %v5707 = vadd.f32 %v5395, %v5601
        %v5708 = vadd.f32 %v5396, %v5604
        %v5709 = vadd.f32 %v5397, %v5606
        %v5710 = vadd.f32 %v5398, %v5609
        %v5711 = vadd.f32 %v5399, %v5611
        %v5712 = vadd.f32 %v5400, %v5614
        %v5713 = vadd.f32 %v5401, %v5616
        %v5714 = vadd.f32 %v5402, %v5619
        %v5715 = vadd.f32 %v5403, %v5621
        %v5716 = vadd.f32 %v5404, %v5624
        %v5717 = vadd.f32 %v5405, %v5626
        %v5718 = vadd.f32 %v5406, %v5629
        %v5719 = vadd.f32 %v5407, %v5631
        %v5720 = vadd.f32 %v5408, %v5634
        %v5721 = vadd.f32 %v5409, %v5636
        %v5722 = vadd.f32 %v5410, %v5639
        %v5723 = vadd.f32 %v5411, %v5641
        %v5724 = vadd.f32 %v5412, %v5644
        %v5725 = vadd.f32 %v5413, %v5646
        %v5726 = vadd.f32 %v5414, %v5649
        %v5727 = vadd.f32 %v5415, %v5651
        %v5728 = vadd.f32 %v5416, %v5654
        %v5729 = vadd.f32 %v5417, %v5656
        %v5730 = vadd.f32 %v5418, %v5659
        %v5731 = vadd.f32 %v5419, %v5661
        %v5732 = vadd.f32 %v5420, %v5664
        %v5733 = vadd.f32 %v5421, %v5666
        %v5734 = vadd.f32 %v5422, %v5669
        %v5735 = vadd.f32 %v5423, %v5671
        %v5736 = vld [vmem:[%s682] sm:$0xe]
        %v5737 = vld [vmem:[%s682 + $0xc] sm:$0xe]
        %v5738 = vld [vmem:[%s682 + $0x18] sm:$0xe]
        %v5739 = vld [vmem:[%s682 + $0x24] sm:$0xe]
        %v5740 = vld [vmem:[%s682 + $0x30] sm:$0xe]
        %v5741 = vld [vmem:[%s682 + $0x3c] sm:$0xe]
        %v5742 = vld [vmem:[%s682 + $0x48] sm:$0xe]
        %v5743 = vld [vmem:[%s682 + $0x54] sm:$0xe]
        %v5744 = vld [vmem:[%s682 + $0x60] sm:$0xe]
        %v5745 = vld [vmem:[%s682 + $0x6c] sm:$0xe]
        %v5746 = vld [vmem:[%s682 + $0x78] sm:$0xe]
        %v5747 = vld [vmem:[%s682 + $0x84] sm:$0xe]
        %v5748 = vld [vmem:[%s682 + $0x90] sm:$0xe]
        %v5749 = vld [vmem:[%s682 + $0x9c] sm:$0xe]
        %v5750 = vld [vmem:[%s682 + $0xa8] sm:$0xe]
        %v5751 = vld [vmem:[%s682 + $0xb4] sm:$0xe]
        %v5752 = vlaneseq
        %v5753 = vshrl.u32 %v5752, 7
        %v5754 = vsub.s32 2, %v5753
        %v5755 = vrot.slane %v4678, %v5754
        %v5757 = vunpack.c.l.b16 %v5755
        %v5758 = vpack.c.b16 %v5757, %v5757
        %v5760 = vmul.bf16 %v5736, %v5758
        %v5761 = vmul.bf16 %v5289, %v5758
        %v5762 = vmul.bf16 %v5424, %v5758
        %v5763 = vmul.bf16 %v5737, %v5758
        %v5764 = vmul.bf16 %v5291, %v5758
        %v5765 = vmul.bf16 %v5425, %v5758
        %v5766 = vmul.bf16 %v5738, %v5758
        %v5767 = vmul.bf16 %v5293, %v5758
        %v5768 = vmul.bf16 %v5426, %v5758
        %v5769 = vmul.bf16 %v5739, %v5758
        %v5770 = vmul.bf16 %v5295, %v5758
        %v5771 = vmul.bf16 %v5427, %v5758
        %v5772 = vmul.bf16 %v5740, %v5758
        %v5773 = vmul.bf16 %v5297, %v5758
        %v5774 = vmul.bf16 %v5428, %v5758
        %v5775 = vmul.bf16 %v5741, %v5758
        %v5776 = vmul.bf16 %v5299, %v5758
        %v5777 = vmul.bf16 %v5429, %v5758
        %v5778 = vmul.bf16 %v5742, %v5758
        %v5779 = vmul.bf16 %v5301, %v5758
        %v5780 = vmul.bf16 %v5430, %v5758
        %v5781 = vmul.bf16 %v5743, %v5758
        %v5782 = vmul.bf16 %v5303, %v5758
        %v5783 = vmul.bf16 %v5431, %v5758
        %v5784 = vmul.bf16 %v5744, %v5758
        %v5785 = vmul.bf16 %v5305, %v5758
        %v5786 = vmul.bf16 %v5432, %v5758
        %v5787 = vmul.bf16 %v5745, %v5758
        %v5788 = vmul.bf16 %v5307, %v5758
        %v5789 = vmul.bf16 %v5433, %v5758
        %v5790 = vmul.bf16 %v5746, %v5758
        %v5791 = vmul.bf16 %v5309, %v5758
        %v5792 = vmul.bf16 %v5434, %v5758
        %v5793 = vmul.bf16 %v5747, %v5758
        %v5794 = vmul.bf16 %v5311, %v5758
        %v5795 = vmul.bf16 %v5435, %v5758
        %v5796 = vmul.bf16 %v5748, %v5758
        %v5797 = vmul.bf16 %v5313, %v5758
        %v5798 = vmul.bf16 %v5436, %v5758
        %v5799 = vmul.bf16 %v5749, %v5758
        %v5800 = vmul.bf16 %v5315, %v5758
        %v5801 = vmul.bf16 %v5437, %v5758
        %v5802 = vmul.bf16 %v5750, %v5758
        %v5803 = vmul.bf16 %v5317, %v5758
        %v5804 = vmul.bf16 %v5438, %v5758
        %v5805 = vmul.bf16 %v5751, %v5758
        %v5806 = vmul.bf16 %v5319, %v5758
        %v5807 = vmul.bf16 %v5439, %v5758
        %v5808 = vunpack.c.l.bf16 %v5760
        %v5809 = vunpack.c.l.bf16 %v5761
        %v5810 = vunpack.c.l.bf16 %v5762
        %v5811 = vunpack.c.l.bf16 %v5763
        %v5812 = vunpack.c.l.bf16 %v5764
        %v5813 = vunpack.c.l.bf16 %v5765
        %v5814 = vunpack.c.l.bf16 %v5766
        %v5815 = vunpack.c.l.bf16 %v5767
        %v5816 = vunpack.c.l.bf16 %v5768
        %v5817 = vunpack.c.l.bf16 %v5769
        %v5818 = vunpack.c.l.bf16 %v5770
        %v5819 = vunpack.c.l.bf16 %v5771
        %v5820 = vunpack.c.l.bf16 %v5772
        %v5821 = vunpack.c.l.bf16 %v5773
        %v5822 = vunpack.c.l.bf16 %v5774
        %v5823 = vunpack.c.l.bf16 %v5775
        %v5824 = vunpack.c.l.bf16 %v5776
        %v5825 = vunpack.c.l.bf16 %v5777
        %v5826 = vunpack.c.l.bf16 %v5778
        %v5827 = vunpack.c.l.bf16 %v5779
        %v5828 = vunpack.c.l.bf16 %v5780
        %v5829 = vunpack.c.l.bf16 %v5781
        %v5830 = vunpack.c.l.bf16 %v5782
        %v5831 = vunpack.c.l.bf16 %v5783
        %v5832 = vunpack.c.l.bf16 %v5784
        %v5833 = vunpack.c.l.bf16 %v5785
        %v5834 = vunpack.c.l.bf16 %v5786
        %v5835 = vunpack.c.l.bf16 %v5787
        %v5836 = vunpack.c.l.bf16 %v5788
        %v5837 = vunpack.c.l.bf16 %v5789
        %v5838 = vunpack.c.l.bf16 %v5790
        %v5839 = vunpack.c.l.bf16 %v5791
        %v5840 = vunpack.c.l.bf16 %v5792
        %v5841 = vunpack.c.l.bf16 %v5793
        %v5842 = vunpack.c.l.bf16 %v5794
        %v5843 = vunpack.c.l.bf16 %v5795
        %v5844 = vunpack.c.l.bf16 %v5796
        %v5845 = vunpack.c.l.bf16 %v5797
        %v5846 = vunpack.c.l.bf16 %v5798
        %v5847 = vunpack.c.l.bf16 %v5799
        %v5848 = vunpack.c.l.bf16 %v5800
        %v5849 = vunpack.c.l.bf16 %v5801
        %v5850 = vunpack.c.l.bf16 %v5802
        %v5851 = vunpack.c.l.bf16 %v5803
        %v5852 = vunpack.c.l.bf16 %v5804
        %v5853 = vunpack.c.l.bf16 %v5805
        %v5854 = vunpack.c.l.bf16 %v5806
        %v5855 = vunpack.c.l.bf16 %v5807
        %v5904 = vrot.slane %v5808, 2
        %v5905 = vrot.slane %v5809, 2
        %v5906 = vsel %vm1973, %v5904, %v5905
        %v5907 = vrot.slane %v5810, 2
        %v5908 = vsel %vm1973, %v5905, %v5907
        %v5909 = vrot.slane %v5811, 2
        %v5910 = vrot.slane %v5812, 2
        %v5911 = vsel %vm1973, %v5909, %v5910
        %v5912 = vrot.slane %v5813, 2
        %v5913 = vsel %vm1973, %v5910, %v5912
        %v5914 = vrot.slane %v5814, 2
        %v5915 = vrot.slane %v5815, 2
        %v5916 = vsel %vm1973, %v5914, %v5915
        %v5917 = vrot.slane %v5816, 2
        %v5918 = vsel %vm1973, %v5915, %v5917
        %v5919 = vrot.slane %v5817, 2
        %v5920 = vrot.slane %v5818, 2
        %v5921 = vsel %vm1973, %v5919, %v5920
        %v5922 = vrot.slane %v5819, 2
        %v5923 = vsel %vm1973, %v5920, %v5922
        %v5924 = vrot.slane %v5820, 2
        %v5925 = vrot.slane %v5821, 2
        %v5926 = vsel %vm1973, %v5924, %v5925
        %v5927 = vrot.slane %v5822, 2
        %v5928 = vsel %vm1973, %v5925, %v5927
        %v5929 = vrot.slane %v5823, 2
        %v5930 = vrot.slane %v5824, 2
        %v5931 = vsel %vm1973, %v5929, %v5930
        %v5932 = vrot.slane %v5825, 2
        %v5933 = vsel %vm1973, %v5930, %v5932
        %v5934 = vrot.slane %v5826, 2
        %v5935 = vrot.slane %v5827, 2
        %v5936 = vsel %vm1973, %v5934, %v5935
        %v5937 = vrot.slane %v5828, 2
        %v5938 = vsel %vm1973, %v5935, %v5937
        %v5939 = vrot.slane %v5829, 2
        %v5940 = vrot.slane %v5830, 2
        %v5941 = vsel %vm1973, %v5939, %v5940
        %v5942 = vrot.slane %v5831, 2
        %v5943 = vsel %vm1973, %v5940, %v5942
        %v5944 = vrot.slane %v5832, 2
        %v5945 = vrot.slane %v5833, 2
        %v5946 = vsel %vm1973, %v5944, %v5945
        %v5947 = vrot.slane %v5834, 2
        %v5948 = vsel %vm1973, %v5945, %v5947
        %v5949 = vrot.slane %v5835, 2
        %v5950 = vrot.slane %v5836, 2
        %v5951 = vsel %vm1973, %v5949, %v5950
        %v5952 = vrot.slane %v5837, 2
        %v5953 = vsel %vm1973, %v5950, %v5952
        %v5954 = vrot.slane %v5838, 2
        %v5955 = vrot.slane %v5839, 2
        %v5956 = vsel %vm1973, %v5954, %v5955
        %v5957 = vrot.slane %v5840, 2
        %v5958 = vsel %vm1973, %v5955, %v5957
        %v5959 = vrot.slane %v5841, 2
        %v5960 = vrot.slane %v5842, 2
        %v5961 = vsel %vm1973, %v5959, %v5960
        %v5962 = vrot.slane %v5843, 2
        %v5963 = vsel %vm1973, %v5960, %v5962
        %v5964 = vrot.slane %v5844, 2
        %v5965 = vrot.slane %v5845, 2
        %v5966 = vsel %vm1973, %v5964, %v5965
        %v5967 = vrot.slane %v5846, 2
        %v5968 = vsel %vm1973, %v5965, %v5967
        %v5969 = vrot.slane %v5847, 2
        %v5970 = vrot.slane %v5848, 2
        %v5971 = vsel %vm1973, %v5969, %v5970
        %v5972 = vrot.slane %v5849, 2
        %v5973 = vsel %vm1973, %v5970, %v5972
        %v5974 = vrot.slane %v5850, 2
        %v5975 = vrot.slane %v5851, 2
        %v5976 = vsel %vm1973, %v5974, %v5975
        %v5977 = vrot.slane %v5852, 2
        %v5978 = vsel %vm1973, %v5975, %v5977
        %v5979 = vrot.slane %v5853, 2
        %v5980 = vrot.slane %v5854, 2
        %v5981 = vsel %vm1973, %v5979, %v5980
        %v5982 = vrot.slane %v5855, 2
        %v5983 = vsel %vm1973, %v5980, %v5982
        %v6016 = vadd.f32 %v5704, %v5906
        %v6017 = vadd.f32 %v5705, %v5908
        %v6018 = vadd.f32 %v5706, %v5911
        %v6019 = vadd.f32 %v5707, %v5913
        %v6020 = vadd.f32 %v5708, %v5916
        %v6021 = vadd.f32 %v5709, %v5918
        %v6022 = vadd.f32 %v5710, %v5921
        %v6023 = vadd.f32 %v5711, %v5923
        %v6024 = vadd.f32 %v5712, %v5926
        %v6025 = vadd.f32 %v5713, %v5928
        %v6026 = vadd.f32 %v5714, %v5931
        %v6027 = vadd.f32 %v5715, %v5933
        %v6028 = vadd.f32 %v5716, %v5936
        %v6029 = vadd.f32 %v5717, %v5938
        %v6030 = vadd.f32 %v5718, %v5941
        %v6031 = vadd.f32 %v5719, %v5943
        %v6032 = vadd.f32 %v5720, %v5946
        %v6033 = vadd.f32 %v5721, %v5948
        %v6034 = vadd.f32 %v5722, %v5951
        %v6035 = vadd.f32 %v5723, %v5953
        %v6036 = vadd.f32 %v5724, %v5956
        %v6037 = vadd.f32 %v5725, %v5958
        %v6038 = vadd.f32 %v5726, %v5961
        %v6039 = vadd.f32 %v5727, %v5963
        %v6040 = vadd.f32 %v5728, %v5966
        %v6041 = vadd.f32 %v5729, %v5968
        %v6042 = vadd.f32 %v5730, %v5971
        %v6043 = vadd.f32 %v5731, %v5973
        %v6044 = vadd.f32 %v5732, %v5976
        %v6045 = vadd.f32 %v5733, %v5978
        %v6046 = vadd.f32 %v5734, %v5981
        %v6047 = vadd.f32 %v5735, %v5983
        %v6048 = vld [vmem:[%s2878] sm:$0xf]
        %v6049 = vld [vmem:[%s2878 + $0x4] sm:$0xf]
        %v6050 = vld [vmem:[%s2878 + $0xc] sm:$0xf]
        %v6051 = vld [vmem:[%s2878 + $0x10] sm:$0xf]
        %v6052 = vld [vmem:[%s2878 + $0x18] sm:$0xf]
        %v6053 = vld [vmem:[%s2878 + $0x1c] sm:$0xf]
        %v6054 = vld [vmem:[%s2878 + $0x24] sm:$0xf]
        %v6055 = vld [vmem:[%s2878 + $0x28] sm:$0xf]
        %v6056 = vld [vmem:[%s2878 + $0x30] sm:$0xf]
        %v6057 = vld [vmem:[%s2878 + $0x34] sm:$0xf]
        %v6058 = vld [vmem:[%s2878 + $0x3c] sm:$0xf]
        %v6059 = vld [vmem:[%s2878 + $0x40] sm:$0xf]
        %v6060 = vld [vmem:[%s2878 + $0x48] sm:$0xf]
        %v6061 = vld [vmem:[%s2878 + $0x4c] sm:$0xf]
        %v6062 = vld [vmem:[%s2878 + $0x54] sm:$0xf]
        %v6063 = vld [vmem:[%s2878 + $0x58] sm:$0xf]
        %v6064 = vld [vmem:[%s2878 + $0x60] sm:$0xf]
        %v6065 = vld [vmem:[%s2878 + $0x64] sm:$0xf]
        %v6066 = vld [vmem:[%s2878 + $0x6c] sm:$0xf]
        %v6067 = vld [vmem:[%s2878 + $0x70] sm:$0xf]
        %v6068 = vld [vmem:[%s2878 + $0x78] sm:$0xf]
        %v6069 = vld [vmem:[%s2878 + $0x7c] sm:$0xf]
        %v6070 = vld [vmem:[%s2878 + $0x84] sm:$0xf]
        %v6071 = vld [vmem:[%s2878 + $0x88] sm:$0xf]
        %v6072 = vld [vmem:[%s2878 + $0x90] sm:$0xf]
        %v6073 = vld [vmem:[%s2878 + $0x94] sm:$0xf]
        %v6074 = vld [vmem:[%s2878 + $0x9c] sm:$0xf]
        %v6075 = vld [vmem:[%s2878 + $0xa0] sm:$0xf]
        %v6076 = vld [vmem:[%s2878 + $0xa8] sm:$0xf]
        %v6077 = vld [vmem:[%s2878 + $0xac] sm:$0xf]
        %v6078 = vld [vmem:[%s2878 + $0xb4] sm:$0xf]
        %v6079 = vld [vmem:[%s2878 + $0xb8] sm:$0xf]
        %v6080 = vlaneseq
        %v6081 = vshrl.u32 %v6080, 7
        %v6082 = vsub.s32 3, %v6081
        %v6083 = vrot.slane %v4587, %v6082
        %v6085 = vunpack.c.l.b16 %v6083
        %v6086 = vpack.c.b16 %v6085, %v6085
        %v6088 = vmul.bf16 %v6048, %v6086
        %v6089 = vmul.bf16 %v6049, %v6086
        %v6090 = vmul.bf16 %v6050, %v6086
        %v6091 = vmul.bf16 %v6051, %v6086
        %v6092 = vmul.bf16 %v6052, %v6086
        %v6093 = vmul.bf16 %v6053, %v6086
        %v6094 = vmul.bf16 %v6054, %v6086
        %v6095 = vmul.bf16 %v6055, %v6086
        %v6096 = vmul.bf16 %v6056, %v6086
        %v6097 = vmul.bf16 %v6057, %v6086
        %v6098 = vmul.bf16 %v6058, %v6086
        %v6099 = vmul.bf16 %v6059, %v6086
        %v6100 = vmul.bf16 %v6060, %v6086
        %v6101 = vmul.bf16 %v6061, %v6086
        %v6102 = vmul.bf16 %v6062, %v6086
        %v6103 = vmul.bf16 %v6063, %v6086
        %v6104 = vmul.bf16 %v6064, %v6086
        %v6105 = vmul.bf16 %v6065, %v6086
        %v6106 = vmul.bf16 %v6066, %v6086
        %v6107 = vmul.bf16 %v6067, %v6086
        %v6108 = vmul.bf16 %v6068, %v6086
        %v6109 = vmul.bf16 %v6069, %v6086
        %v6110 = vmul.bf16 %v6070, %v6086
        %v6111 = vmul.bf16 %v6071, %v6086
        %v6112 = vmul.bf16 %v6072, %v6086
        %v6113 = vmul.bf16 %v6073, %v6086
        %v6114 = vmul.bf16 %v6074, %v6086
        %v6115 = vmul.bf16 %v6075, %v6086
        %v6116 = vmul.bf16 %v6076, %v6086
        %v6117 = vmul.bf16 %v6077, %v6086
        %v6118 = vmul.bf16 %v6078, %v6086
        %v6119 = vmul.bf16 %v6079, %v6086
        %v6120 = vunpack.c.l.bf16 %v6088
        %v6121 = vunpack.c.l.bf16 %v6089
        %v6122 = vunpack.c.l.bf16 %v6090
        %v6123 = vunpack.c.l.bf16 %v6091
        %v6124 = vunpack.c.l.bf16 %v6092
        %v6125 = vunpack.c.l.bf16 %v6093
        %v6126 = vunpack.c.l.bf16 %v6094
        %v6127 = vunpack.c.l.bf16 %v6095
        %v6128 = vunpack.c.l.bf16 %v6096
        %v6129 = vunpack.c.l.bf16 %v6097
        %v6130 = vunpack.c.l.bf16 %v6098
        %v6131 = vunpack.c.l.bf16 %v6099
        %v6132 = vunpack.c.l.bf16 %v6100
        %v6133 = vunpack.c.l.bf16 %v6101
        %v6134 = vunpack.c.l.bf16 %v6102
        %v6135 = vunpack.c.l.bf16 %v6103
        %v6136 = vunpack.c.l.bf16 %v6104
        %v6137 = vunpack.c.l.bf16 %v6105
        %v6138 = vunpack.c.l.bf16 %v6106
        %v6139 = vunpack.c.l.bf16 %v6107
        %v6140 = vunpack.c.l.bf16 %v6108
        %v6141 = vunpack.c.l.bf16 %v6109
        %v6142 = vunpack.c.l.bf16 %v6110
        %v6143 = vunpack.c.l.bf16 %v6111
        %v6144 = vunpack.c.l.bf16 %v6112
        %v6145 = vunpack.c.l.bf16 %v6113
        %v6146 = vunpack.c.l.bf16 %v6114
        %v6147 = vunpack.c.l.bf16 %v6115
        %v6148 = vunpack.c.l.bf16 %v6116
        %v6149 = vunpack.c.l.bf16 %v6117
        %v6150 = vunpack.c.l.bf16 %v6118
        %v6151 = vunpack.c.l.bf16 %v6119
        %v6152 = vadd.f32 %v6016, %v6120
        %v6153 = vadd.f32 %v6017, %v6121
        %v6154 = vadd.f32 %v6018, %v6122
        %v6155 = vadd.f32 %v6019, %v6123
        %v6156 = vadd.f32 %v6020, %v6124
        %v6157 = vadd.f32 %v6021, %v6125
        %v6158 = vadd.f32 %v6022, %v6126
        %v6159 = vadd.f32 %v6023, %v6127
        %v6160 = vadd.f32 %v6024, %v6128
        %v6161 = vadd.f32 %v6025, %v6129
        %v6162 = vadd.f32 %v6026, %v6130
        %v6163 = vadd.f32 %v6027, %v6131
        %v6164 = vadd.f32 %v6028, %v6132
        %v6165 = vadd.f32 %v6029, %v6133
        %v6166 = vadd.f32 %v6030, %v6134
        %v6167 = vadd.f32 %v6031, %v6135
        %v6168 = vadd.f32 %v6032, %v6136
        %v6169 = vadd.f32 %v6033, %v6137
        %v6170 = vadd.f32 %v6034, %v6138
        %v6171 = vadd.f32 %v6035, %v6139
        %v6172 = vadd.f32 %v6036, %v6140
        %v6173 = vadd.f32 %v6037, %v6141
        %v6174 = vadd.f32 %v6038, %v6142
        %v6175 = vadd.f32 %v6039, %v6143
        %v6176 = vadd.f32 %v6040, %v6144
        %v6177 = vadd.f32 %v6041, %v6145
        %v6178 = vadd.f32 %v6042, %v6146
        %v6179 = vadd.f32 %v6043, %v6147
        %v6180 = vadd.f32 %v6044, %v6148
        %v6181 = vadd.f32 %v6045, %v6149
        %v6182 = vadd.f32 %v6046, %v6150
        %v6183 = vadd.f32 %v6047, %v6151
        %v6184 = vld [vmem:[%s2878 + $0x8] sm:$0x1]
        %v6185 = vld [vmem:[%s2878 + $0x14] sm:$0x1]
        %v6186 = vld [vmem:[%s2878 + $0x20] sm:$0x1]
        %v6187 = vld [vmem:[%s2878 + $0x2c] sm:$0x1]
        %v6188 = vld [vmem:[%s2878 + $0x38] sm:$0x1]
        %v6189 = vld [vmem:[%s2878 + $0x44] sm:$0x1]
        %v6190 = vld [vmem:[%s2878 + $0x50] sm:$0x1]
        %v6191 = vld [vmem:[%s2878 + $0x5c] sm:$0x1]
        %v6192 = vld [vmem:[%s2878 + $0x68] sm:$0x1]
        %v6193 = vld [vmem:[%s2878 + $0x74] sm:$0x1]
        %v6194 = vld [vmem:[%s2878 + $0x80] sm:$0x1]
        %v6195 = vld [vmem:[%s2878 + $0x8c] sm:$0x1]
        %v6196 = vld [vmem:[%s2878 + $0x98] sm:$0x1]
        %v6197 = vld [vmem:[%s2878 + $0xa4] sm:$0x1]
        %v6198 = vld [vmem:[%s2878 + $0xb0] sm:$0x1]
        %v6199 = vld [vmem:[%s2878 + $0xbc] sm:$0x1]
        %v6200 = vlaneseq
        %v6201 = vshrl.u32 %v6200, 7
        %v6202 = vsub.s32 3, %v6201
        %v6203 = vrot.slane %v4678, %v6202
        %v6205 = vunpack.c.l.b16 %v6203
        %v6206 = vpack.c.b16 %v6205, %v6205
        %v6208 = vmul.bf16 %v6048, %v6206
        %v6209 = vmul.bf16 %v6049, %v6206
        %v6210 = vmul.bf16 %v6184, %v6206
        %v6211 = vmul.bf16 %v6050, %v6206
        %v6212 = vmul.bf16 %v6051, %v6206
        %v6213 = vmul.bf16 %v6185, %v6206
        %v6214 = vmul.bf16 %v6052, %v6206
        %v6215 = vmul.bf16 %v6053, %v6206
        %v6216 = vmul.bf16 %v6186, %v6206
        %v6217 = vmul.bf16 %v6054, %v6206
        %v6218 = vmul.bf16 %v6055, %v6206
        %v6219 = vmul.bf16 %v6187, %v6206
        %v6220 = vmul.bf16 %v6056, %v6206
        %v6221 = vmul.bf16 %v6057, %v6206
        %v6222 = vmul.bf16 %v6188, %v6206
        %v6223 = vmul.bf16 %v6058, %v6206
        %v6224 = vmul.bf16 %v6059, %v6206
        %v6225 = vmul.bf16 %v6189, %v6206
        %v6226 = vmul.bf16 %v6060, %v6206
        %v6227 = vmul.bf16 %v6061, %v6206
        %v6228 = vmul.bf16 %v6190, %v6206
        %v6229 = vmul.bf16 %v6062, %v6206
        %v6230 = vmul.bf16 %v6063, %v6206
        %v6231 = vmul.bf16 %v6191, %v6206
        %v6232 = vmul.bf16 %v6064, %v6206
        %v6233 = vmul.bf16 %v6065, %v6206
        %v6234 = vmul.bf16 %v6192, %v6206
        %v6235 = vmul.bf16 %v6066, %v6206
        %v6236 = vmul.bf16 %v6067, %v6206
        %v6237 = vmul.bf16 %v6193, %v6206
        %v6238 = vmul.bf16 %v6068, %v6206
        %v6239 = vmul.bf16 %v6069, %v6206
        %v6240 = vmul.bf16 %v6194, %v6206
        %v6241 = vmul.bf16 %v6070, %v6206
        %v6242 = vmul.bf16 %v6071, %v6206
        %v6243 = vmul.bf16 %v6195, %v6206
        %v6244 = vmul.bf16 %v6072, %v6206
        %v6245 = vmul.bf16 %v6073, %v6206
        %v6246 = vmul.bf16 %v6196, %v6206
        %v6247 = vmul.bf16 %v6074, %v6206
        %v6248 = vmul.bf16 %v6075, %v6206
        %v6249 = vmul.bf16 %v6197, %v6206
        %v6250 = vmul.bf16 %v6076, %v6206
        %v6251 = vmul.bf16 %v6077, %v6206
        %v6252 = vmul.bf16 %v6198, %v6206
        %v6253 = vmul.bf16 %v6078, %v6206
        %v6254 = vmul.bf16 %v6079, %v6206
        %v6255 = vmul.bf16 %v6199, %v6206
        %v6256 = vunpack.c.l.bf16 %v6208
        %v6257 = vunpack.c.l.bf16 %v6209
        %v6258 = vunpack.c.l.bf16 %v6210
        %v6259 = vunpack.c.l.bf16 %v6211
        %v6260 = vunpack.c.l.bf16 %v6212
        %v6261 = vunpack.c.l.bf16 %v6213
        %v6262 = vunpack.c.l.bf16 %v6214
        %v6263 = vunpack.c.l.bf16 %v6215
        %v6264 = vunpack.c.l.bf16 %v6216
        %v6265 = vunpack.c.l.bf16 %v6217
        %v6266 = vunpack.c.l.bf16 %v6218
        %v6267 = vunpack.c.l.bf16 %v6219
        %v6268 = vunpack.c.l.bf16 %v6220
        %v6269 = vunpack.c.l.bf16 %v6221
        %v6270 = vunpack.c.l.bf16 %v6222
        %v6271 = vunpack.c.l.bf16 %v6223
        %v6272 = vunpack.c.l.bf16 %v6224
        %v6273 = vunpack.c.l.bf16 %v6225
        %v6274 = vunpack.c.l.bf16 %v6226
        %v6275 = vunpack.c.l.bf16 %v6227
        %v6276 = vunpack.c.l.bf16 %v6228
        %v6277 = vunpack.c.l.bf16 %v6229
        %v6278 = vunpack.c.l.bf16 %v6230
        %v6279 = vunpack.c.l.bf16 %v6231
        %v6280 = vunpack.c.l.bf16 %v6232
        %v6281 = vunpack.c.l.bf16 %v6233
        %v6282 = vunpack.c.l.bf16 %v6234
        %v6283 = vunpack.c.l.bf16 %v6235
        %v6284 = vunpack.c.l.bf16 %v6236
        %v6285 = vunpack.c.l.bf16 %v6237
        %v6286 = vunpack.c.l.bf16 %v6238
        %v6287 = vunpack.c.l.bf16 %v6239
        %v6288 = vunpack.c.l.bf16 %v6240
        %v6289 = vunpack.c.l.bf16 %v6241
        %v6290 = vunpack.c.l.bf16 %v6242
        %v6291 = vunpack.c.l.bf16 %v6243
        %v6292 = vunpack.c.l.bf16 %v6244
        %v6293 = vunpack.c.l.bf16 %v6245
        %v6294 = vunpack.c.l.bf16 %v6246
        %v6295 = vunpack.c.l.bf16 %v6247
        %v6296 = vunpack.c.l.bf16 %v6248
        %v6297 = vunpack.c.l.bf16 %v6249
        %v6298 = vunpack.c.l.bf16 %v6250
        %v6299 = vunpack.c.l.bf16 %v6251
        %v6300 = vunpack.c.l.bf16 %v6252
        %v6301 = vunpack.c.l.bf16 %v6253
        %v6302 = vunpack.c.l.bf16 %v6254
        %v6303 = vunpack.c.l.bf16 %v6255
        %v6352 = vrot.slane %v6256, 1
        %v6353 = vrot.slane %v6257, 1
        %v6354 = vsel %vm1660, %v6352, %v6353
        %v6355 = vrot.slane %v6258, 1
        %v6356 = vsel %vm1660, %v6353, %v6355
        %v6357 = vrot.slane %v6259, 1
        %v6358 = vrot.slane %v6260, 1
        %v6359 = vsel %vm1660, %v6357, %v6358
        %v6360 = vrot.slane %v6261, 1
        %v6361 = vsel %vm1660, %v6358, %v6360
        %v6362 = vrot.slane %v6262, 1
        %v6363 = vrot.slane %v6263, 1
        %v6364 = vsel %vm1660, %v6362, %v6363
        %v6365 = vrot.slane %v6264, 1
        %v6366 = vsel %vm1660, %v6363, %v6365
        %v6367 = vrot.slane %v6265, 1
        %v6368 = vrot.slane %v6266, 1
        %v6369 = vsel %vm1660, %v6367, %v6368
        %v6370 = vrot.slane %v6267, 1
        %v6371 = vsel %vm1660, %v6368, %v6370
        %v6372 = vrot.slane %v6268, 1
        %v6373 = vrot.slane %v6269, 1
        %v6374 = vsel %vm1660, %v6372, %v6373
        %v6375 = vrot.slane %v6270, 1
        %v6376 = vsel %vm1660, %v6373, %v6375
        %v6377 = vrot.slane %v6271, 1
        %v6378 = vrot.slane %v6272, 1
        %v6379 = vsel %vm1660, %v6377, %v6378
        %v6380 = vrot.slane %v6273, 1
        %v6381 = vsel %vm1660, %v6378, %v6380
        %v6382 = vrot.slane %v6274, 1
        %v6383 = vrot.slane %v6275, 1
        %v6384 = vsel %vm1660, %v6382, %v6383
        %v6385 = vrot.slane %v6276, 1
        %v6386 = vsel %vm1660, %v6383, %v6385
        %v6387 = vrot.slane %v6277, 1
        %v6388 = vrot.slane %v6278, 1
        %v6389 = vsel %vm1660, %v6387, %v6388
        %v6390 = vrot.slane %v6279, 1
        %v6391 = vsel %vm1660, %v6388, %v6390
        %v6392 = vrot.slane %v6280, 1
        %v6393 = vrot.slane %v6281, 1
        %v6394 = vsel %vm1660, %v6392, %v6393
        %v6395 = vrot.slane %v6282, 1
        %v6396 = vsel %vm1660, %v6393, %v6395
        %v6397 = vrot.slane %v6283, 1
        %v6398 = vrot.slane %v6284, 1
        %v6399 = vsel %vm1660, %v6397, %v6398
        %v6400 = vrot.slane %v6285, 1
        %v6401 = vsel %vm1660, %v6398, %v6400
        %v6402 = vrot.slane %v6286, 1
        %v6403 = vrot.slane %v6287, 1
        %v6404 = vsel %vm1660, %v6402, %v6403
        %v6405 = vrot.slane %v6288, 1
        %v6406 = vsel %vm1660, %v6403, %v6405
        %v6407 = vrot.slane %v6289, 1
        %v6408 = vrot.slane %v6290, 1
        %v6409 = vsel %vm1660, %v6407, %v6408
        %v6410 = vrot.slane %v6291, 1
        %v6411 = vsel %vm1660, %v6408, %v6410
        %v6412 = vrot.slane %v6292, 1
        %v6413 = vrot.slane %v6293, 1
        %v6414 = vsel %vm1660, %v6412, %v6413
        %v6415 = vrot.slane %v6294, 1
        %v6416 = vsel %vm1660, %v6413, %v6415
        %v6417 = vrot.slane %v6295, 1
        %v6418 = vrot.slane %v6296, 1
        %v6419 = vsel %vm1660, %v6417, %v6418
        %v6420 = vrot.slane %v6297, 1
        %v6421 = vsel %vm1660, %v6418, %v6420
        %v6422 = vrot.slane %v6298, 1
        %v6423 = vrot.slane %v6299, 1
        %v6424 = vsel %vm1660, %v6422, %v6423
        %v6425 = vrot.slane %v6300, 1
        %v6426 = vsel %vm1660, %v6423, %v6425
        %v6427 = vrot.slane %v6301, 1
        %v6428 = vrot.slane %v6302, 1
        %v6429 = vsel %vm1660, %v6427, %v6428
        %v6430 = vrot.slane %v6303, 1
        %v6431 = vsel %vm1660, %v6428, %v6430
        %v6464 = vadd.f32 %v6152, %v6354
        %v6465 = vadd.f32 %v6153, %v6356
        %v6466 = vadd.f32 %v6154, %v6359
        %v6467 = vadd.f32 %v6155, %v6361
        %v6468 = vadd.f32 %v6156, %v6364
        %v6469 = vadd.f32 %v6157, %v6366
        %v6470 = vadd.f32 %v6158, %v6369
        %v6471 = vadd.f32 %v6159, %v6371
        %v6472 = vadd.f32 %v6160, %v6374
        %v6473 = vadd.f32 %v6161, %v6376
        %v6474 = vadd.f32 %v6162, %v6379
        %v6475 = vadd.f32 %v6163, %v6381
        %v6476 = vadd.f32 %v6164, %v6384
        %v6477 = vadd.f32 %v6165, %v6386
        %v6478 = vadd.f32 %v6166, %v6389
        %v6479 = vadd.f32 %v6167, %v6391
        %v6480 = vadd.f32 %v6168, %v6394
        %v6481 = vadd.f32 %v6169, %v6396
        %v6482 = vadd.f32 %v6170, %v6399
        %v6483 = vadd.f32 %v6171, %v6401
        %v6484 = vadd.f32 %v6172, %v6404
        %v6485 = vadd.f32 %v6173, %v6406
        %v6486 = vadd.f32 %v6174, %v6409
        %v6487 = vadd.f32 %v6175, %v6411
        %v6488 = vadd.f32 %v6176, %v6414
        %v6489 = vadd.f32 %v6177, %v6416
        %v6490 = vadd.f32 %v6178, %v6419
        %v6491 = vadd.f32 %v6179, %v6421
        %v6492 = vadd.f32 %v6180, %v6424
        %v6493 = vadd.f32 %v6181, %v6426
        %v6494 = vadd.f32 %v6182, %v6429
        %v6495 = vadd.f32 %v6183, %v6431
        %v6496 = vld [vmem:[%s2878] sm:$0xe]
        %v6497 = vld [vmem:[%s2878 + $0xc] sm:$0xe]
        %v6498 = vld [vmem:[%s2878 + $0x18] sm:$0xe]
        %v6499 = vld [vmem:[%s2878 + $0x24] sm:$0xe]
        %v6500 = vld [vmem:[%s2878 + $0x30] sm:$0xe]
        %v6501 = vld [vmem:[%s2878 + $0x3c] sm:$0xe]
        %v6502 = vld [vmem:[%s2878 + $0x48] sm:$0xe]
        %v6503 = vld [vmem:[%s2878 + $0x54] sm:$0xe]
        %v6504 = vld [vmem:[%s2878 + $0x60] sm:$0xe]
        %v6505 = vld [vmem:[%s2878 + $0x6c] sm:$0xe]
        %v6506 = vld [vmem:[%s2878 + $0x78] sm:$0xe]
        %v6507 = vld [vmem:[%s2878 + $0x84] sm:$0xe]
        %v6508 = vld [vmem:[%s2878 + $0x90] sm:$0xe]
        %v6509 = vld [vmem:[%s2878 + $0x9c] sm:$0xe]
        %v6510 = vld [vmem:[%s2878 + $0xa8] sm:$0xe]
        %v6511 = vld [vmem:[%s2878 + $0xb4] sm:$0xe]
        %v6513 = vpack.i.b16 %v4553, %v4553
        %v6515 = vlaneseq
        %v6516 = vshrl.u32 %v6515, 7
        %v6517 = vsub.s32 0, %v6516
        %v6518 = vrot.slane %v6513, %v6517
        %v6520 = vunpack.c.l.b16 %v6518
        %v6521 = vpack.c.b16 %v6520, %v6520
        %v6523 = vmul.bf16 %v6496, %v6521
        %v6524 = vmul.bf16 %v6049, %v6521
        %v6525 = vmul.bf16 %v6184, %v6521
        %v6526 = vmul.bf16 %v6497, %v6521
        %v6527 = vmul.bf16 %v6051, %v6521
        %v6528 = vmul.bf16 %v6185, %v6521
        %v6529 = vmul.bf16 %v6498, %v6521
        %v6530 = vmul.bf16 %v6053, %v6521
        %v6531 = vmul.bf16 %v6186, %v6521
        %v6532 = vmul.bf16 %v6499, %v6521
        %v6533 = vmul.bf16 %v6055, %v6521
        %v6534 = vmul.bf16 %v6187, %v6521
        %v6535 = vmul.bf16 %v6500, %v6521
        %v6536 = vmul.bf16 %v6057, %v6521
        %v6537 = vmul.bf16 %v6188, %v6521
        %v6538 = vmul.bf16 %v6501, %v6521
        %v6539 = vmul.bf16 %v6059, %v6521
        %v6540 = vmul.bf16 %v6189, %v6521
        %v6541 = vmul.bf16 %v6502, %v6521
        %v6542 = vmul.bf16 %v6061, %v6521
        %v6543 = vmul.bf16 %v6190, %v6521
        %v6544 = vmul.bf16 %v6503, %v6521
        %v6545 = vmul.bf16 %v6063, %v6521
        %v6546 = vmul.bf16 %v6191, %v6521
        %v6547 = vmul.bf16 %v6504, %v6521
        %v6548 = vmul.bf16 %v6065, %v6521
        %v6549 = vmul.bf16 %v6192, %v6521
        %v6550 = vmul.bf16 %v6505, %v6521
        %v6551 = vmul.bf16 %v6067, %v6521
        %v6552 = vmul.bf16 %v6193, %v6521
        %v6553 = vmul.bf16 %v6506, %v6521
        %v6554 = vmul.bf16 %v6069, %v6521
        %v6555 = vmul.bf16 %v6194, %v6521
        %v6556 = vmul.bf16 %v6507, %v6521
        %v6557 = vmul.bf16 %v6071, %v6521
        %v6558 = vmul.bf16 %v6195, %v6521
        %v6559 = vmul.bf16 %v6508, %v6521
        %v6560 = vmul.bf16 %v6073, %v6521
        %v6561 = vmul.bf16 %v6196, %v6521
        %v6562 = vmul.bf16 %v6509, %v6521
        %v6563 = vmul.bf16 %v6075, %v6521
        %v6564 = vmul.bf16 %v6197, %v6521
        %v6565 = vmul.bf16 %v6510, %v6521
        %v6566 = vmul.bf16 %v6077, %v6521
        %v6567 = vmul.bf16 %v6198, %v6521
        %v6568 = vmul.bf16 %v6511, %v6521
        %v6569 = vmul.bf16 %v6079, %v6521
        %v6570 = vmul.bf16 %v6199, %v6521
        %v6571 = vunpack.c.l.bf16 %v6523
        %v6572 = vunpack.c.l.bf16 %v6524
        %v6573 = vunpack.c.l.bf16 %v6525
        %v6574 = vunpack.c.l.bf16 %v6526
        %v6575 = vunpack.c.l.bf16 %v6527
        %v6576 = vunpack.c.l.bf16 %v6528
        %v6577 = vunpack.c.l.bf16 %v6529
        %v6578 = vunpack.c.l.bf16 %v6530
        %v6579 = vunpack.c.l.bf16 %v6531
        %v6580 = vunpack.c.l.bf16 %v6532
        %v6581 = vunpack.c.l.bf16 %v6533
        %v6582 = vunpack.c.l.bf16 %v6534
        %v6583 = vunpack.c.l.bf16 %v6535
        %v6584 = vunpack.c.l.bf16 %v6536
        %v6585 = vunpack.c.l.bf16 %v6537
        %v6586 = vunpack.c.l.bf16 %v6538
        %v6587 = vunpack.c.l.bf16 %v6539
        %v6588 = vunpack.c.l.bf16 %v6540
        %v6589 = vunpack.c.l.bf16 %v6541
        %v6590 = vunpack.c.l.bf16 %v6542
        %v6591 = vunpack.c.l.bf16 %v6543
        %v6592 = vunpack.c.l.bf16 %v6544
        %v6593 = vunpack.c.l.bf16 %v6545
        %v6594 = vunpack.c.l.bf16 %v6546
        %v6595 = vunpack.c.l.bf16 %v6547
        %v6596 = vunpack.c.l.bf16 %v6548
        %v6597 = vunpack.c.l.bf16 %v6549
        %v6598 = vunpack.c.l.bf16 %v6550
        %v6599 = vunpack.c.l.bf16 %v6551
        %v6600 = vunpack.c.l.bf16 %v6552
        %v6601 = vunpack.c.l.bf16 %v6553
        %v6602 = vunpack.c.l.bf16 %v6554
        %v6603 = vunpack.c.l.bf16 %v6555
        %v6604 = vunpack.c.l.bf16 %v6556
        %v6605 = vunpack.c.l.bf16 %v6557
        %v6606 = vunpack.c.l.bf16 %v6558
        %v6607 = vunpack.c.l.bf16 %v6559
        %v6608 = vunpack.c.l.bf16 %v6560
        %v6609 = vunpack.c.l.bf16 %v6561
        %v6610 = vunpack.c.l.bf16 %v6562
        %v6611 = vunpack.c.l.bf16 %v6563
        %v6612 = vunpack.c.l.bf16 %v6564
        %v6613 = vunpack.c.l.bf16 %v6565
        %v6614 = vunpack.c.l.bf16 %v6566
        %v6615 = vunpack.c.l.bf16 %v6567
        %v6616 = vunpack.c.l.bf16 %v6568
        %v6617 = vunpack.c.l.bf16 %v6569
        %v6618 = vunpack.c.l.bf16 %v6570
        %v6667 = vrot.slane %v6571, 2
        %v6668 = vrot.slane %v6572, 2
        %v6669 = vsel %vm1973, %v6667, %v6668
        %v6670 = vrot.slane %v6573, 2
        %v6671 = vsel %vm1973, %v6668, %v6670
        %v6672 = vrot.slane %v6574, 2
        %v6673 = vrot.slane %v6575, 2
        %v6674 = vsel %vm1973, %v6672, %v6673
        %v6675 = vrot.slane %v6576, 2
        %v6676 = vsel %vm1973, %v6673, %v6675
        %v6677 = vrot.slane %v6577, 2
        %v6678 = vrot.slane %v6578, 2
        %v6679 = vsel %vm1973, %v6677, %v6678
        %v6680 = vrot.slane %v6579, 2
        %v6681 = vsel %vm1973, %v6678, %v6680
        %v6682 = vrot.slane %v6580, 2
        %v6683 = vrot.slane %v6581, 2
        %v6684 = vsel %vm1973, %v6682, %v6683
        %v6685 = vrot.slane %v6582, 2
        %v6686 = vsel %vm1973, %v6683, %v6685
        %v6687 = vrot.slane %v6583, 2
        %v6688 = vrot.slane %v6584, 2
        %v6689 = vsel %vm1973, %v6687, %v6688
        %v6690 = vrot.slane %v6585, 2
        %v6691 = vsel %vm1973, %v6688, %v6690
        %v6692 = vrot.slane %v6586, 2
        %v6693 = vrot.slane %v6587, 2
        %v6694 = vsel %vm1973, %v6692, %v6693
        %v6695 = vrot.slane %v6588, 2
        %v6696 = vsel %vm1973, %v6693, %v6695
        %v6697 = vrot.slane %v6589, 2
        %v6698 = vrot.slane %v6590, 2
        %v6699 = vsel %vm1973, %v6697, %v6698
        %v6700 = vrot.slane %v6591, 2
        %v6701 = vsel %vm1973, %v6698, %v6700
        %v6702 = vrot.slane %v6592, 2
        %v6703 = vrot.slane %v6593, 2
        %v6704 = vsel %vm1973, %v6702, %v6703
        %v6705 = vrot.slane %v6594, 2
        %v6706 = vsel %vm1973, %v6703, %v6705
        %v6707 = vrot.slane %v6595, 2
        %v6708 = vrot.slane %v6596, 2
        %v6709 = vsel %vm1973, %v6707, %v6708
        %v6710 = vrot.slane %v6597, 2
        %v6711 = vsel %vm1973, %v6708, %v6710
        %v6712 = vrot.slane %v6598, 2
        %v6713 = vrot.slane %v6599, 2
        %v6714 = vsel %vm1973, %v6712, %v6713
        %v6715 = vrot.slane %v6600, 2
        %v6716 = vsel %vm1973, %v6713, %v6715
        %v6717 = vrot.slane %v6601, 2
        %v6718 = vrot.slane %v6602, 2
        %v6719 = vsel %vm1973, %v6717, %v6718
        %v6720 = vrot.slane %v6603, 2
        %v6721 = vsel %vm1973, %v6718, %v6720
        %v6722 = vrot.slane %v6604, 2
        %v6723 = vrot.slane %v6605, 2
        %v6724 = vsel %vm1973, %v6722, %v6723
        %v6725 = vrot.slane %v6606, 2
        %v6726 = vsel %vm1973, %v6723, %v6725
        %v6727 = vrot.slane %v6607, 2
        %v6728 = vrot.slane %v6608, 2
        %v6729 = vsel %vm1973, %v6727, %v6728
        %v6730 = vrot.slane %v6609, 2
        %v6731 = vsel %vm1973, %v6728, %v6730
        %v6732 = vrot.slane %v6610, 2
        %v6733 = vrot.slane %v6611, 2
        %v6734 = vsel %vm1973, %v6732, %v6733
        %v6735 = vrot.slane %v6612, 2
        %v6736 = vsel %vm1973, %v6733, %v6735
        %v6737 = vrot.slane %v6613, 2
        %v6738 = vrot.slane %v6614, 2
        %v6739 = vsel %vm1973, %v6737, %v6738
        %v6740 = vrot.slane %v6615, 2
        %v6741 = vsel %vm1973, %v6738, %v6740
        %v6742 = vrot.slane %v6616, 2
        %v6743 = vrot.slane %v6617, 2
        %v6744 = vsel %vm1973, %v6742, %v6743
        %v6745 = vrot.slane %v6618, 2
        %v6746 = vsel %vm1973, %v6743, %v6745
        %v6779 = vadd.f32 %v6464, %v6669
        %v6780 = vadd.f32 %v6465, %v6671
        %v6781 = vadd.f32 %v6466, %v6674
        %v6782 = vadd.f32 %v6467, %v6676
        %v6783 = vadd.f32 %v6468, %v6679
        %v6784 = vadd.f32 %v6469, %v6681
        %v6785 = vadd.f32 %v6470, %v6684
        %v6786 = vadd.f32 %v6471, %v6686
        %v6787 = vadd.f32 %v6472, %v6689
        %v6788 = vadd.f32 %v6473, %v6691
        %v6789 = vadd.f32 %v6474, %v6694
        %v6790 = vadd.f32 %v6475, %v6696
        %v6791 = vadd.f32 %v6476, %v6699
        %v6792 = vadd.f32 %v6477, %v6701
        %v6793 = vadd.f32 %v6478, %v6704
        %v6794 = vadd.f32 %v6479, %v6706
        %v6795 = vadd.f32 %v6480, %v6709
        %v6796 = vadd.f32 %v6481, %v6711
        %v6797 = vadd.f32 %v6482, %v6714
        %v6798 = vadd.f32 %v6483, %v6716
        %v6799 = vadd.f32 %v6484, %v6719
        %v6800 = vadd.f32 %v6485, %v6721
        %v6801 = vadd.f32 %v6486, %v6724
        %v6802 = vadd.f32 %v6487, %v6726
        %v6803 = vadd.f32 %v6488, %v6729
        %v6804 = vadd.f32 %v6489, %v6731
        %v6805 = vadd.f32 %v6490, %v6734
        %v6806 = vadd.f32 %v6491, %v6736
        %v6807 = vadd.f32 %v6492, %v6739
        %v6808 = vadd.f32 %v6493, %v6741
        %v6809 = vadd.f32 %v6494, %v6744
        %v6810 = vadd.f32 %v6495, %v6746
        %v6811 = vld [vmem:[#allocation12] sm:$0x1]
        %v6813 = vlaneseq
        %v6814 = vshrl.u32 %v6813, 7
        %v6815 = vsub.s32 0, %v6814
        %v6816 = vrot.slane %v6811, %v6815
        %v6818 = vadd.f32 %v6779, %v6816
        %v6819 = vadd.f32 %v6780, %v6816
        %v6820 = vadd.f32 %v6781, %v6816
        %v6821 = vadd.f32 %v6782, %v6816
        %v6822 = vadd.f32 %v6783, %v6816
        %v6823 = vadd.f32 %v6784, %v6816
        %v6824 = vadd.f32 %v6785, %v6816
        %v6825 = vadd.f32 %v6786, %v6816
        %v6826 = vadd.f32 %v6787, %v6816
        %v6827 = vadd.f32 %v6788, %v6816
        %v6828 = vadd.f32 %v6789, %v6816
        %v6829 = vadd.f32 %v6790, %v6816
        %v6830 = vadd.f32 %v6791, %v6816
        %v6831 = vadd.f32 %v6792, %v6816
        %v6832 = vadd.f32 %v6793, %v6816
        %v6833 = vadd.f32 %v6794, %v6816
        %v6834 = vadd.f32 %v6795, %v6816
        %v6835 = vadd.f32 %v6796, %v6816
        %v6836 = vadd.f32 %v6797, %v6816
        %v6837 = vadd.f32 %v6798, %v6816
        %v6838 = vadd.f32 %v6799, %v6816
        %v6839 = vadd.f32 %v6800, %v6816
        %v6840 = vadd.f32 %v6801, %v6816
        %v6841 = vadd.f32 %v6802, %v6816
        %v6842 = vadd.f32 %v6803, %v6816
        %v6843 = vadd.f32 %v6804, %v6816
        %v6844 = vadd.f32 %v6805, %v6816
        %v6845 = vadd.f32 %v6806, %v6816
        %v6846 = vadd.f32 %v6807, %v6816
        %v6847 = vadd.f32 %v6808, %v6816
        %v6848 = vadd.f32 %v6809, %v6816
        %v6849 = vadd.f32 %v6810, %v6816
        %v6850 = vmax.f32 %v6818, 0.0
        %v6851 = vmax.f32 %v6819, 0.0
        %v6852 = vmax.f32 %v6820, 0.0
        %v6853 = vmax.f32 %v6821, 0.0
        %v6854 = vmax.f32 %v6822, 0.0
        %v6855 = vmax.f32 %v6823, 0.0
        %v6856 = vmax.f32 %v6824, 0.0
        %v6857 = vmax.f32 %v6825, 0.0
        %v6858 = vmax.f32 %v6826, 0.0
        %v6859 = vmax.f32 %v6827, 0.0
        %v6860 = vmax.f32 %v6828, 0.0
        %v6861 = vmax.f32 %v6829, 0.0
        %v6862 = vmax.f32 %v6830, 0.0
        %v6863 = vmax.f32 %v6831, 0.0
        %v6864 = vmax.f32 %v6832, 0.0
        %v6865 = vmax.f32 %v6833, 0.0
        %v6866 = vmax.f32 %v6834, 0.0
        %v6867 = vmax.f32 %v6835, 0.0
        %v6868 = vmax.f32 %v6836, 0.0
        %v6869 = vmax.f32 %v6837, 0.0
        %v6870 = vmax.f32 %v6838, 0.0
        %v6871 = vmax.f32 %v6839, 0.0
        %v6872 = vmax.f32 %v6840, 0.0
        %v6873 = vmax.f32 %v6841, 0.0
        %v6874 = vmax.f32 %v6842, 0.0
        %v6875 = vmax.f32 %v6843, 0.0
        %v6876 = vmax.f32 %v6844, 0.0
        %v6877 = vmax.f32 %v6845, 0.0
        %v6878 = vmax.f32 %v6846, 0.0
        %v6879 = vmax.f32 %v6847, 0.0
        %v6880 = vmax.f32 %v6848, 0.0
        %v6881 = vmax.f32 %v6849, 0.0
        %v6882 = vpack.c.bf16 %v6851, %v6850
        %v6883 = vpack.c.bf16 %v6853, %v6852
        %v6884 = vpack.c.bf16 %v6855, %v6854
        %v6885 = vpack.c.bf16 %v6857, %v6856
        %v6886 = vpack.c.bf16 %v6859, %v6858
        %v6887 = vpack.c.bf16 %v6861, %v6860
        %v6888 = vpack.c.bf16 %v6863, %v6862
        %v6889 = vpack.c.bf16 %v6865, %v6864
        %v6890 = vpack.c.bf16 %v6867, %v6866
        %v6891 = vpack.c.bf16 %v6869, %v6868
        %v6892 = vpack.c.bf16 %v6871, %v6870
        %v6893 = vpack.c.bf16 %v6873, %v6872
        %v6894 = vpack.c.bf16 %v6875, %v6874
        %v6895 = vpack.c.bf16 %v6877, %v6876
        %v6896 = vpack.c.bf16 %v6879, %v6878
        %v6897 = vpack.c.bf16 %v6881, %v6880
        %v6898 = vld [vmem:[#allocation14] sm:$0xf]
        %v6899 = vld [vmem:[#allocation14 + $0x4] sm:$0xf]
        %v6900 = vld [vmem:[#allocation14 + $0x8] sm:$0xf]
        %v6901 = vld [vmem:[#allocation14 + $0xc] sm:$0xf]
        %v6902 = vld [vmem:[#allocation14 + $0x10] sm:$0xf]
        %v6903 = vld [vmem:[#allocation14 + $0x14] sm:$0xf]
        %v6904 = vld [vmem:[#allocation14 + $0x18] sm:$0xf]
        %v6905 = vld [vmem:[#allocation14 + $0x1c] sm:$0xf]
        %v6906 = vld [vmem:[#allocation14 + $0x20] sm:$0xf]
        %v6907 = vld [vmem:[#allocation14 + $0x24] sm:$0xf]
        %v6908 = vld [vmem:[#allocation14 + $0x28] sm:$0xf]
        %v6909 = vld [vmem:[#allocation14 + $0x2c] sm:$0xf]
        %v6910 = vld [vmem:[#allocation14 + $0x30] sm:$0xf]
        %v6911 = vld [vmem:[#allocation14 + $0x34] sm:$0xf]
        %v6912 = vld [vmem:[#allocation14 + $0x38] sm:$0xf]
        %v6913 = vld [vmem:[#allocation14 + $0x3c] sm:$0xf]
        %v6930 = vunpack.c.l.b16 %v6898
        %v6931 = vunpack.c.l.b16 %v6899
        %v6932 = vunpack.c.l.b16 %v6900
        %v6933 = vunpack.c.l.b16 %v6901
        %v6934 = vunpack.c.l.b16 %v6902
        %v6935 = vunpack.c.l.b16 %v6903
        %v6936 = vunpack.c.l.b16 %v6904
        %v6937 = vunpack.c.l.b16 %v6905
        %v6938 = vunpack.c.l.b16 %v6906
        %v6939 = vunpack.c.l.b16 %v6907
        %v6940 = vunpack.c.l.b16 %v6908
        %v6941 = vunpack.c.l.b16 %v6909
        %v6942 = vunpack.c.l.b16 %v6910
        %v6943 = vunpack.c.l.b16 %v6911
        %v6944 = vunpack.c.l.b16 %v6912
        %v6945 = vunpack.c.l.b16 %v6913
        %v6946 = vpack.c.b16 %v6931, %v6930
        %v6947 = vpack.c.b16 %v6933, %v6932
        %v6948 = vpack.c.b16 %v6935, %v6934
        %v6949 = vpack.c.b16 %v6937, %v6936
        %v6950 = vpack.c.b16 %v6939, %v6938
        %v6951 = vpack.c.b16 %v6941, %v6940
        %v6952 = vpack.c.b16 %v6943, %v6942
        %v6953 = vpack.c.b16 %v6945, %v6944
        %6962 = vmatprep.subr.bf16.mxu0 0
        %6963 = vmatpush1.bf16.msra.mxu0 %v6953
        %6964 = vmatprep.subr.bf16.mxu0 0
        %6965 = vmatpush1.bf16.msra.mxu0 %v6952
        %6966 = vmatprep.subr.bf16.mxu0 0
        %6967 = vmatpush1.bf16.msra.mxu0 %v6951
        %6968 = vmatprep.subr.bf16.mxu0 0
        %6969 = vmatpush1.bf16.msra.mxu0 %v6950
        %6970 = vmatprep.subr.bf16.mxu0 0
        %6971 = vmatpush1.bf16.msra.mxu0 %v6949
        %6972 = vmatprep.subr.bf16.mxu0 0
        %6973 = vmatpush1.bf16.msra.mxu0 %v6948
        %6974 = vmatprep.subr.bf16.mxu0 0
        %6975 = vmatpush1.bf16.msra.mxu0 %v6947
        %6976 = vmatprep.subr.bf16.mxu0 0
        %6977 = vmatpush1.bf16.msra.mxu0 %v6946
        %6978 = vmatprep.subr.bf16.mxu0 0
        %6979 = vmatpush2.bf16.msra.mxu0 0
        %6980 = vmatprep.subr.bf16.mxu0 0
        %6981 = vmatpush2.bf16.msra.mxu0 0
        %6982 = vmatprep.subr.bf16.mxu0 0
        %6983 = vmatpush2.bf16.msra.mxu0 0
        %6984 = vmatprep.subr.bf16.mxu0 0
        %6985 = vmatpush2.bf16.msra.mxu0 0
        %6986 = vmatprep.subr.bf16.mxu0 0
        %6987 = vmatpush2.bf16.msra.mxu0 0
        %6988 = vmatprep.subr.bf16.mxu0 0
        %6989 = vmatpush2.bf16.msra.mxu0 0
        %6990 = vmatprep.subr.bf16.mxu0 0
        %6991 = vmatpush2.bf16.msra.mxu0 0
        %6992 = vmatprep.subr.bf16.mxu0 0
        %6993 = vmatpush2.bf16.msra.mxu0 0
        %6994 = vmatprep.mubr.bf16.mxu0 0
        %6995 = vmatmul.mubr.bf16.gmra.mxu0 %v6882
        %v6996 = vpop.f32.mrf.mxu0
        %v6997 = vadd.f32 0.0, %v6996
        %v6998 = vpop.f32.mrf.mxu0
        %v6999 = vpop.f32.mrf.mxu0
        %v7000 = vadd.f32 0.0, %v6999
        %v7001 = vpop.f32.mrf.mxu0
        %7002 = vmatprep.mubr.bf16.mxu0 0
        %7003 = vmatmul.mubr.bf16.gmra.mxu0 %v6883
        %v7004 = vpop.f32.mrf.mxu0
        %v7005 = vadd.f32 0.0, %v7004
        %v7006 = vpop.f32.mrf.mxu0
        %v7007 = vpop.f32.mrf.mxu0
        %v7008 = vadd.f32 0.0, %v7007
        %v7009 = vpop.f32.mrf.mxu0
        %7010 = vmatprep.mubr.bf16.mxu0 0
        %7011 = vmatmul.mubr.bf16.gmra.mxu0 %v6884
        %v7012 = vpop.f32.mrf.mxu0
        %v7013 = vadd.f32 0.0, %v7012
        %v7014 = vpop.f32.mrf.mxu0
        %v7015 = vpop.f32.mrf.mxu0
        %v7016 = vadd.f32 0.0, %v7015
        %v7017 = vpop.f32.mrf.mxu0
        %7018 = vmatprep.mubr.bf16.mxu0 0
        %7019 = vmatmul.mubr.bf16.gmra.mxu0 %v6885
        %v7020 = vpop.f32.mrf.mxu0
        %v7021 = vadd.f32 0.0, %v7020
        %v7022 = vpop.f32.mrf.mxu0
        %v7023 = vpop.f32.mrf.mxu0
        %v7024 = vadd.f32 0.0, %v7023
        %v7025 = vpop.f32.mrf.mxu0
        %7026 = vmatprep.mubr.bf16.mxu0 0
        %7027 = vmatmul.mubr.bf16.gmra.mxu0 %v6886
        %v7028 = vpop.f32.mrf.mxu0
        %v7029 = vadd.f32 0.0, %v7028
        %v7030 = vpop.f32.mrf.mxu0
        %v7031 = vpop.f32.mrf.mxu0
        %v7032 = vadd.f32 0.0, %v7031
        %v7033 = vpop.f32.mrf.mxu0
        %7034 = vmatprep.mubr.bf16.mxu0 0
        %7035 = vmatmul.mubr.bf16.gmra.mxu0 %v6887
        %v7036 = vpop.f32.mrf.mxu0
        %v7037 = vadd.f32 0.0, %v7036
        %v7038 = vpop.f32.mrf.mxu0
        %v7039 = vpop.f32.mrf.mxu0
        %v7040 = vadd.f32 0.0, %v7039
        %v7041 = vpop.f32.mrf.mxu0
        %7042 = vmatprep.mubr.bf16.mxu0 0
        %7043 = vmatmul.mubr.bf16.gmra.mxu0 %v6888
        %v7044 = vpop.f32.mrf.mxu0
        %v7045 = vadd.f32 0.0, %v7044
        %v7046 = vpop.f32.mrf.mxu0
        %v7047 = vpop.f32.mrf.mxu0
        %v7048 = vadd.f32 0.0, %v7047
        %v7049 = vpop.f32.mrf.mxu0
        %7050 = vmatprep.mubr.bf16.mxu0 0
        %7051 = vmatmul.mubr.bf16.gmra.mxu0 %v6889
        %v7052 = vpop.f32.mrf.mxu0
        %v7053 = vadd.f32 0.0, %v7052
        %v7054 = vpop.f32.mrf.mxu0
        %v7055 = vpop.f32.mrf.mxu0
        %v7056 = vadd.f32 0.0, %v7055
        %v7057 = vpop.f32.mrf.mxu0
        %7058 = vmatprep.mubr.bf16.mxu0 0
        %7059 = vmatmul.mubr.bf16.gmra.mxu0 %v6890
        %v7060 = vpop.f32.mrf.mxu0
        %v7061 = vadd.f32 0.0, %v7060
        %v7062 = vpop.f32.mrf.mxu0
        %v7063 = vpop.f32.mrf.mxu0
        %v7064 = vadd.f32 0.0, %v7063
        %v7065 = vpop.f32.mrf.mxu0
        %7066 = vmatprep.mubr.bf16.mxu0 0
        %7067 = vmatmul.mubr.bf16.gmra.mxu0 %v6891
        %v7068 = vpop.f32.mrf.mxu0
        %v7069 = vadd.f32 0.0, %v7068
        %v7070 = vpop.f32.mrf.mxu0
        %v7071 = vpop.f32.mrf.mxu0
        %v7072 = vadd.f32 0.0, %v7071
        %v7073 = vpop.f32.mrf.mxu0
        %7074 = vmatprep.mubr.bf16.mxu0 0
        %7075 = vmatmul.mubr.bf16.gmra.mxu0 %v6892
        %v7076 = vpop.f32.mrf.mxu0
        %v7077 = vadd.f32 0.0, %v7076
        %v7078 = vpop.f32.mrf.mxu0
        %v7079 = vpop.f32.mrf.mxu0
        %v7080 = vadd.f32 0.0, %v7079
        %v7081 = vpop.f32.mrf.mxu0
        %7082 = vmatprep.mubr.bf16.mxu0 0
        %7083 = vmatmul.mubr.bf16.gmra.mxu0 %v6893
        %v7084 = vpop.f32.mrf.mxu0
        %v7085 = vadd.f32 0.0, %v7084
        %v7086 = vpop.f32.mrf.mxu0
        %v7087 = vpop.f32.mrf.mxu0
        %v7088 = vadd.f32 0.0, %v7087
        %v7089 = vpop.f32.mrf.mxu0
        %7090 = vmatprep.mubr.bf16.mxu0 0
        %7091 = vmatmul.mubr.bf16.gmra.mxu0 %v6894
        %v7092 = vpop.f32.mrf.mxu0
        %v7093 = vadd.f32 0.0, %v7092
        %v7094 = vpop.f32.mrf.mxu0
        %v7095 = vpop.f32.mrf.mxu0
        %v7096 = vadd.f32 0.0, %v7095
        %v7097 = vpop.f32.mrf.mxu0
        %7098 = vmatprep.mubr.bf16.mxu0 0
        %7099 = vmatmul.mubr.bf16.gmra.mxu0 %v6895
        %v7100 = vpop.f32.mrf.mxu0
        %v7101 = vadd.f32 0.0, %v7100
        %v7102 = vpop.f32.mrf.mxu0
        %v7103 = vpop.f32.mrf.mxu0
        %v7104 = vadd.f32 0.0, %v7103
        %v7105 = vpop.f32.mrf.mxu0
        %7106 = vmatprep.mubr.bf16.mxu0 0
        %7107 = vmatmul.mubr.bf16.gmra.mxu0 %v6896
        %v7108 = vpop.f32.mrf.mxu0
        %v7109 = vadd.f32 0.0, %v7108
        %v7110 = vpop.f32.mrf.mxu0
        %v7111 = vpop.f32.mrf.mxu0
        %v7112 = vadd.f32 0.0, %v7111
        %v7113 = vpop.f32.mrf.mxu0
        %7114 = vmatprep.mubr.bf16.mxu0 0
        %7115 = vmatmul.mubr.bf16.gmra.mxu0 %v6897
        %v7116 = vpop.f32.mrf.mxu0
        %v7117 = vadd.f32 0.0, %v7116
        %v7118 = vpop.f32.mrf.mxu0
        %v7119 = vpop.f32.mrf.mxu0
        %v7120 = vadd.f32 0.0, %v7119
        %v7121 = vpop.f32.mrf.mxu0
        %7122 = vdwg.mxu0
        %v7123 = vld [vmem:[#allocation15] sm:$0x1]
        %v7125 = vlaneseq
        %v7126 = vshrl.u32 %v7125, 7
        %v7127 = vsub.s32 0, %v7126
        %v7128 = vrot.slane %v7123, %v7127
        %v7130 = vadd.f32 %v6997, %v7128
        %v7131 = vadd.f32 %v7000, %v7128
        %v7132 = vadd.f32 %v7005, %v7128
        %v7133 = vadd.f32 %v7008, %v7128
        %v7134 = vadd.f32 %v7013, %v7128
        %v7135 = vadd.f32 %v7016, %v7128
        %v7136 = vadd.f32 %v7021, %v7128
        %v7137 = vadd.f32 %v7024, %v7128
        %v7138 = vadd.f32 %v7029, %v7128
        %v7139 = vadd.f32 %v7032, %v7128
        %v7140 = vadd.f32 %v7037, %v7128
        %v7141 = vadd.f32 %v7040, %v7128
        %v7142 = vadd.f32 %v7045, %v7128
        %v7143 = vadd.f32 %v7048, %v7128
        %v7144 = vadd.f32 %v7053, %v7128
        %v7145 = vadd.f32 %v7056, %v7128
        %v7146 = vadd.f32 %v7061, %v7128
        %v7147 = vadd.f32 %v7064, %v7128
        %v7148 = vadd.f32 %v7069, %v7128
        %v7149 = vadd.f32 %v7072, %v7128
        %v7150 = vadd.f32 %v7077, %v7128
        %v7151 = vadd.f32 %v7080, %v7128
        %v7152 = vadd.f32 %v7085, %v7128
        %v7153 = vadd.f32 %v7088, %v7128
        %v7154 = vadd.f32 %v7093, %v7128
        %v7155 = vadd.f32 %v7096, %v7128
        %v7156 = vadd.f32 %v7101, %v7128
        %v7157 = vadd.f32 %v7104, %v7128
        %v7158 = vadd.f32 %v7109, %v7128
        %v7159 = vadd.f32 %v7112, %v7128
        %v7160 = vadd.f32 %v7117, %v7128
        %v7161 = vadd.f32 %v7120, %v7128
        %v7162 = vpack.c.bf16 %v7131, %v7130
        %v7163 = vpack.c.bf16 %v7133, %v7132
        %v7164 = vpack.c.bf16 %v7135, %v7134
        %v7165 = vpack.c.bf16 %v7137, %v7136
        %v7166 = vpack.c.bf16 %v7139, %v7138
        %v7167 = vpack.c.bf16 %v7141, %v7140
        %v7168 = vpack.c.bf16 %v7143, %v7142
        %v7169 = vpack.c.bf16 %v7145, %v7144
        %v7170 = vpack.c.bf16 %v7147, %v7146
        %v7171 = vpack.c.bf16 %v7149, %v7148
        %v7172 = vpack.c.bf16 %v7151, %v7150
        %v7173 = vpack.c.bf16 %v7153, %v7152
        %v7174 = vpack.c.bf16 %v7155, %v7154
        %v7175 = vpack.c.bf16 %v7157, %v7156
        %v7176 = vpack.c.bf16 %v7159, %v7158
        %v7177 = vpack.c.bf16 %v7161, %v7160
        %v7194 = vunpack.c.l.b16 %v7162
        %v7195 = vunpack.c.h.b16 %v7162
        %v7196 = vunpack.c.l.b16 %v7163
        %v7197 = vunpack.c.h.b16 %v7163
        %v7198 = vunpack.c.l.b16 %v7164
        %v7199 = vunpack.c.h.b16 %v7164
        %v7200 = vunpack.c.l.b16 %v7165
        %v7201 = vunpack.c.h.b16 %v7165
        %v7202 = vunpack.c.l.b16 %v7166
        %v7203 = vunpack.c.h.b16 %v7166
        %v7204 = vunpack.c.l.b16 %v7167
        %v7205 = vunpack.c.h.b16 %v7167
        %v7206 = vunpack.c.l.b16 %v7168
        %v7207 = vunpack.c.h.b16 %v7168
        %v7208 = vunpack.c.l.b16 %v7169
        %v7209 = vunpack.c.h.b16 %v7169
        %v7210 = vunpack.c.l.b16 %v7170
        %v7211 = vunpack.c.h.b16 %v7170
        %v7212 = vunpack.c.l.b16 %v7171
        %v7213 = vunpack.c.h.b16 %v7171
        %v7214 = vunpack.c.l.b16 %v7172
        %v7215 = vunpack.c.h.b16 %v7172
        %v7216 = vunpack.c.l.b16 %v7173
        %v7217 = vunpack.c.h.b16 %v7173
        %v7218 = vunpack.c.l.b16 %v7174
        %v7219 = vunpack.c.h.b16 %v7174
        %v7220 = vunpack.c.l.b16 %v7175
        %v7221 = vunpack.c.h.b16 %v7175
        %v7222 = vunpack.c.l.b16 %v7176
        %v7223 = vunpack.c.h.b16 %v7176
        %v7224 = vunpack.c.l.b16 %v7177
        %v7225 = vunpack.c.h.b16 %v7177
        %v7226 = vpack.c.b16 %v7194, %v7194
        %v7227 = vpack.c.b16 %v7195, %v7195
        %v7228 = vpack.c.b16 %v7196, %v7196
        %v7229 = vpack.c.b16 %v7197, %v7197
        %v7230 = vpack.c.b16 %v7198, %v7198
        %v7231 = vpack.c.b16 %v7199, %v7199
        %v7232 = vpack.c.b16 %v7200, %v7200
        %v7233 = vpack.c.b16 %v7201, %v7201
        %v7234 = vpack.c.b16 %v7202, %v7202
        %v7235 = vpack.c.b16 %v7203, %v7203
        %v7236 = vpack.c.b16 %v7204, %v7204
        %v7237 = vpack.c.b16 %v7205, %v7205
        %v7238 = vpack.c.b16 %v7206, %v7206
        %v7239 = vpack.c.b16 %v7207, %v7207
        %v7240 = vpack.c.b16 %v7208, %v7208
        %v7241 = vpack.c.b16 %v7209, %v7209
        %v7242 = vpack.c.b16 %v7210, %v7210
        %v7243 = vpack.c.b16 %v7211, %v7211
        %v7244 = vpack.c.b16 %v7212, %v7212
        %v7245 = vpack.c.b16 %v7213, %v7213
        %v7246 = vpack.c.b16 %v7214, %v7214
        %v7247 = vpack.c.b16 %v7215, %v7215
        %v7248 = vpack.c.b16 %v7216, %v7216
        %v7249 = vpack.c.b16 %v7217, %v7217
        %v7250 = vpack.c.b16 %v7218, %v7218
        %v7251 = vpack.c.b16 %v7219, %v7219
        %v7252 = vpack.c.b16 %v7220, %v7220
        %v7253 = vpack.c.b16 %v7221, %v7221
        %v7254 = vpack.c.b16 %v7222, %v7222
        %v7255 = vpack.c.b16 %v7223, %v7223
        %v7256 = vpack.c.b16 %v7224, %v7224
        %v7257 = vpack.c.b16 %v7225, %v7225
        %7290 = vst [vmem:[%s673] sm:$0xf] %v7226
        %7291 = vst [vmem:[%s673 + $0x4] sm:$0xf] %v7227
        %7292 = vst [vmem:[%s673 + $0x8] sm:$0xf] %v7228
        %7293 = vst [vmem:[%s673 + $0xc] sm:$0xf] %v7229
        %7294 = vst [vmem:[%s673 + $0x10] sm:$0xf] %v7230
        %7295 = vst [vmem:[%s673 + $0x14] sm:$0xf] %v7231
        %7296 = vst [vmem:[%s673 + $0x18] sm:$0xf] %v7232
        %7297 = vst [vmem:[%s673 + $0x1c] sm:$0xf] %v7233
        %7298 = vst [vmem:[%s673 + $0x20] sm:$0xf] %v7234
        %7299 = vst [vmem:[%s673 + $0x24] sm:$0xf] %v7235
        %7300 = vst [vmem:[%s673 + $0x28] sm:$0xf] %v7236
        %7301 = vst [vmem:[%s673 + $0x2c] sm:$0xf] %v7237
        %7302 = vst [vmem:[%s673 + $0x30] sm:$0xf] %v7238
        %7303 = vst [vmem:[%s673 + $0x34] sm:$0xf] %v7239
        %7304 = vst [vmem:[%s673 + $0x38] sm:$0xf] %v7240
        %7305 = vst [vmem:[%s673 + $0x3c] sm:$0xf] %v7241
        %7306 = vst [vmem:[%s673 + $0x40] sm:$0xf] %v7242
        %7307 = vst [vmem:[%s673 + $0x44] sm:$0xf] %v7243
        %7308 = vst [vmem:[%s673 + $0x48] sm:$0xf] %v7244
        %7309 = vst [vmem:[%s673 + $0x4c] sm:$0xf] %v7245
        %7310 = vst [vmem:[%s673 + $0x50] sm:$0xf] %v7246
        %7311 = vst [vmem:[%s673 + $0x54] sm:$0xf] %v7247
        %7312 = vst [vmem:[%s673 + $0x58] sm:$0xf] %v7248
        %7313 = vst [vmem:[%s673 + $0x5c] sm:$0xf] %v7249
        %7314 = vst [vmem:[%s673 + $0x60] sm:$0xf] %v7250
        %7315 = vst [vmem:[%s673 + $0x64] sm:$0xf] %v7251
        %7316 = vst [vmem:[%s673 + $0x68] sm:$0xf] %v7252
        %7317 = vst [vmem:[%s673 + $0x6c] sm:$0xf] %v7253
        %7318 = vst [vmem:[%s673 + $0x70] sm:$0xf] %v7254
        %7319 = vst [vmem:[%s673 + $0x74] sm:$0xf] %v7255
        %7320 = vst [vmem:[%s673 + $0x78] sm:$0xf] %v7256
        %7321 = vst [vmem:[%s673 + $0x7c] sm:$0xf] %v7257
        %v7322 = vmax.f32 %v7130, 0.0
        %v7323 = vmax.f32 %v7131, 0.0
        %v7324 = vmax.f32 %v7132, 0.0
        %v7325 = vmax.f32 %v7133, 0.0
        %v7326 = vmax.f32 %v7134, 0.0
        %v7327 = vmax.f32 %v7135, 0.0
        %v7328 = vmax.f32 %v7136, 0.0
        %v7329 = vmax.f32 %v7137, 0.0
        %v7330 = vmax.f32 %v7138, 0.0
        %v7331 = vmax.f32 %v7139, 0.0
        %v7332 = vmax.f32 %v7140, 0.0
        %v7333 = vmax.f32 %v7141, 0.0
        %v7334 = vmax.f32 %v7142, 0.0
        %v7335 = vmax.f32 %v7143, 0.0
        %v7336 = vmax.f32 %v7144, 0.0
        %v7337 = vmax.f32 %v7145, 0.0
        %v7338 = vmax.f32 %v7146, 0.0
        %v7339 = vmax.f32 %v7147, 0.0
        %v7340 = vmax.f32 %v7148, 0.0
        %v7341 = vmax.f32 %v7149, 0.0
        %v7342 = vmax.f32 %v7150, 0.0
        %v7343 = vmax.f32 %v7151, 0.0
        %v7344 = vmax.f32 %v7152, 0.0
        %v7345 = vmax.f32 %v7153, 0.0
        %v7346 = vmax.f32 %v7154, 0.0
        %v7347 = vmax.f32 %v7155, 0.0
        %v7348 = vmax.f32 %v7156, 0.0
        %v7349 = vmax.f32 %v7157, 0.0
        %v7350 = vmax.f32 %v7158, 0.0
        %v7351 = vmax.f32 %v7159, 0.0
        %v7352 = vmax.f32 %v7160, 0.0
        %v7353 = vmax.f32 %v7161, 0.0
        %v7354 = vpack.c.bf16 %v7323, %v7322
        %v7355 = vpack.c.bf16 %v7325, %v7324
        %v7356 = vpack.c.bf16 %v7327, %v7326
        %v7357 = vpack.c.bf16 %v7329, %v7328
        %v7358 = vpack.c.bf16 %v7331, %v7330
        %v7359 = vpack.c.bf16 %v7333, %v7332
        %v7360 = vpack.c.bf16 %v7335, %v7334
        %v7361 = vpack.c.bf16 %v7337, %v7336
        %v7362 = vpack.c.bf16 %v7339, %v7338
        %v7363 = vpack.c.bf16 %v7341, %v7340
        %v7364 = vpack.c.bf16 %v7343, %v7342
        %v7365 = vpack.c.bf16 %v7345, %v7344
        %v7366 = vpack.c.bf16 %v7347, %v7346
        %v7367 = vpack.c.bf16 %v7349, %v7348
        %v7368 = vpack.c.bf16 %v7351, %v7350
        %v7369 = vpack.c.bf16 %v7353, %v7352
        %v7386 = vunpack.c.l.b16 %v7354
        %v7387 = vunpack.c.h.b16 %v7354
        %v7388 = vunpack.c.l.b16 %v7355
        %v7389 = vunpack.c.h.b16 %v7355
        %v7390 = vunpack.c.l.b16 %v7356
        %v7391 = vunpack.c.h.b16 %v7356
        %v7392 = vunpack.c.l.b16 %v7357
        %v7393 = vunpack.c.h.b16 %v7357
        %v7394 = vunpack.c.l.b16 %v7358
        %v7395 = vunpack.c.h.b16 %v7358
        %v7396 = vunpack.c.l.b16 %v7359
        %v7397 = vunpack.c.h.b16 %v7359
        %v7398 = vunpack.c.l.b16 %v7360
        %v7399 = vunpack.c.h.b16 %v7360
        %v7400 = vunpack.c.l.b16 %v7361
        %v7401 = vunpack.c.h.b16 %v7361
        %v7402 = vunpack.c.l.b16 %v7362
        %v7403 = vunpack.c.h.b16 %v7362
        %v7404 = vunpack.c.l.b16 %v7363
        %v7405 = vunpack.c.h.b16 %v7363
        %v7406 = vunpack.c.l.b16 %v7364
        %v7407 = vunpack.c.h.b16 %v7364
        %v7408 = vunpack.c.l.b16 %v7365
        %v7409 = vunpack.c.h.b16 %v7365
        %v7410 = vunpack.c.l.b16 %v7366
        %v7411 = vunpack.c.h.b16 %v7366
        %v7412 = vunpack.c.l.b16 %v7367
        %v7413 = vunpack.c.h.b16 %v7367
        %v7414 = vunpack.c.l.b16 %v7368
        %v7415 = vunpack.c.h.b16 %v7368
        %v7416 = vunpack.c.l.b16 %v7369
        %v7417 = vunpack.c.h.b16 %v7369
        %v7418 = vpack.c.b16 %v7386, %v7386
        %v7419 = vpack.c.b16 %v7387, %v7387
        %v7420 = vpack.c.b16 %v7388, %v7388
        %v7421 = vpack.c.b16 %v7389, %v7389
        %v7422 = vpack.c.b16 %v7390, %v7390
        %v7423 = vpack.c.b16 %v7391, %v7391
        %v7424 = vpack.c.b16 %v7392, %v7392
        %v7425 = vpack.c.b16 %v7393, %v7393
        %v7426 = vpack.c.b16 %v7394, %v7394
        %v7427 = vpack.c.b16 %v7395, %v7395
        %v7428 = vpack.c.b16 %v7396, %v7396
        %v7429 = vpack.c.b16 %v7397, %v7397
        %v7430 = vpack.c.b16 %v7398, %v7398
        %v7431 = vpack.c.b16 %v7399, %v7399
        %v7432 = vpack.c.b16 %v7400, %v7400
        %v7433 = vpack.c.b16 %v7401, %v7401
        %v7434 = vpack.c.b16 %v7402, %v7402
        %v7435 = vpack.c.b16 %v7403, %v7403
        %v7436 = vpack.c.b16 %v7404, %v7404
        %v7437 = vpack.c.b16 %v7405, %v7405
        %v7438 = vpack.c.b16 %v7406, %v7406
        %v7439 = vpack.c.b16 %v7407, %v7407
        %v7440 = vpack.c.b16 %v7408, %v7408
        %v7441 = vpack.c.b16 %v7409, %v7409
        %v7442 = vpack.c.b16 %v7410, %v7410
        %v7443 = vpack.c.b16 %v7411, %v7411
        %v7444 = vpack.c.b16 %v7412, %v7412
        %v7445 = vpack.c.b16 %v7413, %v7413
        %v7446 = vpack.c.b16 %v7414, %v7414
        %v7447 = vpack.c.b16 %v7415, %v7415
        %v7448 = vpack.c.b16 %v7416, %v7416
        %v7449 = vpack.c.b16 %v7417, %v7417
        %v7451 = vshrl.u32 %v7418, 16
        %v7453 = vrot.slane %v7451, 7
        %v7454 = vshll.u32 %v7418, 16
        %v7456 = vor.u32 %v7453, %v7454
        %v7457 = vrot.slane %v7453, 4
        %v7459 = vshrl.u32 %v7419, 16
        %v7461 = vrot.slane %v7459, 7
        %v7462 = vshll.u32 %v7419, 16
        %v7464 = vor.u32 %v7461, %v7462
        %v7465 = vsel %vm945, %v7457, %v7464
        %v7466 = vrot.slane %v7461, 4
        %v7468 = vshrl.u32 %v7420, 16
        %v7470 = vrot.slane %v7468, 7
        %v7471 = vshll.u32 %v7420, 16
        %v7473 = vor.u32 %v7470, %v7471
        %v7474 = vrot.slane %v7470, 4
        %v7476 = vshrl.u32 %v7421, 16
        %v7478 = vrot.slane %v7476, 7
        %v7479 = vshll.u32 %v7421, 16
        %v7481 = vor.u32 %v7478, %v7479
        %v7482 = vsel %vm945, %v7474, %v7481
        %v7483 = vrot.slane %v7478, 4
        %v7485 = vshrl.u32 %v7422, 16
        %v7487 = vrot.slane %v7485, 7
        %v7488 = vshll.u32 %v7422, 16
        %v7490 = vor.u32 %v7487, %v7488
        %v7491 = vrot.slane %v7487, 4
        %v7493 = vshrl.u32 %v7423, 16
        %v7495 = vrot.slane %v7493, 7
        %v7496 = vshll.u32 %v7423, 16
        %v7498 = vor.u32 %v7495, %v7496
        %v7499 = vsel %vm945, %v7491, %v7498
        %v7500 = vrot.slane %v7495, 4
        %v7502 = vshrl.u32 %v7424, 16
        %v7504 = vrot.slane %v7502, 7
        %v7505 = vshll.u32 %v7424, 16
        %v7507 = vor.u32 %v7504, %v7505
        %v7508 = vrot.slane %v7504, 4
        %v7510 = vshrl.u32 %v7425, 16
        %v7512 = vrot.slane %v7510, 7
        %v7513 = vshll.u32 %v7425, 16
        %v7515 = vor.u32 %v7512, %v7513
        %v7516 = vsel %vm945, %v7508, %v7515
        %v7517 = vrot.slane %v7512, 4
        %v7519 = vshrl.u32 %v7426, 16
        %v7521 = vrot.slane %v7519, 7
        %v7522 = vshll.u32 %v7426, 16
        %v7524 = vor.u32 %v7521, %v7522
        %v7525 = vrot.slane %v7521, 4
        %v7527 = vshrl.u32 %v7427, 16
        %v7529 = vrot.slane %v7527, 7
        %v7530 = vshll.u32 %v7427, 16
        %v7532 = vor.u32 %v7529, %v7530
        %v7533 = vsel %vm945, %v7525, %v7532
        %v7534 = vrot.slane %v7529, 4
        %v7536 = vshrl.u32 %v7428, 16
        %v7538 = vrot.slane %v7536, 7
        %v7539 = vshll.u32 %v7428, 16
        %v7541 = vor.u32 %v7538, %v7539
        %v7542 = vrot.slane %v7538, 4
        %v7544 = vshrl.u32 %v7429, 16
        %v7546 = vrot.slane %v7544, 7
        %v7547 = vshll.u32 %v7429, 16
        %v7549 = vor.u32 %v7546, %v7547
        %v7550 = vsel %vm945, %v7542, %v7549
        %v7551 = vrot.slane %v7546, 4
        %v7553 = vshrl.u32 %v7430, 16
        %v7555 = vrot.slane %v7553, 7
        %v7556 = vshll.u32 %v7430, 16
        %v7558 = vor.u32 %v7555, %v7556
        %v7559 = vrot.slane %v7555, 4
        %v7561 = vshrl.u32 %v7431, 16
        %v7563 = vrot.slane %v7561, 7
        %v7564 = vshll.u32 %v7431, 16
        %v7566 = vor.u32 %v7563, %v7564
        %v7567 = vsel %vm945, %v7559, %v7566
        %v7568 = vrot.slane %v7563, 4
        %v7570 = vshrl.u32 %v7432, 16
        %v7572 = vrot.slane %v7570, 7
        %v7573 = vshll.u32 %v7432, 16
        %v7575 = vor.u32 %v7572, %v7573
        %v7576 = vrot.slane %v7572, 4
        %v7578 = vshrl.u32 %v7433, 16
        %v7580 = vrot.slane %v7578, 7
        %v7581 = vshll.u32 %v7433, 16
        %v7583 = vor.u32 %v7580, %v7581
        %v7584 = vsel %vm945, %v7576, %v7583
        %v7585 = vrot.slane %v7580, 4
        %v7587 = vshrl.u32 %v7434, 16
        %v7589 = vrot.slane %v7587, 7
        %v7590 = vshll.u32 %v7434, 16
        %v7592 = vor.u32 %v7589, %v7590
        %v7593 = vrot.slane %v7589, 4
        %v7595 = vshrl.u32 %v7435, 16
        %v7597 = vrot.slane %v7595, 7
        %v7598 = vshll.u32 %v7435, 16
        %v7600 = vor.u32 %v7597, %v7598
        %v7601 = vsel %vm945, %v7593, %v7600
        %v7602 = vrot.slane %v7597, 4
        %v7604 = vshrl.u32 %v7436, 16
        %v7606 = vrot.slane %v7604, 7
        %v7607 = vshll.u32 %v7436, 16
        %v7609 = vor.u32 %v7606, %v7607
        %v7610 = vrot.slane %v7606, 4
        %v7612 = vshrl.u32 %v7437, 16
        %v7614 = vrot.slane %v7612, 7
        %v7615 = vshll.u32 %v7437, 16
        %v7617 = vor.u32 %v7614, %v7615
        %v7618 = vsel %vm945, %v7610, %v7617
        %v7619 = vrot.slane %v7614, 4
        %v7621 = vshrl.u32 %v7438, 16
        %v7623 = vrot.slane %v7621, 7
        %v7624 = vshll.u32 %v7438, 16
        %v7626 = vor.u32 %v7623, %v7624
        %v7627 = vrot.slane %v7623, 4
        %v7629 = vshrl.u32 %v7439, 16
        %v7631 = vrot.slane %v7629, 7
        %v7632 = vshll.u32 %v7439, 16
        %v7634 = vor.u32 %v7631, %v7632
        %v7635 = vsel %vm945, %v7627, %v7634
        %v7636 = vrot.slane %v7631, 4
        %v7638 = vshrl.u32 %v7440, 16
        %v7640 = vrot.slane %v7638, 7
        %v7641 = vshll.u32 %v7440, 16
        %v7643 = vor.u32 %v7640, %v7641
        %v7644 = vrot.slane %v7640, 4
        %v7646 = vshrl.u32 %v7441, 16
        %v7648 = vrot.slane %v7646, 7
        %v7649 = vshll.u32 %v7441, 16
        %v7651 = vor.u32 %v7648, %v7649
        %v7652 = vsel %vm945, %v7644, %v7651
        %v7653 = vrot.slane %v7648, 4
        %v7655 = vshrl.u32 %v7442, 16
        %v7657 = vrot.slane %v7655, 7
        %v7658 = vshll.u32 %v7442, 16
        %v7660 = vor.u32 %v7657, %v7658
        %v7661 = vrot.slane %v7657, 4
        %v7663 = vshrl.u32 %v7443, 16
        %v7665 = vrot.slane %v7663, 7
        %v7666 = vshll.u32 %v7443, 16
        %v7668 = vor.u32 %v7665, %v7666
        %v7669 = vsel %vm945, %v7661, %v7668
        %v7670 = vrot.slane %v7665, 4
        %v7672 = vshrl.u32 %v7444, 16
        %v7674 = vrot.slane %v7672, 7
        %v7675 = vshll.u32 %v7444, 16
        %v7677 = vor.u32 %v7674, %v7675
        %v7678 = vrot.slane %v7674, 4
        %v7680 = vshrl.u32 %v7445, 16
        %v7682 = vrot.slane %v7680, 7
        %v7683 = vshll.u32 %v7445, 16
        %v7685 = vor.u32 %v7682, %v7683
        %v7686 = vsel %vm945, %v7678, %v7685
        %v7687 = vrot.slane %v7682, 4
        %v7689 = vshrl.u32 %v7446, 16
        %v7691 = vrot.slane %v7689, 7
        %v7692 = vshll.u32 %v7446, 16
        %v7694 = vor.u32 %v7691, %v7692
        %v7695 = vrot.slane %v7691, 4
        %v7697 = vshrl.u32 %v7447, 16
        %v7699 = vrot.slane %v7697, 7
        %v7700 = vshll.u32 %v7447, 16
        %v7702 = vor.u32 %v7699, %v7700
        %v7703 = vsel %vm945, %v7695, %v7702
        %v7704 = vrot.slane %v7699, 4
        %v7706 = vshrl.u32 %v7448, 16
        %v7708 = vrot.slane %v7706, 7
        %v7709 = vshll.u32 %v7448, 16
        %v7711 = vor.u32 %v7708, %v7709
        %v7712 = vrot.slane %v7708, 4
        %v7714 = vshrl.u32 %v7449, 16
        %v7716 = vrot.slane %v7714, 7
        %v7717 = vshll.u32 %v7449, 16
        %v7719 = vor.u32 %v7716, %v7717
        %v7720 = vsel %vm945, %v7712, %v7719
        %v7721 = vrot.slane %v7716, 4
        %v7770 = vld [vmem:[%s682] sm:$0xf]
        %v7771 = vsel %vm1267, %v7456, %v7770
        %7772 = vst [vmem:[%s682] sm:$0xf] %v7771
        %7773 = vst [vmem:[%s682 + $0x4] sm:$0xf] %v7465
        %v7774 = vld [vmem:[%s682 + $0x8] sm:$0x1]
        %v7775 = vsel %vm685, %v7466, %v7774
        %7776 = vst [vmem:[%s682 + $0x8] sm:$0x1] %v7775
        %v7777 = vld [vmem:[%s682 + $0xc] sm:$0xf]
        %v7778 = vsel %vm1267, %v7473, %v7777
        %7779 = vst [vmem:[%s682 + $0xc] sm:$0xf] %v7778
        %7780 = vst [vmem:[%s682 + $0x10] sm:$0xf] %v7482
        %v7781 = vld [vmem:[%s682 + $0x14] sm:$0x1]
        %v7782 = vsel %vm685, %v7483, %v7781
        %7783 = vst [vmem:[%s682 + $0x14] sm:$0x1] %v7782
        %v7784 = vld [vmem:[%s682 + $0x18] sm:$0xf]
        %v7785 = vsel %vm1267, %v7490, %v7784
        %7786 = vst [vmem:[%s682 + $0x18] sm:$0xf] %v7785
        %7787 = vst [vmem:[%s682 + $0x1c] sm:$0xf] %v7499
        %v7788 = vld [vmem:[%s682 + $0x20] sm:$0x1]
        %v7789 = vsel %vm685, %v7500, %v7788
        %7790 = vst [vmem:[%s682 + $0x20] sm:$0x1] %v7789
        %v7791 = vld [vmem:[%s682 + $0x24] sm:$0xf]
        %v7792 = vsel %vm1267, %v7507, %v7791
        %7793 = vst [vmem:[%s682 + $0x24] sm:$0xf] %v7792
        %7794 = vst [vmem:[%s682 + $0x28] sm:$0xf] %v7516
        %v7795 = vld [vmem:[%s682 + $0x2c] sm:$0x1]
        %v7796 = vsel %vm685, %v7517, %v7795
        %7797 = vst [vmem:[%s682 + $0x2c] sm:$0x1] %v7796
        %v7798 = vld [vmem:[%s682 + $0x30] sm:$0xf]
        %v7799 = vsel %vm1267, %v7524, %v7798
        %7800 = vst [vmem:[%s682 + $0x30] sm:$0xf] %v7799
        %7801 = vst [vmem:[%s682 + $0x34] sm:$0xf] %v7533
        %v7802 = vld [vmem:[%s682 + $0x38] sm:$0x1]
        %v7803 = vsel %vm685, %v7534, %v7802
        %7804 = vst [vmem:[%s682 + $0x38] sm:$0x1] %v7803
        %v7805 = vld [vmem:[%s682 + $0x3c] sm:$0xf]
        %v7806 = vsel %vm1267, %v7541, %v7805
        %7807 = vst [vmem:[%s682 + $0x3c] sm:$0xf] %v7806
        %7808 = vst [vmem:[%s682 + $0x40] sm:$0xf] %v7550
        %v7809 = vld [vmem:[%s682 + $0x44] sm:$0x1]
        %v7810 = vsel %vm685, %v7551, %v7809
        %7811 = vst [vmem:[%s682 + $0x44] sm:$0x1] %v7810
        %v7812 = vld [vmem:[%s682 + $0x48] sm:$0xf]
        %v7813 = vsel %vm1267, %v7558, %v7812
        %7814 = vst [vmem:[%s682 + $0x48] sm:$0xf] %v7813
        %7815 = vst [vmem:[%s682 + $0x4c] sm:$0xf] %v7567
        %v7816 = vld [vmem:[%s682 + $0x50] sm:$0x1]
        %v7817 = vsel %vm685, %v7568, %v7816
        %7818 = vst [vmem:[%s682 + $0x50] sm:$0x1] %v7817
        %v7819 = vld [vmem:[%s682 + $0x54] sm:$0xf]
        %v7820 = vsel %vm1267, %v7575, %v7819
        %7821 = vst [vmem:[%s682 + $0x54] sm:$0xf] %v7820
        %7822 = vst [vmem:[%s682 + $0x58] sm:$0xf] %v7584
        %v7823 = vld [vmem:[%s682 + $0x5c] sm:$0x1]
        %v7824 = vsel %vm685, %v7585, %v7823
        %7825 = vst [vmem:[%s682 + $0x5c] sm:$0x1] %v7824
        %v7826 = vld [vmem:[%s682 + $0x60] sm:$0xf]
        %v7827 = vsel %vm1267, %v7592, %v7826
        %7828 = vst [vmem:[%s682 + $0x60] sm:$0xf] %v7827
        %7829 = vst [vmem:[%s682 + $0x64] sm:$0xf] %v7601
        %v7830 = vld [vmem:[%s682 + $0x68] sm:$0x1]
        %v7831 = vsel %vm685, %v7602, %v7830
        %7832 = vst [vmem:[%s682 + $0x68] sm:$0x1] %v7831
        %v7833 = vld [vmem:[%s682 + $0x6c] sm:$0xf]
        %v7834 = vsel %vm1267, %v7609, %v7833
        %7835 = vst [vmem:[%s682 + $0x6c] sm:$0xf] %v7834
        %7836 = vst [vmem:[%s682 + $0x70] sm:$0xf] %v7618
        %v7837 = vld [vmem:[%s682 + $0x74] sm:$0x1]
        %v7838 = vsel %vm685, %v7619, %v7837
        %7839 = vst [vmem:[%s682 + $0x74] sm:$0x1] %v7838
        %v7840 = vld [vmem:[%s682 + $0x78] sm:$0xf]
        %v7841 = vsel %vm1267, %v7626, %v7840
        %7842 = vst [vmem:[%s682 + $0x78] sm:$0xf] %v7841
        %7843 = vst [vmem:[%s682 + $0x7c] sm:$0xf] %v7635
        %v7844 = vld [vmem:[%s682 + $0x80] sm:$0x1]
        %v7845 = vsel %vm685, %v7636, %v7844
        %7846 = vst [vmem:[%s682 + $0x80] sm:$0x1] %v7845
        %v7847 = vld [vmem:[%s682 + $0x84] sm:$0xf]
        %v7848 = vsel %vm1267, %v7643, %v7847
        %7849 = vst [vmem:[%s682 + $0x84] sm:$0xf] %v7848
        %7850 = vst [vmem:[%s682 + $0x88] sm:$0xf] %v7652
        %v7851 = vld [vmem:[%s682 + $0x8c] sm:$0x1]
        %v7852 = vsel %vm685, %v7653, %v7851
        %7853 = vst [vmem:[%s682 + $0x8c] sm:$0x1] %v7852
        %v7854 = vld [vmem:[%s682 + $0x90] sm:$0xf]
        %v7855 = vsel %vm1267, %v7660, %v7854
        %7856 = vst [vmem:[%s682 + $0x90] sm:$0xf] %v7855
        %7857 = vst [vmem:[%s682 + $0x94] sm:$0xf] %v7669
        %v7858 = vld [vmem:[%s682 + $0x98] sm:$0x1]
        %v7859 = vsel %vm685, %v7670, %v7858
        %7860 = vst [vmem:[%s682 + $0x98] sm:$0x1] %v7859
        %v7861 = vld [vmem:[%s682 + $0x9c] sm:$0xf]
        %v7862 = vsel %vm1267, %v7677, %v7861
        %7863 = vst [vmem:[%s682 + $0x9c] sm:$0xf] %v7862
        %7864 = vst [vmem:[%s682 + $0xa0] sm:$0xf] %v7686
        %v7865 = vld [vmem:[%s682 + $0xa4] sm:$0x1]
        %v7866 = vsel %vm685, %v7687, %v7865
        %7867 = vst [vmem:[%s682 + $0xa4] sm:$0x1] %v7866
        %v7868 = vld [vmem:[%s682 + $0xa8] sm:$0xf]
        %v7869 = vsel %vm1267, %v7694, %v7868
        %7870 = vst [vmem:[%s682 + $0xa8] sm:$0xf] %v7869
        %7871 = vst [vmem:[%s682 + $0xac] sm:$0xf] %v7703
        %v7872 = vld [vmem:[%s682 + $0xb0] sm:$0x1]
        %v7873 = vsel %vm685, %v7704, %v7872
        %7874 = vst [vmem:[%s682 + $0xb0] sm:$0x1] %v7873
        %v7875 = vld [vmem:[%s682 + $0xb4] sm:$0xf]
        %v7876 = vsel %vm1267, %v7711, %v7875
        %7877 = vst [vmem:[%s682 + $0xb4] sm:$0xf] %v7876
        %7878 = vst [vmem:[%s682 + $0xb8] sm:$0xf] %v7720
        %v7879 = vld [vmem:[%s682 + $0xbc] sm:$0x1]
        %v7880 = vsel %vm685, %v7721, %v7879
        %7881 = vst [vmem:[%s682 + $0xbc] sm:$0x1] %v7880
        %v7882 = vld [vmem:[%s9] sm:$0xf]
        %v7883 = vld [vmem:[%s9 + $0x4] sm:$0x1]
        %v7884 = vld [vmem:[#allocation2] sm:$0xf]
        %v7885 = vld [vmem:[#allocation2 + $0x4] sm:$0xf]
        %v7886 = vld [vmem:[#allocation2 + $0xc] sm:$0xf]
        %v7887 = vld [vmem:[#allocation2 + $0x10] sm:$0xf]
        %v7888 = vld [vmem:[#allocation2 + $0x18] sm:$0xf]
        %v7889 = vld [vmem:[#allocation2 + $0x1c] sm:$0xf]
        %v7890 = vld [vmem:[#allocation2 + $0x24] sm:$0xf]
        %v7891 = vld [vmem:[#allocation2 + $0x28] sm:$0xf]
        %v7892 = vld [vmem:[#allocation2 + $0x30] sm:$0xf]
        %v7893 = vld [vmem:[#allocation2 + $0x34] sm:$0xf]
        %v7894 = vld [vmem:[#allocation2 + $0x3c] sm:$0xf]
        %v7895 = vld [vmem:[#allocation2 + $0x40] sm:$0xf]
        %v7896 = vld [vmem:[#allocation2 + $0x48] sm:$0xf]
        %v7897 = vld [vmem:[#allocation2 + $0x4c] sm:$0xf]
        %v7898 = vld [vmem:[#allocation2 + $0x54] sm:$0xf]
        %v7899 = vld [vmem:[#allocation2 + $0x58] sm:$0xf]
        %v7900 = vld [vmem:[#allocation2 + $0x60] sm:$0xf]
        %v7901 = vld [vmem:[#allocation2 + $0x64] sm:$0xf]
        %v7902 = vld [vmem:[#allocation2 + $0x6c] sm:$0xf]
        %v7903 = vld [vmem:[#allocation2 + $0x70] sm:$0xf]
        %v7904 = vld [vmem:[#allocation2 + $0x78] sm:$0xf]
        %v7905 = vld [vmem:[#allocation2 + $0x7c] sm:$0xf]
        %v7906 = vld [vmem:[#allocation2 + $0x84] sm:$0xf]
        %v7907 = vld [vmem:[#allocation2 + $0x88] sm:$0xf]
        %v7908 = vld [vmem:[#allocation2 + $0x90] sm:$0xf]
        %v7909 = vld [vmem:[#allocation2 + $0x94] sm:$0xf]
        %v7910 = vld [vmem:[#allocation2 + $0x9c] sm:$0xf]
        %v7911 = vld [vmem:[#allocation2 + $0xa0] sm:$0xf]
        %v7912 = vld [vmem:[#allocation2 + $0xa8] sm:$0xf]
        %v7913 = vld [vmem:[#allocation2 + $0xac] sm:$0xf]
        %v7914 = vld [vmem:[#allocation2 + $0xb4] sm:$0xf]
        %v7915 = vld [vmem:[#allocation2 + $0xb8] sm:$0xf]
        %v7917 = vpack.i.b16 %v7882, %v7882
        %v7919 = vlaneseq
        %v7920 = vshrl.u32 %v7919, 7
        %v7921 = vsub.s32 0, %v7920
        %v7922 = vrot.slane %v7917, %v7921
        %v7924 = vunpack.c.l.b16 %v7922
        %v7925 = vpack.c.b16 %v7924, %v7924
        %v7927 = vmul.bf16 %v7884, %v7925
        %v7928 = vmul.bf16 %v7885, %v7925
        %v7929 = vmul.bf16 %v7886, %v7925
        %v7930 = vmul.bf16 %v7887, %v7925
        %v7931 = vmul.bf16 %v7888, %v7925
        %v7932 = vmul.bf16 %v7889, %v7925
        %v7933 = vmul.bf16 %v7890, %v7925
        %v7934 = vmul.bf16 %v7891, %v7925
        %v7935 = vmul.bf16 %v7892, %v7925
        %v7936 = vmul.bf16 %v7893, %v7925
        %v7937 = vmul.bf16 %v7894, %v7925
        %v7938 = vmul.bf16 %v7895, %v7925
        %v7939 = vmul.bf16 %v7896, %v7925
        %v7940 = vmul.bf16 %v7897, %v7925
        %v7941 = vmul.bf16 %v7898, %v7925
        %v7942 = vmul.bf16 %v7899, %v7925
        %v7943 = vmul.bf16 %v7900, %v7925
        %v7944 = vmul.bf16 %v7901, %v7925
        %v7945 = vmul.bf16 %v7902, %v7925
        %v7946 = vmul.bf16 %v7903, %v7925
        %v7947 = vmul.bf16 %v7904, %v7925
        %v7948 = vmul.bf16 %v7905, %v7925
        %v7949 = vmul.bf16 %v7906, %v7925
        %v7950 = vmul.bf16 %v7907, %v7925
        %v7951 = vmul.bf16 %v7908, %v7925
        %v7952 = vmul.bf16 %v7909, %v7925
        %v7953 = vmul.bf16 %v7910, %v7925
        %v7954 = vmul.bf16 %v7911, %v7925
        %v7955 = vmul.bf16 %v7912, %v7925
        %v7956 = vmul.bf16 %v7913, %v7925
        %v7957 = vmul.bf16 %v7914, %v7925
        %v7958 = vmul.bf16 %v7915, %v7925
        %v7959 = vunpack.c.l.bf16 %v7927
        %v7960 = vunpack.c.l.bf16 %v7928
        %v7961 = vunpack.c.l.bf16 %v7929
        %v7962 = vunpack.c.l.bf16 %v7930
        %v7963 = vunpack.c.l.bf16 %v7931
        %v7964 = vunpack.c.l.bf16 %v7932
        %v7965 = vunpack.c.l.bf16 %v7933
        %v7966 = vunpack.c.l.bf16 %v7934
        %v7967 = vunpack.c.l.bf16 %v7935
        %v7968 = vunpack.c.l.bf16 %v7936
        %v7969 = vunpack.c.l.bf16 %v7937
        %v7970 = vunpack.c.l.bf16 %v7938
        %v7971 = vunpack.c.l.bf16 %v7939
        %v7972 = vunpack.c.l.bf16 %v7940
        %v7973 = vunpack.c.l.bf16 %v7941
        %v7974 = vunpack.c.l.bf16 %v7942
        %v7975 = vunpack.c.l.bf16 %v7943
        %v7976 = vunpack.c.l.bf16 %v7944
        %v7977 = vunpack.c.l.bf16 %v7945
        %v7978 = vunpack.c.l.bf16 %v7946
        %v7979 = vunpack.c.l.bf16 %v7947
        %v7980 = vunpack.c.l.bf16 %v7948
        %v7981 = vunpack.c.l.bf16 %v7949
        %v7982 = vunpack.c.l.bf16 %v7950
        %v7983 = vunpack.c.l.bf16 %v7951
        %v7984 = vunpack.c.l.bf16 %v7952
        %v7985 = vunpack.c.l.bf16 %v7953
        %v7986 = vunpack.c.l.bf16 %v7954
        %v7987 = vunpack.c.l.bf16 %v7955
        %v7988 = vunpack.c.l.bf16 %v7956
        %v7989 = vunpack.c.l.bf16 %v7957
        %v7990 = vunpack.c.l.bf16 %v7958
        %v7991 = vld [vmem:[#allocation2 + $0x8] sm:$0x1]
        %v7992 = vld [vmem:[#allocation2 + $0x14] sm:$0x1]
        %v7993 = vld [vmem:[#allocation2 + $0x20] sm:$0x1]
        %v7994 = vld [vmem:[#allocation2 + $0x2c] sm:$0x1]
        %v7995 = vld [vmem:[#allocation2 + $0x38] sm:$0x1]
        %v7996 = vld [vmem:[#allocation2 + $0x44] sm:$0x1]
        %v7997 = vld [vmem:[#allocation2 + $0x50] sm:$0x1]
        %v7998 = vld [vmem:[#allocation2 + $0x5c] sm:$0x1]
        %v7999 = vld [vmem:[#allocation2 + $0x68] sm:$0x1]
        %v8000 = vld [vmem:[#allocation2 + $0x74] sm:$0x1]
        %v8001 = vld [vmem:[#allocation2 + $0x80] sm:$0x1]
        %v8002 = vld [vmem:[#allocation2 + $0x8c] sm:$0x1]
        %v8003 = vld [vmem:[#allocation2 + $0x98] sm:$0x1]
        %v8004 = vld [vmem:[#allocation2 + $0xa4] sm:$0x1]
        %v8005 = vld [vmem:[#allocation2 + $0xb0] sm:$0x1]
        %v8006 = vld [vmem:[#allocation2 + $0xbc] sm:$0x1]
        %v8007 = vshrl.u32 %v7882, 16
        %v8008 = vpack.i.b16 %v8007, %v8007
        %v8010 = vlaneseq
        %v8011 = vshrl.u32 %v8010, 7
        %v8012 = vsub.s32 0, %v8011
        %v8013 = vrot.slane %v8008, %v8012
        %v8015 = vunpack.c.l.b16 %v8013
        %v8016 = vpack.c.b16 %v8015, %v8015
        %v8018 = vmul.bf16 %v7884, %v8016
        %v8019 = vmul.bf16 %v7885, %v8016
        %v8020 = vmul.bf16 %v7991, %v8016
        %v8021 = vmul.bf16 %v7886, %v8016
        %v8022 = vmul.bf16 %v7887, %v8016
        %v8023 = vmul.bf16 %v7992, %v8016
        %v8024 = vmul.bf16 %v7888, %v8016
        %v8025 = vmul.bf16 %v7889, %v8016
        %v8026 = vmul.bf16 %v7993, %v8016
        %v8027 = vmul.bf16 %v7890, %v8016
        %v8028 = vmul.bf16 %v7891, %v8016
        %v8029 = vmul.bf16 %v7994, %v8016
        %v8030 = vmul.bf16 %v7892, %v8016
        %v8031 = vmul.bf16 %v7893, %v8016
        %v8032 = vmul.bf16 %v7995, %v8016
        %v8033 = vmul.bf16 %v7894, %v8016
        %v8034 = vmul.bf16 %v7895, %v8016
        %v8035 = vmul.bf16 %v7996, %v8016
        %v8036 = vmul.bf16 %v7896, %v8016
        %v8037 = vmul.bf16 %v7897, %v8016
        %v8038 = vmul.bf16 %v7997, %v8016
        %v8039 = vmul.bf16 %v7898, %v8016
        %v8040 = vmul.bf16 %v7899, %v8016
        %v8041 = vmul.bf16 %v7998, %v8016
        %v8042 = vmul.bf16 %v7900, %v8016
        %v8043 = vmul.bf16 %v7901, %v8016
        %v8044 = vmul.bf16 %v7999, %v8016
        %v8045 = vmul.bf16 %v7902, %v8016
        %v8046 = vmul.bf16 %v7903, %v8016
        %v8047 = vmul.bf16 %v8000, %v8016
        %v8048 = vmul.bf16 %v7904, %v8016
        %v8049 = vmul.bf16 %v7905, %v8016
        %v8050 = vmul.bf16 %v8001, %v8016
        %v8051 = vmul.bf16 %v7906, %v8016
        %v8052 = vmul.bf16 %v7907, %v8016
        %v8053 = vmul.bf16 %v8002, %v8016
        %v8054 = vmul.bf16 %v7908, %v8016
        %v8055 = vmul.bf16 %v7909, %v8016
        %v8056 = vmul.bf16 %v8003, %v8016
        %v8057 = vmul.bf16 %v7910, %v8016
        %v8058 = vmul.bf16 %v7911, %v8016
        %v8059 = vmul.bf16 %v8004, %v8016
        %v8060 = vmul.bf16 %v7912, %v8016
        %v8061 = vmul.bf16 %v7913, %v8016
        %v8062 = vmul.bf16 %v8005, %v8016
        %v8063 = vmul.bf16 %v7914, %v8016
        %v8064 = vmul.bf16 %v7915, %v8016
        %v8065 = vmul.bf16 %v8006, %v8016
        %v8066 = vunpack.c.l.bf16 %v8018
        %v8067 = vunpack.c.l.bf16 %v8019
        %v8068 = vunpack.c.l.bf16 %v8020
        %v8069 = vunpack.c.l.bf16 %v8021
        %v8070 = vunpack.c.l.bf16 %v8022
        %v8071 = vunpack.c.l.bf16 %v8023
        %v8072 = vunpack.c.l.bf16 %v8024
        %v8073 = vunpack.c.l.bf16 %v8025
        %v8074 = vunpack.c.l.bf16 %v8026
        %v8075 = vunpack.c.l.bf16 %v8027
        %v8076 = vunpack.c.l.bf16 %v8028
        %v8077 = vunpack.c.l.bf16 %v8029
        %v8078 = vunpack.c.l.bf16 %v8030
        %v8079 = vunpack.c.l.bf16 %v8031
        %v8080 = vunpack.c.l.bf16 %v8032
        %v8081 = vunpack.c.l.bf16 %v8033
        %v8082 = vunpack.c.l.bf16 %v8034
        %v8083 = vunpack.c.l.bf16 %v8035
        %v8084 = vunpack.c.l.bf16 %v8036
        %v8085 = vunpack.c.l.bf16 %v8037
        %v8086 = vunpack.c.l.bf16 %v8038
        %v8087 = vunpack.c.l.bf16 %v8039
        %v8088 = vunpack.c.l.bf16 %v8040
        %v8089 = vunpack.c.l.bf16 %v8041
        %v8090 = vunpack.c.l.bf16 %v8042
        %v8091 = vunpack.c.l.bf16 %v8043
        %v8092 = vunpack.c.l.bf16 %v8044
        %v8093 = vunpack.c.l.bf16 %v8045
        %v8094 = vunpack.c.l.bf16 %v8046
        %v8095 = vunpack.c.l.bf16 %v8047
        %v8096 = vunpack.c.l.bf16 %v8048
        %v8097 = vunpack.c.l.bf16 %v8049
        %v8098 = vunpack.c.l.bf16 %v8050
        %v8099 = vunpack.c.l.bf16 %v8051
        %v8100 = vunpack.c.l.bf16 %v8052
        %v8101 = vunpack.c.l.bf16 %v8053
        %v8102 = vunpack.c.l.bf16 %v8054
        %v8103 = vunpack.c.l.bf16 %v8055
        %v8104 = vunpack.c.l.bf16 %v8056
        %v8105 = vunpack.c.l.bf16 %v8057
        %v8106 = vunpack.c.l.bf16 %v8058
        %v8107 = vunpack.c.l.bf16 %v8059
        %v8108 = vunpack.c.l.bf16 %v8060
        %v8109 = vunpack.c.l.bf16 %v8061
        %v8110 = vunpack.c.l.bf16 %v8062
        %v8111 = vunpack.c.l.bf16 %v8063
        %v8112 = vunpack.c.l.bf16 %v8064
        %v8113 = vunpack.c.l.bf16 %v8065
        %v8162 = vrot.slane %v8066, 1
        %v8163 = vrot.slane %v8067, 1
        %v8164 = vsel %vm1660, %v8162, %v8163
        %v8165 = vrot.slane %v8068, 1
        %v8166 = vsel %vm1660, %v8163, %v8165
        %v8167 = vrot.slane %v8069, 1
        %v8168 = vrot.slane %v8070, 1
        %v8169 = vsel %vm1660, %v8167, %v8168
        %v8170 = vrot.slane %v8071, 1
        %v8171 = vsel %vm1660, %v8168, %v8170
        %v8172 = vrot.slane %v8072, 1
        %v8173 = vrot.slane %v8073, 1
        %v8174 = vsel %vm1660, %v8172, %v8173
        %v8175 = vrot.slane %v8074, 1
        %v8176 = vsel %vm1660, %v8173, %v8175
        %v8177 = vrot.slane %v8075, 1
        %v8178 = vrot.slane %v8076, 1
        %v8179 = vsel %vm1660, %v8177, %v8178
        %v8180 = vrot.slane %v8077, 1
        %v8181 = vsel %vm1660, %v8178, %v8180
        %v8182 = vrot.slane %v8078, 1
        %v8183 = vrot.slane %v8079, 1
        %v8184 = vsel %vm1660, %v8182, %v8183
        %v8185 = vrot.slane %v8080, 1
        %v8186 = vsel %vm1660, %v8183, %v8185
        %v8187 = vrot.slane %v8081, 1
        %v8188 = vrot.slane %v8082, 1
        %v8189 = vsel %vm1660, %v8187, %v8188
        %v8190 = vrot.slane %v8083, 1
        %v8191 = vsel %vm1660, %v8188, %v8190
        %v8192 = vrot.slane %v8084, 1
        %v8193 = vrot.slane %v8085, 1
        %v8194 = vsel %vm1660, %v8192, %v8193
        %v8195 = vrot.slane %v8086, 1
        %v8196 = vsel %vm1660, %v8193, %v8195
        %v8197 = vrot.slane %v8087, 1
        %v8198 = vrot.slane %v8088, 1
        %v8199 = vsel %vm1660, %v8197, %v8198
        %v8200 = vrot.slane %v8089, 1
        %v8201 = vsel %vm1660, %v8198, %v8200
        %v8202 = vrot.slane %v8090, 1
        %v8203 = vrot.slane %v8091, 1
        %v8204 = vsel %vm1660, %v8202, %v8203
        %v8205 = vrot.slane %v8092, 1
        %v8206 = vsel %vm1660, %v8203, %v8205
        %v8207 = vrot.slane %v8093, 1
        %v8208 = vrot.slane %v8094, 1
        %v8209 = vsel %vm1660, %v8207, %v8208
        %v8210 = vrot.slane %v8095, 1
        %v8211 = vsel %vm1660, %v8208, %v8210
        %v8212 = vrot.slane %v8096, 1
        %v8213 = vrot.slane %v8097, 1
        %v8214 = vsel %vm1660, %v8212, %v8213
        %v8215 = vrot.slane %v8098, 1
        %v8216 = vsel %vm1660, %v8213, %v8215
        %v8217 = vrot.slane %v8099, 1
        %v8218 = vrot.slane %v8100, 1
        %v8219 = vsel %vm1660, %v8217, %v8218
        %v8220 = vrot.slane %v8101, 1
        %v8221 = vsel %vm1660, %v8218, %v8220
        %v8222 = vrot.slane %v8102, 1
        %v8223 = vrot.slane %v8103, 1
        %v8224 = vsel %vm1660, %v8222, %v8223
        %v8225 = vrot.slane %v8104, 1
        %v8226 = vsel %vm1660, %v8223, %v8225
        %v8227 = vrot.slane %v8105, 1
        %v8228 = vrot.slane %v8106, 1
        %v8229 = vsel %vm1660, %v8227, %v8228
        %v8230 = vrot.slane %v8107, 1
        %v8231 = vsel %vm1660, %v8228, %v8230
        %v8232 = vrot.slane %v8108, 1
        %v8233 = vrot.slane %v8109, 1
        %v8234 = vsel %vm1660, %v8232, %v8233
        %v8235 = vrot.slane %v8110, 1
        %v8236 = vsel %vm1660, %v8233, %v8235
        %v8237 = vrot.slane %v8111, 1
        %v8238 = vrot.slane %v8112, 1
        %v8239 = vsel %vm1660, %v8237, %v8238
        %v8240 = vrot.slane %v8113, 1
        %v8241 = vsel %vm1660, %v8238, %v8240
        %v8274 = vadd.f32 %v7959, %v8164
        %v8275 = vadd.f32 %v7960, %v8166
        %v8276 = vadd.f32 %v7961, %v8169
        %v8277 = vadd.f32 %v7962, %v8171
        %v8278 = vadd.f32 %v7963, %v8174
        %v8279 = vadd.f32 %v7964, %v8176
        %v8280 = vadd.f32 %v7965, %v8179
        %v8281 = vadd.f32 %v7966, %v8181
        %v8282 = vadd.f32 %v7967, %v8184
        %v8283 = vadd.f32 %v7968, %v8186
        %v8284 = vadd.f32 %v7969, %v8189
        %v8285 = vadd.f32 %v7970, %v8191
        %v8286 = vadd.f32 %v7971, %v8194
        %v8287 = vadd.f32 %v7972, %v8196
        %v8288 = vadd.f32 %v7973, %v8199
        %v8289 = vadd.f32 %v7974, %v8201
        %v8290 = vadd.f32 %v7975, %v8204
        %v8291 = vadd.f32 %v7976, %v8206
        %v8292 = vadd.f32 %v7977, %v8209
        %v8293 = vadd.f32 %v7978, %v8211
        %v8294 = vadd.f32 %v7979, %v8214
        %v8295 = vadd.f32 %v7980, %v8216
        %v8296 = vadd.f32 %v7981, %v8219
        %v8297 = vadd.f32 %v7982, %v8221
        %v8298 = vadd.f32 %v7983, %v8224
        %v8299 = vadd.f32 %v7984, %v8226
        %v8300 = vadd.f32 %v7985, %v8229
        %v8301 = vadd.f32 %v7986, %v8231
        %v8302 = vadd.f32 %v7987, %v8234
        %v8303 = vadd.f32 %v7988, %v8236
        %v8304 = vadd.f32 %v7989, %v8239
        %v8305 = vadd.f32 %v7990, %v8241
        %v8306 = vld [vmem:[#allocation2] sm:$0xe]
        %v8307 = vld [vmem:[#allocation2 + $0xc] sm:$0xe]
        %v8308 = vld [vmem:[#allocation2 + $0x18] sm:$0xe]
        %v8309 = vld [vmem:[#allocation2 + $0x24] sm:$0xe]
        %v8310 = vld [vmem:[#allocation2 + $0x30] sm:$0xe]
        %v8311 = vld [vmem:[#allocation2 + $0x3c] sm:$0xe]
        %v8312 = vld [vmem:[#allocation2 + $0x48] sm:$0xe]
        %v8313 = vld [vmem:[#allocation2 + $0x54] sm:$0xe]
        %v8314 = vld [vmem:[#allocation2 + $0x60] sm:$0xe]
        %v8315 = vld [vmem:[#allocation2 + $0x6c] sm:$0xe]
        %v8316 = vld [vmem:[#allocation2 + $0x78] sm:$0xe]
        %v8317 = vld [vmem:[#allocation2 + $0x84] sm:$0xe]
        %v8318 = vld [vmem:[#allocation2 + $0x90] sm:$0xe]
        %v8319 = vld [vmem:[#allocation2 + $0x9c] sm:$0xe]
        %v8320 = vld [vmem:[#allocation2 + $0xa8] sm:$0xe]
        %v8321 = vld [vmem:[#allocation2 + $0xb4] sm:$0xe]
        %v8322 = vlaneseq
        %v8323 = vshrl.u32 %v8322, 7
        %v8324 = vsub.s32 1, %v8323
        %v8325 = vrot.slane %v7917, %v8324
        %v8327 = vunpack.c.l.b16 %v8325
        %v8328 = vpack.c.b16 %v8327, %v8327
        %v8330 = vmul.bf16 %v8306, %v8328
        %v8331 = vmul.bf16 %v7885, %v8328
        %v8332 = vmul.bf16 %v7991, %v8328
        %v8333 = vmul.bf16 %v8307, %v8328
        %v8334 = vmul.bf16 %v7887, %v8328
        %v8335 = vmul.bf16 %v7992, %v8328
        %v8336 = vmul.bf16 %v8308, %v8328
        %v8337 = vmul.bf16 %v7889, %v8328
        %v8338 = vmul.bf16 %v7993, %v8328
        %v8339 = vmul.bf16 %v8309, %v8328
        %v8340 = vmul.bf16 %v7891, %v8328
        %v8341 = vmul.bf16 %v7994, %v8328
        %v8342 = vmul.bf16 %v8310, %v8328
        %v8343 = vmul.bf16 %v7893, %v8328
        %v8344 = vmul.bf16 %v7995, %v8328
        %v8345 = vmul.bf16 %v8311, %v8328
        %v8346 = vmul.bf16 %v7895, %v8328
        %v8347 = vmul.bf16 %v7996, %v8328
        %v8348 = vmul.bf16 %v8312, %v8328
        %v8349 = vmul.bf16 %v7897, %v8328
        %v8350 = vmul.bf16 %v7997, %v8328
        %v8351 = vmul.bf16 %v8313, %v8328
        %v8352 = vmul.bf16 %v7899, %v8328
        %v8353 = vmul.bf16 %v7998, %v8328
        %v8354 = vmul.bf16 %v8314, %v8328
        %v8355 = vmul.bf16 %v7901, %v8328
        %v8356 = vmul.bf16 %v7999, %v8328
        %v8357 = vmul.bf16 %v8315, %v8328
        %v8358 = vmul.bf16 %v7903, %v8328
        %v8359 = vmul.bf16 %v8000, %v8328
        %v8360 = vmul.bf16 %v8316, %v8328
        %v8361 = vmul.bf16 %v7905, %v8328
        %v8362 = vmul.bf16 %v8001, %v8328
        %v8363 = vmul.bf16 %v8317, %v8328
        %v8364 = vmul.bf16 %v7907, %v8328
        %v8365 = vmul.bf16 %v8002, %v8328
        %v8366 = vmul.bf16 %v8318, %v8328
        %v8367 = vmul.bf16 %v7909, %v8328
        %v8368 = vmul.bf16 %v8003, %v8328
        %v8369 = vmul.bf16 %v8319, %v8328
        %v8370 = vmul.bf16 %v7911, %v8328
        %v8371 = vmul.bf16 %v8004, %v8328
        %v8372 = vmul.bf16 %v8320, %v8328
        %v8373 = vmul.bf16 %v7913, %v8328
        %v8374 = vmul.bf16 %v8005, %v8328
        %v8375 = vmul.bf16 %v8321, %v8328
        %v8376 = vmul.bf16 %v7915, %v8328
        %v8377 = vmul.bf16 %v8006, %v8328
        %v8378 = vunpack.c.l.bf16 %v8330
        %v8379 = vunpack.c.l.bf16 %v8331
        %v8380 = vunpack.c.l.bf16 %v8332
        %v8381 = vunpack.c.l.bf16 %v8333
        %v8382 = vunpack.c.l.bf16 %v8334
        %v8383 = vunpack.c.l.bf16 %v8335
        %v8384 = vunpack.c.l.bf16 %v8336
        %v8385 = vunpack.c.l.bf16 %v8337
        %v8386 = vunpack.c.l.bf16 %v8338
        %v8387 = vunpack.c.l.bf16 %v8339
        %v8388 = vunpack.c.l.bf16 %v8340
        %v8389 = vunpack.c.l.bf16 %v8341
        %v8390 = vunpack.c.l.bf16 %v8342
        %v8391 = vunpack.c.l.bf16 %v8343
        %v8392 = vunpack.c.l.bf16 %v8344
        %v8393 = vunpack.c.l.bf16 %v8345
        %v8394 = vunpack.c.l.bf16 %v8346
        %v8395 = vunpack.c.l.bf16 %v8347
        %v8396 = vunpack.c.l.bf16 %v8348
        %v8397 = vunpack.c.l.bf16 %v8349
        %v8398 = vunpack.c.l.bf16 %v8350
        %v8399 = vunpack.c.l.bf16 %v8351
        %v8400 = vunpack.c.l.bf16 %v8352
        %v8401 = vunpack.c.l.bf16 %v8353
        %v8402 = vunpack.c.l.bf16 %v8354
        %v8403 = vunpack.c.l.bf16 %v8355
        %v8404 = vunpack.c.l.bf16 %v8356
        %v8405 = vunpack.c.l.bf16 %v8357
        %v8406 = vunpack.c.l.bf16 %v8358
        %v8407 = vunpack.c.l.bf16 %v8359
        %v8408 = vunpack.c.l.bf16 %v8360
        %v8409 = vunpack.c.l.bf16 %v8361
        %v8410 = vunpack.c.l.bf16 %v8362
        %v8411 = vunpack.c.l.bf16 %v8363
        %v8412 = vunpack.c.l.bf16 %v8364
        %v8413 = vunpack.c.l.bf16 %v8365
        %v8414 = vunpack.c.l.bf16 %v8366
        %v8415 = vunpack.c.l.bf16 %v8367
        %v8416 = vunpack.c.l.bf16 %v8368
        %v8417 = vunpack.c.l.bf16 %v8369
        %v8418 = vunpack.c.l.bf16 %v8370
        %v8419 = vunpack.c.l.bf16 %v8371
        %v8420 = vunpack.c.l.bf16 %v8372
        %v8421 = vunpack.c.l.bf16 %v8373
        %v8422 = vunpack.c.l.bf16 %v8374
        %v8423 = vunpack.c.l.bf16 %v8375
        %v8424 = vunpack.c.l.bf16 %v8376
        %v8425 = vunpack.c.l.bf16 %v8377
        %v8474 = vrot.slane %v8378, 2
        %v8475 = vrot.slane %v8379, 2
        %v8476 = vsel %vm1973, %v8474, %v8475
        %v8477 = vrot.slane %v8380, 2
        %v8478 = vsel %vm1973, %v8475, %v8477
        %v8479 = vrot.slane %v8381, 2
        %v8480 = vrot.slane %v8382, 2
        %v8481 = vsel %vm1973, %v8479, %v8480
        %v8482 = vrot.slane %v8383, 2
        %v8483 = vsel %vm1973, %v8480, %v8482
        %v8484 = vrot.slane %v8384, 2
        %v8485 = vrot.slane %v8385, 2
        %v8486 = vsel %vm1973, %v8484, %v8485
        %v8487 = vrot.slane %v8386, 2
        %v8488 = vsel %vm1973, %v8485, %v8487
        %v8489 = vrot.slane %v8387, 2
        %v8490 = vrot.slane %v8388, 2
        %v8491 = vsel %vm1973, %v8489, %v8490
        %v8492 = vrot.slane %v8389, 2
        %v8493 = vsel %vm1973, %v8490, %v8492
        %v8494 = vrot.slane %v8390, 2
        %v8495 = vrot.slane %v8391, 2
        %v8496 = vsel %vm1973, %v8494, %v8495
        %v8497 = vrot.slane %v8392, 2
        %v8498 = vsel %vm1973, %v8495, %v8497
        %v8499 = vrot.slane %v8393, 2
        %v8500 = vrot.slane %v8394, 2
        %v8501 = vsel %vm1973, %v8499, %v8500
        %v8502 = vrot.slane %v8395, 2
        %v8503 = vsel %vm1973, %v8500, %v8502
        %v8504 = vrot.slane %v8396, 2
        %v8505 = vrot.slane %v8397, 2
        %v8506 = vsel %vm1973, %v8504, %v8505
        %v8507 = vrot.slane %v8398, 2
        %v8508 = vsel %vm1973, %v8505, %v8507
        %v8509 = vrot.slane %v8399, 2
        %v8510 = vrot.slane %v8400, 2
        %v8511 = vsel %vm1973, %v8509, %v8510
        %v8512 = vrot.slane %v8401, 2
        %v8513 = vsel %vm1973, %v8510, %v8512
        %v8514 = vrot.slane %v8402, 2
        %v8515 = vrot.slane %v8403, 2
        %v8516 = vsel %vm1973, %v8514, %v8515
        %v8517 = vrot.slane %v8404, 2
        %v8518 = vsel %vm1973, %v8515, %v8517
        %v8519 = vrot.slane %v8405, 2
        %v8520 = vrot.slane %v8406, 2
        %v8521 = vsel %vm1973, %v8519, %v8520
        %v8522 = vrot.slane %v8407, 2
        %v8523 = vsel %vm1973, %v8520, %v8522
        %v8524 = vrot.slane %v8408, 2
        %v8525 = vrot.slane %v8409, 2
        %v8526 = vsel %vm1973, %v8524, %v8525
        %v8527 = vrot.slane %v8410, 2
        %v8528 = vsel %vm1973, %v8525, %v8527
        %v8529 = vrot.slane %v8411, 2
        %v8530 = vrot.slane %v8412, 2
        %v8531 = vsel %vm1973, %v8529, %v8530
        %v8532 = vrot.slane %v8413, 2
        %v8533 = vsel %vm1973, %v8530, %v8532
        %v8534 = vrot.slane %v8414, 2
        %v8535 = vrot.slane %v8415, 2
        %v8536 = vsel %vm1973, %v8534, %v8535
        %v8537 = vrot.slane %v8416, 2
        %v8538 = vsel %vm1973, %v8535, %v8537
        %v8539 = vrot.slane %v8417, 2
        %v8540 = vrot.slane %v8418, 2
        %v8541 = vsel %vm1973, %v8539, %v8540
        %v8542 = vrot.slane %v8419, 2
        %v8543 = vsel %vm1973, %v8540, %v8542
        %v8544 = vrot.slane %v8420, 2
        %v8545 = vrot.slane %v8421, 2
        %v8546 = vsel %vm1973, %v8544, %v8545
        %v8547 = vrot.slane %v8422, 2
        %v8548 = vsel %vm1973, %v8545, %v8547
        %v8549 = vrot.slane %v8423, 2
        %v8550 = vrot.slane %v8424, 2
        %v8551 = vsel %vm1973, %v8549, %v8550
        %v8552 = vrot.slane %v8425, 2
        %v8553 = vsel %vm1973, %v8550, %v8552
        %v8586 = vadd.f32 %v8274, %v8476
        %v8587 = vadd.f32 %v8275, %v8478
        %v8588 = vadd.f32 %v8276, %v8481
        %v8589 = vadd.f32 %v8277, %v8483
        %v8590 = vadd.f32 %v8278, %v8486
        %v8591 = vadd.f32 %v8279, %v8488
        %v8592 = vadd.f32 %v8280, %v8491
        %v8593 = vadd.f32 %v8281, %v8493
        %v8594 = vadd.f32 %v8282, %v8496
        %v8595 = vadd.f32 %v8283, %v8498
        %v8596 = vadd.f32 %v8284, %v8501
        %v8597 = vadd.f32 %v8285, %v8503
        %v8598 = vadd.f32 %v8286, %v8506
        %v8599 = vadd.f32 %v8287, %v8508
        %v8600 = vadd.f32 %v8288, %v8511
        %v8601 = vadd.f32 %v8289, %v8513
        %v8602 = vadd.f32 %v8290, %v8516
        %v8603 = vadd.f32 %v8291, %v8518
        %v8604 = vadd.f32 %v8292, %v8521
        %v8605 = vadd.f32 %v8293, %v8523
        %v8606 = vadd.f32 %v8294, %v8526
        %v8607 = vadd.f32 %v8295, %v8528
        %v8608 = vadd.f32 %v8296, %v8531
        %v8609 = vadd.f32 %v8297, %v8533
        %v8610 = vadd.f32 %v8298, %v8536
        %v8611 = vadd.f32 %v8299, %v8538
        %v8612 = vadd.f32 %v8300, %v8541
        %v8613 = vadd.f32 %v8301, %v8543
        %v8614 = vadd.f32 %v8302, %v8546
        %v8615 = vadd.f32 %v8303, %v8548
        %v8616 = vadd.f32 %v8304, %v8551
        %v8617 = vadd.f32 %v8305, %v8553
        %v8618 = vld [vmem:[%s682] sm:$0xf]
        %v8619 = vld [vmem:[%s682 + $0x4] sm:$0xf]
        %v8620 = vld [vmem:[%s682 + $0xc] sm:$0xf]
        %v8621 = vld [vmem:[%s682 + $0x10] sm:$0xf]
        %v8622 = vld [vmem:[%s682 + $0x18] sm:$0xf]
        %v8623 = vld [vmem:[%s682 + $0x1c] sm:$0xf]
        %v8624 = vld [vmem:[%s682 + $0x24] sm:$0xf]
        %v8625 = vld [vmem:[%s682 + $0x28] sm:$0xf]
        %v8626 = vld [vmem:[%s682 + $0x30] sm:$0xf]
        %v8627 = vld [vmem:[%s682 + $0x34] sm:$0xf]
        %v8628 = vld [vmem:[%s682 + $0x3c] sm:$0xf]
        %v8629 = vld [vmem:[%s682 + $0x40] sm:$0xf]
        %v8630 = vld [vmem:[%s682 + $0x48] sm:$0xf]
        %v8631 = vld [vmem:[%s682 + $0x4c] sm:$0xf]
        %v8632 = vld [vmem:[%s682 + $0x54] sm:$0xf]
        %v8633 = vld [vmem:[%s682 + $0x58] sm:$0xf]
        %v8634 = vld [vmem:[%s682 + $0x60] sm:$0xf]
        %v8635 = vld [vmem:[%s682 + $0x64] sm:$0xf]
        %v8636 = vld [vmem:[%s682 + $0x6c] sm:$0xf]
        %v8637 = vld [vmem:[%s682 + $0x70] sm:$0xf]
        %v8638 = vld [vmem:[%s682 + $0x78] sm:$0xf]
        %v8639 = vld [vmem:[%s682 + $0x7c] sm:$0xf]
        %v8640 = vld [vmem:[%s682 + $0x84] sm:$0xf]
        %v8641 = vld [vmem:[%s682 + $0x88] sm:$0xf]
        %v8642 = vld [vmem:[%s682 + $0x90] sm:$0xf]
        %v8643 = vld [vmem:[%s682 + $0x94] sm:$0xf]
        %v8644 = vld [vmem:[%s682 + $0x9c] sm:$0xf]
        %v8645 = vld [vmem:[%s682 + $0xa0] sm:$0xf]
        %v8646 = vld [vmem:[%s682 + $0xa8] sm:$0xf]
        %v8647 = vld [vmem:[%s682 + $0xac] sm:$0xf]
        %v8648 = vld [vmem:[%s682 + $0xb4] sm:$0xf]
        %v8649 = vld [vmem:[%s682 + $0xb8] sm:$0xf]
        %v8650 = vlaneseq
        %v8651 = vshrl.u32 %v8650, 7
        %v8652 = vsub.s32 1, %v8651
        %v8653 = vrot.slane %v8008, %v8652
        %v8655 = vunpack.c.l.b16 %v8653
        %v8656 = vpack.c.b16 %v8655, %v8655
        %v8658 = vmul.bf16 %v8618, %v8656
        %v8659 = vmul.bf16 %v8619, %v8656
        %v8660 = vmul.bf16 %v8620, %v8656
        %v8661 = vmul.bf16 %v8621, %v8656
        %v8662 = vmul.bf16 %v8622, %v8656
        %v8663 = vmul.bf16 %v8623, %v8656
        %v8664 = vmul.bf16 %v8624, %v8656
        %v8665 = vmul.bf16 %v8625, %v8656
        %v8666 = vmul.bf16 %v8626, %v8656
        %v8667 = vmul.bf16 %v8627, %v8656
        %v8668 = vmul.bf16 %v8628, %v8656
        %v8669 = vmul.bf16 %v8629, %v8656
        %v8670 = vmul.bf16 %v8630, %v8656
        %v8671 = vmul.bf16 %v8631, %v8656
        %v8672 = vmul.bf16 %v8632, %v8656
        %v8673 = vmul.bf16 %v8633, %v8656
        %v8674 = vmul.bf16 %v8634, %v8656
        %v8675 = vmul.bf16 %v8635, %v8656
        %v8676 = vmul.bf16 %v8636, %v8656
        %v8677 = vmul.bf16 %v8637, %v8656
        %v8678 = vmul.bf16 %v8638, %v8656
        %v8679 = vmul.bf16 %v8639, %v8656
        %v8680 = vmul.bf16 %v8640, %v8656
        %v8681 = vmul.bf16 %v8641, %v8656
        %v8682 = vmul.bf16 %v8642, %v8656
        %v8683 = vmul.bf16 %v8643, %v8656
        %v8684 = vmul.bf16 %v8644, %v8656
        %v8685 = vmul.bf16 %v8645, %v8656
        %v8686 = vmul.bf16 %v8646, %v8656
        %v8687 = vmul.bf16 %v8647, %v8656
        %v8688 = vmul.bf16 %v8648, %v8656
        %v8689 = vmul.bf16 %v8649, %v8656
        %v8690 = vunpack.c.l.bf16 %v8658
        %v8691 = vunpack.c.l.bf16 %v8659
        %v8692 = vunpack.c.l.bf16 %v8660
        %v8693 = vunpack.c.l.bf16 %v8661
        %v8694 = vunpack.c.l.bf16 %v8662
        %v8695 = vunpack.c.l.bf16 %v8663
        %v8696 = vunpack.c.l.bf16 %v8664
        %v8697 = vunpack.c.l.bf16 %v8665
        %v8698 = vunpack.c.l.bf16 %v8666
        %v8699 = vunpack.c.l.bf16 %v8667
        %v8700 = vunpack.c.l.bf16 %v8668
        %v8701 = vunpack.c.l.bf16 %v8669
        %v8702 = vunpack.c.l.bf16 %v8670
        %v8703 = vunpack.c.l.bf16 %v8671
        %v8704 = vunpack.c.l.bf16 %v8672
        %v8705 = vunpack.c.l.bf16 %v8673
        %v8706 = vunpack.c.l.bf16 %v8674
        %v8707 = vunpack.c.l.bf16 %v8675
        %v8708 = vunpack.c.l.bf16 %v8676
        %v8709 = vunpack.c.l.bf16 %v8677
        %v8710 = vunpack.c.l.bf16 %v8678
        %v8711 = vunpack.c.l.bf16 %v8679
        %v8712 = vunpack.c.l.bf16 %v8680
        %v8713 = vunpack.c.l.bf16 %v8681
        %v8714 = vunpack.c.l.bf16 %v8682
        %v8715 = vunpack.c.l.bf16 %v8683
        %v8716 = vunpack.c.l.bf16 %v8684
        %v8717 = vunpack.c.l.bf16 %v8685
        %v8718 = vunpack.c.l.bf16 %v8686
        %v8719 = vunpack.c.l.bf16 %v8687
        %v8720 = vunpack.c.l.bf16 %v8688
        %v8721 = vunpack.c.l.bf16 %v8689
        %v8722 = vadd.f32 %v8586, %v8690
        %v8723 = vadd.f32 %v8587, %v8691
        %v8724 = vadd.f32 %v8588, %v8692
        %v8725 = vadd.f32 %v8589, %v8693
        %v8726 = vadd.f32 %v8590, %v8694
        %v8727 = vadd.f32 %v8591, %v8695
        %v8728 = vadd.f32 %v8592, %v8696
        %v8729 = vadd.f32 %v8593, %v8697
        %v8730 = vadd.f32 %v8594, %v8698
        %v8731 = vadd.f32 %v8595, %v8699
        %v8732 = vadd.f32 %v8596, %v8700
        %v8733 = vadd.f32 %v8597, %v8701
        %v8734 = vadd.f32 %v8598, %v8702
        %v8735 = vadd.f32 %v8599, %v8703
        %v8736 = vadd.f32 %v8600, %v8704
        %v8737 = vadd.f32 %v8601, %v8705
        %v8738 = vadd.f32 %v8602, %v8706
        %v8739 = vadd.f32 %v8603, %v8707
        %v8740 = vadd.f32 %v8604, %v8708
        %v8741 = vadd.f32 %v8605, %v8709
        %v8742 = vadd.f32 %v8606, %v8710
        %v8743 = vadd.f32 %v8607, %v8711
        %v8744 = vadd.f32 %v8608, %v8712
        %v8745 = vadd.f32 %v8609, %v8713
        %v8746 = vadd.f32 %v8610, %v8714
        %v8747 = vadd.f32 %v8611, %v8715
        %v8748 = vadd.f32 %v8612, %v8716
        %v8749 = vadd.f32 %v8613, %v8717
        %v8750 = vadd.f32 %v8614, %v8718
        %v8751 = vadd.f32 %v8615, %v8719
        %v8752 = vadd.f32 %v8616, %v8720
        %v8753 = vadd.f32 %v8617, %v8721
        %v8754 = vld [vmem:[%s682 + $0x8] sm:$0x1]
        %v8755 = vld [vmem:[%s682 + $0x14] sm:$0x1]
        %v8756 = vld [vmem:[%s682 + $0x20] sm:$0x1]
        %v8757 = vld [vmem:[%s682 + $0x2c] sm:$0x1]
        %v8758 = vld [vmem:[%s682 + $0x38] sm:$0x1]
        %v8759 = vld [vmem:[%s682 + $0x44] sm:$0x1]
        %v8760 = vld [vmem:[%s682 + $0x50] sm:$0x1]
        %v8761 = vld [vmem:[%s682 + $0x5c] sm:$0x1]
        %v8762 = vld [vmem:[%s682 + $0x68] sm:$0x1]
        %v8763 = vld [vmem:[%s682 + $0x74] sm:$0x1]
        %v8764 = vld [vmem:[%s682 + $0x80] sm:$0x1]
        %v8765 = vld [vmem:[%s682 + $0x8c] sm:$0x1]
        %v8766 = vld [vmem:[%s682 + $0x98] sm:$0x1]
        %v8767 = vld [vmem:[%s682 + $0xa4] sm:$0x1]
        %v8768 = vld [vmem:[%s682 + $0xb0] sm:$0x1]
        %v8769 = vld [vmem:[%s682 + $0xbc] sm:$0x1]
        %v8770 = vlaneseq
        %v8771 = vshrl.u32 %v8770, 7
        %v8772 = vsub.s32 2, %v8771
        %v8773 = vrot.slane %v7917, %v8772
        %v8775 = vunpack.c.l.b16 %v8773
        %v8776 = vpack.c.b16 %v8775, %v8775
        %v8778 = vmul.bf16 %v8618, %v8776
        %v8779 = vmul.bf16 %v8619, %v8776
        %v8780 = vmul.bf16 %v8754, %v8776
        %v8781 = vmul.bf16 %v8620, %v8776
        %v8782 = vmul.bf16 %v8621, %v8776
        %v8783 = vmul.bf16 %v8755, %v8776
        %v8784 = vmul.bf16 %v8622, %v8776
        %v8785 = vmul.bf16 %v8623, %v8776
        %v8786 = vmul.bf16 %v8756, %v8776
        %v8787 = vmul.bf16 %v8624, %v8776
        %v8788 = vmul.bf16 %v8625, %v8776
        %v8789 = vmul.bf16 %v8757, %v8776
        %v8790 = vmul.bf16 %v8626, %v8776
        %v8791 = vmul.bf16 %v8627, %v8776
        %v8792 = vmul.bf16 %v8758, %v8776
        %v8793 = vmul.bf16 %v8628, %v8776
        %v8794 = vmul.bf16 %v8629, %v8776
        %v8795 = vmul.bf16 %v8759, %v8776
        %v8796 = vmul.bf16 %v8630, %v8776
        %v8797 = vmul.bf16 %v8631, %v8776
        %v8798 = vmul.bf16 %v8760, %v8776
        %v8799 = vmul.bf16 %v8632, %v8776
        %v8800 = vmul.bf16 %v8633, %v8776
        %v8801 = vmul.bf16 %v8761, %v8776
        %v8802 = vmul.bf16 %v8634, %v8776
        %v8803 = vmul.bf16 %v8635, %v8776
        %v8804 = vmul.bf16 %v8762, %v8776
        %v8805 = vmul.bf16 %v8636, %v8776
        %v8806 = vmul.bf16 %v8637, %v8776
        %v8807 = vmul.bf16 %v8763, %v8776
        %v8808 = vmul.bf16 %v8638, %v8776
        %v8809 = vmul.bf16 %v8639, %v8776
        %v8810 = vmul.bf16 %v8764, %v8776
        %v8811 = vmul.bf16 %v8640, %v8776
        %v8812 = vmul.bf16 %v8641, %v8776
        %v8813 = vmul.bf16 %v8765, %v8776
        %v8814 = vmul.bf16 %v8642, %v8776
        %v8815 = vmul.bf16 %v8643, %v8776
        %v8816 = vmul.bf16 %v8766, %v8776
        %v8817 = vmul.bf16 %v8644, %v8776
        %v8818 = vmul.bf16 %v8645, %v8776
        %v8819 = vmul.bf16 %v8767, %v8776
        %v8820 = vmul.bf16 %v8646, %v8776
        %v8821 = vmul.bf16 %v8647, %v8776
        %v8822 = vmul.bf16 %v8768, %v8776
        %v8823 = vmul.bf16 %v8648, %v8776
        %v8824 = vmul.bf16 %v8649, %v8776
        %v8825 = vmul.bf16 %v8769, %v8776
        %v8826 = vunpack.c.l.bf16 %v8778
        %v8827 = vunpack.c.l.bf16 %v8779
        %v8828 = vunpack.c.l.bf16 %v8780
        %v8829 = vunpack.c.l.bf16 %v8781
        %v8830 = vunpack.c.l.bf16 %v8782
        %v8831 = vunpack.c.l.bf16 %v8783
        %v8832 = vunpack.c.l.bf16 %v8784
        %v8833 = vunpack.c.l.bf16 %v8785
        %v8834 = vunpack.c.l.bf16 %v8786
        %v8835 = vunpack.c.l.bf16 %v8787
        %v8836 = vunpack.c.l.bf16 %v8788
        %v8837 = vunpack.c.l.bf16 %v8789
        %v8838 = vunpack.c.l.bf16 %v8790
        %v8839 = vunpack.c.l.bf16 %v8791
        %v8840 = vunpack.c.l.bf16 %v8792
        %v8841 = vunpack.c.l.bf16 %v8793
        %v8842 = vunpack.c.l.bf16 %v8794
        %v8843 = vunpack.c.l.bf16 %v8795
        %v8844 = vunpack.c.l.bf16 %v8796
        %v8845 = vunpack.c.l.bf16 %v8797
        %v8846 = vunpack.c.l.bf16 %v8798
        %v8847 = vunpack.c.l.bf16 %v8799
        %v8848 = vunpack.c.l.bf16 %v8800
        %v8849 = vunpack.c.l.bf16 %v8801
        %v8850 = vunpack.c.l.bf16 %v8802
        %v8851 = vunpack.c.l.bf16 %v8803
        %v8852 = vunpack.c.l.bf16 %v8804
        %v8853 = vunpack.c.l.bf16 %v8805
        %v8854 = vunpack.c.l.bf16 %v8806
        %v8855 = vunpack.c.l.bf16 %v8807
        %v8856 = vunpack.c.l.bf16 %v8808
        %v8857 = vunpack.c.l.bf16 %v8809
        %v8858 = vunpack.c.l.bf16 %v8810
        %v8859 = vunpack.c.l.bf16 %v8811
        %v8860 = vunpack.c.l.bf16 %v8812
        %v8861 = vunpack.c.l.bf16 %v8813
        %v8862 = vunpack.c.l.bf16 %v8814
        %v8863 = vunpack.c.l.bf16 %v8815
        %v8864 = vunpack.c.l.bf16 %v8816
        %v8865 = vunpack.c.l.bf16 %v8817
        %v8866 = vunpack.c.l.bf16 %v8818
        %v8867 = vunpack.c.l.bf16 %v8819
        %v8868 = vunpack.c.l.bf16 %v8820
        %v8869 = vunpack.c.l.bf16 %v8821
        %v8870 = vunpack.c.l.bf16 %v8822
        %v8871 = vunpack.c.l.bf16 %v8823
        %v8872 = vunpack.c.l.bf16 %v8824
        %v8873 = vunpack.c.l.bf16 %v8825
        %v8922 = vrot.slane %v8826, 1
        %v8923 = vrot.slane %v8827, 1
        %v8924 = vsel %vm1660, %v8922, %v8923
        %v8925 = vrot.slane %v8828, 1
        %v8926 = vsel %vm1660, %v8923, %v8925
        %v8927 = vrot.slane %v8829, 1
        %v8928 = vrot.slane %v8830, 1
        %v8929 = vsel %vm1660, %v8927, %v8928
        %v8930 = vrot.slane %v8831, 1
        %v8931 = vsel %vm1660, %v8928, %v8930
        %v8932 = vrot.slane %v8832, 1
        %v8933 = vrot.slane %v8833, 1
        %v8934 = vsel %vm1660, %v8932, %v8933
        %v8935 = vrot.slane %v8834, 1
        %v8936 = vsel %vm1660, %v8933, %v8935
        %v8937 = vrot.slane %v8835, 1
        %v8938 = vrot.slane %v8836, 1
        %v8939 = vsel %vm1660, %v8937, %v8938
        %v8940 = vrot.slane %v8837, 1
        %v8941 = vsel %vm1660, %v8938, %v8940
        %v8942 = vrot.slane %v8838, 1
        %v8943 = vrot.slane %v8839, 1
        %v8944 = vsel %vm1660, %v8942, %v8943
        %v8945 = vrot.slane %v8840, 1
        %v8946 = vsel %vm1660, %v8943, %v8945
        %v8947 = vrot.slane %v8841, 1
        %v8948 = vrot.slane %v8842, 1
        %v8949 = vsel %vm1660, %v8947, %v8948
        %v8950 = vrot.slane %v8843, 1
        %v8951 = vsel %vm1660, %v8948, %v8950
        %v8952 = vrot.slane %v8844, 1
        %v8953 = vrot.slane %v8845, 1
        %v8954 = vsel %vm1660, %v8952, %v8953
        %v8955 = vrot.slane %v8846, 1
        %v8956 = vsel %vm1660, %v8953, %v8955
        %v8957 = vrot.slane %v8847, 1
        %v8958 = vrot.slane %v8848, 1
        %v8959 = vsel %vm1660, %v8957, %v8958
        %v8960 = vrot.slane %v8849, 1
        %v8961 = vsel %vm1660, %v8958, %v8960
        %v8962 = vrot.slane %v8850, 1
        %v8963 = vrot.slane %v8851, 1
        %v8964 = vsel %vm1660, %v8962, %v8963
        %v8965 = vrot.slane %v8852, 1
        %v8966 = vsel %vm1660, %v8963, %v8965
        %v8967 = vrot.slane %v8853, 1
        %v8968 = vrot.slane %v8854, 1
        %v8969 = vsel %vm1660, %v8967, %v8968
        %v8970 = vrot.slane %v8855, 1
        %v8971 = vsel %vm1660, %v8968, %v8970
        %v8972 = vrot.slane %v8856, 1
        %v8973 = vrot.slane %v8857, 1
        %v8974 = vsel %vm1660, %v8972, %v8973
        %v8975 = vrot.slane %v8858, 1
        %v8976 = vsel %vm1660, %v8973, %v8975
        %v8977 = vrot.slane %v8859, 1
        %v8978 = vrot.slane %v8860, 1
        %v8979 = vsel %vm1660, %v8977, %v8978
        %v8980 = vrot.slane %v8861, 1
        %v8981 = vsel %vm1660, %v8978, %v8980
        %v8982 = vrot.slane %v8862, 1
        %v8983 = vrot.slane %v8863, 1
        %v8984 = vsel %vm1660, %v8982, %v8983
        %v8985 = vrot.slane %v8864, 1
        %v8986 = vsel %vm1660, %v8983, %v8985
        %v8987 = vrot.slane %v8865, 1
        %v8988 = vrot.slane %v8866, 1
        %v8989 = vsel %vm1660, %v8987, %v8988
        %v8990 = vrot.slane %v8867, 1
        %v8991 = vsel %vm1660, %v8988, %v8990
        %v8992 = vrot.slane %v8868, 1
        %v8993 = vrot.slane %v8869, 1
        %v8994 = vsel %vm1660, %v8992, %v8993
        %v8995 = vrot.slane %v8870, 1
        %v8996 = vsel %vm1660, %v8993, %v8995
        %v8997 = vrot.slane %v8871, 1
        %v8998 = vrot.slane %v8872, 1
        %v8999 = vsel %vm1660, %v8997, %v8998
        %v9000 = vrot.slane %v8873, 1
        %v9001 = vsel %vm1660, %v8998, %v9000
        %v9034 = vadd.f32 %v8722, %v8924
        %v9035 = vadd.f32 %v8723, %v8926
        %v9036 = vadd.f32 %v8724, %v8929
        %v9037 = vadd.f32 %v8725, %v8931
        %v9038 = vadd.f32 %v8726, %v8934
        %v9039 = vadd.f32 %v8727, %v8936
        %v9040 = vadd.f32 %v8728, %v8939
        %v9041 = vadd.f32 %v8729, %v8941
        %v9042 = vadd.f32 %v8730, %v8944
        %v9043 = vadd.f32 %v8731, %v8946
        %v9044 = vadd.f32 %v8732, %v8949
        %v9045 = vadd.f32 %v8733, %v8951
        %v9046 = vadd.f32 %v8734, %v8954
        %v9047 = vadd.f32 %v8735, %v8956
        %v9048 = vadd.f32 %v8736, %v8959
        %v9049 = vadd.f32 %v8737, %v8961
        %v9050 = vadd.f32 %v8738, %v8964
        %v9051 = vadd.f32 %v8739, %v8966
        %v9052 = vadd.f32 %v8740, %v8969
        %v9053 = vadd.f32 %v8741, %v8971
        %v9054 = vadd.f32 %v8742, %v8974
        %v9055 = vadd.f32 %v8743, %v8976
        %v9056 = vadd.f32 %v8744, %v8979
        %v9057 = vadd.f32 %v8745, %v8981
        %v9058 = vadd.f32 %v8746, %v8984
        %v9059 = vadd.f32 %v8747, %v8986
        %v9060 = vadd.f32 %v8748, %v8989
        %v9061 = vadd.f32 %v8749, %v8991
        %v9062 = vadd.f32 %v8750, %v8994
        %v9063 = vadd.f32 %v8751, %v8996
        %v9064 = vadd.f32 %v8752, %v8999
        %v9065 = vadd.f32 %v8753, %v9001
        %v9066 = vld [vmem:[%s682] sm:$0xe]
        %v9067 = vld [vmem:[%s682 + $0xc] sm:$0xe]
        %v9068 = vld [vmem:[%s682 + $0x18] sm:$0xe]
        %v9069 = vld [vmem:[%s682 + $0x24] sm:$0xe]
        %v9070 = vld [vmem:[%s682 + $0x30] sm:$0xe]
        %v9071 = vld [vmem:[%s682 + $0x3c] sm:$0xe]
        %v9072 = vld [vmem:[%s682 + $0x48] sm:$0xe]
        %v9073 = vld [vmem:[%s682 + $0x54] sm:$0xe]
        %v9074 = vld [vmem:[%s682 + $0x60] sm:$0xe]
        %v9075 = vld [vmem:[%s682 + $0x6c] sm:$0xe]
        %v9076 = vld [vmem:[%s682 + $0x78] sm:$0xe]
        %v9077 = vld [vmem:[%s682 + $0x84] sm:$0xe]
        %v9078 = vld [vmem:[%s682 + $0x90] sm:$0xe]
        %v9079 = vld [vmem:[%s682 + $0x9c] sm:$0xe]
        %v9080 = vld [vmem:[%s682 + $0xa8] sm:$0xe]
        %v9081 = vld [vmem:[%s682 + $0xb4] sm:$0xe]
        %v9082 = vlaneseq
        %v9083 = vshrl.u32 %v9082, 7
        %v9084 = vsub.s32 2, %v9083
        %v9085 = vrot.slane %v8008, %v9084
        %v9087 = vunpack.c.l.b16 %v9085
        %v9088 = vpack.c.b16 %v9087, %v9087
        %v9090 = vmul.bf16 %v9066, %v9088
        %v9091 = vmul.bf16 %v8619, %v9088
        %v9092 = vmul.bf16 %v8754, %v9088
        %v9093 = vmul.bf16 %v9067, %v9088
        %v9094 = vmul.bf16 %v8621, %v9088
        %v9095 = vmul.bf16 %v8755, %v9088
        %v9096 = vmul.bf16 %v9068, %v9088
        %v9097 = vmul.bf16 %v8623, %v9088
        %v9098 = vmul.bf16 %v8756, %v9088
        %v9099 = vmul.bf16 %v9069, %v9088
        %v9100 = vmul.bf16 %v8625, %v9088
        %v9101 = vmul.bf16 %v8757, %v9088
        %v9102 = vmul.bf16 %v9070, %v9088
        %v9103 = vmul.bf16 %v8627, %v9088
        %v9104 = vmul.bf16 %v8758, %v9088
        %v9105 = vmul.bf16 %v9071, %v9088
        %v9106 = vmul.bf16 %v8629, %v9088
        %v9107 = vmul.bf16 %v8759, %v9088
        %v9108 = vmul.bf16 %v9072, %v9088
        %v9109 = vmul.bf16 %v8631, %v9088
        %v9110 = vmul.bf16 %v8760, %v9088
        %v9111 = vmul.bf16 %v9073, %v9088
        %v9112 = vmul.bf16 %v8633, %v9088
        %v9113 = vmul.bf16 %v8761, %v9088
        %v9114 = vmul.bf16 %v9074, %v9088
        %v9115 = vmul.bf16 %v8635, %v9088
        %v9116 = vmul.bf16 %v8762, %v9088
        %v9117 = vmul.bf16 %v9075, %v9088
        %v9118 = vmul.bf16 %v8637, %v9088
        %v9119 = vmul.bf16 %v8763, %v9088
        %v9120 = vmul.bf16 %v9076, %v9088
        %v9121 = vmul.bf16 %v8639, %v9088
        %v9122 = vmul.bf16 %v8764, %v9088
        %v9123 = vmul.bf16 %v9077, %v9088
        %v9124 = vmul.bf16 %v8641, %v9088
        %v9125 = vmul.bf16 %v8765, %v9088
        %v9126 = vmul.bf16 %v9078, %v9088
        %v9127 = vmul.bf16 %v8643, %v9088
        %v9128 = vmul.bf16 %v8766, %v9088
        %v9129 = vmul.bf16 %v9079, %v9088
        %v9130 = vmul.bf16 %v8645, %v9088
        %v9131 = vmul.bf16 %v8767, %v9088
        %v9132 = vmul.bf16 %v9080, %v9088
        %v9133 = vmul.bf16 %v8647, %v9088
        %v9134 = vmul.bf16 %v8768, %v9088
        %v9135 = vmul.bf16 %v9081, %v9088
        %v9136 = vmul.bf16 %v8649, %v9088
        %v9137 = vmul.bf16 %v8769, %v9088
        %v9138 = vunpack.c.l.bf16 %v9090
        %v9139 = vunpack.c.l.bf16 %v9091
        %v9140 = vunpack.c.l.bf16 %v9092
        %v9141 = vunpack.c.l.bf16 %v9093
        %v9142 = vunpack.c.l.bf16 %v9094
        %v9143 = vunpack.c.l.bf16 %v9095
        %v9144 = vunpack.c.l.bf16 %v9096
        %v9145 = vunpack.c.l.bf16 %v9097
        %v9146 = vunpack.c.l.bf16 %v9098
        %v9147 = vunpack.c.l.bf16 %v9099
        %v9148 = vunpack.c.l.bf16 %v9100
        %v9149 = vunpack.c.l.bf16 %v9101
        %v9150 = vunpack.c.l.bf16 %v9102
        %v9151 = vunpack.c.l.bf16 %v9103
        %v9152 = vunpack.c.l.bf16 %v9104
        %v9153 = vunpack.c.l.bf16 %v9105
        %v9154 = vunpack.c.l.bf16 %v9106
        %v9155 = vunpack.c.l.bf16 %v9107
        %v9156 = vunpack.c.l.bf16 %v9108
        %v9157 = vunpack.c.l.bf16 %v9109
        %v9158 = vunpack.c.l.bf16 %v9110
        %v9159 = vunpack.c.l.bf16 %v9111
        %v9160 = vunpack.c.l.bf16 %v9112
        %v9161 = vunpack.c.l.bf16 %v9113
        %v9162 = vunpack.c.l.bf16 %v9114
        %v9163 = vunpack.c.l.bf16 %v9115
        %v9164 = vunpack.c.l.bf16 %v9116
        %v9165 = vunpack.c.l.bf16 %v9117
        %v9166 = vunpack.c.l.bf16 %v9118
        %v9167 = vunpack.c.l.bf16 %v9119
        %v9168 = vunpack.c.l.bf16 %v9120
        %v9169 = vunpack.c.l.bf16 %v9121
        %v9170 = vunpack.c.l.bf16 %v9122
        %v9171 = vunpack.c.l.bf16 %v9123
        %v9172 = vunpack.c.l.bf16 %v9124
        %v9173 = vunpack.c.l.bf16 %v9125
        %v9174 = vunpack.c.l.bf16 %v9126
        %v9175 = vunpack.c.l.bf16 %v9127
        %v9176 = vunpack.c.l.bf16 %v9128
        %v9177 = vunpack.c.l.bf16 %v9129
        %v9178 = vunpack.c.l.bf16 %v9130
        %v9179 = vunpack.c.l.bf16 %v9131
        %v9180 = vunpack.c.l.bf16 %v9132
        %v9181 = vunpack.c.l.bf16 %v9133
        %v9182 = vunpack.c.l.bf16 %v9134
        %v9183 = vunpack.c.l.bf16 %v9135
        %v9184 = vunpack.c.l.bf16 %v9136
        %v9185 = vunpack.c.l.bf16 %v9137
        %v9234 = vrot.slane %v9138, 2
        %v9235 = vrot.slane %v9139, 2
        %v9236 = vsel %vm1973, %v9234, %v9235
        %v9237 = vrot.slane %v9140, 2
        %v9238 = vsel %vm1973, %v9235, %v9237
        %v9239 = vrot.slane %v9141, 2
        %v9240 = vrot.slane %v9142, 2
        %v9241 = vsel %vm1973, %v9239, %v9240
        %v9242 = vrot.slane %v9143, 2
        %v9243 = vsel %vm1973, %v9240, %v9242
        %v9244 = vrot.slane %v9144, 2
        %v9245 = vrot.slane %v9145, 2
        %v9246 = vsel %vm1973, %v9244, %v9245
        %v9247 = vrot.slane %v9146, 2
        %v9248 = vsel %vm1973, %v9245, %v9247
        %v9249 = vrot.slane %v9147, 2
        %v9250 = vrot.slane %v9148, 2
        %v9251 = vsel %vm1973, %v9249, %v9250
        %v9252 = vrot.slane %v9149, 2
        %v9253 = vsel %vm1973, %v9250, %v9252
        %v9254 = vrot.slane %v9150, 2
        %v9255 = vrot.slane %v9151, 2
        %v9256 = vsel %vm1973, %v9254, %v9255
        %v9257 = vrot.slane %v9152, 2
        %v9258 = vsel %vm1973, %v9255, %v9257
        %v9259 = vrot.slane %v9153, 2
        %v9260 = vrot.slane %v9154, 2
        %v9261 = vsel %vm1973, %v9259, %v9260
        %v9262 = vrot.slane %v9155, 2
        %v9263 = vsel %vm1973, %v9260, %v9262
        %v9264 = vrot.slane %v9156, 2
        %v9265 = vrot.slane %v9157, 2
        %v9266 = vsel %vm1973, %v9264, %v9265
        %v9267 = vrot.slane %v9158, 2
        %v9268 = vsel %vm1973, %v9265, %v9267
        %v9269 = vrot.slane %v9159, 2
        %v9270 = vrot.slane %v9160, 2
        %v9271 = vsel %vm1973, %v9269, %v9270
        %v9272 = vrot.slane %v9161, 2
        %v9273 = vsel %vm1973, %v9270, %v9272
        %v9274 = vrot.slane %v9162, 2
        %v9275 = vrot.slane %v9163, 2
        %v9276 = vsel %vm1973, %v9274, %v9275
        %v9277 = vrot.slane %v9164, 2
        %v9278 = vsel %vm1973, %v9275, %v9277
        %v9279 = vrot.slane %v9165, 2
        %v9280 = vrot.slane %v9166, 2
        %v9281 = vsel %vm1973, %v9279, %v9280
        %v9282 = vrot.slane %v9167, 2
        %v9283 = vsel %vm1973, %v9280, %v9282
        %v9284 = vrot.slane %v9168, 2
        %v9285 = vrot.slane %v9169, 2
        %v9286 = vsel %vm1973, %v9284, %v9285
        %v9287 = vrot.slane %v9170, 2
        %v9288 = vsel %vm1973, %v9285, %v9287
        %v9289 = vrot.slane %v9171, 2
        %v9290 = vrot.slane %v9172, 2
        %v9291 = vsel %vm1973, %v9289, %v9290
        %v9292 = vrot.slane %v9173, 2
        %v9293 = vsel %vm1973, %v9290, %v9292
        %v9294 = vrot.slane %v9174, 2
        %v9295 = vrot.slane %v9175, 2
        %v9296 = vsel %vm1973, %v9294, %v9295
        %v9297 = vrot.slane %v9176, 2
        %v9298 = vsel %vm1973, %v9295, %v9297
        %v9299 = vrot.slane %v9177, 2
        %v9300 = vrot.slane %v9178, 2
        %v9301 = vsel %vm1973, %v9299, %v9300
        %v9302 = vrot.slane %v9179, 2
        %v9303 = vsel %vm1973, %v9300, %v9302
        %v9304 = vrot.slane %v9180, 2
        %v9305 = vrot.slane %v9181, 2
        %v9306 = vsel %vm1973, %v9304, %v9305
        %v9307 = vrot.slane %v9182, 2
        %v9308 = vsel %vm1973, %v9305, %v9307
        %v9309 = vrot.slane %v9183, 2
        %v9310 = vrot.slane %v9184, 2
        %v9311 = vsel %vm1973, %v9309, %v9310
        %v9312 = vrot.slane %v9185, 2
        %v9313 = vsel %vm1973, %v9310, %v9312
        %v9346 = vadd.f32 %v9034, %v9236
        %v9347 = vadd.f32 %v9035, %v9238
        %v9348 = vadd.f32 %v9036, %v9241
        %v9349 = vadd.f32 %v9037, %v9243
        %v9350 = vadd.f32 %v9038, %v9246
        %v9351 = vadd.f32 %v9039, %v9248
        %v9352 = vadd.f32 %v9040, %v9251
        %v9353 = vadd.f32 %v9041, %v9253
        %v9354 = vadd.f32 %v9042, %v9256
        %v9355 = vadd.f32 %v9043, %v9258
        %v9356 = vadd.f32 %v9044, %v9261
        %v9357 = vadd.f32 %v9045, %v9263
        %v9358 = vadd.f32 %v9046, %v9266
        %v9359 = vadd.f32 %v9047, %v9268
        %v9360 = vadd.f32 %v9048, %v9271
        %v9361 = vadd.f32 %v9049, %v9273
        %v9362 = vadd.f32 %v9050, %v9276
        %v9363 = vadd.f32 %v9051, %v9278
        %v9364 = vadd.f32 %v9052, %v9281
        %v9365 = vadd.f32 %v9053, %v9283
        %v9366 = vadd.f32 %v9054, %v9286
        %v9367 = vadd.f32 %v9055, %v9288
        %v9368 = vadd.f32 %v9056, %v9291
        %v9369 = vadd.f32 %v9057, %v9293
        %v9370 = vadd.f32 %v9058, %v9296
        %v9371 = vadd.f32 %v9059, %v9298
        %v9372 = vadd.f32 %v9060, %v9301
        %v9373 = vadd.f32 %v9061, %v9303
        %v9374 = vadd.f32 %v9062, %v9306
        %v9375 = vadd.f32 %v9063, %v9308
        %v9376 = vadd.f32 %v9064, %v9311
        %v9377 = vadd.f32 %v9065, %v9313
        %v9378 = vld [vmem:[%s2878] sm:$0xf]
        %v9379 = vld [vmem:[%s2878 + $0x4] sm:$0xf]
        %v9380 = vld [vmem:[%s2878 + $0xc] sm:$0xf]
        %v9381 = vld [vmem:[%s2878 + $0x10] sm:$0xf]
        %v9382 = vld [vmem:[%s2878 + $0x18] sm:$0xf]
        %v9383 = vld [vmem:[%s2878 + $0x1c] sm:$0xf]
        %v9384 = vld [vmem:[%s2878 + $0x24] sm:$0xf]
        %v9385 = vld [vmem:[%s2878 + $0x28] sm:$0xf]
        %v9386 = vld [vmem:[%s2878 + $0x30] sm:$0xf]
        %v9387 = vld [vmem:[%s2878 + $0x34] sm:$0xf]
        %v9388 = vld [vmem:[%s2878 + $0x3c] sm:$0xf]
        %v9389 = vld [vmem:[%s2878 + $0x40] sm:$0xf]
        %v9390 = vld [vmem:[%s2878 + $0x48] sm:$0xf]
        %v9391 = vld [vmem:[%s2878 + $0x4c] sm:$0xf]
        %v9392 = vld [vmem:[%s2878 + $0x54] sm:$0xf]
        %v9393 = vld [vmem:[%s2878 + $0x58] sm:$0xf]
        %v9394 = vld [vmem:[%s2878 + $0x60] sm:$0xf]
        %v9395 = vld [vmem:[%s2878 + $0x64] sm:$0xf]
        %v9396 = vld [vmem:[%s2878 + $0x6c] sm:$0xf]
        %v9397 = vld [vmem:[%s2878 + $0x70] sm:$0xf]
        %v9398 = vld [vmem:[%s2878 + $0x78] sm:$0xf]
        %v9399 = vld [vmem:[%s2878 + $0x7c] sm:$0xf]
        %v9400 = vld [vmem:[%s2878 + $0x84] sm:$0xf]
        %v9401 = vld [vmem:[%s2878 + $0x88] sm:$0xf]
        %v9402 = vld [vmem:[%s2878 + $0x90] sm:$0xf]
        %v9403 = vld [vmem:[%s2878 + $0x94] sm:$0xf]
        %v9404 = vld [vmem:[%s2878 + $0x9c] sm:$0xf]
        %v9405 = vld [vmem:[%s2878 + $0xa0] sm:$0xf]
        %v9406 = vld [vmem:[%s2878 + $0xa8] sm:$0xf]
        %v9407 = vld [vmem:[%s2878 + $0xac] sm:$0xf]
        %v9408 = vld [vmem:[%s2878 + $0xb4] sm:$0xf]
        %v9409 = vld [vmem:[%s2878 + $0xb8] sm:$0xf]
        %v9410 = vlaneseq
        %v9411 = vshrl.u32 %v9410, 7
        %v9412 = vsub.s32 3, %v9411
        %v9413 = vrot.slane %v7917, %v9412
        %v9415 = vunpack.c.l.b16 %v9413
        %v9416 = vpack.c.b16 %v9415, %v9415
        %v9418 = vmul.bf16 %v9378, %v9416
        %v9419 = vmul.bf16 %v9379, %v9416
        %v9420 = vmul.bf16 %v9380, %v9416
        %v9421 = vmul.bf16 %v9381, %v9416
        %v9422 = vmul.bf16 %v9382, %v9416
        %v9423 = vmul.bf16 %v9383, %v9416
        %v9424 = vmul.bf16 %v9384, %v9416
        %v9425 = vmul.bf16 %v9385, %v9416
        %v9426 = vmul.bf16 %v9386, %v9416
        %v9427 = vmul.bf16 %v9387, %v9416
        %v9428 = vmul.bf16 %v9388, %v9416
        %v9429 = vmul.bf16 %v9389, %v9416
        %v9430 = vmul.bf16 %v9390, %v9416
        %v9431 = vmul.bf16 %v9391, %v9416
        %v9432 = vmul.bf16 %v9392, %v9416
        %v9433 = vmul.bf16 %v9393, %v9416
        %v9434 = vmul.bf16 %v9394, %v9416
        %v9435 = vmul.bf16 %v9395, %v9416
        %v9436 = vmul.bf16 %v9396, %v9416
        %v9437 = vmul.bf16 %v9397, %v9416
        %v9438 = vmul.bf16 %v9398, %v9416
        %v9439 = vmul.bf16 %v9399, %v9416
        %v9440 = vmul.bf16 %v9400, %v9416
        %v9441 = vmul.bf16 %v9401, %v9416
        %v9442 = vmul.bf16 %v9402, %v9416
        %v9443 = vmul.bf16 %v9403, %v9416
        %v9444 = vmul.bf16 %v9404, %v9416
        %v9445 = vmul.bf16 %v9405, %v9416
        %v9446 = vmul.bf16 %v9406, %v9416
        %v9447 = vmul.bf16 %v9407, %v9416
        %v9448 = vmul.bf16 %v9408, %v9416
        %v9449 = vmul.bf16 %v9409, %v9416
        %v9450 = vunpack.c.l.bf16 %v9418
        %v9451 = vunpack.c.l.bf16 %v9419
        %v9452 = vunpack.c.l.bf16 %v9420
        %v9453 = vunpack.c.l.bf16 %v9421
        %v9454 = vunpack.c.l.bf16 %v9422
        %v9455 = vunpack.c.l.bf16 %v9423
        %v9456 = vunpack.c.l.bf16 %v9424
        %v9457 = vunpack.c.l.bf16 %v9425
        %v9458 = vunpack.c.l.bf16 %v9426
        %v9459 = vunpack.c.l.bf16 %v9427
        %v9460 = vunpack.c.l.bf16 %v9428
        %v9461 = vunpack.c.l.bf16 %v9429
        %v9462 = vunpack.c.l.bf16 %v9430
        %v9463 = vunpack.c.l.bf16 %v9431
        %v9464 = vunpack.c.l.bf16 %v9432
        %v9465 = vunpack.c.l.bf16 %v9433
        %v9466 = vunpack.c.l.bf16 %v9434
        %v9467 = vunpack.c.l.bf16 %v9435
        %v9468 = vunpack.c.l.bf16 %v9436
        %v9469 = vunpack.c.l.bf16 %v9437
        %v9470 = vunpack.c.l.bf16 %v9438
        %v9471 = vunpack.c.l.bf16 %v9439
        %v9472 = vunpack.c.l.bf16 %v9440
        %v9473 = vunpack.c.l.bf16 %v9441
        %v9474 = vunpack.c.l.bf16 %v9442
        %v9475 = vunpack.c.l.bf16 %v9443
        %v9476 = vunpack.c.l.bf16 %v9444
        %v9477 = vunpack.c.l.bf16 %v9445
        %v9478 = vunpack.c.l.bf16 %v9446
        %v9479 = vunpack.c.l.bf16 %v9447
        %v9480 = vunpack.c.l.bf16 %v9448
        %v9481 = vunpack.c.l.bf16 %v9449
        %v9482 = vadd.f32 %v9346, %v9450
        %v9483 = vadd.f32 %v9347, %v9451
        %v9484 = vadd.f32 %v9348, %v9452
        %v9485 = vadd.f32 %v9349, %v9453
        %v9486 = vadd.f32 %v9350, %v9454
        %v9487 = vadd.f32 %v9351, %v9455
        %v9488 = vadd.f32 %v9352, %v9456
        %v9489 = vadd.f32 %v9353, %v9457
        %v9490 = vadd.f32 %v9354, %v9458
        %v9491 = vadd.f32 %v9355, %v9459
        %v9492 = vadd.f32 %v9356, %v9460
        %v9493 = vadd.f32 %v9357, %v9461
        %v9494 = vadd.f32 %v9358, %v9462
        %v9495 = vadd.f32 %v9359, %v9463
        %v9496 = vadd.f32 %v9360, %v9464
        %v9497 = vadd.f32 %v9361, %v9465
        %v9498 = vadd.f32 %v9362, %v9466
        %v9499 = vadd.f32 %v9363, %v9467
        %v9500 = vadd.f32 %v9364, %v9468
        %v9501 = vadd.f32 %v9365, %v9469
        %v9502 = vadd.f32 %v9366, %v9470
        %v9503 = vadd.f32 %v9367, %v9471
        %v9504 = vadd.f32 %v9368, %v9472
        %v9505 = vadd.f32 %v9369, %v9473
        %v9506 = vadd.f32 %v9370, %v9474
        %v9507 = vadd.f32 %v9371, %v9475
        %v9508 = vadd.f32 %v9372, %v9476
        %v9509 = vadd.f32 %v9373, %v9477
        %v9510 = vadd.f32 %v9374, %v9478
        %v9511 = vadd.f32 %v9375, %v9479
        %v9512 = vadd.f32 %v9376, %v9480
        %v9513 = vadd.f32 %v9377, %v9481
        %v9514 = vld [vmem:[%s2878 + $0x8] sm:$0x1]
        %v9515 = vld [vmem:[%s2878 + $0x14] sm:$0x1]
        %v9516 = vld [vmem:[%s2878 + $0x20] sm:$0x1]
        %v9517 = vld [vmem:[%s2878 + $0x2c] sm:$0x1]
        %v9518 = vld [vmem:[%s2878 + $0x38] sm:$0x1]
        %v9519 = vld [vmem:[%s2878 + $0x44] sm:$0x1]
        %v9520 = vld [vmem:[%s2878 + $0x50] sm:$0x1]
        %v9521 = vld [vmem:[%s2878 + $0x5c] sm:$0x1]
        %v9522 = vld [vmem:[%s2878 + $0x68] sm:$0x1]
        %v9523 = vld [vmem:[%s2878 + $0x74] sm:$0x1]
        %v9524 = vld [vmem:[%s2878 + $0x80] sm:$0x1]
        %v9525 = vld [vmem:[%s2878 + $0x8c] sm:$0x1]
        %v9526 = vld [vmem:[%s2878 + $0x98] sm:$0x1]
        %v9527 = vld [vmem:[%s2878 + $0xa4] sm:$0x1]
        %v9528 = vld [vmem:[%s2878 + $0xb0] sm:$0x1]
        %v9529 = vld [vmem:[%s2878 + $0xbc] sm:$0x1]
        %v9530 = vlaneseq
        %v9531 = vshrl.u32 %v9530, 7
        %v9532 = vsub.s32 3, %v9531
        %v9533 = vrot.slane %v8008, %v9532
        %v9535 = vunpack.c.l.b16 %v9533
        %v9536 = vpack.c.b16 %v9535, %v9535
        %v9538 = vmul.bf16 %v9378, %v9536
        %v9539 = vmul.bf16 %v9379, %v9536
        %v9540 = vmul.bf16 %v9514, %v9536
        %v9541 = vmul.bf16 %v9380, %v9536
        %v9542 = vmul.bf16 %v9381, %v9536
        %v9543 = vmul.bf16 %v9515, %v9536
        %v9544 = vmul.bf16 %v9382, %v9536
        %v9545 = vmul.bf16 %v9383, %v9536
        %v9546 = vmul.bf16 %v9516, %v9536
        %v9547 = vmul.bf16 %v9384, %v9536
        %v9548 = vmul.bf16 %v9385, %v9536
        %v9549 = vmul.bf16 %v9517, %v9536
        %v9550 = vmul.bf16 %v9386, %v9536
        %v9551 = vmul.bf16 %v9387, %v9536
        %v9552 = vmul.bf16 %v9518, %v9536
        %v9553 = vmul.bf16 %v9388, %v9536
        %v9554 = vmul.bf16 %v9389, %v9536
        %v9555 = vmul.bf16 %v9519, %v9536
        %v9556 = vmul.bf16 %v9390, %v9536
        %v9557 = vmul.bf16 %v9391, %v9536
        %v9558 = vmul.bf16 %v9520, %v9536
        %v9559 = vmul.bf16 %v9392, %v9536
        %v9560 = vmul.bf16 %v9393, %v9536
        %v9561 = vmul.bf16 %v9521, %v9536
        %v9562 = vmul.bf16 %v9394, %v9536
        %v9563 = vmul.bf16 %v9395, %v9536
        %v9564 = vmul.bf16 %v9522, %v9536
        %v9565 = vmul.bf16 %v9396, %v9536
        %v9566 = vmul.bf16 %v9397, %v9536
        %v9567 = vmul.bf16 %v9523, %v9536
        %v9568 = vmul.bf16 %v9398, %v9536
        %v9569 = vmul.bf16 %v9399, %v9536
        %v9570 = vmul.bf16 %v9524, %v9536
        %v9571 = vmul.bf16 %v9400, %v9536
        %v9572 = vmul.bf16 %v9401, %v9536
        %v9573 = vmul.bf16 %v9525, %v9536
        %v9574 = vmul.bf16 %v9402, %v9536
        %v9575 = vmul.bf16 %v9403, %v9536
        %v9576 = vmul.bf16 %v9526, %v9536
        %v9577 = vmul.bf16 %v9404, %v9536
        %v9578 = vmul.bf16 %v9405, %v9536
        %v9579 = vmul.bf16 %v9527, %v9536
        %v9580 = vmul.bf16 %v9406, %v9536
        %v9581 = vmul.bf16 %v9407, %v9536
        %v9582 = vmul.bf16 %v9528, %v9536
        %v9583 = vmul.bf16 %v9408, %v9536
        %v9584 = vmul.bf16 %v9409, %v9536
        %v9585 = vmul.bf16 %v9529, %v9536
        %v9586 = vunpack.c.l.bf16 %v9538
        %v9587 = vunpack.c.l.bf16 %v9539
        %v9588 = vunpack.c.l.bf16 %v9540
        %v9589 = vunpack.c.l.bf16 %v9541
        %v9590 = vunpack.c.l.bf16 %v9542
        %v9591 = vunpack.c.l.bf16 %v9543
        %v9592 = vunpack.c.l.bf16 %v9544
        %v9593 = vunpack.c.l.bf16 %v9545
        %v9594 = vunpack.c.l.bf16 %v9546
        %v9595 = vunpack.c.l.bf16 %v9547
        %v9596 = vunpack.c.l.bf16 %v9548
        %v9597 = vunpack.c.l.bf16 %v9549
        %v9598 = vunpack.c.l.bf16 %v9550
        %v9599 = vunpack.c.l.bf16 %v9551
        %v9600 = vunpack.c.l.bf16 %v9552
        %v9601 = vunpack.c.l.bf16 %v9553
        %v9602 = vunpack.c.l.bf16 %v9554
        %v9603 = vunpack.c.l.bf16 %v9555
        %v9604 = vunpack.c.l.bf16 %v9556
        %v9605 = vunpack.c.l.bf16 %v9557
        %v9606 = vunpack.c.l.bf16 %v9558
        %v9607 = vunpack.c.l.bf16 %v9559
        %v9608 = vunpack.c.l.bf16 %v9560
        %v9609 = vunpack.c.l.bf16 %v9561
        %v9610 = vunpack.c.l.bf16 %v9562
        %v9611 = vunpack.c.l.bf16 %v9563
        %v9612 = vunpack.c.l.bf16 %v9564
        %v9613 = vunpack.c.l.bf16 %v9565
        %v9614 = vunpack.c.l.bf16 %v9566
        %v9615 = vunpack.c.l.bf16 %v9567
        %v9616 = vunpack.c.l.bf16 %v9568
        %v9617 = vunpack.c.l.bf16 %v9569
        %v9618 = vunpack.c.l.bf16 %v9570
        %v9619 = vunpack.c.l.bf16 %v9571
        %v9620 = vunpack.c.l.bf16 %v9572
        %v9621 = vunpack.c.l.bf16 %v9573
        %v9622 = vunpack.c.l.bf16 %v9574
        %v9623 = vunpack.c.l.bf16 %v9575
        %v9624 = vunpack.c.l.bf16 %v9576
        %v9625 = vunpack.c.l.bf16 %v9577
        %v9626 = vunpack.c.l.bf16 %v9578
        %v9627 = vunpack.c.l.bf16 %v9579
        %v9628 = vunpack.c.l.bf16 %v9580
        %v9629 = vunpack.c.l.bf16 %v9581
        %v9630 = vunpack.c.l.bf16 %v9582
        %v9631 = vunpack.c.l.bf16 %v9583
        %v9632 = vunpack.c.l.bf16 %v9584
        %v9633 = vunpack.c.l.bf16 %v9585
        %v9682 = vrot.slane %v9586, 1
        %v9683 = vrot.slane %v9587, 1
        %v9684 = vsel %vm1660, %v9682, %v9683
        %v9685 = vrot.slane %v9588, 1
        %v9686 = vsel %vm1660, %v9683, %v9685
        %v9687 = vrot.slane %v9589, 1
        %v9688 = vrot.slane %v9590, 1
        %v9689 = vsel %vm1660, %v9687, %v9688
        %v9690 = vrot.slane %v9591, 1
        %v9691 = vsel %vm1660, %v9688, %v9690
        %v9692 = vrot.slane %v9592, 1
        %v9693 = vrot.slane %v9593, 1
        %v9694 = vsel %vm1660, %v9692, %v9693
        %v9695 = vrot.slane %v9594, 1
        %v9696 = vsel %vm1660, %v9693, %v9695
        %v9697 = vrot.slane %v9595, 1
        %v9698 = vrot.slane %v9596, 1
        %v9699 = vsel %vm1660, %v9697, %v9698
        %v9700 = vrot.slane %v9597, 1
        %v9701 = vsel %vm1660, %v9698, %v9700
        %v9702 = vrot.slane %v9598, 1
        %v9703 = vrot.slane %v9599, 1
        %v9704 = vsel %vm1660, %v9702, %v9703
        %v9705 = vrot.slane %v9600, 1
        %v9706 = vsel %vm1660, %v9703, %v9705
        %v9707 = vrot.slane %v9601, 1
        %v9708 = vrot.slane %v9602, 1
        %v9709 = vsel %vm1660, %v9707, %v9708
        %v9710 = vrot.slane %v9603, 1
        %v9711 = vsel %vm1660, %v9708, %v9710
        %v9712 = vrot.slane %v9604, 1
        %v9713 = vrot.slane %v9605, 1
        %v9714 = vsel %vm1660, %v9712, %v9713
        %v9715 = vrot.slane %v9606, 1
        %v9716 = vsel %vm1660, %v9713, %v9715
        %v9717 = vrot.slane %v9607, 1
        %v9718 = vrot.slane %v9608, 1
        %v9719 = vsel %vm1660, %v9717, %v9718
        %v9720 = vrot.slane %v9609, 1
        %v9721 = vsel %vm1660, %v9718, %v9720
        %v9722 = vrot.slane %v9610, 1
        %v9723 = vrot.slane %v9611, 1
        %v9724 = vsel %vm1660, %v9722, %v9723
        %v9725 = vrot.slane %v9612, 1
        %v9726 = vsel %vm1660, %v9723, %v9725
        %v9727 = vrot.slane %v9613, 1
        %v9728 = vrot.slane %v9614, 1
        %v9729 = vsel %vm1660, %v9727, %v9728
        %v9730 = vrot.slane %v9615, 1
        %v9731 = vsel %vm1660, %v9728, %v9730
        %v9732 = vrot.slane %v9616, 1
        %v9733 = vrot.slane %v9617, 1
        %v9734 = vsel %vm1660, %v9732, %v9733
        %v9735 = vrot.slane %v9618, 1
        %v9736 = vsel %vm1660, %v9733, %v9735
        %v9737 = vrot.slane %v9619, 1
        %v9738 = vrot.slane %v9620, 1
        %v9739 = vsel %vm1660, %v9737, %v9738
        %v9740 = vrot.slane %v9621, 1
        %v9741 = vsel %vm1660, %v9738, %v9740
        %v9742 = vrot.slane %v9622, 1
        %v9743 = vrot.slane %v9623, 1
        %v9744 = vsel %vm1660, %v9742, %v9743
        %v9745 = vrot.slane %v9624, 1
        %v9746 = vsel %vm1660, %v9743, %v9745
        %v9747 = vrot.slane %v9625, 1
        %v9748 = vrot.slane %v9626, 1
        %v9749 = vsel %vm1660, %v9747, %v9748
        %v9750 = vrot.slane %v9627, 1
        %v9751 = vsel %vm1660, %v9748, %v9750
        %v9752 = vrot.slane %v9628, 1
        %v9753 = vrot.slane %v9629, 1
        %v9754 = vsel %vm1660, %v9752, %v9753
        %v9755 = vrot.slane %v9630, 1
        %v9756 = vsel %vm1660, %v9753, %v9755
        %v9757 = vrot.slane %v9631, 1
        %v9758 = vrot.slane %v9632, 1
        %v9759 = vsel %vm1660, %v9757, %v9758
        %v9760 = vrot.slane %v9633, 1
        %v9761 = vsel %vm1660, %v9758, %v9760
        %v9794 = vadd.f32 %v9482, %v9684
        %v9795 = vadd.f32 %v9483, %v9686
        %v9796 = vadd.f32 %v9484, %v9689
        %v9797 = vadd.f32 %v9485, %v9691
        %v9798 = vadd.f32 %v9486, %v9694
        %v9799 = vadd.f32 %v9487, %v9696
        %v9800 = vadd.f32 %v9488, %v9699
        %v9801 = vadd.f32 %v9489, %v9701
        %v9802 = vadd.f32 %v9490, %v9704
        %v9803 = vadd.f32 %v9491, %v9706
        %v9804 = vadd.f32 %v9492, %v9709
        %v9805 = vadd.f32 %v9493, %v9711
        %v9806 = vadd.f32 %v9494, %v9714
        %v9807 = vadd.f32 %v9495, %v9716
        %v9808 = vadd.f32 %v9496, %v9719
        %v9809 = vadd.f32 %v9497, %v9721
        %v9810 = vadd.f32 %v9498, %v9724
        %v9811 = vadd.f32 %v9499, %v9726
        %v9812 = vadd.f32 %v9500, %v9729
        %v9813 = vadd.f32 %v9501, %v9731
        %v9814 = vadd.f32 %v9502, %v9734
        %v9815 = vadd.f32 %v9503, %v9736
        %v9816 = vadd.f32 %v9504, %v9739
        %v9817 = vadd.f32 %v9505, %v9741
        %v9818 = vadd.f32 %v9506, %v9744
        %v9819 = vadd.f32 %v9507, %v9746
        %v9820 = vadd.f32 %v9508, %v9749
        %v9821 = vadd.f32 %v9509, %v9751
        %v9822 = vadd.f32 %v9510, %v9754
        %v9823 = vadd.f32 %v9511, %v9756
        %v9824 = vadd.f32 %v9512, %v9759
        %v9825 = vadd.f32 %v9513, %v9761
        %v9826 = vld [vmem:[%s2878] sm:$0xe]
        %v9827 = vld [vmem:[%s2878 + $0xc] sm:$0xe]
        %v9828 = vld [vmem:[%s2878 + $0x18] sm:$0xe]
        %v9829 = vld [vmem:[%s2878 + $0x24] sm:$0xe]
        %v9830 = vld [vmem:[%s2878 + $0x30] sm:$0xe]
        %v9831 = vld [vmem:[%s2878 + $0x3c] sm:$0xe]
        %v9832 = vld [vmem:[%s2878 + $0x48] sm:$0xe]
        %v9833 = vld [vmem:[%s2878 + $0x54] sm:$0xe]
        %v9834 = vld [vmem:[%s2878 + $0x60] sm:$0xe]
        %v9835 = vld [vmem:[%s2878 + $0x6c] sm:$0xe]
        %v9836 = vld [vmem:[%s2878 + $0x78] sm:$0xe]
        %v9837 = vld [vmem:[%s2878 + $0x84] sm:$0xe]
        %v9838 = vld [vmem:[%s2878 + $0x90] sm:$0xe]
        %v9839 = vld [vmem:[%s2878 + $0x9c] sm:$0xe]
        %v9840 = vld [vmem:[%s2878 + $0xa8] sm:$0xe]
        %v9841 = vld [vmem:[%s2878 + $0xb4] sm:$0xe]
        %v9843 = vpack.i.b16 %v7883, %v7883
        %v9845 = vlaneseq
        %v9846 = vshrl.u32 %v9845, 7
        %v9847 = vsub.s32 0, %v9846
        %v9848 = vrot.slane %v9843, %v9847
        %v9850 = vunpack.c.l.b16 %v9848
        %v9851 = vpack.c.b16 %v9850, %v9850
        %v9853 = vmul.bf16 %v9826, %v9851
        %v9854 = vmul.bf16 %v9379, %v9851
        %v9855 = vmul.bf16 %v9514, %v9851
        %v9856 = vmul.bf16 %v9827, %v9851
        %v9857 = vmul.bf16 %v9381, %v9851
        %v9858 = vmul.bf16 %v9515, %v9851
        %v9859 = vmul.bf16 %v9828, %v9851
        %v9860 = vmul.bf16 %v9383, %v9851
        %v9861 = vmul.bf16 %v9516, %v9851
        %v9862 = vmul.bf16 %v9829, %v9851
        %v9863 = vmul.bf16 %v9385, %v9851
        %v9864 = vmul.bf16 %v9517, %v9851
        %v9865 = vmul.bf16 %v9830, %v9851
        %v9866 = vmul.bf16 %v9387, %v9851
        %v9867 = vmul.bf16 %v9518, %v9851
        %v9868 = vmul.bf16 %v9831, %v9851
        %v9869 = vmul.bf16 %v9389, %v9851
        %v9870 = vmul.bf16 %v9519, %v9851
        %v9871 = vmul.bf16 %v9832, %v9851
        %v9872 = vmul.bf16 %v9391, %v9851
        %v9873 = vmul.bf16 %v9520, %v9851
        %v9874 = vmul.bf16 %v9833, %v9851
        %v9875 = vmul.bf16 %v9393, %v9851
        %v9876 = vmul.bf16 %v9521, %v9851
        %v9877 = vmul.bf16 %v9834, %v9851
        %v9878 = vmul.bf16 %v9395, %v9851
        %v9879 = vmul.bf16 %v9522, %v9851
        %v9880 = vmul.bf16 %v9835, %v9851
        %v9881 = vmul.bf16 %v9397, %v9851
        %v9882 = vmul.bf16 %v9523, %v9851
        %v9883 = vmul.bf16 %v9836, %v9851
        %v9884 = vmul.bf16 %v9399, %v9851
        %v9885 = vmul.bf16 %v9524, %v9851
        %v9886 = vmul.bf16 %v9837, %v9851
        %v9887 = vmul.bf16 %v9401, %v9851
        %v9888 = vmul.bf16 %v9525, %v9851
        %v9889 = vmul.bf16 %v9838, %v9851
        %v9890 = vmul.bf16 %v9403, %v9851
        %v9891 = vmul.bf16 %v9526, %v9851
        %v9892 = vmul.bf16 %v9839, %v9851
        %v9893 = vmul.bf16 %v9405, %v9851
        %v9894 = vmul.bf16 %v9527, %v9851
        %v9895 = vmul.bf16 %v9840, %v9851
        %v9896 = vmul.bf16 %v9407, %v9851
        %v9897 = vmul.bf16 %v9528, %v9851
        %v9898 = vmul.bf16 %v9841, %v9851
        %v9899 = vmul.bf16 %v9409, %v9851
        %v9900 = vmul.bf16 %v9529, %v9851
        %v9901 = vunpack.c.l.bf16 %v9853
        %v9902 = vunpack.c.l.bf16 %v9854
        %v9903 = vunpack.c.l.bf16 %v9855
        %v9904 = vunpack.c.l.bf16 %v9856
        %v9905 = vunpack.c.l.bf16 %v9857
        %v9906 = vunpack.c.l.bf16 %v9858
        %v9907 = vunpack.c.l.bf16 %v9859
        %v9908 = vunpack.c.l.bf16 %v9860
        %v9909 = vunpack.c.l.bf16 %v9861
        %v9910 = vunpack.c.l.bf16 %v9862
        %v9911 = vunpack.c.l.bf16 %v9863
        %v9912 = vunpack.c.l.bf16 %v9864
        %v9913 = vunpack.c.l.bf16 %v9865
        %v9914 = vunpack.c.l.bf16 %v9866
        %v9915 = vunpack.c.l.bf16 %v9867
        %v9916 = vunpack.c.l.bf16 %v9868
        %v9917 = vunpack.c.l.bf16 %v9869
        %v9918 = vunpack.c.l.bf16 %v9870
        %v9919 = vunpack.c.l.bf16 %v9871
        %v9920 = vunpack.c.l.bf16 %v9872
        %v9921 = vunpack.c.l.bf16 %v9873
        %v9922 = vunpack.c.l.bf16 %v9874
        %v9923 = vunpack.c.l.bf16 %v9875
        %v9924 = vunpack.c.l.bf16 %v9876
        %v9925 = vunpack.c.l.bf16 %v9877
        %v9926 = vunpack.c.l.bf16 %v9878
        %v9927 = vunpack.c.l.bf16 %v9879
        %v9928 = vunpack.c.l.bf16 %v9880
        %v9929 = vunpack.c.l.bf16 %v9881
        %v9930 = vunpack.c.l.bf16 %v9882
        %v9931 = vunpack.c.l.bf16 %v9883
        %v9932 = vunpack.c.l.bf16 %v9884
        %v9933 = vunpack.c.l.bf16 %v9885
        %v9934 = vunpack.c.l.bf16 %v9886
        %v9935 = vunpack.c.l.bf16 %v9887
        %v9936 = vunpack.c.l.bf16 %v9888
        %v9937 = vunpack.c.l.bf16 %v9889
        %v9938 = vunpack.c.l.bf16 %v9890
        %v9939 = vunpack.c.l.bf16 %v9891
        %v9940 = vunpack.c.l.bf16 %v9892
        %v9941 = vunpack.c.l.bf16 %v9893
        %v9942 = vunpack.c.l.bf16 %v9894
        %v9943 = vunpack.c.l.bf16 %v9895
        %v9944 = vunpack.c.l.bf16 %v9896
        %v9945 = vunpack.c.l.bf16 %v9897
        %v9946 = vunpack.c.l.bf16 %v9898
        %v9947 = vunpack.c.l.bf16 %v9899
        %v9948 = vunpack.c.l.bf16 %v9900
        %v9997 = vrot.slane %v9901, 2
        %v9998 = vrot.slane %v9902, 2
        %v9999 = vsel %vm1973, %v9997, %v9998
        %v10000 = vrot.slane %v9903, 2
        %v10001 = vsel %vm1973, %v9998, %v10000
        %v10002 = vrot.slane %v9904, 2
        %v10003 = vrot.slane %v9905, 2
        %v10004 = vsel %vm1973, %v10002, %v10003
        %v10005 = vrot.slane %v9906, 2
        %v10006 = vsel %vm1973, %v10003, %v10005
        %v10007 = vrot.slane %v9907, 2
        %v10008 = vrot.slane %v9908, 2
        %v10009 = vsel %vm1973, %v10007, %v10008
        %v10010 = vrot.slane %v9909, 2
        %v10011 = vsel %vm1973, %v10008, %v10010
        %v10012 = vrot.slane %v9910, 2
        %v10013 = vrot.slane %v9911, 2
        %v10014 = vsel %vm1973, %v10012, %v10013
        %v10015 = vrot.slane %v9912, 2
        %v10016 = vsel %vm1973, %v10013, %v10015
        %v10017 = vrot.slane %v9913, 2
        %v10018 = vrot.slane %v9914, 2
        %v10019 = vsel %vm1973, %v10017, %v10018
        %v10020 = vrot.slane %v9915, 2
        %v10021 = vsel %vm1973, %v10018, %v10020
        %v10022 = vrot.slane %v9916, 2
        %v10023 = vrot.slane %v9917, 2
        %v10024 = vsel %vm1973, %v10022, %v10023
        %v10025 = vrot.slane %v9918, 2
        %v10026 = vsel %vm1973, %v10023, %v10025
        %v10027 = vrot.slane %v9919, 2
        %v10028 = vrot.slane %v9920, 2
        %v10029 = vsel %vm1973, %v10027, %v10028
        %v10030 = vrot.slane %v9921, 2
        %v10031 = vsel %vm1973, %v10028, %v10030
        %v10032 = vrot.slane %v9922, 2
        %v10033 = vrot.slane %v9923, 2
        %v10034 = vsel %vm1973, %v10032, %v10033
        %v10035 = vrot.slane %v9924, 2
        %v10036 = vsel %vm1973, %v10033, %v10035
        %v10037 = vrot.slane %v9925, 2
        %v10038 = vrot.slane %v9926, 2
        %v10039 = vsel %vm1973, %v10037, %v10038
        %v10040 = vrot.slane %v9927, 2
        %v10041 = vsel %vm1973, %v10038, %v10040
        %v10042 = vrot.slane %v9928, 2
        %v10043 = vrot.slane %v9929, 2
        %v10044 = vsel %vm1973, %v10042, %v10043
        %v10045 = vrot.slane %v9930, 2
        %v10046 = vsel %vm1973, %v10043, %v10045
        %v10047 = vrot.slane %v9931, 2
        %v10048 = vrot.slane %v9932, 2
        %v10049 = vsel %vm1973, %v10047, %v10048
        %v10050 = vrot.slane %v9933, 2
        %v10051 = vsel %vm1973, %v10048, %v10050
        %v10052 = vrot.slane %v9934, 2
        %v10053 = vrot.slane %v9935, 2
        %v10054 = vsel %vm1973, %v10052, %v10053
        %v10055 = vrot.slane %v9936, 2
        %v10056 = vsel %vm1973, %v10053, %v10055
        %v10057 = vrot.slane %v9937, 2
        %v10058 = vrot.slane %v9938, 2
        %v10059 = vsel %vm1973, %v10057, %v10058
        %v10060 = vrot.slane %v9939, 2
        %v10061 = vsel %vm1973, %v10058, %v10060
        %v10062 = vrot.slane %v9940, 2
        %v10063 = vrot.slane %v9941, 2
        %v10064 = vsel %vm1973, %v10062, %v10063
        %v10065 = vrot.slane %v9942, 2
        %v10066 = vsel %vm1973, %v10063, %v10065
        %v10067 = vrot.slane %v9943, 2
        %v10068 = vrot.slane %v9944, 2
        %v10069 = vsel %vm1973, %v10067, %v10068
        %v10070 = vrot.slane %v9945, 2
        %v10071 = vsel %vm1973, %v10068, %v10070
        %v10072 = vrot.slane %v9946, 2
        %v10073 = vrot.slane %v9947, 2
        %v10074 = vsel %vm1973, %v10072, %v10073
        %v10075 = vrot.slane %v9948, 2
        %v10076 = vsel %vm1973, %v10073, %v10075
        %v10109 = vadd.f32 %v9794, %v9999
        %v10110 = vadd.f32 %v9795, %v10001
        %v10111 = vadd.f32 %v9796, %v10004
        %v10112 = vadd.f32 %v9797, %v10006
        %v10113 = vadd.f32 %v9798, %v10009
        %v10114 = vadd.f32 %v9799, %v10011
        %v10115 = vadd.f32 %v9800, %v10014
        %v10116 = vadd.f32 %v9801, %v10016
        %v10117 = vadd.f32 %v9802, %v10019
        %v10118 = vadd.f32 %v9803, %v10021
        %v10119 = vadd.f32 %v9804, %v10024
        %v10120 = vadd.f32 %v9805, %v10026
        %v10121 = vadd.f32 %v9806, %v10029
        %v10122 = vadd.f32 %v9807, %v10031
        %v10123 = vadd.f32 %v9808, %v10034
        %v10124 = vadd.f32 %v9809, %v10036
        %v10125 = vadd.f32 %v9810, %v10039
        %v10126 = vadd.f32 %v9811, %v10041
        %v10127 = vadd.f32 %v9812, %v10044
        %v10128 = vadd.f32 %v9813, %v10046
        %v10129 = vadd.f32 %v9814, %v10049
        %v10130 = vadd.f32 %v9815, %v10051
        %v10131 = vadd.f32 %v9816, %v10054
        %v10132 = vadd.f32 %v9817, %v10056
        %v10133 = vadd.f32 %v9818, %v10059
        %v10134 = vadd.f32 %v9819, %v10061
        %v10135 = vadd.f32 %v9820, %v10064
        %v10136 = vadd.f32 %v9821, %v10066
        %v10137 = vadd.f32 %v9822, %v10069
        %v10138 = vadd.f32 %v9823, %v10071
        %v10139 = vadd.f32 %v9824, %v10074
        %v10140 = vadd.f32 %v9825, %v10076
        %v10141 = vld [vmem:[%s10] sm:$0x1]
        %v10143 = vlaneseq
        %v10144 = vshrl.u32 %v10143, 7
        %v10145 = vsub.s32 0, %v10144
        %v10146 = vrot.slane %v10141, %v10145
        %v10148 = vadd.f32 %v10109, %v10146
        %v10149 = vadd.f32 %v10110, %v10146
        %v10150 = vadd.f32 %v10111, %v10146
        %v10151 = vadd.f32 %v10112, %v10146
        %v10152 = vadd.f32 %v10113, %v10146
        %v10153 = vadd.f32 %v10114, %v10146
        %v10154 = vadd.f32 %v10115, %v10146
        %v10155 = vadd.f32 %v10116, %v10146
        %v10156 = vadd.f32 %v10117, %v10146
        %v10157 = vadd.f32 %v10118, %v10146
        %v10158 = vadd.f32 %v10119, %v10146
        %v10159 = vadd.f32 %v10120, %v10146
        %v10160 = vadd.f32 %v10121, %v10146
        %v10161 = vadd.f32 %v10122, %v10146
        %v10162 = vadd.f32 %v10123, %v10146
        %v10163 = vadd.f32 %v10124, %v10146
        %v10164 = vadd.f32 %v10125, %v10146
        %v10165 = vadd.f32 %v10126, %v10146
        %v10166 = vadd.f32 %v10127, %v10146
        %v10167 = vadd.f32 %v10128, %v10146
        %v10168 = vadd.f32 %v10129, %v10146
        %v10169 = vadd.f32 %v10130, %v10146
        %v10170 = vadd.f32 %v10131, %v10146
        %v10171 = vadd.f32 %v10132, %v10146
        %v10172 = vadd.f32 %v10133, %v10146
        %v10173 = vadd.f32 %v10134, %v10146
        %v10174 = vadd.f32 %v10135, %v10146
        %v10175 = vadd.f32 %v10136, %v10146
        %v10176 = vadd.f32 %v10137, %v10146
        %v10177 = vadd.f32 %v10138, %v10146
        %v10178 = vadd.f32 %v10139, %v10146
        %v10179 = vadd.f32 %v10140, %v10146
        %v10180 = vmax.f32 %v10148, 0.0
        %v10181 = vmax.f32 %v10149, 0.0
        %v10182 = vmax.f32 %v10150, 0.0
        %v10183 = vmax.f32 %v10151, 0.0
        %v10184 = vmax.f32 %v10152, 0.0
        %v10185 = vmax.f32 %v10153, 0.0
        %v10186 = vmax.f32 %v10154, 0.0
        %v10187 = vmax.f32 %v10155, 0.0
        %v10188 = vmax.f32 %v10156, 0.0
        %v10189 = vmax.f32 %v10157, 0.0
        %v10190 = vmax.f32 %v10158, 0.0
        %v10191 = vmax.f32 %v10159, 0.0
        %v10192 = vmax.f32 %v10160, 0.0
        %v10193 = vmax.f32 %v10161, 0.0
        %v10194 = vmax.f32 %v10162, 0.0
        %v10195 = vmax.f32 %v10163, 0.0
        %v10196 = vmax.f32 %v10164, 0.0
        %v10197 = vmax.f32 %v10165, 0.0
        %v10198 = vmax.f32 %v10166, 0.0
        %v10199 = vmax.f32 %v10167, 0.0
        %v10200 = vmax.f32 %v10168, 0.0
        %v10201 = vmax.f32 %v10169, 0.0
        %v10202 = vmax.f32 %v10170, 0.0
        %v10203 = vmax.f32 %v10171, 0.0
        %v10204 = vmax.f32 %v10172, 0.0
        %v10205 = vmax.f32 %v10173, 0.0
        %v10206 = vmax.f32 %v10174, 0.0
        %v10207 = vmax.f32 %v10175, 0.0
        %v10208 = vmax.f32 %v10176, 0.0
        %v10209 = vmax.f32 %v10177, 0.0
        %v10210 = vmax.f32 %v10178, 0.0
        %v10211 = vmax.f32 %v10179, 0.0
        %v10212 = vpack.c.bf16 %v10181, %v10180
        %v10213 = vpack.c.bf16 %v10183, %v10182
        %v10214 = vpack.c.bf16 %v10185, %v10184
        %v10215 = vpack.c.bf16 %v10187, %v10186
        %v10216 = vpack.c.bf16 %v10189, %v10188
        %v10217 = vpack.c.bf16 %v10191, %v10190
        %v10218 = vpack.c.bf16 %v10193, %v10192
        %v10219 = vpack.c.bf16 %v10195, %v10194
        %v10220 = vpack.c.bf16 %v10197, %v10196
        %v10221 = vpack.c.bf16 %v10199, %v10198
        %v10222 = vpack.c.bf16 %v10201, %v10200
        %v10223 = vpack.c.bf16 %v10203, %v10202
        %v10224 = vpack.c.bf16 %v10205, %v10204
        %v10225 = vpack.c.bf16 %v10207, %v10206
        %v10226 = vpack.c.bf16 %v10209, %v10208
        %v10227 = vpack.c.bf16 %v10211, %v10210
        %v10228 = vld [vmem:[#allocation17] sm:$0xf]
        %v10229 = vld [vmem:[#allocation17 + $0x4] sm:$0xf]
        %v10230 = vld [vmem:[#allocation17 + $0x8] sm:$0xf]
        %v10231 = vld [vmem:[#allocation17 + $0xc] sm:$0xf]
        %v10232 = vld [vmem:[#allocation17 + $0x10] sm:$0xf]
        %v10233 = vld [vmem:[#allocation17 + $0x14] sm:$0xf]
        %v10234 = vld [vmem:[#allocation17 + $0x18] sm:$0xf]
        %v10235 = vld [vmem:[#allocation17 + $0x1c] sm:$0xf]
        %v10236 = vld [vmem:[#allocation17 + $0x20] sm:$0xf]
        %v10237 = vld [vmem:[#allocation17 + $0x24] sm:$0xf]
        %v10238 = vld [vmem:[#allocation17 + $0x28] sm:$0xf]
        %v10239 = vld [vmem:[#allocation17 + $0x2c] sm:$0xf]
        %v10240 = vld [vmem:[#allocation17 + $0x30] sm:$0xf]
        %v10241 = vld [vmem:[#allocation17 + $0x34] sm:$0xf]
        %v10242 = vld [vmem:[#allocation17 + $0x38] sm:$0xf]
        %v10243 = vld [vmem:[#allocation17 + $0x3c] sm:$0xf]
        %v10260 = vunpack.c.l.b16 %v10228
        %v10261 = vunpack.c.l.b16 %v10229
        %v10262 = vunpack.c.l.b16 %v10230
        %v10263 = vunpack.c.l.b16 %v10231
        %v10264 = vunpack.c.l.b16 %v10232
        %v10265 = vunpack.c.l.b16 %v10233
        %v10266 = vunpack.c.l.b16 %v10234
        %v10267 = vunpack.c.l.b16 %v10235
        %v10268 = vunpack.c.l.b16 %v10236
        %v10269 = vunpack.c.l.b16 %v10237
        %v10270 = vunpack.c.l.b16 %v10238
        %v10271 = vunpack.c.l.b16 %v10239
        %v10272 = vunpack.c.l.b16 %v10240
        %v10273 = vunpack.c.l.b16 %v10241
        %v10274 = vunpack.c.l.b16 %v10242
        %v10275 = vunpack.c.l.b16 %v10243
        %v10276 = vpack.c.b16 %v10261, %v10260
        %v10277 = vpack.c.b16 %v10263, %v10262
        %v10278 = vpack.c.b16 %v10265, %v10264
        %v10279 = vpack.c.b16 %v10267, %v10266
        %v10280 = vpack.c.b16 %v10269, %v10268
        %v10281 = vpack.c.b16 %v10271, %v10270
        %v10282 = vpack.c.b16 %v10273, %v10272
        %v10283 = vpack.c.b16 %v10275, %v10274
        %10292 = vmatprep.subr.bf16.mxu0 0
        %10293 = vmatpush1.bf16.msra.mxu0 %v10283
        %10294 = vmatprep.subr.bf16.mxu0 0
        %10295 = vmatpush1.bf16.msra.mxu0 %v10282
        %10296 = vmatprep.subr.bf16.mxu0 0
        %10297 = vmatpush1.bf16.msra.mxu0 %v10281
        %10298 = vmatprep.subr.bf16.mxu0 0
        %10299 = vmatpush1.bf16.msra.mxu0 %v10280
        %10300 = vmatprep.subr.bf16.mxu0 0
        %10301 = vmatpush1.bf16.msra.mxu0 %v10279
        %10302 = vmatprep.subr.bf16.mxu0 0
        %10303 = vmatpush1.bf16.msra.mxu0 %v10278
        %10304 = vmatprep.subr.bf16.mxu0 0
        %10305 = vmatpush1.bf16.msra.mxu0 %v10277
        %10306 = vmatprep.subr.bf16.mxu0 0
        %10307 = vmatpush1.bf16.msra.mxu0 %v10276
        %10308 = vmatprep.subr.bf16.mxu0 0
        %10309 = vmatpush2.bf16.msra.mxu0 0
        %10310 = vmatprep.subr.bf16.mxu0 0
        %10311 = vmatpush2.bf16.msra.mxu0 0
        %10312 = vmatprep.subr.bf16.mxu0 0
        %10313 = vmatpush2.bf16.msra.mxu0 0
        %10314 = vmatprep.subr.bf16.mxu0 0
        %10315 = vmatpush2.bf16.msra.mxu0 0
        %10316 = vmatprep.subr.bf16.mxu0 0
        %10317 = vmatpush2.bf16.msra.mxu0 0
        %10318 = vmatprep.subr.bf16.mxu0 0
        %10319 = vmatpush2.bf16.msra.mxu0 0
        %10320 = vmatprep.subr.bf16.mxu0 0
        %10321 = vmatpush2.bf16.msra.mxu0 0
        %10322 = vmatprep.subr.bf16.mxu0 0
        %10323 = vmatpush2.bf16.msra.mxu0 0
        %10324 = vmatprep.mubr.bf16.mxu0 0
        %10325 = vmatmul.mubr.bf16.gmra.mxu0 %v10212
        %v10326 = vpop.f32.mrf.mxu0
        %v10327 = vadd.f32 0.0, %v10326
        %v10328 = vpop.f32.mrf.mxu0
        %v10329 = vpop.f32.mrf.mxu0
        %v10330 = vadd.f32 0.0, %v10329
        %v10331 = vpop.f32.mrf.mxu0
        %10332 = vmatprep.mubr.bf16.mxu0 0
        %10333 = vmatmul.mubr.bf16.gmra.mxu0 %v10213
        %v10334 = vpop.f32.mrf.mxu0
        %v10335 = vadd.f32 0.0, %v10334
        %v10336 = vpop.f32.mrf.mxu0
        %v10337 = vpop.f32.mrf.mxu0
        %v10338 = vadd.f32 0.0, %v10337
        %v10339 = vpop.f32.mrf.mxu0
        %10340 = vmatprep.mubr.bf16.mxu0 0
        %10341 = vmatmul.mubr.bf16.gmra.mxu0 %v10214
        %v10342 = vpop.f32.mrf.mxu0
        %v10343 = vadd.f32 0.0, %v10342
        %v10344 = vpop.f32.mrf.mxu0
        %v10345 = vpop.f32.mrf.mxu0
        %v10346 = vadd.f32 0.0, %v10345
        %v10347 = vpop.f32.mrf.mxu0
        %10348 = vmatprep.mubr.bf16.mxu0 0
        %10349 = vmatmul.mubr.bf16.gmra.mxu0 %v10215
        %v10350 = vpop.f32.mrf.mxu0
        %v10351 = vadd.f32 0.0, %v10350
        %v10352 = vpop.f32.mrf.mxu0
        %v10353 = vpop.f32.mrf.mxu0
        %v10354 = vadd.f32 0.0, %v10353
        %v10355 = vpop.f32.mrf.mxu0
        %10356 = vmatprep.mubr.bf16.mxu0 0
        %10357 = vmatmul.mubr.bf16.gmra.mxu0 %v10216
        %v10358 = vpop.f32.mrf.mxu0
        %v10359 = vadd.f32 0.0, %v10358
        %v10360 = vpop.f32.mrf.mxu0
        %v10361 = vpop.f32.mrf.mxu0
        %v10362 = vadd.f32 0.0, %v10361
        %v10363 = vpop.f32.mrf.mxu0
        %10364 = vmatprep.mubr.bf16.mxu0 0
        %10365 = vmatmul.mubr.bf16.gmra.mxu0 %v10217
        %v10366 = vpop.f32.mrf.mxu0
        %v10367 = vadd.f32 0.0, %v10366
        %v10368 = vpop.f32.mrf.mxu0
        %v10369 = vpop.f32.mrf.mxu0
        %v10370 = vadd.f32 0.0, %v10369
        %v10371 = vpop.f32.mrf.mxu0
        %10372 = vmatprep.mubr.bf16.mxu0 0
        %10373 = vmatmul.mubr.bf16.gmra.mxu0 %v10218
        %v10374 = vpop.f32.mrf.mxu0
        %v10375 = vadd.f32 0.0, %v10374
        %v10376 = vpop.f32.mrf.mxu0
        %v10377 = vpop.f32.mrf.mxu0
        %v10378 = vadd.f32 0.0, %v10377
        %v10379 = vpop.f32.mrf.mxu0
        %10380 = vmatprep.mubr.bf16.mxu0 0
        %10381 = vmatmul.mubr.bf16.gmra.mxu0 %v10219
        %v10382 = vpop.f32.mrf.mxu0
        %v10383 = vadd.f32 0.0, %v10382
        %v10384 = vpop.f32.mrf.mxu0
        %v10385 = vpop.f32.mrf.mxu0
        %v10386 = vadd.f32 0.0, %v10385
        %v10387 = vpop.f32.mrf.mxu0
        %10388 = vmatprep.mubr.bf16.mxu0 0
        %10389 = vmatmul.mubr.bf16.gmra.mxu0 %v10220
        %v10390 = vpop.f32.mrf.mxu0
        %v10391 = vadd.f32 0.0, %v10390
        %v10392 = vpop.f32.mrf.mxu0
        %v10393 = vpop.f32.mrf.mxu0
        %v10394 = vadd.f32 0.0, %v10393
        %v10395 = vpop.f32.mrf.mxu0
        %10396 = vmatprep.mubr.bf16.mxu0 0
        %10397 = vmatmul.mubr.bf16.gmra.mxu0 %v10221
        %v10398 = vpop.f32.mrf.mxu0
        %v10399 = vadd.f32 0.0, %v10398
        %v10400 = vpop.f32.mrf.mxu0
        %v10401 = vpop.f32.mrf.mxu0
        %v10402 = vadd.f32 0.0, %v10401
        %v10403 = vpop.f32.mrf.mxu0
        %10404 = vmatprep.mubr.bf16.mxu0 0
        %10405 = vmatmul.mubr.bf16.gmra.mxu0 %v10222
        %v10406 = vpop.f32.mrf.mxu0
        %v10407 = vadd.f32 0.0, %v10406
        %v10408 = vpop.f32.mrf.mxu0
        %v10409 = vpop.f32.mrf.mxu0
        %v10410 = vadd.f32 0.0, %v10409
        %v10411 = vpop.f32.mrf.mxu0
        %10412 = vmatprep.mubr.bf16.mxu0 0
        %10413 = vmatmul.mubr.bf16.gmra.mxu0 %v10223
        %v10414 = vpop.f32.mrf.mxu0
        %v10415 = vadd.f32 0.0, %v10414
        %v10416 = vpop.f32.mrf.mxu0
        %v10417 = vpop.f32.mrf.mxu0
        %v10418 = vadd.f32 0.0, %v10417
        %v10419 = vpop.f32.mrf.mxu0
        %10420 = vmatprep.mubr.bf16.mxu0 0
        %10421 = vmatmul.mubr.bf16.gmra.mxu0 %v10224
        %v10422 = vpop.f32.mrf.mxu0
        %v10423 = vadd.f32 0.0, %v10422
        %v10424 = vpop.f32.mrf.mxu0
        %v10425 = vpop.f32.mrf.mxu0
        %v10426 = vadd.f32 0.0, %v10425
        %v10427 = vpop.f32.mrf.mxu0
        %10428 = vmatprep.mubr.bf16.mxu0 0
        %10429 = vmatmul.mubr.bf16.gmra.mxu0 %v10225
        %v10430 = vpop.f32.mrf.mxu0
        %v10431 = vadd.f32 0.0, %v10430
        %v10432 = vpop.f32.mrf.mxu0
        %v10433 = vpop.f32.mrf.mxu0
        %v10434 = vadd.f32 0.0, %v10433
        %v10435 = vpop.f32.mrf.mxu0
        %10436 = vmatprep.mubr.bf16.mxu0 0
        %10437 = vmatmul.mubr.bf16.gmra.mxu0 %v10226
        %v10438 = vpop.f32.mrf.mxu0
        %v10439 = vadd.f32 0.0, %v10438
        %v10440 = vpop.f32.mrf.mxu0
        %v10441 = vpop.f32.mrf.mxu0
        %v10442 = vadd.f32 0.0, %v10441
        %v10443 = vpop.f32.mrf.mxu0
        %10444 = vmatprep.mubr.bf16.mxu0 0
        %10445 = vmatmul.mubr.bf16.gmra.mxu0 %v10227
        %v10446 = vpop.f32.mrf.mxu0
        %v10447 = vadd.f32 0.0, %v10446
        %v10448 = vpop.f32.mrf.mxu0
        %v10449 = vpop.f32.mrf.mxu0
        %v10450 = vadd.f32 0.0, %v10449
        %v10451 = vpop.f32.mrf.mxu0
        %10452 = vdwg.mxu0
        %v10453 = vld [vmem:[%s12] sm:$0x1]
        %v10455 = vlaneseq
        %v10456 = vshrl.u32 %v10455, 7
        %v10457 = vsub.s32 0, %v10456
        %v10458 = vrot.slane %v10453, %v10457
        %v10460 = vadd.f32 %v10327, %v10458
        %v10461 = vadd.f32 %v10330, %v10458
        %v10462 = vadd.f32 %v10335, %v10458
        %v10463 = vadd.f32 %v10338, %v10458
        %v10464 = vadd.f32 %v10343, %v10458
        %v10465 = vadd.f32 %v10346, %v10458
        %v10466 = vadd.f32 %v10351, %v10458
        %v10467 = vadd.f32 %v10354, %v10458
        %v10468 = vadd.f32 %v10359, %v10458
        %v10469 = vadd.f32 %v10362, %v10458
        %v10470 = vadd.f32 %v10367, %v10458
        %v10471 = vadd.f32 %v10370, %v10458
        %v10472 = vadd.f32 %v10375, %v10458
        %v10473 = vadd.f32 %v10378, %v10458
        %v10474 = vadd.f32 %v10383, %v10458
        %v10475 = vadd.f32 %v10386, %v10458
        %v10476 = vadd.f32 %v10391, %v10458
        %v10477 = vadd.f32 %v10394, %v10458
        %v10478 = vadd.f32 %v10399, %v10458
        %v10479 = vadd.f32 %v10402, %v10458
        %v10480 = vadd.f32 %v10407, %v10458
        %v10481 = vadd.f32 %v10410, %v10458
        %v10482 = vadd.f32 %v10415, %v10458
        %v10483 = vadd.f32 %v10418, %v10458
        %v10484 = vadd.f32 %v10423, %v10458
        %v10485 = vadd.f32 %v10426, %v10458
        %v10486 = vadd.f32 %v10431, %v10458
        %v10487 = vadd.f32 %v10434, %v10458
        %v10488 = vadd.f32 %v10439, %v10458
        %v10489 = vadd.f32 %v10442, %v10458
        %v10490 = vadd.f32 %v10447, %v10458
        %v10491 = vadd.f32 %v10450, %v10458
        %v10492 = vld [vmem:[%s584] sm:$0xff]
        %v10493 = vld [vmem:[%s584 + $0x8] sm:$0xff]
        %v10494 = vld [vmem:[%s584 + $0x10] sm:$0xff]
        %v10495 = vld [vmem:[%s584 + $0x18] sm:$0xff]
        %v10496 = vld [vmem:[%s584 + $0x20] sm:$0xff]
        %v10497 = vld [vmem:[%s584 + $0x28] sm:$0xff]
        %v10498 = vld [vmem:[%s584 + $0x30] sm:$0xff]
        %v10499 = vld [vmem:[%s584 + $0x38] sm:$0xff]
        %v10500 = vld [vmem:[%s584 + $0x40] sm:$0xff]
        %v10501 = vld [vmem:[%s584 + $0x48] sm:$0xff]
        %v10502 = vld [vmem:[%s584 + $0x50] sm:$0xff]
        %v10503 = vld [vmem:[%s584 + $0x58] sm:$0xff]
        %v10504 = vld [vmem:[%s584 + $0x60] sm:$0xff]
        %v10505 = vld [vmem:[%s584 + $0x68] sm:$0xff]
        %v10506 = vld [vmem:[%s584 + $0x70] sm:$0xff]
        %v10507 = vld [vmem:[%s584 + $0x78] sm:$0xff]
        %v10508 = vld [vmem:[%s584 + $0x80] sm:$0xff]
        %v10509 = vld [vmem:[%s584 + $0x88] sm:$0xff]
        %v10510 = vld [vmem:[%s584 + $0x90] sm:$0xff]
        %v10511 = vld [vmem:[%s584 + $0x98] sm:$0xff]
        %v10512 = vld [vmem:[%s584 + $0xa0] sm:$0xff]
        %v10513 = vld [vmem:[%s584 + $0xa8] sm:$0xff]
        %v10514 = vld [vmem:[%s584 + $0xb0] sm:$0xff]
        %v10515 = vld [vmem:[%s584 + $0xb8] sm:$0xff]
        %v10516 = vld [vmem:[%s584 + $0xc0] sm:$0xff]
        %v10517 = vld [vmem:[%s584 + $0xc8] sm:$0xff]
        %v10518 = vld [vmem:[%s584 + $0xd0] sm:$0xff]
        %v10519 = vld [vmem:[%s584 + $0xd8] sm:$0xff]
        %v10520 = vld [vmem:[%s584 + $0xe0] sm:$0xff]
        %v10521 = vld [vmem:[%s584 + $0xe8] sm:$0xff]
        %v10522 = vld [vmem:[%s584 + $0xf0] sm:$0xff]
        %v10523 = vld [vmem:[%s584 + $0xf8] sm:$0xff]
        %v10524 = vpack.c.bf16 %v10493, %v10492
        %v10525 = vpack.c.bf16 %v10495, %v10494
        %v10526 = vpack.c.bf16 %v10497, %v10496
        %v10527 = vpack.c.bf16 %v10499, %v10498
        %v10528 = vpack.c.bf16 %v10501, %v10500
        %v10529 = vpack.c.bf16 %v10503, %v10502
        %v10530 = vpack.c.bf16 %v10505, %v10504
        %v10531 = vpack.c.bf16 %v10507, %v10506
        %v10532 = vpack.c.bf16 %v10509, %v10508
        %v10533 = vpack.c.bf16 %v10511, %v10510
        %v10534 = vpack.c.bf16 %v10513, %v10512
        %v10535 = vpack.c.bf16 %v10515, %v10514
        %v10536 = vpack.c.bf16 %v10517, %v10516
        %v10537 = vpack.c.bf16 %v10519, %v10518
        %v10538 = vpack.c.bf16 %v10521, %v10520
        %v10539 = vpack.c.bf16 %v10523, %v10522
        %v10540 = vld [vmem:[#allocation18] sm:$0xf]
        %v10541 = vld [vmem:[#allocation18 + $0x4] sm:$0xf]
        %v10542 = vld [vmem:[#allocation18 + $0x8] sm:$0xf]
        %v10543 = vld [vmem:[#allocation18 + $0xc] sm:$0xf]
        %v10544 = vld [vmem:[#allocation18 + $0x10] sm:$0xf]
        %v10545 = vld [vmem:[#allocation18 + $0x14] sm:$0xf]
        %v10546 = vld [vmem:[#allocation18 + $0x18] sm:$0xf]
        %v10547 = vld [vmem:[#allocation18 + $0x1c] sm:$0xf]
        %v10548 = vld [vmem:[#allocation18 + $0x20] sm:$0xf]
        %v10549 = vld [vmem:[#allocation18 + $0x24] sm:$0xf]
        %v10550 = vld [vmem:[#allocation18 + $0x28] sm:$0xf]
        %v10551 = vld [vmem:[#allocation18 + $0x2c] sm:$0xf]
        %v10552 = vld [vmem:[#allocation18 + $0x30] sm:$0xf]
        %v10553 = vld [vmem:[#allocation18 + $0x34] sm:$0xf]
        %v10554 = vld [vmem:[#allocation18 + $0x38] sm:$0xf]
        %v10555 = vld [vmem:[#allocation18 + $0x3c] sm:$0xf]
        %v10572 = vunpack.c.l.b16 %v10540
        %v10573 = vunpack.c.l.b16 %v10541
        %v10574 = vunpack.c.l.b16 %v10542
        %v10575 = vunpack.c.l.b16 %v10543
        %v10576 = vunpack.c.l.b16 %v10544
        %v10577 = vunpack.c.l.b16 %v10545
        %v10578 = vunpack.c.l.b16 %v10546
        %v10579 = vunpack.c.l.b16 %v10547
        %v10580 = vunpack.c.l.b16 %v10548
        %v10581 = vunpack.c.l.b16 %v10549
        %v10582 = vunpack.c.l.b16 %v10550
        %v10583 = vunpack.c.l.b16 %v10551
        %v10584 = vunpack.c.l.b16 %v10552
        %v10585 = vunpack.c.l.b16 %v10553
        %v10586 = vunpack.c.l.b16 %v10554
        %v10587 = vunpack.c.l.b16 %v10555
        %v10588 = vpack.c.b16 %v10573, %v10572
        %v10589 = vpack.c.b16 %v10575, %v10574
        %v10590 = vpack.c.b16 %v10577, %v10576
        %v10591 = vpack.c.b16 %v10579, %v10578
        %v10592 = vpack.c.b16 %v10581, %v10580
        %v10593 = vpack.c.b16 %v10583, %v10582
        %v10594 = vpack.c.b16 %v10585, %v10584
        %v10595 = vpack.c.b16 %v10587, %v10586
        %10604 = vmatprep.subr.bf16.mxu0 0
        %10605 = vmatpush1.bf16.msra.mxu0 %v10595
        %10606 = vmatprep.subr.bf16.mxu0 0
        %10607 = vmatpush1.bf16.msra.mxu0 %v10594
        %10608 = vmatprep.subr.bf16.mxu0 0
        %10609 = vmatpush1.bf16.msra.mxu0 %v10593
        %10610 = vmatprep.subr.bf16.mxu0 0
        %10611 = vmatpush1.bf16.msra.mxu0 %v10592
        %10612 = vmatprep.subr.bf16.mxu0 0
        %10613 = vmatpush1.bf16.msra.mxu0 %v10591
        %10614 = vmatprep.subr.bf16.mxu0 0
        %10615 = vmatpush1.bf16.msra.mxu0 %v10590
        %10616 = vmatprep.subr.bf16.mxu0 0
        %10617 = vmatpush1.bf16.msra.mxu0 %v10589
        %10618 = vmatprep.subr.bf16.mxu0 0
        %10619 = vmatpush1.bf16.msra.mxu0 %v10588
        %10620 = vmatprep.subr.bf16.mxu0 0
        %10621 = vmatpush2.bf16.msra.mxu0 0
        %10622 = vmatprep.subr.bf16.mxu0 0
        %10623 = vmatpush2.bf16.msra.mxu0 0
        %10624 = vmatprep.subr.bf16.mxu0 0
        %10625 = vmatpush2.bf16.msra.mxu0 0
        %10626 = vmatprep.subr.bf16.mxu0 0
        %10627 = vmatpush2.bf16.msra.mxu0 0
        %10628 = vmatprep.subr.bf16.mxu0 0
        %10629 = vmatpush2.bf16.msra.mxu0 0
        %10630 = vmatprep.subr.bf16.mxu0 0
        %10631 = vmatpush2.bf16.msra.mxu0 0
        %10632 = vmatprep.subr.bf16.mxu0 0
        %10633 = vmatpush2.bf16.msra.mxu0 0
        %10634 = vmatprep.subr.bf16.mxu0 0
        %10635 = vmatpush2.bf16.msra.mxu0 0
        %10636 = vmatprep.mubr.bf16.mxu0 0
        %10637 = vmatmul.mubr.bf16.gmra.mxu0 %v10524
        %v10638 = vpop.f32.mrf.mxu0
        %v10639 = vadd.f32 0.0, %v10638
        %v10640 = vpop.f32.mrf.mxu0
        %v10641 = vpop.f32.mrf.mxu0
        %v10642 = vadd.f32 0.0, %v10641
        %v10643 = vpop.f32.mrf.mxu0
        %10644 = vmatprep.mubr.bf16.mxu0 0
        %10645 = vmatmul.mubr.bf16.gmra.mxu0 %v10525
        %v10646 = vpop.f32.mrf.mxu0
        %v10647 = vadd.f32 0.0, %v10646
        %v10648 = vpop.f32.mrf.mxu0
        %v10649 = vpop.f32.mrf.mxu0
        %v10650 = vadd.f32 0.0, %v10649
        %v10651 = vpop.f32.mrf.mxu0
        %10652 = vmatprep.mubr.bf16.mxu0 0
        %10653 = vmatmul.mubr.bf16.gmra.mxu0 %v10526
        %v10654 = vpop.f32.mrf.mxu0
        %v10655 = vadd.f32 0.0, %v10654
        %v10656 = vpop.f32.mrf.mxu0
        %v10657 = vpop.f32.mrf.mxu0
        %v10658 = vadd.f32 0.0, %v10657
        %v10659 = vpop.f32.mrf.mxu0
        %10660 = vmatprep.mubr.bf16.mxu0 0
        %10661 = vmatmul.mubr.bf16.gmra.mxu0 %v10527
        %v10662 = vpop.f32.mrf.mxu0
        %v10663 = vadd.f32 0.0, %v10662
        %v10664 = vpop.f32.mrf.mxu0
        %v10665 = vpop.f32.mrf.mxu0
        %v10666 = vadd.f32 0.0, %v10665
        %v10667 = vpop.f32.mrf.mxu0
        %10668 = vmatprep.mubr.bf16.mxu0 0
        %10669 = vmatmul.mubr.bf16.gmra.mxu0 %v10528
        %v10670 = vpop.f32.mrf.mxu0
        %v10671 = vadd.f32 0.0, %v10670
        %v10672 = vpop.f32.mrf.mxu0
        %v10673 = vpop.f32.mrf.mxu0
        %v10674 = vadd.f32 0.0, %v10673
        %v10675 = vpop.f32.mrf.mxu0
        %10676 = vmatprep.mubr.bf16.mxu0 0
        %10677 = vmatmul.mubr.bf16.gmra.mxu0 %v10529
        %v10678 = vpop.f32.mrf.mxu0
        %v10679 = vadd.f32 0.0, %v10678
        %v10680 = vpop.f32.mrf.mxu0
        %v10681 = vpop.f32.mrf.mxu0
        %v10682 = vadd.f32 0.0, %v10681
        %v10683 = vpop.f32.mrf.mxu0
        %10684 = vmatprep.mubr.bf16.mxu0 0
        %10685 = vmatmul.mubr.bf16.gmra.mxu0 %v10530
        %v10686 = vpop.f32.mrf.mxu0
        %v10687 = vadd.f32 0.0, %v10686
        %v10688 = vpop.f32.mrf.mxu0
        %v10689 = vpop.f32.mrf.mxu0
        %v10690 = vadd.f32 0.0, %v10689
        %v10691 = vpop.f32.mrf.mxu0
        %10692 = vmatprep.mubr.bf16.mxu0 0
        %10693 = vmatmul.mubr.bf16.gmra.mxu0 %v10531
        %v10694 = vpop.f32.mrf.mxu0
        %v10695 = vadd.f32 0.0, %v10694
        %v10696 = vpop.f32.mrf.mxu0
        %v10697 = vpop.f32.mrf.mxu0
        %v10698 = vadd.f32 0.0, %v10697
        %v10699 = vpop.f32.mrf.mxu0
        %10700 = vmatprep.mubr.bf16.mxu0 0
        %10701 = vmatmul.mubr.bf16.gmra.mxu0 %v10532
        %v10702 = vpop.f32.mrf.mxu0
        %v10703 = vadd.f32 0.0, %v10702
        %v10704 = vpop.f32.mrf.mxu0
        %v10705 = vpop.f32.mrf.mxu0
        %v10706 = vadd.f32 0.0, %v10705
        %v10707 = vpop.f32.mrf.mxu0
        %10708 = vmatprep.mubr.bf16.mxu0 0
        %10709 = vmatmul.mubr.bf16.gmra.mxu0 %v10533
        %v10710 = vpop.f32.mrf.mxu0
        %v10711 = vadd.f32 0.0, %v10710
        %v10712 = vpop.f32.mrf.mxu0
        %v10713 = vpop.f32.mrf.mxu0
        %v10714 = vadd.f32 0.0, %v10713
        %v10715 = vpop.f32.mrf.mxu0
        %10716 = vmatprep.mubr.bf16.mxu0 0
        %10717 = vmatmul.mubr.bf16.gmra.mxu0 %v10534
        %v10718 = vpop.f32.mrf.mxu0
        %v10719 = vadd.f32 0.0, %v10718
        %v10720 = vpop.f32.mrf.mxu0
        %v10721 = vpop.f32.mrf.mxu0
        %v10722 = vadd.f32 0.0, %v10721
        %v10723 = vpop.f32.mrf.mxu0
        %10724 = vmatprep.mubr.bf16.mxu0 0
        %10725 = vmatmul.mubr.bf16.gmra.mxu0 %v10535
        %v10726 = vpop.f32.mrf.mxu0
        %v10727 = vadd.f32 0.0, %v10726
        %v10728 = vpop.f32.mrf.mxu0
        %v10729 = vpop.f32.mrf.mxu0
        %v10730 = vadd.f32 0.0, %v10729
        %v10731 = vpop.f32.mrf.mxu0
        %10732 = vmatprep.mubr.bf16.mxu0 0
        %10733 = vmatmul.mubr.bf16.gmra.mxu0 %v10536
        %v10734 = vpop.f32.mrf.mxu0
        %v10735 = vadd.f32 0.0, %v10734
        %v10736 = vpop.f32.mrf.mxu0
        %v10737 = vpop.f32.mrf.mxu0
        %v10738 = vadd.f32 0.0, %v10737
        %v10739 = vpop.f32.mrf.mxu0
        %10740 = vmatprep.mubr.bf16.mxu0 0
        %10741 = vmatmul.mubr.bf16.gmra.mxu0 %v10537
        %v10742 = vpop.f32.mrf.mxu0
        %v10743 = vadd.f32 0.0, %v10742
        %v10744 = vpop.f32.mrf.mxu0
        %v10745 = vpop.f32.mrf.mxu0
        %v10746 = vadd.f32 0.0, %v10745
        %v10747 = vpop.f32.mrf.mxu0
        %10748 = vmatprep.mubr.bf16.mxu0 0
        %10749 = vmatmul.mubr.bf16.gmra.mxu0 %v10538
        %v10750 = vpop.f32.mrf.mxu0
        %v10751 = vadd.f32 0.0, %v10750
        %v10752 = vpop.f32.mrf.mxu0
        %v10753 = vpop.f32.mrf.mxu0
        %v10754 = vadd.f32 0.0, %v10753
        %v10755 = vpop.f32.mrf.mxu0
        %10756 = vmatprep.mubr.bf16.mxu0 0
        %10757 = vmatmul.mubr.bf16.gmra.mxu0 %v10539
        %v10758 = vpop.f32.mrf.mxu0
        %v10759 = vadd.f32 0.0, %v10758
        %v10760 = vpop.f32.mrf.mxu0
        %v10761 = vpop.f32.mrf.mxu0
        %v10762 = vadd.f32 0.0, %v10761
        %v10763 = vpop.f32.mrf.mxu0
        %10764 = vdwg.mxu0
        %v10765 = vadd.f32 %v10460, %v10639
        %v10766 = vadd.f32 %v10461, %v10642
        %v10767 = vadd.f32 %v10462, %v10647
        %v10768 = vadd.f32 %v10463, %v10650
        %v10769 = vadd.f32 %v10464, %v10655
        %v10770 = vadd.f32 %v10465, %v10658
        %v10771 = vadd.f32 %v10466, %v10663
        %v10772 = vadd.f32 %v10467, %v10666
        %v10773 = vadd.f32 %v10468, %v10671
        %v10774 = vadd.f32 %v10469, %v10674
        %v10775 = vadd.f32 %v10470, %v10679
        %v10776 = vadd.f32 %v10471, %v10682
        %v10777 = vadd.f32 %v10472, %v10687
        %v10778 = vadd.f32 %v10473, %v10690
        %v10779 = vadd.f32 %v10474, %v10695
        %v10780 = vadd.f32 %v10475, %v10698
        %v10781 = vadd.f32 %v10476, %v10703
        %v10782 = vadd.f32 %v10477, %v10706
        %v10783 = vadd.f32 %v10478, %v10711
        %v10784 = vadd.f32 %v10479, %v10714
        %v10785 = vadd.f32 %v10480, %v10719
        %v10786 = vadd.f32 %v10481, %v10722
        %v10787 = vadd.f32 %v10482, %v10727
        %v10788 = vadd.f32 %v10483, %v10730
        %v10789 = vadd.f32 %v10484, %v10735
        %v10790 = vadd.f32 %v10485, %v10738
        %v10791 = vadd.f32 %v10486, %v10743
        %v10792 = vadd.f32 %v10487, %v10746
        %v10793 = vadd.f32 %v10488, %v10751
        %v10794 = vadd.f32 %v10489, %v10754
        %v10795 = vadd.f32 %v10490, %v10759
        %v10796 = vadd.f32 %v10491, %v10762
        %v10797 = vld [vmem:[%s14] sm:$0x1]
        %v10799 = vlaneseq
        %v10800 = vshrl.u32 %v10799, 7
        %v10801 = vsub.s32 0, %v10800
        %v10802 = vrot.slane %v10797, %v10801
        %v10804 = vadd.f32 %v10765, %v10802
        %v10805 = vadd.f32 %v10766, %v10802
        %v10806 = vadd.f32 %v10767, %v10802
        %v10807 = vadd.f32 %v10768, %v10802
        %v10808 = vadd.f32 %v10769, %v10802
        %v10809 = vadd.f32 %v10770, %v10802
        %v10810 = vadd.f32 %v10771, %v10802
        %v10811 = vadd.f32 %v10772, %v10802
        %v10812 = vadd.f32 %v10773, %v10802
        %v10813 = vadd.f32 %v10774, %v10802
        %v10814 = vadd.f32 %v10775, %v10802
        %v10815 = vadd.f32 %v10776, %v10802
        %v10816 = vadd.f32 %v10777, %v10802
        %v10817 = vadd.f32 %v10778, %v10802
        %v10818 = vadd.f32 %v10779, %v10802
        %v10819 = vadd.f32 %v10780, %v10802
        %v10820 = vadd.f32 %v10781, %v10802
        %v10821 = vadd.f32 %v10782, %v10802
        %v10822 = vadd.f32 %v10783, %v10802
        %v10823 = vadd.f32 %v10784, %v10802
        %v10824 = vadd.f32 %v10785, %v10802
        %v10825 = vadd.f32 %v10786, %v10802
        %v10826 = vadd.f32 %v10787, %v10802
        %v10827 = vadd.f32 %v10788, %v10802
        %v10828 = vadd.f32 %v10789, %v10802
        %v10829 = vadd.f32 %v10790, %v10802
        %v10830 = vadd.f32 %v10791, %v10802
        %v10831 = vadd.f32 %v10792, %v10802
        %v10832 = vadd.f32 %v10793, %v10802
        %v10833 = vadd.f32 %v10794, %v10802
        %v10834 = vadd.f32 %v10795, %v10802
        %v10835 = vadd.f32 %v10796, %v10802
        %10836 = vst [vmem:[%s666] sm:$0xff] %v10804
        %10837 = vst [vmem:[%s666 + $0x8] sm:$0xff] %v10805
        %10838 = vst [vmem:[%s666 + $0x10] sm:$0xff] %v10806
        %10839 = vst [vmem:[%s666 + $0x18] sm:$0xff] %v10807
        %10840 = vst [vmem:[%s666 + $0x20] sm:$0xff] %v10808
        %10841 = vst [vmem:[%s666 + $0x28] sm:$0xff] %v10809
        %10842 = vst [vmem:[%s666 + $0x30] sm:$0xff] %v10810
        %10843 = vst [vmem:[%s666 + $0x38] sm:$0xff] %v10811
        %10844 = vst [vmem:[%s666 + $0x40] sm:$0xff] %v10812
        %10845 = vst [vmem:[%s666 + $0x48] sm:$0xff] %v10813
        %10846 = vst [vmem:[%s666 + $0x50] sm:$0xff] %v10814
        %10847 = vst [vmem:[%s666 + $0x58] sm:$0xff] %v10815
        %10848 = vst [vmem:[%s666 + $0x60] sm:$0xff] %v10816
        %10849 = vst [vmem:[%s666 + $0x68] sm:$0xff] %v10817
        %10850 = vst [vmem:[%s666 + $0x70] sm:$0xff] %v10818
        %10851 = vst [vmem:[%s666 + $0x78] sm:$0xff] %v10819
        %10852 = vst [vmem:[%s666 + $0x80] sm:$0xff] %v10820
        %10853 = vst [vmem:[%s666 + $0x88] sm:$0xff] %v10821
        %10854 = vst [vmem:[%s666 + $0x90] sm:$0xff] %v10822
        %10855 = vst [vmem:[%s666 + $0x98] sm:$0xff] %v10823
        %10856 = vst [vmem:[%s666 + $0xa0] sm:$0xff] %v10824
        %10857 = vst [vmem:[%s666 + $0xa8] sm:$0xff] %v10825
        %10858 = vst [vmem:[%s666 + $0xb0] sm:$0xff] %v10826
        %10859 = vst [vmem:[%s666 + $0xb8] sm:$0xff] %v10827
        %10860 = vst [vmem:[%s666 + $0xc0] sm:$0xff] %v10828
        %10861 = vst [vmem:[%s666 + $0xc8] sm:$0xff] %v10829
        %10862 = vst [vmem:[%s666 + $0xd0] sm:$0xff] %v10830
        %10863 = vst [vmem:[%s666 + $0xd8] sm:$0xff] %v10831
        %10864 = vst [vmem:[%s666 + $0xe0] sm:$0xff] %v10832
        %10865 = vst [vmem:[%s666 + $0xe8] sm:$0xff] %v10833
        %10866 = vst [vmem:[%s666 + $0xf0] sm:$0xff] %v10834
        %10867 = vst [vmem:[%s666 + $0xf8] sm:$0xff] %v10835
        %s10868 = sand.u32 %s370, 1
        %s10869 = scalar_lea.sflag [#allocation5], %s10868
        %s10870 = sand.u32 %s370, 1
        %s10871 = smul.addr %s10870, 256
        %s10872 = scalar_lea.vmem [#allocation20], %s10871
        %s10873 = sand.u32 %s396, 1
        %s10874 = scalar_lea.sflag [#allocation22], %s10873
        %s10875 = sand.u32 %s396, 1
        %s10876 = smul.addr %s10875, 128
        %s10877 = scalar_lea.vmem [#allocation21], %s10876
        // Predicated region
        $region121: #{tpu_custom_call.1} parent=79 // pred_check
          %p10878 = pneg %p380
        $region122: #{tpu_custom_call.1} parent=79 // pred_check_branch
          %10880 = sbr.rel (%p10878) target = $region124
        $region123: #{tpu_custom_call.1} parent=79 // pred_region
          %s10882 = ssub.s32 4096, 4096
          %10883 = vsyncadd %s10869, %s10882
          %s10884 = smul.addr %s42, 32
          %s10885 = smul.addr %s10884, 128
          %s10886 = scalar_lea.hbm %s15, %s10885
          %s10887 = sshll.u32 %s10872, 4
          %s10888 = int_to_ptr.vmem [resolvable:$true] %s10887
          %10893 = dma.vmem_to_hbm [thread:$0]  %s10888, 4096, %s10886, %s10869, 128, 128, 8
        $region124: #{tpu_custom_call.1} parent=79 // pred_fallthru
          _
        // Predicated region
        $region125: #{tpu_custom_call.1} parent=79 // pred_check
          %p10894 = pneg %p406
        $region126: #{tpu_custom_call.1} parent=79 // pred_check_branch
          %10896 = sbr.rel (%p10894) target = $region128
        $region127: #{tpu_custom_call.1} parent=79 // pred_region
          %s10898 = ssub.s32 2048, 2048
          %10899 = vsyncadd %s10874, %s10898
          %s10900 = smul.addr %s42, 32
          %s10901 = smul.addr %s10900, 64
          %s10902 = scalar_lea.hbm %s16, %s10901
          %s10903 = sshll.u32 %s10877, 4
          %s10904 = int_to_ptr.vmem [resolvable:$true] %s10903
          %10909 = dma.vmem_to_hbm [thread:$0]  %s10904, 2048, %s10902, %s10874, 64, 64, 4
        $region128: #{tpu_custom_call.1} parent=79 // pred_fallthru
          _
      $region80: #{tpu_custom_call.1} parent=5 // pred_fallthru
        _
      %p10910 = scmp.le.s32.totalorder 2, %s37
      // Predicated region
      $region129: #{tpu_custom_call.1} parent=5 // pred_check
        %p10911 = pneg %p10910
      $region130: #{tpu_custom_call.1} parent=5 // pred_check_branch
        %10913 = sbr.rel (%p10911) target = $region132
      $region131: #{tpu_custom_call.1} parent=5 // pred_region
        %s10914 = ssub.s32 %s37, 2
        // Predicated region
        $region133: #{tpu_custom_call.1} parent=131 // pred_check
          %p10915 = pneg %p386
        $region134: #{tpu_custom_call.1} parent=131 // pred_check_branch
          %10917 = sbr.rel (%p10915) target = $region136
        $region135: #{tpu_custom_call.1} parent=131 // pred_region
          %s10918 = sand.u32 %s371, 1
          %s10919 = scalar_lea.sflag [#allocation5], %s10918
          %s10920 = sand.u32 %s371, 1
          %s10921 = smul.addr %s10920, 256
          %s10922 = scalar_lea.vmem [#allocation20], %s10921
          %10923 = dma.done %s10919, 4096
        $region136: #{tpu_custom_call.1} parent=131 // pred_fallthru
          _
        // Predicated region
        $region137: #{tpu_custom_call.1} parent=131 // pred_check
          %p10924 = pneg %p412
        $region138: #{tpu_custom_call.1} parent=131 // pred_check_branch
          %10926 = sbr.rel (%p10924) target = $region140
        $region139: #{tpu_custom_call.1} parent=131 // pred_region
          %s10927 = sand.u32 %s397, 1
          %s10928 = scalar_lea.sflag [#allocation22], %s10927
          %s10929 = sand.u32 %s397, 1
          %s10930 = smul.addr %s10929, 128
          %s10931 = scalar_lea.vmem [#allocation21], %s10930
          %10932 = dma.done %s10928, 2048
        $region140: #{tpu_custom_call.1} parent=131 // pred_fallthru
          _
      $region132: #{tpu_custom_call.1} parent=5 // pred_fallthru
        _
    $region6: #{tpu_custom_call.1} parent=1 // loop_footer
      %s41 = sadd.s32 1, %s37
    $region7: #{tpu_custom_call.1} parent=1 // loop_footer_branch
      %36 = sbr.rel target = $region3
    $region8: #{tpu_custom_call.1} parent=1 // loop_exit
      _
    %10933 = vsyncpa [#allocation4], 1
    %s10934 = scalar_lea.sflag [#allocation4], 1
    %10935 = vsyncpa %s10934, 1
    %10936 = vsyncpa [#allocation7], 1
    %10937 = vsyncpa [#allocation10], 1
    %10938 = vsyncpa [#allocation13], 1
    %10939 = vsyncpa [#allocation16], 1
    %10940 = vsyncpa [#allocation19], 1
    %10941 = vsyncpa [#allocation5], 1
    %s10942 = scalar_lea.sflag [#allocation5], 1
    %10943 = vsyncpa %s10942, 1
    %10944 = vsyncpa [#allocation22], 1
    %s10945 = scalar_lea.sflag [#allocation22], 1
    %10946 = vsyncpa %s10945, 1

</llo_original>
